<compile_context>
chip_gen: v5e
topology: v5e:2x2
jax: 0.10.0
libtpu: 0.0.40
codegen_flags: <defaults>
</compile_context>

<pallas_src>
import functools

import jax
import jax.numpy as jnp
from jax.experimental import pallas as pl
from jax.experimental.pallas import tpu as pltpu


# ---------------------------------------------------------------------------
# Pass 1: fused Q/K/V projection, emitted head-major (nh, tq, hs).
# ---------------------------------------------------------------------------
def _qkv_proj_kernel(num_heads, x_ref, wqkv_ref, q_ref, k_ref, v_ref):
    tp = x_ref.shape[1]
    E = x_ref.shape[2]
    nh = num_heads
    hs = E // nh

    x_t = x_ref[0]                                                   # (tp, E) bf16
    qkv = jnp.dot(x_t, wqkv_ref[...],
                  preferred_element_type=jnp.float32)                # (tp, 3E) f32

    def head_major(block):                                           # (tp, E) -> (nh, tp, hs)
        return block.reshape(tp, nh, hs).transpose(1, 0, 2).astype(jnp.bfloat16)

    # Softmax scale is already folded into the Wq columns (wrapper).
    q_ref[0] = head_major(qkv[:, :E])
    k_ref[0] = head_major(qkv[:, E:2 * E])
    v_ref[0] = head_major(qkv[:, 2 * E:])


# ---------------------------------------------------------------------------
# Pass 2: causal flash attention + output projection.
# ---------------------------------------------------------------------------
def _flash_kernel(num_heads, q_ref, k_ref, v_ref, wproj_ref, bproj_ref,
                  o_ref, m_scr, l_scr, acc_scr):
    qi = pl.program_id(1)
    ki = pl.program_id(2)
    nk = pl.num_programs(2)

    nh = num_heads
    tq = q_ref.shape[2]
    tk = k_ref.shape[2]
    hs = q_ref.shape[3]

    # ---- init flash state once per query tile ----
    @pl.when(ki == 0)
    def _init():
        m_scr[...] = jnp.full(m_scr.shape, -jnp.inf, dtype=jnp.float32)
        l_scr[...] = jnp.zeros(l_scr.shape, dtype=jnp.float32)
        acc_scr[...] = jnp.zeros(acc_scr.shape, dtype=jnp.float32)

    # ---- flash step; fully-masked tiles (ki > qi) are skipped (and never DMA'd) ----
    @pl.when(ki <= qi)
    def _step():
        q = q_ref[0]                                                 # (nh, tq, hs) bf16, pre-scaled
        k = k_ref[0]                                                 # (nh, tk, hs) bf16
        v = v_ref[0]                                                 # (nh, tk, hs) bf16
        s = jnp.einsum('hqd,hkd->hqk', q, k,
                       preferred_element_type=jnp.float32)           # (nh, tq, tk) f32

        def _update(scores):
            m_prev = m_scr[...]
            m_new = jnp.maximum(m_prev, scores.max(axis=-1, keepdims=True))
            alpha = jnp.exp(m_prev - m_new)
            p = jnp.exp(scores - m_new)
            l_scr[...] = alpha * l_scr[...] + p.sum(axis=-1, keepdims=True)
            acc_scr[...] = alpha * acc_scr[...] + jnp.einsum(
                'hqk,hkd->hqd', p.astype(jnp.bfloat16), v,
                preferred_element_type=jnp.float32)
            m_scr[...] = m_new

        # Only the diagonal tile needs the causal mask; below-diagonal tiles are
        # fully visible, so skip the iota/where work there.
        @pl.when(ki == qi)
        def _masked():
            row = jax.lax.broadcasted_iota(jnp.int32, (tq, tk), 0)
            col = jax.lax.broadcasted_iota(jnp.int32, (tq, tk), 1)
            causal = (col <= row)[None, :, :]
            _update(jnp.where(causal, s, -jnp.inf))

        @pl.when(ki < qi)
        def _unmasked():
            _update(s)

    # ---- finalize: normalize, fold heads, single full-depth output matmul ----
    @pl.when(ki == nk - 1)
    def _finalize():
        inv_l = pl.reciprocal(l_scr[...], approx=True)               # EUP slot
        attn = acc_scr[...] * inv_l                                  # (nh, tq, hs) f32
        attn2 = attn.transpose(1, 0, 2).reshape(tq, nh * hs).astype(jnp.bfloat16)
        out = jnp.dot(attn2, wproj_ref[...],
                      preferred_element_type=jnp.float32)            # (tq, E) f32
        out = out + bproj_ref[0]
        # TODO(synk): attention-weight dropout skipped (identity / eval mode).
        o_ref[0] = out.astype(o_ref.dtype)


# ---------------------------------------------------------------------------
# Wrapper
# ---------------------------------------------------------------------------
def multi_head_attention(x, params, num_heads, *, tile=128):
    """x: (B, T, E) f32. params: combined head-major weights, y = x @ W (+ b)."""
    B, T, E = x.shape
    nh = num_heads
    hs = E // nh
    assert nh * hs == E
    tq = min(tile, T)
    assert T % tq == 0, "T must be a multiple of the tile size"
    nq = T // tq
    nk = nq

    # NOTE: the PyTorch reference scales by C**-0.5 where C = num_embed (not head_size).
    scale = float(E) ** (-0.5)

    x_bf = x.astype(jnp.bfloat16)
    # Fold the softmax scale into Wq; fuse Wq|Wk|Wv into one (E, 3E) matmul.
    wqkv = jnp.concatenate(
        [params["wq"] * scale, params["wk"], params["wv"]], axis=1
    ).astype(jnp.bfloat16)                                           # (E, 3E)
    wproj = params["wproj"].astype(jnp.bfloat16)                     # (E, E)
    bproj = params["bproj"].astype(jnp.float32)                      # (1, E)

    # ---- pass 1: Q/K/V projection (head-major), once per row tile ----
    qkv_shape = jax.ShapeDtypeStruct((B, nh, T, hs), jnp.bfloat16)
    q, k, v = pl.pallas_call(
        functools.partial(_qkv_proj_kernel, nh),
        out_shape=(qkv_shape, qkv_shape, qkv_shape),
        grid_spec=pltpu.PrefetchScalarGridSpec(
            num_scalar_prefetch=0,
            grid=(B, nq),
            in_specs=[
                pl.BlockSpec((1, tq, E), lambda b, ti: (b, ti, 0)),   # x rows
                pl.BlockSpec((E, 3 * E), lambda b, ti: (0, 0)),       # [Wq*scale | Wk | Wv]
            ],
            out_specs=[
                pl.BlockSpec((1, nh, tq, hs), lambda b, ti: (b, 0, ti, 0)),
                pl.BlockSpec((1, nh, tq, hs), lambda b, ti: (b, 0, ti, 0)),
                pl.BlockSpec((1, nh, tq, hs), lambda b, ti: (b, 0, ti, 0)),
            ],
        ),
        compiler_params=pltpu.CompilerParams(
            dimension_semantics=("parallel", "parallel"),
        ),
    )(x_bf, wqkv)

    # ---- pass 2: causal flash attention + output projection ----
    # K/V index_map clamps ki to qi: fully causally-masked tiles are never
    # fetched from HBM (compute for them is also skipped by pl.when).
    kv_map = lambda b, qi, ki: (b, 0, jnp.minimum(ki, qi), 0)

    out = pl.pallas_call(
        functools.partial(_flash_kernel, nh),
        out_shape=jax.ShapeDtypeStruct((B, T, E), jnp.float32),
        grid_spec=pltpu.PrefetchScalarGridSpec(
            num_scalar_prefetch=0,
            grid=(B, nq, nk),
            in_specs=[
                pl.BlockSpec((1, nh, tq, hs), lambda b, qi, ki: (b, 0, qi, 0)),  # Q
                pl.BlockSpec((1, nh, tq, hs), kv_map),                            # K
                pl.BlockSpec((1, nh, tq, hs), kv_map),                            # V
                pl.BlockSpec((E, E), lambda b, qi, ki: (0, 0)),                   # Wproj
                pl.BlockSpec((1, E), lambda b, qi, ki: (0, 0)),                   # bproj
            ],
            out_specs=pl.BlockSpec((1, tq, E), lambda b, qi, ki: (b, qi, 0)),
            scratch_shapes=[
                pltpu.VMEM((nh, tq, 1), jnp.float32),    # m (running max)
                pltpu.VMEM((nh, tq, 1), jnp.float32),    # l (running denom)
                pltpu.VMEM((nh, tq, hs), jnp.float32),   # acc (unnormalized output)
            ],
        ),
        compiler_params=pltpu.CompilerParams(
            dimension_semantics=("parallel", "parallel", "arbitrary"),
            vmem_limit_bytes=48 * 1024 * 1024,   # headroom below 64 MiB (v7x)
        ),
    )(q, k, v, wproj, bproj)
    return out


def multi_head_attention_ref(x, params, num_heads):
    """Pure-JAX reference matching the PyTorch MultiHeadAttention (eval mode)."""
    B, T, E = x.shape
    hs = E // num_heads
    scale = float(E) ** (-0.5)
    q = x @ params["wq"]
    k = x @ params["wk"]
    v = x @ params["wv"]
    mask = jnp.tril(jnp.ones((T, T), dtype=bool))
    outs = []
    for h in range(num_heads):
        sl = slice(h * hs, (h + 1) * hs)
        wei = jnp.einsum("btd,bsd->bts", q[..., sl], k[..., sl]) * scale
        wei = jnp.where(mask[None], wei, -jnp.inf)
        wei = jax.nn.softmax(wei, axis=-1)
        outs.append(jnp.einsum("bts,bsd->btd", wei, v[..., sl]))
    out = jnp.concatenate(outs, axis=-1) @ params["wproj"] + params["bproj"][0]
    return out


def init_params(key, num_embed):
    E = num_embed
    keys = jax.random.split(key, 5)
    s = 0.02
    # Per-head K/Q/V Linear(E, hs, bias=False) weights concatenated head-major
    # along the output dim -> one (E, E) matrix each.
    return {
        "wq": s * jax.random.normal(keys[0], (E, E), jnp.float32),
        "wk": s * jax.random.normal(keys[1], (E, E), jnp.float32),
        "wv": s * jax.random.normal(keys[2], (E, E), jnp.float32),
        "wproj": s * jax.random.normal(keys[3], (E, E), jnp.float32),
        "bproj": s * jax.random.normal(keys[4], (1, E), jnp.float32),
    }


if __name__ == "__main__":
    # Small but lane-dense shapes: E multiple of 128, T gives 2x2 (q,kv) tiles so
    # causal tile skipping and the online softmax actually exercise.
    B, T, E = 2, 256, 128
    NUM_HEADS = 4          # head_size = E // NUM_HEADS = 32

    root = jax.random.PRNGKey(0)
    kx, kp = jax.random.split(root)
    x = jax.random.normal(kx, (B, T, E), jnp.float32)
    params = init_params(kp, E)

    out = jax.block_until_ready(multi_head_attention(x, params, NUM_HEADS))
    ref = multi_head_attention_ref(x, params, NUM_HEADS)

    assert out.shape == (B, T, E)
    max_err = float(jnp.max(jnp.abs(out - ref)))
    assert jnp.allclose(out, ref, atol=2e-2, rtol=2e-2), (
        f"mismatch vs JAX reference (max abs err {max_err})")

    print("KERNEL_OK")
</pallas_src>

<mosaic_0001>
module attributes {stable_mosaic.version = 11 : i64} {
  func.func @_qkv_proj_kernel(%arg0: i32, %arg1: i32, %arg2: memref<1x128x128xbf16, #tpu.memory_space<vmem>>, %arg3: memref<128x384xbf16, #tpu.memory_space<vmem>>, %arg4: memref<1x4x128x32xbf16, #tpu.memory_space<vmem>>, %arg5: memref<1x4x128x32xbf16, #tpu.memory_space<vmem>>, %arg6: memref<1x4x128x32xbf16, #tpu.memory_space<vmem>>) attributes {dimension_semantics = [#tpu.dimension_semantics<parallel>, #tpu.dimension_semantics<parallel>], iteration_bounds = array<i64: 2, 2>, scalar_prefetch = 0 : i64, scratch_operands = 0 : i64, tpu.core_type = #tpu.core_type<tc>, window_params = [{transform_indices = @transform_0, window_bounds = array<i64: 1, 128, 128>}, {pipeline_mode = #tpu.pipeline_mode<synchronous>, transform_indices = @transform_1, window_bounds = array<i64: 128, 384>}, {transform_indices = @transform_2, window_bounds = array<i64: 1, 4, 128, 32>}, {transform_indices = @transform_3, window_bounds = array<i64: 1, 4, 128, 32>}, {transform_indices = @transform_4, window_bounds = array<i64: 1, 4, 128, 32>}]} {
    %c0 = arith.constant 0 : index
    %c0_0 = arith.constant 0 : index
    %c0_1 = arith.constant 0 : index
    %0 = vector.load %arg2[%c0, %c0_0, %c0_1] : memref<1x128x128xbf16, #tpu.memory_space<vmem>>, vector<1x128x128xbf16>
    %1 = vector.shape_cast %0 : vector<1x128x128xbf16> to vector<128x128xbf16>
    %c0_2 = arith.constant 0 : index
    %c0_3 = arith.constant 0 : index
    %2 = vector.load %arg3[%c0_2, %c0_3] : memref<128x384xbf16, #tpu.memory_space<vmem>>, vector<128x384xbf16>
    %cst = arith.constant dense<0.000000e+00> : vector<128x384xf32>
    %3 = tpu.matmul %1, %2, %cst {dimension_numbers = #tpu.dot_dimension_numbers<[1], [0], [0], [1], [0, 0, 1, 1], [], []>} : vector<128x128xbf16>, vector<128x384xbf16>, vector<128x384xf32> -> vector<128x384xf32>
    %4 = vector.extract_strided_slice %3 {offsets = [0, 0], sizes = [128, 128], strides = [1, 1]} : vector<128x384xf32> to vector<128x128xf32>
    %5 = vector.shape_cast %4 : vector<128x128xf32> to vector<128x4x32xf32>
    %6 = tpu.transpose %5, [1, 0, 2] : vector<128x4x32xf32> -> vector<4x128x32xf32>
    %7 = arith.truncf %6 : vector<4x128x32xf32> to vector<4x128x32xbf16>
    %c0_4 = arith.constant 0 : index
    %c0_5 = arith.constant 0 : index
    %c0_6 = arith.constant 0 : index
    %c0_7 = arith.constant 0 : index
    %8 = vector.load %arg4[%c0_4, %c0_5, %c0_6, %c0_7] : memref<1x4x128x32xbf16, #tpu.memory_space<vmem>>, vector<1x4x128x32xbf16>
    %9 = vector.shape_cast %8 : vector<1x4x128x32xbf16> to vector<4x128x32xbf16>
    %10 = vector.shape_cast %7 : vector<4x128x32xbf16> to vector<1x4x128x32xbf16>
    tpu.vector_store %arg4[%c0_4, %c0_5, %c0_6, %c0_7], %10 {strides = array<i32>} : memref<1x4x128x32xbf16, #tpu.memory_space<vmem>>, vector<1x4x128x32xbf16>,
    %11 = vector.extract_strided_slice %3 {offsets = [0, 128], sizes = [128, 128], strides = [1, 1]} : vector<128x384xf32> to vector<128x128xf32>
    %12 = vector.shape_cast %11 : vector<128x128xf32> to vector<128x4x32xf32>
    %13 = tpu.transpose %12, [1, 0, 2] : vector<128x4x32xf32> -> vector<4x128x32xf32>
    %14 = arith.truncf %13 : vector<4x128x32xf32> to vector<4x128x32xbf16>
    %c0_8 = arith.constant 0 : index
    %c0_9 = arith.constant 0 : index
    %c0_10 = arith.constant 0 : index
    %c0_11 = arith.constant 0 : index
    %15 = vector.load %arg5[%c0_8, %c0_9, %c0_10, %c0_11] : memref<1x4x128x32xbf16, #tpu.memory_space<vmem>>, vector<1x4x128x32xbf16>
    %16 = vector.shape_cast %15 : vector<1x4x128x32xbf16> to vector<4x128x32xbf16>
    %17 = vector.shape_cast %14 : vector<4x128x32xbf16> to vector<1x4x128x32xbf16>
    tpu.vector_store %arg5[%c0_8, %c0_9, %c0_10, %c0_11], %17 {strides = array<i32>} : memref<1x4x128x32xbf16, #tpu.memory_space<vmem>>, vector<1x4x128x32xbf16>,
    %18 = vector.extract_strided_slice %3 {offsets = [0, 256], sizes = [128, 128], strides = [1, 1]} : vector<128x384xf32> to vector<128x128xf32>
    %19 = vector.shape_cast %18 : vector<128x128xf32> to vector<128x4x32xf32>
    %20 = tpu.transpose %19, [1, 0, 2] : vector<128x4x32xf32> -> vector<4x128x32xf32>
    %21 = arith.truncf %20 : vector<4x128x32xf32> to vector<4x128x32xbf16>
    %c0_12 = arith.constant 0 : index
    %c0_13 = arith.constant 0 : index
    %c0_14 = arith.constant 0 : index
    %c0_15 = arith.constant 0 : index
    %22 = vector.load %arg6[%c0_12, %c0_13, %c0_14, %c0_15] : memref<1x4x128x32xbf16, #tpu.memory_space<vmem>>, vector<1x4x128x32xbf16>
    %23 = vector.shape_cast %22 : vector<1x4x128x32xbf16> to vector<4x128x32xbf16>
    %24 = vector.shape_cast %21 : vector<4x128x32xbf16> to vector<1x4x128x32xbf16>
    tpu.vector_store %arg6[%c0_12, %c0_13, %c0_14, %c0_15], %24 {strides = array<i32>} : memref<1x4x128x32xbf16, #tpu.memory_space<vmem>>, vector<1x4x128x32xbf16>,
    return
  }
  func.func @transform_0(%arg0: i32, %arg1: i32) -> (i32, i32, i32) {
    %c0_i32 = arith.constant 0 : i32
    %c0_i32_0 = arith.constant 0 : i32
    return %arg0, %arg1, %c0_i32 : i32, i32, i32
  }
  func.func @transform_1(%arg0: i32, %arg1: i32) -> (i32, i32) {
    %c0_i32 = arith.constant 0 : i32
    %c0_i32_0 = arith.constant 0 : i32
    %c0_i32_1 = arith.constant 0 : i32
    return %c0_i32, %c0_i32_0 : i32, i32
  }
  func.func @transform_2(%arg0: i32, %arg1: i32) -> (i32, i32, i32, i32) {
    %c0_i32 = arith.constant 0 : i32
    %c0_i32_0 = arith.constant 0 : i32
    %c0_i32_1 = arith.constant 0 : i32
    return %arg0, %c0_i32, %arg1, %c0_i32_0 : i32, i32, i32, i32
  }
  func.func @transform_3(%arg0: i32, %arg1: i32) -> (i32, i32, i32, i32) {
    %c0_i32 = arith.constant 0 : i32
    %c0_i32_0 = arith.constant 0 : i32
    %c0_i32_1 = arith.constant 0 : i32
    return %arg0, %c0_i32, %arg1, %c0_i32_0 : i32, i32, i32, i32
  }
  func.func @transform_4(%arg0: i32, %arg1: i32) -> (i32, i32, i32, i32) {
    %c0_i32 = arith.constant 0 : i32
    %c0_i32_0 = arith.constant 0 : i32
    %c0_i32_1 = arith.constant 0 : i32
    return %arg0, %c0_i32, %arg1, %c0_i32_0 : i32, i32, i32, i32
  }
}

</mosaic_0001>

<llo_original>
// kernel: tpu_custom_call.1
$region0: #{tpu_custom_call.1}
  #allocation0 [shape = 'u32[]', space=smem, size = 0x4, offset = 0x4, fixed_abs, tag = 'smem constant byte address 0x4 - core index']
  #allocation1 [shape = 'u32[72,128]{1,0:T(1,128)}', space=vmem, size = 0x9000, scoped, tag = 'internal scratch']
  %s0 = inlined_call_operand.hbm [shape: bf16[2,256,128], index: 0, kind: input, shape index: {}]
  %s1 = inlined_call_operand.hbm [shape: bf16[128,384], index: 1, kind: input, shape index: {}]
  %s2 = inlined_call_operand.vmem [shape: bf16[2,4,256,32], index: 2, kind: output, shape index: {0}]
  %s3 = inlined_call_operand.vmem [shape: bf16[2,4,256,32], index: 3, kind: output, shape index: {1}]
  %s4 = inlined_call_operand.vmem [shape: bf16[2,4,256,32], index: 4, kind: output, shape index: {2}]
  %5 = xla_tuple %s2, %s3, %s4
  %s6 = sld [smem:[#allocation0]]
  $region176: #{tpu_custom_call.1} parent=0
    _
  %s8 = ssub.s32 1, %s6
  %s9 = scalar_select 0, %s8, %s6
  $region1: #{tpu_custom_call.1} parent=0
    #allocation2 [shape = 'u8[65536]{0}', space=vmem, size = 0x10000, scoped, tag = 'input window, operand 0']
    #allocation3 [shape = 's32[2]{0}', space=sflag, size = 0x8, scoped, tag = 'scoped memory for tpu_custom_call.1']
    #allocation4 [shape = 'u8[98304]{0}', space=vmem, size = 0x18000, scoped, tag = 'input window, operand 1, single buffered']
    #allocation5 [shape = 's32[1]{0}', space=sflag, size = 0x4, scoped, tag = 'scoped memory for tpu_custom_call.1']
    #allocation6 [shape = 'u8[262144]{0}', space=vmem, size = 0x40000, scoped, tag = 'output window, operand 0']
    #allocation7 [shape = 'u8[262144]{0}', space=vmem, size = 0x40000, scoped, tag = 'output window, operand 1']
    #allocation8 [shape = 'u8[262144]{0}', space=vmem, size = 0x40000, scoped, tag = 'output window, operand 2']
    %10 = vsyncpa [#allocation3], 0
    %s11 = scalar_lea.sflag [#allocation3], 1
    %12 = vsyncpa %s11, 0
    %13 = vsyncpa [#allocation5], 0
    loop: start=0, step=1, limit=6
    $region2: #{tpu_custom_call.1} parent=1 // loop_pre_header
      _
    $region3: #{tpu_custom_call.1} parent=1 // loop_header
      %s15 = sphi 0, %s19
      %p16 = scmp.ge.s32.totalorder %s15, 6
      %s22 = sphi 0, %s34
      %s23 = sphi 0, %s30
      %s24 = sphi 0, %s22
      %s25 = sphi 0, %s23
      %s26 = sphi 0, %s24
      %s27 = sphi 0, %s25
      %s39 = sphi 0, %s41
      %s42 = sphi 0, %s39
      %s43 = sphi 0, %s42
      %s59 = sphi 0, %s43
      %s63 = sphi 0, %s63
      %s65 = sphi 0, %s63
      %s66 = sphi 0, %s65
      %s80 = sphi 0, %s66
      %s88 = sphi 0, %s90
      %s91 = sphi 0, %s88
      %s92 = sphi 0, %s91
      %s108 = sphi 0, %s92
      %s116 = sphi 0, %s118
      %s119 = sphi 0, %s116
      %s120 = sphi 0, %s119
      %s136 = sphi 0, %s120
      %s144 = sphi 0, %s146
      %s147 = sphi 0, %s144
      %s148 = sphi 0, %s147
      %s164 = sphi 0, %s148
    $region4: #{tpu_custom_call.1} parent=1 // loop_header_branch
      %18 = sbr.rel (%p16) target = $region8
    $region5: #{tpu_custom_call.1} parent=1 // loop_body
      %s20 = ssub.s32 %s15, 1
      %s21 = ssub.s32 %s15, 2
      %s28 = sadd.s32 1, %s23
      %p29 = scmp.ge.s32.totalorder %s28, 2
      %s30 = scalar_select %p29, 0, %s28
      %s31 = sadd.s32 1, %s22
      %s32 = scalar_select %p29, %s31, %s22
      %p33 = scmp.ge.s32.totalorder %s32, 2
      %s34 = scalar_select %p33, 0, %s32
      %s35 = ssub.s32 %s22, %s34
      %s36 = ssub.s32 %s23, %s30
      %s37 = sor.u32 %s35, %s36
      %p38 = scmp.eq.s32.totalorder %s37, 0
      %s40 = sadd.s32 %s39, 1
      %s41 = scalar_select %p38, %s39, %s40
      %p44 = pneg %p38
      %p45 = scmp.eq.s32.totalorder %s15, 3
      %p46 = por %p44, %p45
      %p47 = scmp.ne.s32.totalorder %s39, %s42
      %p48 = scmp.eq.s32.totalorder %s15, 0
      %p49 = por %p47, %p48
      %p50 = scmp.ne.s32.totalorder %s39, %s42
      %p51 = scmp.eq.s32.totalorder %s20, 3
      %p52 = por %p50, %p51
      %p53 = scmp.ne.s32.totalorder %s42, %s43
      %p54 = scmp.eq.s32.totalorder %s20, 0
      %p55 = por %p53, %p54
      %p56 = scmp.ne.s32.totalorder %s42, %s43
      %p57 = scmp.eq.s32.totalorder %s21, 3
      %p58 = por %p56, %p57
      %p60 = scmp.ne.s32.totalorder %s43, %s59
      %p61 = scmp.eq.s32.totalorder %s21, 0
      %p62 = por %p60, %p61
      %s64 = sadd.s32 %s63, 1
      %p67 = scmp.eq.s32.totalorder %s15, 3
      %p68 = scmp.ne.s32.totalorder %s63, %s65
      %p69 = scmp.eq.s32.totalorder %s15, 0
      %p70 = por %p68, %p69
      %p71 = scmp.ne.s32.totalorder %s63, %s65
      %p72 = scmp.eq.s32.totalorder %s20, 3
      %p73 = por %p71, %p72
      %p74 = scmp.ne.s32.totalorder %s65, %s66
      %p75 = scmp.eq.s32.totalorder %s20, 0
      %p76 = por %p74, %p75
      %p77 = scmp.ne.s32.totalorder %s65, %s66
      %p78 = scmp.eq.s32.totalorder %s21, 3
      %p79 = por %p77, %p78
      %p81 = scmp.ne.s32.totalorder %s66, %s80
      %p82 = scmp.eq.s32.totalorder %s21, 0
      %p83 = por %p81, %p82
      %s84 = ssub.s32 %s22, %s34
      %s85 = ssub.s32 %s23, %s30
      %s86 = sor.u32 %s84, %s85
      %p87 = scmp.eq.s32.totalorder %s86, 0
      %s89 = sadd.s32 %s88, 1
      %s90 = scalar_select %p87, %s88, %s89
      %p93 = pneg %p87
      %p94 = scmp.eq.s32.totalorder %s15, 3
      %p95 = por %p93, %p94
      %p96 = scmp.ne.s32.totalorder %s88, %s91
      %p97 = scmp.eq.s32.totalorder %s15, 0
      %p98 = por %p96, %p97
      %p99 = scmp.ne.s32.totalorder %s88, %s91
      %p100 = scmp.eq.s32.totalorder %s20, 3
      %p101 = por %p99, %p100
      %p102 = scmp.ne.s32.totalorder %s91, %s92
      %p103 = scmp.eq.s32.totalorder %s20, 0
      %p104 = por %p102, %p103
      %p105 = scmp.ne.s32.totalorder %s91, %s92
      %p106 = scmp.eq.s32.totalorder %s21, 3
      %p107 = por %p105, %p106
      %p109 = scmp.ne.s32.totalorder %s92, %s108
      %p110 = scmp.eq.s32.totalorder %s21, 0
      %p111 = por %p109, %p110
      %s112 = ssub.s32 %s22, %s34
      %s113 = ssub.s32 %s23, %s30
      %s114 = sor.u32 %s112, %s113
      %p115 = scmp.eq.s32.totalorder %s114, 0
      %s117 = sadd.s32 %s116, 1
      %s118 = scalar_select %p115, %s116, %s117
      %p121 = pneg %p115
      %p122 = scmp.eq.s32.totalorder %s15, 3
      %p123 = por %p121, %p122
      %p124 = scmp.ne.s32.totalorder %s116, %s119
      %p125 = scmp.eq.s32.totalorder %s15, 0
      %p126 = por %p124, %p125
      %p127 = scmp.ne.s32.totalorder %s116, %s119
      %p128 = scmp.eq.s32.totalorder %s20, 3
      %p129 = por %p127, %p128
      %p130 = scmp.ne.s32.totalorder %s119, %s120
      %p131 = scmp.eq.s32.totalorder %s20, 0
      %p132 = por %p130, %p131
      %p133 = scmp.ne.s32.totalorder %s119, %s120
      %p134 = scmp.eq.s32.totalorder %s21, 3
      %p135 = por %p133, %p134
      %p137 = scmp.ne.s32.totalorder %s120, %s136
      %p138 = scmp.eq.s32.totalorder %s21, 0
      %p139 = por %p137, %p138
      %s140 = ssub.s32 %s22, %s34
      %s141 = ssub.s32 %s23, %s30
      %s142 = sor.u32 %s140, %s141
      %p143 = scmp.eq.s32.totalorder %s142, 0
      %s145 = sadd.s32 %s144, 1
      %s146 = scalar_select %p143, %s144, %s145
      %p149 = pneg %p143
      %p150 = scmp.eq.s32.totalorder %s15, 3
      %p151 = por %p149, %p150
      %p152 = scmp.ne.s32.totalorder %s144, %s147
      %p153 = scmp.eq.s32.totalorder %s15, 0
      %p154 = por %p152, %p153
      %p155 = scmp.ne.s32.totalorder %s144, %s147
      %p156 = scmp.eq.s32.totalorder %s20, 3
      %p157 = por %p155, %p156
      %p158 = scmp.ne.s32.totalorder %s147, %s148
      %p159 = scmp.eq.s32.totalorder %s20, 0
      %p160 = por %p158, %p159
      %p161 = scmp.ne.s32.totalorder %s147, %s148
      %p162 = scmp.eq.s32.totalorder %s21, 3
      %p163 = por %p161, %p162
      %p165 = scmp.ne.s32.totalorder %s148, %s164
      %p166 = scmp.eq.s32.totalorder %s21, 0
      %p167 = por %p165, %p166
      %p168 = scmp.le.s32.totalorder 1, %s15
      %p169 = scmp.lt.s32.totalorder %s15, 5
      %p170 = pnand %p168, %p169
      %p171 = pneg %p170
      // Predicated region
      $region9: #{tpu_custom_call.1} parent=5 // pred_check
        _
      $region10: #{tpu_custom_call.1} parent=5 // pred_check_branch
        %173 = sbr.rel (%p170) target = $region12
      $region11: #{tpu_custom_call.1} parent=5 // pred_region
        %s174 = ssub.s32 %s15, 1
        // Predicated region
        $region13: #{tpu_custom_call.1} parent=11 // pred_check
          %p175 = pneg %p76
        $region14: #{tpu_custom_call.1} parent=11 // pred_check_branch
          %177 = sbr.rel (%p175) target = $region16
        $region15: #{tpu_custom_call.1} parent=11 // pred_region
          %179 = vsyncadd [#allocation5], 0
          %s180 = sshll.u32 %s1, 4
          %s181 = int_to_ptr.hbm [resolvable:$true] %s180
          %s182 = sshll.u32 [#allocation4], 4
          %s183 = int_to_ptr.vmem [resolvable:$true] %s182
          %188 = dma.hbm_to_vmem [thread:$0]  %s181, 3072, %s183, [#allocation5], 192, 192, 12
        $region16: #{tpu_custom_call.1} parent=11 // pred_fallthru
          _
      $region12: #{tpu_custom_call.1} parent=5 // pred_fallthru
        _
      %p189 = scmp.lt.s32.totalorder %s15, 4
      // Predicated region
      $region17: #{tpu_custom_call.1} parent=5 // pred_check
        %p190 = pneg %p189
      $region18: #{tpu_custom_call.1} parent=5 // pred_check_branch
        %192 = sbr.rel (%p190) target = $region20
      $region19: #{tpu_custom_call.1} parent=5 // pred_region
        // Predicated region
        $region21: #{tpu_custom_call.1} parent=19 // pred_check
          %p193 = pneg %p49
        $region22: #{tpu_custom_call.1} parent=19 // pred_check_branch
          %195 = sbr.rel (%p193) target = $region24
        $region23: #{tpu_custom_call.1} parent=19 // pred_region
          %s196 = sand.u32 %s39, 1
          %s197 = scalar_lea.sflag [#allocation3], %s196
          %s198 = sand.u32 %s39, 1
          %s199 = smul.addr %s198, 64
          %s200 = scalar_lea.vmem [#allocation2], %s199
          %s201 = smul.u32 16, %s23
          %203 = vsyncadd %s197, 0
          %s204 = smul.addr %s22, 32
          %s205 = sadd.s32 %s201, %s204
          %s206 = smul.addr %s205, 4
          %s207 = scalar_lea.hbm %s0, %s206
          %s208 = sshll.u32 %s207, 4
          %s209 = int_to_ptr.hbm [resolvable:$true] %s208
          %s210 = sshll.u32 %s200, 4
          %s211 = int_to_ptr.vmem [resolvable:$true] %s210
          %216 = dma.hbm_to_vmem [thread:$0]  %s209, 1024, %s211, %s197, 64, 64, 4
        $region24: #{tpu_custom_call.1} parent=19 // pred_fallthru
          _
      $region20: #{tpu_custom_call.1} parent=5 // pred_fallthru
        _
      %p217 = scmp.le.s32.totalorder 1, %s15
      %p218 = scmp.lt.s32.totalorder %s15, 5
      %p219 = pnand %p217, %p218
      %p220 = pneg %p219
      // Predicated region
      $region25: #{tpu_custom_call.1} parent=5 // pred_check
        _
      $region26: #{tpu_custom_call.1} parent=5 // pred_check_branch
        %222 = sbr.rel (%p219) target = $region28
      $region27: #{tpu_custom_call.1} parent=5 // pred_region
        %s223 = ssub.s32 %s15, 1
        %s224 = sand.u32 %s42, 1
        %s225 = scalar_lea.sflag [#allocation3], %s224
        %s226 = sand.u32 %s42, 1
        %s227 = smul.addr %s226, 64
        %s228 = scalar_lea.vmem [#allocation2], %s227
        // Predicated region
        $region29: #{tpu_custom_call.1} parent=27 // pred_check
          %p229 = pneg %p55
        $region30: #{tpu_custom_call.1} parent=27 // pred_check_branch
          %231 = sbr.rel (%p229) target = $region32
        $region31: #{tpu_custom_call.1} parent=27 // pred_region
          %233 = dma.done %s225, 1024
        $region32: #{tpu_custom_call.1} parent=27 // pred_fallthru
          _
        // Predicated region
        $region33: #{tpu_custom_call.1} parent=27 // pred_check
          %p234 = pneg %p76
        $region34: #{tpu_custom_call.1} parent=27 // pred_check_branch
          %236 = sbr.rel (%p234) target = $region36
        $region35: #{tpu_custom_call.1} parent=27 // pred_region
          %238 = dma.done [#allocation5], 3072
        $region36: #{tpu_custom_call.1} parent=27 // pred_fallthru
          _
        %s239 = sand.u32 %s42, 1
        %s240 = scalar_lea.sflag [#allocation3], %s239
        %s241 = sand.u32 %s42, 1
        %s242 = smul.addr %s241, 64
        %s243 = scalar_lea.vmem [#allocation2], %s242
        %p244 = pneg %p55
        %p245 = pneg %p52
        %p246 = pneg %p76
        %p247 = pneg %p73
        %p248 = pneg %p104
        %p249 = pneg %p101
        %s250 = sand.u32 %s91, 1
        %s251 = sand.u32 %s91, 1
        %s252 = smul.addr %s251, 256
        %s253 = scalar_lea.vmem [#allocation6], %s252
        %p254 = pneg %p132
        %p255 = pneg %p129
        %s256 = sand.u32 %s119, 1
        %s257 = sand.u32 %s119, 1
        %s258 = smul.addr %s257, 256
        %s259 = scalar_lea.vmem [#allocation7], %s258
        %p260 = pneg %p160
        %p261 = pneg %p157
        %s262 = sand.u32 %s147, 1
        %s263 = sand.u32 %s147, 1
        %s264 = smul.addr %s263, 256
        %s265 = scalar_lea.vmem [#allocation8], %s264
        %s266 = smul.u32 16, %s25
        %s267 = smul.u32 16, %s25
        %s268 = smul.u32 16, %s25
        %s269 = smul.u32 16, %s25
        %v270 = vld [vmem:[%s228] sm:$0xf]
        %v271 = vld [vmem:[%s228 + $0x4] sm:$0xf]
        %v272 = vld [vmem:[%s228 + $0x8] sm:$0xf]
        %v273 = vld [vmem:[%s228 + $0xc] sm:$0xf]
        %v274 = vld [vmem:[%s228 + $0x10] sm:$0xf]
        %v275 = vld [vmem:[%s228 + $0x14] sm:$0xf]
        %v276 = vld [vmem:[%s228 + $0x18] sm:$0xf]
        %v277 = vld [vmem:[%s228 + $0x1c] sm:$0xf]
        %v278 = vld [vmem:[%s228 + $0x20] sm:$0xf]
        %v279 = vld [vmem:[%s228 + $0x24] sm:$0xf]
        %v280 = vld [vmem:[%s228 + $0x28] sm:$0xf]
        %v281 = vld [vmem:[%s228 + $0x2c] sm:$0xf]
        %v282 = vld [vmem:[%s228 + $0x30] sm:$0xf]
        %v283 = vld [vmem:[%s228 + $0x34] sm:$0xf]
        %v284 = vld [vmem:[%s228 + $0x38] sm:$0xf]
        %v285 = vld [vmem:[%s228 + $0x3c] sm:$0xf]
        %v286 = vld [vmem:[#allocation4] sm:$0xff]
        %v287 = vld [vmem:[#allocation4 + $0x8] sm:$0xf]
        %v288 = vld [vmem:[#allocation4 + $0xc] sm:$0xff]
        %v289 = vld [vmem:[#allocation4 + $0x14] sm:$0xf]
        %v290 = vld [vmem:[#allocation4 + $0x18] sm:$0xff]
        %v291 = vld [vmem:[#allocation4 + $0x20] sm:$0xf]
        %v292 = vld [vmem:[#allocation4 + $0x24] sm:$0xff]
        %v293 = vld [vmem:[#allocation4 + $0x2c] sm:$0xf]
        %v294 = vld [vmem:[#allocation4 + $0x30] sm:$0xff]
        %v295 = vld [vmem:[#allocation4 + $0x38] sm:$0xf]
        %v296 = vld [vmem:[#allocation4 + $0x3c] sm:$0xff]
        %v297 = vld [vmem:[#allocation4 + $0x44] sm:$0xf]
        %v298 = vld [vmem:[#allocation4 + $0x48] sm:$0xff]
        %v299 = vld [vmem:[#allocation4 + $0x50] sm:$0xf]
        %v300 = vld [vmem:[#allocation4 + $0x54] sm:$0xff]
        %v301 = vld [vmem:[#allocation4 + $0x5c] sm:$0xf]
        %v302 = vld [vmem:[#allocation4 + $0x60] sm:$0xff]
        %v303 = vld [vmem:[#allocation4 + $0x68] sm:$0xf]
        %v304 = vld [vmem:[#allocation4 + $0x6c] sm:$0xff]
        %v305 = vld [vmem:[#allocation4 + $0x74] sm:$0xf]
        %v306 = vld [vmem:[#allocation4 + $0x78] sm:$0xff]
        %v307 = vld [vmem:[#allocation4 + $0x80] sm:$0xf]
        %v308 = vld [vmem:[#allocation4 + $0x84] sm:$0xff]
        %v309 = vld [vmem:[#allocation4 + $0x8c] sm:$0xf]
        %v310 = vld [vmem:[#allocation4 + $0x90] sm:$0xff]
        %v311 = vld [vmem:[#allocation4 + $0x98] sm:$0xf]
        %v312 = vld [vmem:[#allocation4 + $0x9c] sm:$0xff]
        %v313 = vld [vmem:[#allocation4 + $0xa4] sm:$0xf]
        %v314 = vld [vmem:[#allocation4 + $0xa8] sm:$0xff]
        %v315 = vld [vmem:[#allocation4 + $0xb0] sm:$0xf]
        %v316 = vld [vmem:[#allocation4 + $0xb4] sm:$0xff]
        %v317 = vld [vmem:[#allocation4 + $0xbc] sm:$0xf]
        %v334 = vunpack.c.l.b16 %v270
        %v335 = vunpack.c.l.b16 %v271
        %v336 = vunpack.c.l.b16 %v272
        %v337 = vunpack.c.l.b16 %v273
        %v338 = vunpack.c.l.b16 %v274
        %v339 = vunpack.c.l.b16 %v275
        %v340 = vunpack.c.l.b16 %v276
        %v341 = vunpack.c.l.b16 %v277
        %v342 = vunpack.c.l.b16 %v278
        %v343 = vunpack.c.l.b16 %v279
        %v344 = vunpack.c.l.b16 %v280
        %v345 = vunpack.c.l.b16 %v281
        %v346 = vunpack.c.l.b16 %v282
        %v347 = vunpack.c.l.b16 %v283
        %v348 = vunpack.c.l.b16 %v284
        %v349 = vunpack.c.l.b16 %v285
        %v350 = vpack.c.b16 %v335, %v334
        %v351 = vpack.c.b16 %v337, %v336
        %v352 = vpack.c.b16 %v339, %v338
        %v353 = vpack.c.b16 %v341, %v340
        %v354 = vpack.c.b16 %v343, %v342
        %v355 = vpack.c.b16 %v345, %v344
        %v356 = vpack.c.b16 %v347, %v346
        %v357 = vpack.c.b16 %v349, %v348
        %v398 = vunpack.c.l.b16 %v286
        %v399 = vunpack.c.h.b16 %v286
        %v400 = vunpack.c.l.b16 %v287
        %v401 = vunpack.c.l.b16 %v288
        %v402 = vunpack.c.h.b16 %v288
        %v403 = vunpack.c.l.b16 %v289
        %v404 = vunpack.c.l.b16 %v290
        %v405 = vunpack.c.h.b16 %v290
        %v406 = vunpack.c.l.b16 %v291
        %v407 = vunpack.c.l.b16 %v292
        %v408 = vunpack.c.h.b16 %v292
        %v409 = vunpack.c.l.b16 %v293
        %v410 = vunpack.c.l.b16 %v294
        %v411 = vunpack.c.h.b16 %v294
        %v412 = vunpack.c.l.b16 %v295
        %v413 = vunpack.c.l.b16 %v296
        %v414 = vunpack.c.h.b16 %v296
        %v415 = vunpack.c.l.b16 %v297
        %v416 = vunpack.c.l.b16 %v298
        %v417 = vunpack.c.h.b16 %v298
        %v418 = vunpack.c.l.b16 %v299
        %v419 = vunpack.c.l.b16 %v300
        %v420 = vunpack.c.h.b16 %v300
        %v421 = vunpack.c.l.b16 %v301
        %v422 = vunpack.c.l.b16 %v302
        %v423 = vunpack.c.h.b16 %v302
        %v424 = vunpack.c.l.b16 %v303
        %v425 = vunpack.c.l.b16 %v304
        %v426 = vunpack.c.h.b16 %v304
        %v427 = vunpack.c.l.b16 %v305
        %v428 = vunpack.c.l.b16 %v306
        %v429 = vunpack.c.h.b16 %v306
        %v430 = vunpack.c.l.b16 %v307
        %v431 = vunpack.c.l.b16 %v308
        %v432 = vunpack.c.h.b16 %v308
        %v433 = vunpack.c.l.b16 %v309
        %v434 = vunpack.c.l.b16 %v310
        %v435 = vunpack.c.h.b16 %v310
        %v436 = vunpack.c.l.b16 %v311
        %v437 = vunpack.c.l.b16 %v312
        %v438 = vunpack.c.h.b16 %v312
        %v439 = vunpack.c.l.b16 %v313
        %v440 = vunpack.c.l.b16 %v314
        %v441 = vunpack.c.h.b16 %v314
        %v442 = vunpack.c.l.b16 %v315
        %v443 = vunpack.c.l.b16 %v316
        %v444 = vunpack.c.h.b16 %v316
        %v445 = vunpack.c.l.b16 %v317
        %v446 = vpack.c.b16 %v401, %v398
        %v447 = vpack.c.b16 %v402, %v399
        %v448 = vpack.c.b16 %v403, %v400
        %v449 = vpack.c.b16 %v407, %v404
        %v450 = vpack.c.b16 %v408, %v405
        %v451 = vpack.c.b16 %v409, %v406
        %v452 = vpack.c.b16 %v413, %v410
        %v453 = vpack.c.b16 %v414, %v411
        %v454 = vpack.c.b16 %v415, %v412
        %v455 = vpack.c.b16 %v419, %v416
        %v456 = vpack.c.b16 %v420, %v417
        %v457 = vpack.c.b16 %v421, %v418
        %v458 = vpack.c.b16 %v425, %v422
        %v459 = vpack.c.b16 %v426, %v423
        %v460 = vpack.c.b16 %v427, %v424
        %v461 = vpack.c.b16 %v431, %v428
        %v462 = vpack.c.b16 %v432, %v429
        %v463 = vpack.c.b16 %v433, %v430
        %v464 = vpack.c.b16 %v437, %v434
        %v465 = vpack.c.b16 %v438, %v435
        %v466 = vpack.c.b16 %v439, %v436
        %v467 = vpack.c.b16 %v443, %v440
        %v468 = vpack.c.b16 %v444, %v441
        %v469 = vpack.c.b16 %v445, %v442
        %494 = vmatpush.bf16.msra.mxu0 %v467
        %495 = vmatpush.bf16.msra.mxu0 %v464
        %496 = vmatpush.bf16.msra.mxu0 %v461
        %497 = vmatpush.bf16.msra.mxu0 %v458
        %498 = vmatpush.bf16.msra.mxu0 %v455
        %499 = vmatpush.bf16.msra.mxu0 %v452
        %500 = vmatpush.bf16.msra.mxu0 %v449
        %501 = vmatpush.bf16.msra.mxu0 %v446
        %502 = vmatmul.bf16.gmra.mxu0 %v350
        %v503 = vpop.f32.mrf.mxu0
        %v504 = vadd.f32 0.0, %v503
        %v505 = vpop.f32.mrf.mxu0
        %v506 = vadd.f32 0.0, %v505
        %507 = vmatmul.bf16.gmra.mxu0 %v351
        %v508 = vpop.f32.mrf.mxu0
        %v509 = vadd.f32 0.0, %v508
        %v510 = vpop.f32.mrf.mxu0
        %v511 = vadd.f32 0.0, %v510
        %512 = vmatmul.bf16.gmra.mxu0 %v352
        %v513 = vpop.f32.mrf.mxu0
        %v514 = vadd.f32 0.0, %v513
        %v515 = vpop.f32.mrf.mxu0
        %v516 = vadd.f32 0.0, %v515
        %517 = vmatmul.bf16.gmra.mxu0 %v353
        %v518 = vpop.f32.mrf.mxu0
        %v519 = vadd.f32 0.0, %v518
        %v520 = vpop.f32.mrf.mxu0
        %v521 = vadd.f32 0.0, %v520
        %522 = vmatmul.bf16.gmra.mxu0 %v354
        %v523 = vpop.f32.mrf.mxu0
        %v524 = vadd.f32 0.0, %v523
        %v525 = vpop.f32.mrf.mxu0
        %v526 = vadd.f32 0.0, %v525
        %527 = vmatmul.bf16.gmra.mxu0 %v355
        %v528 = vpop.f32.mrf.mxu0
        %v529 = vadd.f32 0.0, %v528
        %v530 = vpop.f32.mrf.mxu0
        %v531 = vadd.f32 0.0, %v530
        %532 = vmatmul.bf16.gmra.mxu0 %v356
        %v533 = vpop.f32.mrf.mxu0
        %v534 = vadd.f32 0.0, %v533
        %v535 = vpop.f32.mrf.mxu0
        %v536 = vadd.f32 0.0, %v535
        %537 = vmatmul.bf16.gmra.mxu0 %v357
        %v538 = vpop.f32.mrf.mxu0
        %v539 = vadd.f32 0.0, %v538
        %v540 = vpop.f32.mrf.mxu0
        %v541 = vadd.f32 0.0, %v540
        %542 = vdwg.mxu0
        %543 = vmatpush.bf16.msra.mxu0 %v468
        %544 = vmatpush.bf16.msra.mxu0 %v465
        %545 = vmatpush.bf16.msra.mxu0 %v462
        %546 = vmatpush.bf16.msra.mxu0 %v459
        %547 = vmatpush.bf16.msra.mxu0 %v456
        %548 = vmatpush.bf16.msra.mxu0 %v453
        %549 = vmatpush.bf16.msra.mxu0 %v450
        %550 = vmatpush.bf16.msra.mxu0 %v447
        %551 = vmatmul.bf16.gmra.mxu0 %v350
        %v552 = vpop.f32.mrf.mxu0
        %v553 = vadd.f32 0.0, %v552
        %v554 = vpop.f32.mrf.mxu0
        %v555 = vadd.f32 0.0, %v554
        %556 = vmatmul.bf16.gmra.mxu0 %v351
        %v557 = vpop.f32.mrf.mxu0
        %v558 = vadd.f32 0.0, %v557
        %v559 = vpop.f32.mrf.mxu0
        %v560 = vadd.f32 0.0, %v559
        %561 = vmatmul.bf16.gmra.mxu0 %v352
        %v562 = vpop.f32.mrf.mxu0
        %v563 = vadd.f32 0.0, %v562
        %v564 = vpop.f32.mrf.mxu0
        %v565 = vadd.f32 0.0, %v564
        %566 = vmatmul.bf16.gmra.mxu0 %v353
        %v567 = vpop.f32.mrf.mxu0
        %v568 = vadd.f32 0.0, %v567
        %v569 = vpop.f32.mrf.mxu0
        %v570 = vadd.f32 0.0, %v569
        %571 = vmatmul.bf16.gmra.mxu0 %v354
        %v572 = vpop.f32.mrf.mxu0
        %v573 = vadd.f32 0.0, %v572
        %v574 = vpop.f32.mrf.mxu0
        %v575 = vadd.f32 0.0, %v574
        %576 = vmatmul.bf16.gmra.mxu0 %v355
        %v577 = vpop.f32.mrf.mxu0
        %v578 = vadd.f32 0.0, %v577
        %v579 = vpop.f32.mrf.mxu0
        %v580 = vadd.f32 0.0, %v579
        %581 = vmatmul.bf16.gmra.mxu0 %v356
        %v582 = vpop.f32.mrf.mxu0
        %v583 = vadd.f32 0.0, %v582
        %v584 = vpop.f32.mrf.mxu0
        %v585 = vadd.f32 0.0, %v584
        %586 = vmatmul.bf16.gmra.mxu0 %v357
        %v587 = vpop.f32.mrf.mxu0
        %v588 = vadd.f32 0.0, %v587
        %v589 = vpop.f32.mrf.mxu0
        %v590 = vadd.f32 0.0, %v589
        %591 = vdwg.mxu0
        %592 = vmatpush.bf16.msra.mxu0 %v469
        %593 = vmatpush.bf16.msra.mxu0 %v466
        %594 = vmatpush.bf16.msra.mxu0 %v463
        %595 = vmatpush.bf16.msra.mxu0 %v460
        %596 = vmatpush.bf16.msra.mxu0 %v457
        %597 = vmatpush.bf16.msra.mxu0 %v454
        %598 = vmatpush.bf16.msra.mxu0 %v451
        %599 = vmatpush.bf16.msra.mxu0 %v448
        %600 = vmatmul.bf16.gmra.mxu0 %v350
        %v601 = vpop.f32.mrf.mxu0
        %v602 = vadd.f32 0.0, %v601
        %v603 = vpop.f32.mrf.mxu0
        %v604 = vadd.f32 0.0, %v603
        %605 = vmatmul.bf16.gmra.mxu0 %v351
        %v606 = vpop.f32.mrf.mxu0
        %v607 = vadd.f32 0.0, %v606
        %v608 = vpop.f32.mrf.mxu0
        %v609 = vadd.f32 0.0, %v608
        %610 = vmatmul.bf16.gmra.mxu0 %v352
        %v611 = vpop.f32.mrf.mxu0
        %v612 = vadd.f32 0.0, %v611
        %v613 = vpop.f32.mrf.mxu0
        %v614 = vadd.f32 0.0, %v613
        %615 = vmatmul.bf16.gmra.mxu0 %v353
        %v616 = vpop.f32.mrf.mxu0
        %v617 = vadd.f32 0.0, %v616
        %v618 = vpop.f32.mrf.mxu0
        %v619 = vadd.f32 0.0, %v618
        %620 = vmatmul.bf16.gmra.mxu0 %v354
        %v621 = vpop.f32.mrf.mxu0
        %v622 = vadd.f32 0.0, %v621
        %v623 = vpop.f32.mrf.mxu0
        %v624 = vadd.f32 0.0, %v623
        %625 = vmatmul.bf16.gmra.mxu0 %v355
        %v626 = vpop.f32.mrf.mxu0
        %v627 = vadd.f32 0.0, %v626
        %v628 = vpop.f32.mrf.mxu0
        %v629 = vadd.f32 0.0, %v628
        %630 = vmatmul.bf16.gmra.mxu0 %v356
        %v631 = vpop.f32.mrf.mxu0
        %v632 = vadd.f32 0.0, %v631
        %v633 = vpop.f32.mrf.mxu0
        %v634 = vadd.f32 0.0, %v633
        %635 = vmatmul.bf16.gmra.mxu0 %v357
        %v636 = vpop.f32.mrf.mxu0
        %v637 = vadd.f32 0.0, %v636
        %v638 = vpop.f32.mrf.mxu0
        %v639 = vadd.f32 0.0, %v638
        %640 = vdwg.mxu0
        %657 = vrot.lane.b32.xlu0 %v504, 96
        %v658 = vpop.permute.xlu0 %657
        %659 = vrot.lane.b32.xlu0 %v506, 96
        %v660 = vpop.permute.xlu0 %659
        %661 = vrot.lane.b32.xlu0 %v509, 96
        %v662 = vpop.permute.xlu0 %661
        %663 = vrot.lane.b32.xlu0 %v511, 96
        %v664 = vpop.permute.xlu0 %663
        %665 = vrot.lane.b32.xlu0 %v514, 96
        %v666 = vpop.permute.xlu0 %665
        %667 = vrot.lane.b32.xlu0 %v516, 96
        %v668 = vpop.permute.xlu0 %667
        %669 = vrot.lane.b32.xlu0 %v519, 96
        %v670 = vpop.permute.xlu0 %669
        %671 = vrot.lane.b32.xlu0 %v521, 96
        %v672 = vpop.permute.xlu0 %671
        %673 = vrot.lane.b32.xlu0 %v524, 96
        %v674 = vpop.permute.xlu0 %673
        %675 = vrot.lane.b32.xlu0 %v526, 96
        %v676 = vpop.permute.xlu0 %675
        %677 = vrot.lane.b32.xlu0 %v529, 96
        %v678 = vpop.permute.xlu0 %677
        %679 = vrot.lane.b32.xlu0 %v531, 96
        %v680 = vpop.permute.xlu0 %679
        %681 = vrot.lane.b32.xlu0 %v534, 96
        %v682 = vpop.permute.xlu0 %681
        %683 = vrot.lane.b32.xlu0 %v536, 96
        %v684 = vpop.permute.xlu0 %683
        %685 = vrot.lane.b32.xlu0 %v539, 96
        %v686 = vpop.permute.xlu0 %685
        %687 = vrot.lane.b32.xlu0 %v541, 96
        %v688 = vpop.permute.xlu0 %687
        %705 = vrot.lane.b32.xlu0 %v504, 64
        %v706 = vpop.permute.xlu0 %705
        %707 = vrot.lane.b32.xlu0 %v506, 64
        %v708 = vpop.permute.xlu0 %707
        %709 = vrot.lane.b32.xlu0 %v509, 64
        %v710 = vpop.permute.xlu0 %709
        %711 = vrot.lane.b32.xlu0 %v511, 64
        %v712 = vpop.permute.xlu0 %711
        %713 = vrot.lane.b32.xlu0 %v514, 64
        %v714 = vpop.permute.xlu0 %713
        %715 = vrot.lane.b32.xlu0 %v516, 64
        %v716 = vpop.permute.xlu0 %715
        %717 = vrot.lane.b32.xlu0 %v519, 64
        %v718 = vpop.permute.xlu0 %717
        %719 = vrot.lane.b32.xlu0 %v521, 64
        %v720 = vpop.permute.xlu0 %719
        %721 = vrot.lane.b32.xlu0 %v524, 64
        %v722 = vpop.permute.xlu0 %721
        %723 = vrot.lane.b32.xlu0 %v526, 64
        %v724 = vpop.permute.xlu0 %723
        %725 = vrot.lane.b32.xlu0 %v529, 64
        %v726 = vpop.permute.xlu0 %725
        %727 = vrot.lane.b32.xlu0 %v531, 64
        %v728 = vpop.permute.xlu0 %727
        %729 = vrot.lane.b32.xlu0 %v534, 64
        %v730 = vpop.permute.xlu0 %729
        %731 = vrot.lane.b32.xlu0 %v536, 64
        %v732 = vpop.permute.xlu0 %731
        %733 = vrot.lane.b32.xlu0 %v539, 64
        %v734 = vpop.permute.xlu0 %733
        %735 = vrot.lane.b32.xlu0 %v541, 64
        %v736 = vpop.permute.xlu0 %735
        %753 = vrot.lane.b32.xlu0 %v504, 32
        %v754 = vpop.permute.xlu0 %753
        %755 = vrot.lane.b32.xlu0 %v506, 32
        %v756 = vpop.permute.xlu0 %755
        %757 = vrot.lane.b32.xlu0 %v509, 32
        %v758 = vpop.permute.xlu0 %757
        %759 = vrot.lane.b32.xlu0 %v511, 32
        %v760 = vpop.permute.xlu0 %759
        %761 = vrot.lane.b32.xlu0 %v514, 32
        %v762 = vpop.permute.xlu0 %761
        %763 = vrot.lane.b32.xlu0 %v516, 32
        %v764 = vpop.permute.xlu0 %763
        %765 = vrot.lane.b32.xlu0 %v519, 32
        %v766 = vpop.permute.xlu0 %765
        %767 = vrot.lane.b32.xlu0 %v521, 32
        %v768 = vpop.permute.xlu0 %767
        %769 = vrot.lane.b32.xlu0 %v524, 32
        %v770 = vpop.permute.xlu0 %769
        %771 = vrot.lane.b32.xlu0 %v526, 32
        %v772 = vpop.permute.xlu0 %771
        %773 = vrot.lane.b32.xlu0 %v529, 32
        %v774 = vpop.permute.xlu0 %773
        %775 = vrot.lane.b32.xlu0 %v531, 32
        %v776 = vpop.permute.xlu0 %775
        %777 = vrot.lane.b32.xlu0 %v534, 32
        %v778 = vpop.permute.xlu0 %777
        %779 = vrot.lane.b32.xlu0 %v536, 32
        %v780 = vpop.permute.xlu0 %779
        %781 = vrot.lane.b32.xlu0 %v539, 32
        %v782 = vpop.permute.xlu0 %781
        %783 = vrot.lane.b32.xlu0 %v541, 32
        %v784 = vpop.permute.xlu0 %783
        %v801 = vrot.slane %v706, 4
        %vm802 = vcmask 1047556
        %v803 = vsel %vm802, %v801, %v504
        %v804 = vrot.slane %v504, 4
        %v805 = vsel %vm802, %v706, %v804
        %v807 = vunpack.c.l.s4 1983009808
        %v808 = vunpack.c.0.s8 %v807
        %v809 = vperm.slane %v803, %v808
        %v811 = vunpack.c.l.s4 1983009808
        %v812 = vunpack.c.0.s8 %v811
        %v813 = vperm.slane %v805, %v812
        %v814 = vrot.slane %v754, 4
        %v815 = vsel %vm802, %v814, %v658
        %v816 = vrot.slane %v658, 4
        %v817 = vsel %vm802, %v754, %v816
        %v819 = vunpack.c.l.s4 1983009808
        %v820 = vunpack.c.0.s8 %v819
        %v821 = vperm.slane %v815, %v820
        %v823 = vunpack.c.l.s4 1983009808
        %v824 = vunpack.c.0.s8 %v823
        %v825 = vperm.slane %v817, %v824
        %v826 = vrot.slane %v821, 4
        %v827 = vsel %vm802, %v826, %v809
        %v828 = vrot.slane %v809, 4
        %v829 = vsel %vm802, %v821, %v828
        %v831 = vunpack.c.l.s4 1934713408
        %v832 = vunpack.c.0.s8 %v831
        %v833 = vperm.slane %v827, %v832
        %v835 = vunpack.c.l.s4 1934713408
        %v836 = vunpack.c.0.s8 %v835
        %v837 = vperm.slane %v829, %v836
        %v838 = vrot.slane %v825, 4
        %v839 = vsel %vm802, %v838, %v813
        %v840 = vrot.slane %v813, 4
        %v841 = vsel %vm802, %v825, %v840
        %v843 = vunpack.c.l.s4 1934713408
        %v844 = vunpack.c.0.s8 %v843
        %v845 = vperm.slane %v839, %v844
        %v847 = vunpack.c.l.s4 1934713408
        %v848 = vunpack.c.0.s8 %v847
        %v849 = vperm.slane %v841, %v848
        %v850 = vrot.slane %v833, 4
        %v851 = vsel %vm802, 0.0, %v850
        %v852 = vrot.slane %v837, 4
        %v853 = vsel %vm802, 0.0, %v852
        %v854 = vrot.slane %v845, 4
        %v855 = vsel %vm802, 0.0, %v854
        %v856 = vrot.slane %v849, 4
        %v857 = vsel %vm802, 0.0, %v856
        %v858 = vrot.slane %v708, 4
        %v859 = vsel %vm802, %v858, %v506
        %v860 = vrot.slane %v506, 4
        %v861 = vsel %vm802, %v708, %v860
        %v863 = vunpack.c.l.s4 1983009808
        %v864 = vunpack.c.0.s8 %v863
        %v865 = vperm.slane %v859, %v864
        %v867 = vunpack.c.l.s4 1983009808
        %v868 = vunpack.c.0.s8 %v867
        %v869 = vperm.slane %v861, %v868
        %v870 = vrot.slane %v756, 4
        %v871 = vsel %vm802, %v870, %v660
        %v872 = vrot.slane %v660, 4
        %v873 = vsel %vm802, %v756, %v872
        %v875 = vunpack.c.l.s4 1983009808
        %v876 = vunpack.c.0.s8 %v875
        %v877 = vperm.slane %v871, %v876
        %v879 = vunpack.c.l.s4 1983009808
        %v880 = vunpack.c.0.s8 %v879
        %v881 = vperm.slane %v873, %v880
        %v882 = vrot.slane %v877, 4
        %v883 = vsel %vm802, %v882, %v865
        %v884 = vrot.slane %v865, 4
        %v885 = vsel %vm802, %v877, %v884
        %v887 = vunpack.c.l.s4 1934713408
        %v888 = vunpack.c.0.s8 %v887
        %v889 = vperm.slane %v883, %v888
        %v891 = vunpack.c.l.s4 1934713408
        %v892 = vunpack.c.0.s8 %v891
        %v893 = vperm.slane %v885, %v892
        %v894 = vrot.slane %v881, 4
        %v895 = vsel %vm802, %v894, %v869
        %v896 = vrot.slane %v869, 4
        %v897 = vsel %vm802, %v881, %v896
        %v899 = vunpack.c.l.s4 1934713408
        %v900 = vunpack.c.0.s8 %v899
        %v901 = vperm.slane %v895, %v900
        %v903 = vunpack.c.l.s4 1934713408
        %v904 = vunpack.c.0.s8 %v903
        %v905 = vperm.slane %v897, %v904
        %v906 = vrot.slane %v889, 4
        %v907 = vsel %vm802, 0.0, %v906
        %v908 = vrot.slane %v893, 4
        %v909 = vsel %vm802, 0.0, %v908
        %v910 = vrot.slane %v901, 4
        %v911 = vsel %vm802, 0.0, %v910
        %v912 = vrot.slane %v905, 4
        %v913 = vsel %vm802, 0.0, %v912
        %v914 = vrot.slane %v710, 4
        %v915 = vsel %vm802, %v914, %v509
        %v916 = vrot.slane %v509, 4
        %v917 = vsel %vm802, %v710, %v916
        %v919 = vunpack.c.l.s4 1983009808
        %v920 = vunpack.c.0.s8 %v919
        %v921 = vperm.slane %v915, %v920
        %v923 = vunpack.c.l.s4 1983009808
        %v924 = vunpack.c.0.s8 %v923
        %v925 = vperm.slane %v917, %v924
        %v926 = vrot.slane %v758, 4
        %v927 = vsel %vm802, %v926, %v662
        %v928 = vrot.slane %v662, 4
        %v929 = vsel %vm802, %v758, %v928
        %v931 = vunpack.c.l.s4 1983009808
        %v932 = vunpack.c.0.s8 %v931
        %v933 = vperm.slane %v927, %v932
        %v935 = vunpack.c.l.s4 1983009808
        %v936 = vunpack.c.0.s8 %v935
        %v937 = vperm.slane %v929, %v936
        %v938 = vrot.slane %v933, 4
        %v939 = vsel %vm802, %v938, %v921
        %v940 = vrot.slane %v921, 4
        %v941 = vsel %vm802, %v933, %v940
        %v943 = vunpack.c.l.s4 1934713408
        %v944 = vunpack.c.0.s8 %v943
        %v945 = vperm.slane %v939, %v944
        %v947 = vunpack.c.l.s4 1934713408
        %v948 = vunpack.c.0.s8 %v947
        %v949 = vperm.slane %v941, %v948
        %v950 = vrot.slane %v937, 4
        %v951 = vsel %vm802, %v950, %v925
        %v952 = vrot.slane %v925, 4
        %v953 = vsel %vm802, %v937, %v952
        %v955 = vunpack.c.l.s4 1934713408
        %v956 = vunpack.c.0.s8 %v955
        %v957 = vperm.slane %v951, %v956
        %v959 = vunpack.c.l.s4 1934713408
        %v960 = vunpack.c.0.s8 %v959
        %v961 = vperm.slane %v953, %v960
        %v962 = vrot.slane %v945, 4
        %v963 = vsel %vm802, 0.0, %v962
        %v964 = vrot.slane %v949, 4
        %v965 = vsel %vm802, 0.0, %v964
        %v966 = vrot.slane %v957, 4
        %v967 = vsel %vm802, 0.0, %v966
        %v968 = vrot.slane %v961, 4
        %v969 = vsel %vm802, 0.0, %v968
        %v970 = vrot.slane %v712, 4
        %v971 = vsel %vm802, %v970, %v511
        %v972 = vrot.slane %v511, 4
        %v973 = vsel %vm802, %v712, %v972
        %v975 = vunpack.c.l.s4 1983009808
        %v976 = vunpack.c.0.s8 %v975
        %v977 = vperm.slane %v971, %v976
        %v979 = vunpack.c.l.s4 1983009808
        %v980 = vunpack.c.0.s8 %v979
        %v981 = vperm.slane %v973, %v980
        %v982 = vrot.slane %v760, 4
        %v983 = vsel %vm802, %v982, %v664
        %v984 = vrot.slane %v664, 4
        %v985 = vsel %vm802, %v760, %v984
        %v987 = vunpack.c.l.s4 1983009808
        %v988 = vunpack.c.0.s8 %v987
        %v989 = vperm.slane %v983, %v988
        %v991 = vunpack.c.l.s4 1983009808
        %v992 = vunpack.c.0.s8 %v991
        %v993 = vperm.slane %v985, %v992
        %v994 = vrot.slane %v989, 4
        %v995 = vsel %vm802, %v994, %v977
        %v996 = vrot.slane %v977, 4
        %v997 = vsel %vm802, %v989, %v996
        %v999 = vunpack.c.l.s4 1934713408
        %v1000 = vunpack.c.0.s8 %v999
        %v1001 = vperm.slane %v995, %v1000
        %v1003 = vunpack.c.l.s4 1934713408
        %v1004 = vunpack.c.0.s8 %v1003
        %v1005 = vperm.slane %v997, %v1004
        %v1006 = vrot.slane %v993, 4
        %v1007 = vsel %vm802, %v1006, %v981
        %v1008 = vrot.slane %v981, 4
        %v1009 = vsel %vm802, %v993, %v1008
        %v1011 = vunpack.c.l.s4 1934713408
        %v1012 = vunpack.c.0.s8 %v1011
        %v1013 = vperm.slane %v1007, %v1012
        %v1015 = vunpack.c.l.s4 1934713408
        %v1016 = vunpack.c.0.s8 %v1015
        %v1017 = vperm.slane %v1009, %v1016
        %v1018 = vrot.slane %v1001, 4
        %v1019 = vsel %vm802, 0.0, %v1018
        %v1020 = vrot.slane %v1005, 4
        %v1021 = vsel %vm802, 0.0, %v1020
        %v1022 = vrot.slane %v1013, 4
        %v1023 = vsel %vm802, 0.0, %v1022
        %v1024 = vrot.slane %v1017, 4
        %v1025 = vsel %vm802, 0.0, %v1024
        %v1026 = vrot.slane %v714, 4
        %v1027 = vsel %vm802, %v1026, %v514
        %v1028 = vrot.slane %v514, 4
        %v1029 = vsel %vm802, %v714, %v1028
        %v1031 = vunpack.c.l.s4 1983009808
        %v1032 = vunpack.c.0.s8 %v1031
        %v1033 = vperm.slane %v1027, %v1032
        %v1035 = vunpack.c.l.s4 1983009808
        %v1036 = vunpack.c.0.s8 %v1035
        %v1037 = vperm.slane %v1029, %v1036
        %v1038 = vrot.slane %v762, 4
        %v1039 = vsel %vm802, %v1038, %v666
        %v1040 = vrot.slane %v666, 4
        %v1041 = vsel %vm802, %v762, %v1040
        %v1043 = vunpack.c.l.s4 1983009808
        %v1044 = vunpack.c.0.s8 %v1043
        %v1045 = vperm.slane %v1039, %v1044
        %v1047 = vunpack.c.l.s4 1983009808
        %v1048 = vunpack.c.0.s8 %v1047
        %v1049 = vperm.slane %v1041, %v1048
        %v1050 = vrot.slane %v1045, 4
        %v1051 = vsel %vm802, %v1050, %v1033
        %v1052 = vrot.slane %v1033, 4
        %v1053 = vsel %vm802, %v1045, %v1052
        %v1055 = vunpack.c.l.s4 1934713408
        %v1056 = vunpack.c.0.s8 %v1055
        %v1057 = vperm.slane %v1051, %v1056
        %v1059 = vunpack.c.l.s4 1934713408
        %v1060 = vunpack.c.0.s8 %v1059
        %v1061 = vperm.slane %v1053, %v1060
        %v1062 = vrot.slane %v1049, 4
        %v1063 = vsel %vm802, %v1062, %v1037
        %v1064 = vrot.slane %v1037, 4
        %v1065 = vsel %vm802, %v1049, %v1064
        %v1067 = vunpack.c.l.s4 1934713408
        %v1068 = vunpack.c.0.s8 %v1067
        %v1069 = vperm.slane %v1063, %v1068
        %v1071 = vunpack.c.l.s4 1934713408
        %v1072 = vunpack.c.0.s8 %v1071
        %v1073 = vperm.slane %v1065, %v1072
        %v1074 = vrot.slane %v1057, 4
        %v1075 = vsel %vm802, 0.0, %v1074
        %v1076 = vrot.slane %v1061, 4
        %v1077 = vsel %vm802, 0.0, %v1076
        %v1078 = vrot.slane %v1069, 4
        %v1079 = vsel %vm802, 0.0, %v1078
        %v1080 = vrot.slane %v1073, 4
        %v1081 = vsel %vm802, 0.0, %v1080
        %v1082 = vrot.slane %v716, 4
        %v1083 = vsel %vm802, %v1082, %v516
        %v1084 = vrot.slane %v516, 4
        %v1085 = vsel %vm802, %v716, %v1084
        %v1087 = vunpack.c.l.s4 1983009808
        %v1088 = vunpack.c.0.s8 %v1087
        %v1089 = vperm.slane %v1083, %v1088
        %v1091 = vunpack.c.l.s4 1983009808
        %v1092 = vunpack.c.0.s8 %v1091
        %v1093 = vperm.slane %v1085, %v1092
        %v1094 = vrot.slane %v764, 4
        %v1095 = vsel %vm802, %v1094, %v668
        %v1096 = vrot.slane %v668, 4
        %v1097 = vsel %vm802, %v764, %v1096
        %v1099 = vunpack.c.l.s4 1983009808
        %v1100 = vunpack.c.0.s8 %v1099
        %v1101 = vperm.slane %v1095, %v1100
        %v1103 = vunpack.c.l.s4 1983009808
        %v1104 = vunpack.c.0.s8 %v1103
        %v1105 = vperm.slane %v1097, %v1104
        %v1106 = vrot.slane %v1101, 4
        %v1107 = vsel %vm802, %v1106, %v1089
        %v1108 = vrot.slane %v1089, 4
        %v1109 = vsel %vm802, %v1101, %v1108
        %v1111 = vunpack.c.l.s4 1934713408
        %v1112 = vunpack.c.0.s8 %v1111
        %v1113 = vperm.slane %v1107, %v1112
        %v1115 = vunpack.c.l.s4 1934713408
        %v1116 = vunpack.c.0.s8 %v1115
        %v1117 = vperm.slane %v1109, %v1116
        %v1118 = vrot.slane %v1105, 4
        %v1119 = vsel %vm802, %v1118, %v1093
        %v1120 = vrot.slane %v1093, 4
        %v1121 = vsel %vm802, %v1105, %v1120
        %v1123 = vunpack.c.l.s4 1934713408
        %v1124 = vunpack.c.0.s8 %v1123
        %v1125 = vperm.slane %v1119, %v1124
        %v1127 = vunpack.c.l.s4 1934713408
        %v1128 = vunpack.c.0.s8 %v1127
        %v1129 = vperm.slane %v1121, %v1128
        %v1130 = vrot.slane %v1113, 4
        %v1131 = vsel %vm802, 0.0, %v1130
        %v1132 = vrot.slane %v1117, 4
        %v1133 = vsel %vm802, 0.0, %v1132
        %v1134 = vrot.slane %v1125, 4
        %v1135 = vsel %vm802, 0.0, %v1134
        %v1136 = vrot.slane %v1129, 4
        %v1137 = vsel %vm802, 0.0, %v1136
        %v1138 = vrot.slane %v718, 4
        %v1139 = vsel %vm802, %v1138, %v519
        %v1140 = vrot.slane %v519, 4
        %v1141 = vsel %vm802, %v718, %v1140
        %v1143 = vunpack.c.l.s4 1983009808
        %v1144 = vunpack.c.0.s8 %v1143
        %v1145 = vperm.slane %v1139, %v1144
        %v1147 = vunpack.c.l.s4 1983009808
        %v1148 = vunpack.c.0.s8 %v1147
        %v1149 = vperm.slane %v1141, %v1148
        %v1150 = vrot.slane %v766, 4
        %v1151 = vsel %vm802, %v1150, %v670
        %v1152 = vrot.slane %v670, 4
        %v1153 = vsel %vm802, %v766, %v1152
        %v1155 = vunpack.c.l.s4 1983009808
        %v1156 = vunpack.c.0.s8 %v1155
        %v1157 = vperm.slane %v1151, %v1156
        %v1159 = vunpack.c.l.s4 1983009808
        %v1160 = vunpack.c.0.s8 %v1159
        %v1161 = vperm.slane %v1153, %v1160
        %v1162 = vrot.slane %v1157, 4
        %v1163 = vsel %vm802, %v1162, %v1145
        %v1164 = vrot.slane %v1145, 4
        %v1165 = vsel %vm802, %v1157, %v1164
        %v1167 = vunpack.c.l.s4 1934713408
        %v1168 = vunpack.c.0.s8 %v1167
        %v1169 = vperm.slane %v1163, %v1168
        %v1171 = vunpack.c.l.s4 1934713408
        %v1172 = vunpack.c.0.s8 %v1171
        %v1173 = vperm.slane %v1165, %v1172
        %v1174 = vrot.slane %v1161, 4
        %v1175 = vsel %vm802, %v1174, %v1149
        %v1176 = vrot.slane %v1149, 4
        %v1177 = vsel %vm802, %v1161, %v1176
        %v1179 = vunpack.c.l.s4 1934713408
        %v1180 = vunpack.c.0.s8 %v1179
        %v1181 = vperm.slane %v1175, %v1180
        %v1183 = vunpack.c.l.s4 1934713408
        %v1184 = vunpack.c.0.s8 %v1183
        %v1185 = vperm.slane %v1177, %v1184
        %v1186 = vrot.slane %v1169, 4
        %v1187 = vsel %vm802, 0.0, %v1186
        %v1188 = vrot.slane %v1173, 4
        %v1189 = vsel %vm802, 0.0, %v1188
        %v1190 = vrot.slane %v1181, 4
        %v1191 = vsel %vm802, 0.0, %v1190
        %v1192 = vrot.slane %v1185, 4
        %v1193 = vsel %vm802, 0.0, %v1192
        %v1194 = vrot.slane %v720, 4
        %v1195 = vsel %vm802, %v1194, %v521
        %v1196 = vrot.slane %v521, 4
        %v1197 = vsel %vm802, %v720, %v1196
        %v1199 = vunpack.c.l.s4 1983009808
        %v1200 = vunpack.c.0.s8 %v1199
        %v1201 = vperm.slane %v1195, %v1200
        %v1203 = vunpack.c.l.s4 1983009808
        %v1204 = vunpack.c.0.s8 %v1203
        %v1205 = vperm.slane %v1197, %v1204
        %v1206 = vrot.slane %v768, 4
        %v1207 = vsel %vm802, %v1206, %v672
        %v1208 = vrot.slane %v672, 4
        %v1209 = vsel %vm802, %v768, %v1208
        %v1211 = vunpack.c.l.s4 1983009808
        %v1212 = vunpack.c.0.s8 %v1211
        %v1213 = vperm.slane %v1207, %v1212
        %v1215 = vunpack.c.l.s4 1983009808
        %v1216 = vunpack.c.0.s8 %v1215
        %v1217 = vperm.slane %v1209, %v1216
        %v1218 = vrot.slane %v1213, 4
        %v1219 = vsel %vm802, %v1218, %v1201
        %v1220 = vrot.slane %v1201, 4
        %v1221 = vsel %vm802, %v1213, %v1220
        %v1223 = vunpack.c.l.s4 1934713408
        %v1224 = vunpack.c.0.s8 %v1223
        %v1225 = vperm.slane %v1219, %v1224
        %v1227 = vunpack.c.l.s4 1934713408
        %v1228 = vunpack.c.0.s8 %v1227
        %v1229 = vperm.slane %v1221, %v1228
        %v1230 = vrot.slane %v1217, 4
        %v1231 = vsel %vm802, %v1230, %v1205
        %v1232 = vrot.slane %v1205, 4
        %v1233 = vsel %vm802, %v1217, %v1232
        %v1235 = vunpack.c.l.s4 1934713408
        %v1236 = vunpack.c.0.s8 %v1235
        %v1237 = vperm.slane %v1231, %v1236
        %v1239 = vunpack.c.l.s4 1934713408
        %v1240 = vunpack.c.0.s8 %v1239
        %v1241 = vperm.slane %v1233, %v1240
        %v1242 = vrot.slane %v1225, 4
        %v1243 = vsel %vm802, 0.0, %v1242
        %v1244 = vrot.slane %v1229, 4
        %v1245 = vsel %vm802, 0.0, %v1244
        %v1246 = vrot.slane %v1237, 4
        %v1247 = vsel %vm802, 0.0, %v1246
        %v1248 = vrot.slane %v1241, 4
        %v1249 = vsel %vm802, 0.0, %v1248
        %v1250 = vrot.slane %v722, 4
        %v1251 = vsel %vm802, %v1250, %v524
        %v1252 = vrot.slane %v524, 4
        %v1253 = vsel %vm802, %v722, %v1252
        %v1255 = vunpack.c.l.s4 1983009808
        %v1256 = vunpack.c.0.s8 %v1255
        %v1257 = vperm.slane %v1251, %v1256
        %v1259 = vunpack.c.l.s4 1983009808
        %v1260 = vunpack.c.0.s8 %v1259
        %v1261 = vperm.slane %v1253, %v1260
        %v1262 = vrot.slane %v770, 4
        %v1263 = vsel %vm802, %v1262, %v674
        %v1264 = vrot.slane %v674, 4
        %v1265 = vsel %vm802, %v770, %v1264
        %v1267 = vunpack.c.l.s4 1983009808
        %v1268 = vunpack.c.0.s8 %v1267
        %v1269 = vperm.slane %v1263, %v1268
        %v1271 = vunpack.c.l.s4 1983009808
        %v1272 = vunpack.c.0.s8 %v1271
        %v1273 = vperm.slane %v1265, %v1272
        %v1274 = vrot.slane %v1269, 4
        %v1275 = vsel %vm802, %v1274, %v1257
        %v1276 = vrot.slane %v1257, 4
        %v1277 = vsel %vm802, %v1269, %v1276
        %v1279 = vunpack.c.l.s4 1934713408
        %v1280 = vunpack.c.0.s8 %v1279
        %v1281 = vperm.slane %v1275, %v1280
        %v1283 = vunpack.c.l.s4 1934713408
        %v1284 = vunpack.c.0.s8 %v1283
        %v1285 = vperm.slane %v1277, %v1284
        %v1286 = vrot.slane %v1273, 4
        %v1287 = vsel %vm802, %v1286, %v1261
        %v1288 = vrot.slane %v1261, 4
        %v1289 = vsel %vm802, %v1273, %v1288
        %v1291 = vunpack.c.l.s4 1934713408
        %v1292 = vunpack.c.0.s8 %v1291
        %v1293 = vperm.slane %v1287, %v1292
        %v1295 = vunpack.c.l.s4 1934713408
        %v1296 = vunpack.c.0.s8 %v1295
        %v1297 = vperm.slane %v1289, %v1296
        %v1298 = vrot.slane %v1281, 4
        %v1299 = vsel %vm802, 0.0, %v1298
        %v1300 = vrot.slane %v1285, 4
        %v1301 = vsel %vm802, 0.0, %v1300
        %v1302 = vrot.slane %v1293, 4
        %v1303 = vsel %vm802, 0.0, %v1302
        %v1304 = vrot.slane %v1297, 4
        %v1305 = vsel %vm802, 0.0, %v1304
        %v1306 = vrot.slane %v724, 4
        %v1307 = vsel %vm802, %v1306, %v526
        %v1308 = vrot.slane %v526, 4
        %v1309 = vsel %vm802, %v724, %v1308
        %v1311 = vunpack.c.l.s4 1983009808
        %v1312 = vunpack.c.0.s8 %v1311
        %v1313 = vperm.slane %v1307, %v1312
        %v1315 = vunpack.c.l.s4 1983009808
        %v1316 = vunpack.c.0.s8 %v1315
        %v1317 = vperm.slane %v1309, %v1316
        %v1318 = vrot.slane %v772, 4
        %v1319 = vsel %vm802, %v1318, %v676
        %v1320 = vrot.slane %v676, 4
        %v1321 = vsel %vm802, %v772, %v1320
        %v1323 = vunpack.c.l.s4 1983009808
        %v1324 = vunpack.c.0.s8 %v1323
        %v1325 = vperm.slane %v1319, %v1324
        %v1327 = vunpack.c.l.s4 1983009808
        %v1328 = vunpack.c.0.s8 %v1327
        %v1329 = vperm.slane %v1321, %v1328
        %v1330 = vrot.slane %v1325, 4
        %v1331 = vsel %vm802, %v1330, %v1313
        %v1332 = vrot.slane %v1313, 4
        %v1333 = vsel %vm802, %v1325, %v1332
        %v1335 = vunpack.c.l.s4 1934713408
        %v1336 = vunpack.c.0.s8 %v1335
        %v1337 = vperm.slane %v1331, %v1336
        %v1339 = vunpack.c.l.s4 1934713408
        %v1340 = vunpack.c.0.s8 %v1339
        %v1341 = vperm.slane %v1333, %v1340
        %v1342 = vrot.slane %v1329, 4
        %v1343 = vsel %vm802, %v1342, %v1317
        %v1344 = vrot.slane %v1317, 4
        %v1345 = vsel %vm802, %v1329, %v1344
        %v1347 = vunpack.c.l.s4 1934713408
        %v1348 = vunpack.c.0.s8 %v1347
        %v1349 = vperm.slane %v1343, %v1348
        %v1351 = vunpack.c.l.s4 1934713408
        %v1352 = vunpack.c.0.s8 %v1351
        %v1353 = vperm.slane %v1345, %v1352
        %v1354 = vrot.slane %v1337, 4
        %v1355 = vsel %vm802, 0.0, %v1354
        %v1356 = vrot.slane %v1341, 4
        %v1357 = vsel %vm802, 0.0, %v1356
        %v1358 = vrot.slane %v1349, 4
        %v1359 = vsel %vm802, 0.0, %v1358
        %v1360 = vrot.slane %v1353, 4
        %v1361 = vsel %vm802, 0.0, %v1360
        %v1362 = vrot.slane %v726, 4
        %v1363 = vsel %vm802, %v1362, %v529
        %v1364 = vrot.slane %v529, 4
        %v1365 = vsel %vm802, %v726, %v1364
        %v1367 = vunpack.c.l.s4 1983009808
        %v1368 = vunpack.c.0.s8 %v1367
        %v1369 = vperm.slane %v1363, %v1368
        %v1371 = vunpack.c.l.s4 1983009808
        %v1372 = vunpack.c.0.s8 %v1371
        %v1373 = vperm.slane %v1365, %v1372
        %v1374 = vrot.slane %v774, 4
        %v1375 = vsel %vm802, %v1374, %v678
        %v1376 = vrot.slane %v678, 4
        %v1377 = vsel %vm802, %v774, %v1376
        %v1379 = vunpack.c.l.s4 1983009808
        %v1380 = vunpack.c.0.s8 %v1379
        %v1381 = vperm.slane %v1375, %v1380
        %v1383 = vunpack.c.l.s4 1983009808
        %v1384 = vunpack.c.0.s8 %v1383
        %v1385 = vperm.slane %v1377, %v1384
        %v1386 = vrot.slane %v1381, 4
        %v1387 = vsel %vm802, %v1386, %v1369
        %v1388 = vrot.slane %v1369, 4
        %v1389 = vsel %vm802, %v1381, %v1388
        %v1391 = vunpack.c.l.s4 1934713408
        %v1392 = vunpack.c.0.s8 %v1391
        %v1393 = vperm.slane %v1387, %v1392
        %v1395 = vunpack.c.l.s4 1934713408
        %v1396 = vunpack.c.0.s8 %v1395
        %v1397 = vperm.slane %v1389, %v1396
        %v1398 = vrot.slane %v1385, 4
        %v1399 = vsel %vm802, %v1398, %v1373
        %v1400 = vrot.slane %v1373, 4
        %v1401 = vsel %vm802, %v1385, %v1400
        %v1403 = vunpack.c.l.s4 1934713408
        %v1404 = vunpack.c.0.s8 %v1403
        %v1405 = vperm.slane %v1399, %v1404
        %v1407 = vunpack.c.l.s4 1934713408
        %v1408 = vunpack.c.0.s8 %v1407
        %v1409 = vperm.slane %v1401, %v1408
        %v1410 = vrot.slane %v1393, 4
        %v1411 = vsel %vm802, 0.0, %v1410
        %v1412 = vrot.slane %v1397, 4
        %v1413 = vsel %vm802, 0.0, %v1412
        %v1414 = vrot.slane %v1405, 4
        %v1415 = vsel %vm802, 0.0, %v1414
        %v1416 = vrot.slane %v1409, 4
        %v1417 = vsel %vm802, 0.0, %v1416
        %v1418 = vrot.slane %v728, 4
        %v1419 = vsel %vm802, %v1418, %v531
        %v1420 = vrot.slane %v531, 4
        %v1421 = vsel %vm802, %v728, %v1420
        %v1423 = vunpack.c.l.s4 1983009808
        %v1424 = vunpack.c.0.s8 %v1423
        %v1425 = vperm.slane %v1419, %v1424
        %v1427 = vunpack.c.l.s4 1983009808
        %v1428 = vunpack.c.0.s8 %v1427
        %v1429 = vperm.slane %v1421, %v1428
        %v1430 = vrot.slane %v776, 4
        %v1431 = vsel %vm802, %v1430, %v680
        %v1432 = vrot.slane %v680, 4
        %v1433 = vsel %vm802, %v776, %v1432
        %v1435 = vunpack.c.l.s4 1983009808
        %v1436 = vunpack.c.0.s8 %v1435
        %v1437 = vperm.slane %v1431, %v1436
        %v1439 = vunpack.c.l.s4 1983009808
        %v1440 = vunpack.c.0.s8 %v1439
        %v1441 = vperm.slane %v1433, %v1440
        %v1442 = vrot.slane %v1437, 4
        %v1443 = vsel %vm802, %v1442, %v1425
        %v1444 = vrot.slane %v1425, 4
        %v1445 = vsel %vm802, %v1437, %v1444
        %v1447 = vunpack.c.l.s4 1934713408
        %v1448 = vunpack.c.0.s8 %v1447
        %v1449 = vperm.slane %v1443, %v1448
        %v1451 = vunpack.c.l.s4 1934713408
        %v1452 = vunpack.c.0.s8 %v1451
        %v1453 = vperm.slane %v1445, %v1452
        %v1454 = vrot.slane %v1441, 4
        %v1455 = vsel %vm802, %v1454, %v1429
        %v1456 = vrot.slane %v1429, 4
        %v1457 = vsel %vm802, %v1441, %v1456
        %v1459 = vunpack.c.l.s4 1934713408
        %v1460 = vunpack.c.0.s8 %v1459
        %v1461 = vperm.slane %v1455, %v1460
        %v1463 = vunpack.c.l.s4 1934713408
        %v1464 = vunpack.c.0.s8 %v1463
        %v1465 = vperm.slane %v1457, %v1464
        %v1466 = vrot.slane %v1449, 4
        %v1467 = vsel %vm802, 0.0, %v1466
        %v1468 = vrot.slane %v1453, 4
        %v1469 = vsel %vm802, 0.0, %v1468
        %v1470 = vrot.slane %v1461, 4
        %v1471 = vsel %vm802, 0.0, %v1470
        %v1472 = vrot.slane %v1465, 4
        %v1473 = vsel %vm802, 0.0, %v1472
        %v1474 = vrot.slane %v730, 4
        %v1475 = vsel %vm802, %v1474, %v534
        %v1476 = vrot.slane %v534, 4
        %v1477 = vsel %vm802, %v730, %v1476
        %v1479 = vunpack.c.l.s4 1983009808
        %v1480 = vunpack.c.0.s8 %v1479
        %v1481 = vperm.slane %v1475, %v1480
        %v1483 = vunpack.c.l.s4 1983009808
        %v1484 = vunpack.c.0.s8 %v1483
        %v1485 = vperm.slane %v1477, %v1484
        %v1486 = vrot.slane %v778, 4
        %v1487 = vsel %vm802, %v1486, %v682
        %v1488 = vrot.slane %v682, 4
        %v1489 = vsel %vm802, %v778, %v1488
        %v1491 = vunpack.c.l.s4 1983009808
        %v1492 = vunpack.c.0.s8 %v1491
        %v1493 = vperm.slane %v1487, %v1492
        %v1495 = vunpack.c.l.s4 1983009808
        %v1496 = vunpack.c.0.s8 %v1495
        %v1497 = vperm.slane %v1489, %v1496
        %v1498 = vrot.slane %v1493, 4
        %v1499 = vsel %vm802, %v1498, %v1481
        %v1500 = vrot.slane %v1481, 4
        %v1501 = vsel %vm802, %v1493, %v1500
        %v1503 = vunpack.c.l.s4 1934713408
        %v1504 = vunpack.c.0.s8 %v1503
        %v1505 = vperm.slane %v1499, %v1504
        %v1507 = vunpack.c.l.s4 1934713408
        %v1508 = vunpack.c.0.s8 %v1507
        %v1509 = vperm.slane %v1501, %v1508
        %v1510 = vrot.slane %v1497, 4
        %v1511 = vsel %vm802, %v1510, %v1485
        %v1512 = vrot.slane %v1485, 4
        %v1513 = vsel %vm802, %v1497, %v1512
        %v1515 = vunpack.c.l.s4 1934713408
        %v1516 = vunpack.c.0.s8 %v1515
        %v1517 = vperm.slane %v1511, %v1516
        %v1519 = vunpack.c.l.s4 1934713408
        %v1520 = vunpack.c.0.s8 %v1519
        %v1521 = vperm.slane %v1513, %v1520
        %v1522 = vrot.slane %v1505, 4
        %v1523 = vsel %vm802, 0.0, %v1522
        %v1524 = vrot.slane %v1509, 4
        %v1525 = vsel %vm802, 0.0, %v1524
        %v1526 = vrot.slane %v1517, 4
        %v1527 = vsel %vm802, 0.0, %v1526
        %v1528 = vrot.slane %v1521, 4
        %v1529 = vsel %vm802, 0.0, %v1528
        %v1530 = vrot.slane %v732, 4
        %v1531 = vsel %vm802, %v1530, %v536
        %v1532 = vrot.slane %v536, 4
        %v1533 = vsel %vm802, %v732, %v1532
        %v1535 = vunpack.c.l.s4 1983009808
        %v1536 = vunpack.c.0.s8 %v1535
        %v1537 = vperm.slane %v1531, %v1536
        %v1539 = vunpack.c.l.s4 1983009808
        %v1540 = vunpack.c.0.s8 %v1539
        %v1541 = vperm.slane %v1533, %v1540
        %v1542 = vrot.slane %v780, 4
        %v1543 = vsel %vm802, %v1542, %v684
        %v1544 = vrot.slane %v684, 4
        %v1545 = vsel %vm802, %v780, %v1544
        %v1547 = vunpack.c.l.s4 1983009808
        %v1548 = vunpack.c.0.s8 %v1547
        %v1549 = vperm.slane %v1543, %v1548
        %v1551 = vunpack.c.l.s4 1983009808
        %v1552 = vunpack.c.0.s8 %v1551
        %v1553 = vperm.slane %v1545, %v1552
        %v1554 = vrot.slane %v1549, 4
        %v1555 = vsel %vm802, %v1554, %v1537
        %v1556 = vrot.slane %v1537, 4
        %v1557 = vsel %vm802, %v1549, %v1556
        %v1559 = vunpack.c.l.s4 1934713408
        %v1560 = vunpack.c.0.s8 %v1559
        %v1561 = vperm.slane %v1555, %v1560
        %v1563 = vunpack.c.l.s4 1934713408
        %v1564 = vunpack.c.0.s8 %v1563
        %v1565 = vperm.slane %v1557, %v1564
        %v1566 = vrot.slane %v1553, 4
        %v1567 = vsel %vm802, %v1566, %v1541
        %v1568 = vrot.slane %v1541, 4
        %v1569 = vsel %vm802, %v1553, %v1568
        %v1571 = vunpack.c.l.s4 1934713408
        %v1572 = vunpack.c.0.s8 %v1571
        %v1573 = vperm.slane %v1567, %v1572
        %v1575 = vunpack.c.l.s4 1934713408
        %v1576 = vunpack.c.0.s8 %v1575
        %v1577 = vperm.slane %v1569, %v1576
        %v1578 = vrot.slane %v1561, 4
        %v1579 = vsel %vm802, 0.0, %v1578
        %v1580 = vrot.slane %v1565, 4
        %v1581 = vsel %vm802, 0.0, %v1580
        %v1582 = vrot.slane %v1573, 4
        %v1583 = vsel %vm802, 0.0, %v1582
        %v1584 = vrot.slane %v1577, 4
        %v1585 = vsel %vm802, 0.0, %v1584
        %v1586 = vrot.slane %v734, 4
        %v1587 = vsel %vm802, %v1586, %v539
        %v1588 = vrot.slane %v539, 4
        %v1589 = vsel %vm802, %v734, %v1588
        %v1591 = vunpack.c.l.s4 1983009808
        %v1592 = vunpack.c.0.s8 %v1591
        %v1593 = vperm.slane %v1587, %v1592
        %v1595 = vunpack.c.l.s4 1983009808
        %v1596 = vunpack.c.0.s8 %v1595
        %v1597 = vperm.slane %v1589, %v1596
        %v1598 = vrot.slane %v782, 4
        %v1599 = vsel %vm802, %v1598, %v686
        %v1600 = vrot.slane %v686, 4
        %v1601 = vsel %vm802, %v782, %v1600
        %v1603 = vunpack.c.l.s4 1983009808
        %v1604 = vunpack.c.0.s8 %v1603
        %v1605 = vperm.slane %v1599, %v1604
        %v1607 = vunpack.c.l.s4 1983009808
        %v1608 = vunpack.c.0.s8 %v1607
        %v1609 = vperm.slane %v1601, %v1608
        %v1610 = vrot.slane %v1605, 4
        %v1611 = vsel %vm802, %v1610, %v1593
        %v1612 = vrot.slane %v1593, 4
        %v1613 = vsel %vm802, %v1605, %v1612
        %v1615 = vunpack.c.l.s4 1934713408
        %v1616 = vunpack.c.0.s8 %v1615
        %v1617 = vperm.slane %v1611, %v1616
        %v1619 = vunpack.c.l.s4 1934713408
        %v1620 = vunpack.c.0.s8 %v1619
        %v1621 = vperm.slane %v1613, %v1620
        %v1622 = vrot.slane %v1609, 4
        %v1623 = vsel %vm802, %v1622, %v1597
        %v1624 = vrot.slane %v1597, 4
        %v1625 = vsel %vm802, %v1609, %v1624
        %v1627 = vunpack.c.l.s4 1934713408
        %v1628 = vunpack.c.0.s8 %v1627
        %v1629 = vperm.slane %v1623, %v1628
        %v1631 = vunpack.c.l.s4 1934713408
        %v1632 = vunpack.c.0.s8 %v1631
        %v1633 = vperm.slane %v1625, %v1632
        %v1634 = vrot.slane %v1617, 4
        %v1635 = vsel %vm802, 0.0, %v1634
        %v1636 = vrot.slane %v1621, 4
        %v1637 = vsel %vm802, 0.0, %v1636
        %v1638 = vrot.slane %v1629, 4
        %v1639 = vsel %vm802, 0.0, %v1638
        %v1640 = vrot.slane %v1633, 4
        %v1641 = vsel %vm802, 0.0, %v1640
        %v1642 = vrot.slane %v736, 4
        %v1643 = vsel %vm802, %v1642, %v541
        %v1644 = vrot.slane %v541, 4
        %v1645 = vsel %vm802, %v736, %v1644
        %v1647 = vunpack.c.l.s4 1983009808
        %v1648 = vunpack.c.0.s8 %v1647
        %v1649 = vperm.slane %v1643, %v1648
        %v1651 = vunpack.c.l.s4 1983009808
        %v1652 = vunpack.c.0.s8 %v1651
        %v1653 = vperm.slane %v1645, %v1652
        %v1654 = vrot.slane %v784, 4
        %v1655 = vsel %vm802, %v1654, %v688
        %v1656 = vrot.slane %v688, 4
        %v1657 = vsel %vm802, %v784, %v1656
        %v1659 = vunpack.c.l.s4 1983009808
        %v1660 = vunpack.c.0.s8 %v1659
        %v1661 = vperm.slane %v1655, %v1660
        %v1663 = vunpack.c.l.s4 1983009808
        %v1664 = vunpack.c.0.s8 %v1663
        %v1665 = vperm.slane %v1657, %v1664
        %v1666 = vrot.slane %v1661, 4
        %v1667 = vsel %vm802, %v1666, %v1649
        %v1668 = vrot.slane %v1649, 4
        %v1669 = vsel %vm802, %v1661, %v1668
        %v1671 = vunpack.c.l.s4 1934713408
        %v1672 = vunpack.c.0.s8 %v1671
        %v1673 = vperm.slane %v1667, %v1672
        %v1675 = vunpack.c.l.s4 1934713408
        %v1676 = vunpack.c.0.s8 %v1675
        %v1677 = vperm.slane %v1669, %v1676
        %v1678 = vrot.slane %v1665, 4
        %v1679 = vsel %vm802, %v1678, %v1653
        %v1680 = vrot.slane %v1653, 4
        %v1681 = vsel %vm802, %v1665, %v1680
        %v1683 = vunpack.c.l.s4 1934713408
        %v1684 = vunpack.c.0.s8 %v1683
        %v1685 = vperm.slane %v1679, %v1684
        %v1687 = vunpack.c.l.s4 1934713408
        %v1688 = vunpack.c.0.s8 %v1687
        %v1689 = vperm.slane %v1681, %v1688
        %v1690 = vrot.slane %v1673, 4
        %v1691 = vsel %vm802, 0.0, %v1690
        %v1692 = vrot.slane %v1677, 4
        %v1693 = vsel %vm802, 0.0, %v1692
        %v1694 = vrot.slane %v1685, 4
        %v1695 = vsel %vm802, 0.0, %v1694
        %v1696 = vrot.slane %v1689, 4
        %v1697 = vsel %vm802, 0.0, %v1696
        %v1698 = vsel %vm802, %v852, %v833
        %v1700 = vunpack.c.l.s4 1983009808
        %v1701 = vunpack.c.0.s8 %v1700
        %v1702 = vperm.slane %v1698, %v1701
        %v1703 = vrot.slane %v853, 4
        %v1704 = vsel %vm802, %v1703, %v851
        %v1706 = vunpack.c.l.s4 1983009808
        %v1707 = vunpack.c.0.s8 %v1706
        %v1708 = vperm.slane %v1704, %v1707
        %v1709 = vsel %vm802, %v856, %v845
        %v1711 = vunpack.c.l.s4 1983009808
        %v1712 = vunpack.c.0.s8 %v1711
        %v1713 = vperm.slane %v1709, %v1712
        %v1714 = vrot.slane %v857, 4
        %v1715 = vsel %vm802, %v1714, %v855
        %v1717 = vunpack.c.l.s4 1983009808
        %v1718 = vunpack.c.0.s8 %v1717
        %v1719 = vperm.slane %v1715, %v1718
        %v1720 = vrot.slane %v1708, 4
        %v1721 = vsel %vm802, %v1720, %v1702
        %v1722 = vrot.slane %v1702, 4
        %v1723 = vsel %vm802, %v1708, %v1722
        %v1725 = vunpack.c.l.s4 1934713408
        %v1726 = vunpack.c.0.s8 %v1725
        %v1727 = vperm.slane %v1721, %v1726
        %v1729 = vunpack.c.l.s4 1934713408
        %v1730 = vunpack.c.0.s8 %v1729
        %v1731 = vperm.slane %v1723, %v1730
        %v1732 = vrot.slane %v1719, 4
        %v1733 = vsel %vm802, %v1732, %v1713
        %v1734 = vrot.slane %v1713, 4
        %v1735 = vsel %vm802, %v1719, %v1734
        %v1737 = vunpack.c.l.s4 1934713408
        %v1738 = vunpack.c.0.s8 %v1737
        %v1739 = vperm.slane %v1733, %v1738
        %v1741 = vunpack.c.l.s4 1934713408
        %v1742 = vunpack.c.0.s8 %v1741
        %v1743 = vperm.slane %v1735, %v1742
        %v1744 = vrot.slane %v1739, 4
        %v1745 = vsel %vm802, %v1744, %v1727
        %v1746 = vrot.slane %v1727, 4
        %v1747 = vsel %vm802, %v1739, %v1746
        %v1748 = vrot.slane %v1743, 4
        %v1749 = vsel %vm802, %v1748, %v1731
        %v1750 = vrot.slane %v1731, 4
        %v1751 = vsel %vm802, %v1743, %v1750
        %v1752 = vsel %vm802, %v908, %v889
        %v1754 = vunpack.c.l.s4 1983009808
        %v1755 = vunpack.c.0.s8 %v1754
        %v1756 = vperm.slane %v1752, %v1755
        %v1757 = vrot.slane %v909, 4
        %v1758 = vsel %vm802, %v1757, %v907
        %v1760 = vunpack.c.l.s4 1983009808
        %v1761 = vunpack.c.0.s8 %v1760
        %v1762 = vperm.slane %v1758, %v1761
        %v1763 = vsel %vm802, %v912, %v901
        %v1765 = vunpack.c.l.s4 1983009808
        %v1766 = vunpack.c.0.s8 %v1765
        %v1767 = vperm.slane %v1763, %v1766
        %v1768 = vrot.slane %v913, 4
        %v1769 = vsel %vm802, %v1768, %v911
        %v1771 = vunpack.c.l.s4 1983009808
        %v1772 = vunpack.c.0.s8 %v1771
        %v1773 = vperm.slane %v1769, %v1772
        %v1774 = vrot.slane %v1762, 4
        %v1775 = vsel %vm802, %v1774, %v1756
        %v1776 = vrot.slane %v1756, 4
        %v1777 = vsel %vm802, %v1762, %v1776
        %v1779 = vunpack.c.l.s4 1934713408
        %v1780 = vunpack.c.0.s8 %v1779
        %v1781 = vperm.slane %v1775, %v1780
        %v1783 = vunpack.c.l.s4 1934713408
        %v1784 = vunpack.c.0.s8 %v1783
        %v1785 = vperm.slane %v1777, %v1784
        %v1786 = vrot.slane %v1773, 4
        %v1787 = vsel %vm802, %v1786, %v1767
        %v1788 = vrot.slane %v1767, 4
        %v1789 = vsel %vm802, %v1773, %v1788
        %v1791 = vunpack.c.l.s4 1934713408
        %v1792 = vunpack.c.0.s8 %v1791
        %v1793 = vperm.slane %v1787, %v1792
        %v1795 = vunpack.c.l.s4 1934713408
        %v1796 = vunpack.c.0.s8 %v1795
        %v1797 = vperm.slane %v1789, %v1796
        %v1798 = vrot.slane %v1793, 4
        %v1799 = vsel %vm802, %v1798, %v1781
        %v1800 = vrot.slane %v1781, 4
        %v1801 = vsel %vm802, %v1793, %v1800
        %v1802 = vrot.slane %v1797, 4
        %v1803 = vsel %vm802, %v1802, %v1785
        %v1804 = vrot.slane %v1785, 4
        %v1805 = vsel %vm802, %v1797, %v1804
        %v1806 = vsel %vm802, %v964, %v945
        %v1808 = vunpack.c.l.s4 1983009808
        %v1809 = vunpack.c.0.s8 %v1808
        %v1810 = vperm.slane %v1806, %v1809
        %v1811 = vrot.slane %v965, 4
        %v1812 = vsel %vm802, %v1811, %v963
        %v1814 = vunpack.c.l.s4 1983009808
        %v1815 = vunpack.c.0.s8 %v1814
        %v1816 = vperm.slane %v1812, %v1815
        %v1817 = vsel %vm802, %v968, %v957
        %v1819 = vunpack.c.l.s4 1983009808
        %v1820 = vunpack.c.0.s8 %v1819
        %v1821 = vperm.slane %v1817, %v1820
        %v1822 = vrot.slane %v969, 4
        %v1823 = vsel %vm802, %v1822, %v967
        %v1825 = vunpack.c.l.s4 1983009808
        %v1826 = vunpack.c.0.s8 %v1825
        %v1827 = vperm.slane %v1823, %v1826
        %v1828 = vrot.slane %v1816, 4
        %v1829 = vsel %vm802, %v1828, %v1810
        %v1830 = vrot.slane %v1810, 4
        %v1831 = vsel %vm802, %v1816, %v1830
        %v1833 = vunpack.c.l.s4 1934713408
        %v1834 = vunpack.c.0.s8 %v1833
        %v1835 = vperm.slane %v1829, %v1834
        %v1837 = vunpack.c.l.s4 1934713408
        %v1838 = vunpack.c.0.s8 %v1837
        %v1839 = vperm.slane %v1831, %v1838
        %v1840 = vrot.slane %v1827, 4
        %v1841 = vsel %vm802, %v1840, %v1821
        %v1842 = vrot.slane %v1821, 4
        %v1843 = vsel %vm802, %v1827, %v1842
        %v1845 = vunpack.c.l.s4 1934713408
        %v1846 = vunpack.c.0.s8 %v1845
        %v1847 = vperm.slane %v1841, %v1846
        %v1849 = vunpack.c.l.s4 1934713408
        %v1850 = vunpack.c.0.s8 %v1849
        %v1851 = vperm.slane %v1843, %v1850
        %v1852 = vrot.slane %v1847, 4
        %v1853 = vsel %vm802, %v1852, %v1835
        %v1854 = vrot.slane %v1835, 4
        %v1855 = vsel %vm802, %v1847, %v1854
        %v1856 = vrot.slane %v1851, 4
        %v1857 = vsel %vm802, %v1856, %v1839
        %v1858 = vrot.slane %v1839, 4
        %v1859 = vsel %vm802, %v1851, %v1858
        %v1860 = vsel %vm802, %v1020, %v1001
        %v1862 = vunpack.c.l.s4 1983009808
        %v1863 = vunpack.c.0.s8 %v1862
        %v1864 = vperm.slane %v1860, %v1863
        %v1865 = vrot.slane %v1021, 4
        %v1866 = vsel %vm802, %v1865, %v1019
        %v1868 = vunpack.c.l.s4 1983009808
        %v1869 = vunpack.c.0.s8 %v1868
        %v1870 = vperm.slane %v1866, %v1869
        %v1871 = vsel %vm802, %v1024, %v1013
        %v1873 = vunpack.c.l.s4 1983009808
        %v1874 = vunpack.c.0.s8 %v1873
        %v1875 = vperm.slane %v1871, %v1874
        %v1876 = vrot.slane %v1025, 4
        %v1877 = vsel %vm802, %v1876, %v1023
        %v1879 = vunpack.c.l.s4 1983009808
        %v1880 = vunpack.c.0.s8 %v1879
        %v1881 = vperm.slane %v1877, %v1880
        %v1882 = vrot.slane %v1870, 4
        %v1883 = vsel %vm802, %v1882, %v1864
        %v1884 = vrot.slane %v1864, 4
        %v1885 = vsel %vm802, %v1870, %v1884
        %v1887 = vunpack.c.l.s4 1934713408
        %v1888 = vunpack.c.0.s8 %v1887
        %v1889 = vperm.slane %v1883, %v1888
        %v1891 = vunpack.c.l.s4 1934713408
        %v1892 = vunpack.c.0.s8 %v1891
        %v1893 = vperm.slane %v1885, %v1892
        %v1894 = vrot.slane %v1881, 4
        %v1895 = vsel %vm802, %v1894, %v1875
        %v1896 = vrot.slane %v1875, 4
        %v1897 = vsel %vm802, %v1881, %v1896
        %v1899 = vunpack.c.l.s4 1934713408
        %v1900 = vunpack.c.0.s8 %v1899
        %v1901 = vperm.slane %v1895, %v1900
        %v1903 = vunpack.c.l.s4 1934713408
        %v1904 = vunpack.c.0.s8 %v1903
        %v1905 = vperm.slane %v1897, %v1904
        %v1906 = vrot.slane %v1901, 4
        %v1907 = vsel %vm802, %v1906, %v1889
        %v1908 = vrot.slane %v1889, 4
        %v1909 = vsel %vm802, %v1901, %v1908
        %v1910 = vrot.slane %v1905, 4
        %v1911 = vsel %vm802, %v1910, %v1893
        %v1912 = vrot.slane %v1893, 4
        %v1913 = vsel %vm802, %v1905, %v1912
        %v1914 = vsel %vm802, %v1076, %v1057
        %v1916 = vunpack.c.l.s4 1983009808
        %v1917 = vunpack.c.0.s8 %v1916
        %v1918 = vperm.slane %v1914, %v1917
        %v1919 = vrot.slane %v1077, 4
        %v1920 = vsel %vm802, %v1919, %v1075
        %v1922 = vunpack.c.l.s4 1983009808
        %v1923 = vunpack.c.0.s8 %v1922
        %v1924 = vperm.slane %v1920, %v1923
        %v1925 = vsel %vm802, %v1080, %v1069
        %v1927 = vunpack.c.l.s4 1983009808
        %v1928 = vunpack.c.0.s8 %v1927
        %v1929 = vperm.slane %v1925, %v1928
        %v1930 = vrot.slane %v1081, 4
        %v1931 = vsel %vm802, %v1930, %v1079
        %v1933 = vunpack.c.l.s4 1983009808
        %v1934 = vunpack.c.0.s8 %v1933
        %v1935 = vperm.slane %v1931, %v1934
        %v1936 = vrot.slane %v1924, 4
        %v1937 = vsel %vm802, %v1936, %v1918
        %v1938 = vrot.slane %v1918, 4
        %v1939 = vsel %vm802, %v1924, %v1938
        %v1941 = vunpack.c.l.s4 1934713408
        %v1942 = vunpack.c.0.s8 %v1941
        %v1943 = vperm.slane %v1937, %v1942
        %v1945 = vunpack.c.l.s4 1934713408
        %v1946 = vunpack.c.0.s8 %v1945
        %v1947 = vperm.slane %v1939, %v1946
        %v1948 = vrot.slane %v1935, 4
        %v1949 = vsel %vm802, %v1948, %v1929
        %v1950 = vrot.slane %v1929, 4
        %v1951 = vsel %vm802, %v1935, %v1950
        %v1953 = vunpack.c.l.s4 1934713408
        %v1954 = vunpack.c.0.s8 %v1953
        %v1955 = vperm.slane %v1949, %v1954
        %v1957 = vunpack.c.l.s4 1934713408
        %v1958 = vunpack.c.0.s8 %v1957
        %v1959 = vperm.slane %v1951, %v1958
        %v1960 = vrot.slane %v1955, 4
        %v1961 = vsel %vm802, %v1960, %v1943
        %v1962 = vrot.slane %v1943, 4
        %v1963 = vsel %vm802, %v1955, %v1962
        %v1964 = vrot.slane %v1959, 4
        %v1965 = vsel %vm802, %v1964, %v1947
        %v1966 = vrot.slane %v1947, 4
        %v1967 = vsel %vm802, %v1959, %v1966
        %v1968 = vsel %vm802, %v1132, %v1113
        %v1970 = vunpack.c.l.s4 1983009808
        %v1971 = vunpack.c.0.s8 %v1970
        %v1972 = vperm.slane %v1968, %v1971
        %v1973 = vrot.slane %v1133, 4
        %v1974 = vsel %vm802, %v1973, %v1131
        %v1976 = vunpack.c.l.s4 1983009808
        %v1977 = vunpack.c.0.s8 %v1976
        %v1978 = vperm.slane %v1974, %v1977
        %v1979 = vsel %vm802, %v1136, %v1125
        %v1981 = vunpack.c.l.s4 1983009808
        %v1982 = vunpack.c.0.s8 %v1981
        %v1983 = vperm.slane %v1979, %v1982
        %v1984 = vrot.slane %v1137, 4
        %v1985 = vsel %vm802, %v1984, %v1135
        %v1987 = vunpack.c.l.s4 1983009808
        %v1988 = vunpack.c.0.s8 %v1987
        %v1989 = vperm.slane %v1985, %v1988
        %v1990 = vrot.slane %v1978, 4
        %v1991 = vsel %vm802, %v1990, %v1972
        %v1992 = vrot.slane %v1972, 4
        %v1993 = vsel %vm802, %v1978, %v1992
        %v1995 = vunpack.c.l.s4 1934713408
        %v1996 = vunpack.c.0.s8 %v1995
        %v1997 = vperm.slane %v1991, %v1996
        %v1999 = vunpack.c.l.s4 1934713408
        %v2000 = vunpack.c.0.s8 %v1999
        %v2001 = vperm.slane %v1993, %v2000
        %v2002 = vrot.slane %v1989, 4
        %v2003 = vsel %vm802, %v2002, %v1983
        %v2004 = vrot.slane %v1983, 4
        %v2005 = vsel %vm802, %v1989, %v2004
        %v2007 = vunpack.c.l.s4 1934713408
        %v2008 = vunpack.c.0.s8 %v2007
        %v2009 = vperm.slane %v2003, %v2008
        %v2011 = vunpack.c.l.s4 1934713408
        %v2012 = vunpack.c.0.s8 %v2011
        %v2013 = vperm.slane %v2005, %v2012
        %v2014 = vrot.slane %v2009, 4
        %v2015 = vsel %vm802, %v2014, %v1997
        %v2016 = vrot.slane %v1997, 4
        %v2017 = vsel %vm802, %v2009, %v2016
        %v2018 = vrot.slane %v2013, 4
        %v2019 = vsel %vm802, %v2018, %v2001
        %v2020 = vrot.slane %v2001, 4
        %v2021 = vsel %vm802, %v2013, %v2020
        %v2022 = vsel %vm802, %v1188, %v1169
        %v2024 = vunpack.c.l.s4 1983009808
        %v2025 = vunpack.c.0.s8 %v2024
        %v2026 = vperm.slane %v2022, %v2025
        %v2027 = vrot.slane %v1189, 4
        %v2028 = vsel %vm802, %v2027, %v1187
        %v2030 = vunpack.c.l.s4 1983009808
        %v2031 = vunpack.c.0.s8 %v2030
        %v2032 = vperm.slane %v2028, %v2031
        %v2033 = vsel %vm802, %v1192, %v1181
        %v2035 = vunpack.c.l.s4 1983009808
        %v2036 = vunpack.c.0.s8 %v2035
        %v2037 = vperm.slane %v2033, %v2036
        %v2038 = vrot.slane %v1193, 4
        %v2039 = vsel %vm802, %v2038, %v1191
        %v2041 = vunpack.c.l.s4 1983009808
        %v2042 = vunpack.c.0.s8 %v2041
        %v2043 = vperm.slane %v2039, %v2042
        %v2044 = vrot.slane %v2032, 4
        %v2045 = vsel %vm802, %v2044, %v2026
        %v2046 = vrot.slane %v2026, 4
        %v2047 = vsel %vm802, %v2032, %v2046
        %v2049 = vunpack.c.l.s4 1934713408
        %v2050 = vunpack.c.0.s8 %v2049
        %v2051 = vperm.slane %v2045, %v2050
        %v2053 = vunpack.c.l.s4 1934713408
        %v2054 = vunpack.c.0.s8 %v2053
        %v2055 = vperm.slane %v2047, %v2054
        %v2056 = vrot.slane %v2043, 4
        %v2057 = vsel %vm802, %v2056, %v2037
        %v2058 = vrot.slane %v2037, 4
        %v2059 = vsel %vm802, %v2043, %v2058
        %v2061 = vunpack.c.l.s4 1934713408
        %v2062 = vunpack.c.0.s8 %v2061
        %v2063 = vperm.slane %v2057, %v2062
        %v2065 = vunpack.c.l.s4 1934713408
        %v2066 = vunpack.c.0.s8 %v2065
        %v2067 = vperm.slane %v2059, %v2066
        %v2068 = vrot.slane %v2063, 4
        %v2069 = vsel %vm802, %v2068, %v2051
        %v2070 = vrot.slane %v2051, 4
        %v2071 = vsel %vm802, %v2063, %v2070
        %v2072 = vrot.slane %v2067, 4
        %v2073 = vsel %vm802, %v2072, %v2055
        %v2074 = vrot.slane %v2055, 4
        %v2075 = vsel %vm802, %v2067, %v2074
        %v2076 = vsel %vm802, %v1244, %v1225
        %v2078 = vunpack.c.l.s4 1983009808
        %v2079 = vunpack.c.0.s8 %v2078
        %v2080 = vperm.slane %v2076, %v2079
        %v2081 = vrot.slane %v1245, 4
        %v2082 = vsel %vm802, %v2081, %v1243
        %v2084 = vunpack.c.l.s4 1983009808
        %v2085 = vunpack.c.0.s8 %v2084
        %v2086 = vperm.slane %v2082, %v2085
        %v2087 = vsel %vm802, %v1248, %v1237
        %v2089 = vunpack.c.l.s4 1983009808
        %v2090 = vunpack.c.0.s8 %v2089
        %v2091 = vperm.slane %v2087, %v2090
        %v2092 = vrot.slane %v1249, 4
        %v2093 = vsel %vm802, %v2092, %v1247
        %v2095 = vunpack.c.l.s4 1983009808
        %v2096 = vunpack.c.0.s8 %v2095
        %v2097 = vperm.slane %v2093, %v2096
        %v2098 = vrot.slane %v2086, 4
        %v2099 = vsel %vm802, %v2098, %v2080
        %v2100 = vrot.slane %v2080, 4
        %v2101 = vsel %vm802, %v2086, %v2100
        %v2103 = vunpack.c.l.s4 1934713408
        %v2104 = vunpack.c.0.s8 %v2103
        %v2105 = vperm.slane %v2099, %v2104
        %v2107 = vunpack.c.l.s4 1934713408
        %v2108 = vunpack.c.0.s8 %v2107
        %v2109 = vperm.slane %v2101, %v2108
        %v2110 = vrot.slane %v2097, 4
        %v2111 = vsel %vm802, %v2110, %v2091
        %v2112 = vrot.slane %v2091, 4
        %v2113 = vsel %vm802, %v2097, %v2112
        %v2115 = vunpack.c.l.s4 1934713408
        %v2116 = vunpack.c.0.s8 %v2115
        %v2117 = vperm.slane %v2111, %v2116
        %v2119 = vunpack.c.l.s4 1934713408
        %v2120 = vunpack.c.0.s8 %v2119
        %v2121 = vperm.slane %v2113, %v2120
        %v2122 = vrot.slane %v2117, 4
        %v2123 = vsel %vm802, %v2122, %v2105
        %v2124 = vrot.slane %v2105, 4
        %v2125 = vsel %vm802, %v2117, %v2124
        %v2126 = vrot.slane %v2121, 4
        %v2127 = vsel %vm802, %v2126, %v2109
        %v2128 = vrot.slane %v2109, 4
        %v2129 = vsel %vm802, %v2121, %v2128
        %v2130 = vsel %vm802, %v1300, %v1281
        %v2132 = vunpack.c.l.s4 1983009808
        %v2133 = vunpack.c.0.s8 %v2132
        %v2134 = vperm.slane %v2130, %v2133
        %v2135 = vrot.slane %v1301, 4
        %v2136 = vsel %vm802, %v2135, %v1299
        %v2138 = vunpack.c.l.s4 1983009808
        %v2139 = vunpack.c.0.s8 %v2138
        %v2140 = vperm.slane %v2136, %v2139
        %v2141 = vsel %vm802, %v1304, %v1293
        %v2143 = vunpack.c.l.s4 1983009808
        %v2144 = vunpack.c.0.s8 %v2143
        %v2145 = vperm.slane %v2141, %v2144
        %v2146 = vrot.slane %v1305, 4
        %v2147 = vsel %vm802, %v2146, %v1303
        %v2149 = vunpack.c.l.s4 1983009808
        %v2150 = vunpack.c.0.s8 %v2149
        %v2151 = vperm.slane %v2147, %v2150
        %v2152 = vrot.slane %v2140, 4
        %v2153 = vsel %vm802, %v2152, %v2134
        %v2154 = vrot.slane %v2134, 4
        %v2155 = vsel %vm802, %v2140, %v2154
        %v2157 = vunpack.c.l.s4 1934713408
        %v2158 = vunpack.c.0.s8 %v2157
        %v2159 = vperm.slane %v2153, %v2158
        %v2161 = vunpack.c.l.s4 1934713408
        %v2162 = vunpack.c.0.s8 %v2161
        %v2163 = vperm.slane %v2155, %v2162
        %v2164 = vrot.slane %v2151, 4
        %v2165 = vsel %vm802, %v2164, %v2145
        %v2166 = vrot.slane %v2145, 4
        %v2167 = vsel %vm802, %v2151, %v2166
        %v2169 = vunpack.c.l.s4 1934713408
        %v2170 = vunpack.c.0.s8 %v2169
        %v2171 = vperm.slane %v2165, %v2170
        %v2173 = vunpack.c.l.s4 1934713408
        %v2174 = vunpack.c.0.s8 %v2173
        %v2175 = vperm.slane %v2167, %v2174
        %v2176 = vrot.slane %v2171, 4
        %v2177 = vsel %vm802, %v2176, %v2159
        %v2178 = vrot.slane %v2159, 4
        %v2179 = vsel %vm802, %v2171, %v2178
        %v2180 = vrot.slane %v2175, 4
        %v2181 = vsel %vm802, %v2180, %v2163
        %v2182 = vrot.slane %v2163, 4
        %v2183 = vsel %vm802, %v2175, %v2182
        %v2184 = vsel %vm802, %v1356, %v1337
        %v2186 = vunpack.c.l.s4 1983009808
        %v2187 = vunpack.c.0.s8 %v2186
        %v2188 = vperm.slane %v2184, %v2187
        %v2189 = vrot.slane %v1357, 4
        %v2190 = vsel %vm802, %v2189, %v1355
        %v2192 = vunpack.c.l.s4 1983009808
        %v2193 = vunpack.c.0.s8 %v2192
        %v2194 = vperm.slane %v2190, %v2193
        %v2195 = vsel %vm802, %v1360, %v1349
        %v2197 = vunpack.c.l.s4 1983009808
        %v2198 = vunpack.c.0.s8 %v2197
        %v2199 = vperm.slane %v2195, %v2198
        %v2200 = vrot.slane %v1361, 4
        %v2201 = vsel %vm802, %v2200, %v1359
        %v2203 = vunpack.c.l.s4 1983009808
        %v2204 = vunpack.c.0.s8 %v2203
        %v2205 = vperm.slane %v2201, %v2204
        %v2206 = vrot.slane %v2194, 4
        %v2207 = vsel %vm802, %v2206, %v2188
        %v2208 = vrot.slane %v2188, 4
        %v2209 = vsel %vm802, %v2194, %v2208
        %v2211 = vunpack.c.l.s4 1934713408
        %v2212 = vunpack.c.0.s8 %v2211
        %v2213 = vperm.slane %v2207, %v2212
        %v2215 = vunpack.c.l.s4 1934713408
        %v2216 = vunpack.c.0.s8 %v2215
        %v2217 = vperm.slane %v2209, %v2216
        %v2218 = vrot.slane %v2205, 4
        %v2219 = vsel %vm802, %v2218, %v2199
        %v2220 = vrot.slane %v2199, 4
        %v2221 = vsel %vm802, %v2205, %v2220
        %v2223 = vunpack.c.l.s4 1934713408
        %v2224 = vunpack.c.0.s8 %v2223
        %v2225 = vperm.slane %v2219, %v2224
        %v2227 = vunpack.c.l.s4 1934713408
        %v2228 = vunpack.c.0.s8 %v2227
        %v2229 = vperm.slane %v2221, %v2228
        %v2230 = vrot.slane %v2225, 4
        %v2231 = vsel %vm802, %v2230, %v2213
        %v2232 = vrot.slane %v2213, 4
        %v2233 = vsel %vm802, %v2225, %v2232
        %v2234 = vrot.slane %v2229, 4
        %v2235 = vsel %vm802, %v2234, %v2217
        %v2236 = vrot.slane %v2217, 4
        %v2237 = vsel %vm802, %v2229, %v2236
        %v2238 = vsel %vm802, %v1412, %v1393
        %v2240 = vunpack.c.l.s4 1983009808
        %v2241 = vunpack.c.0.s8 %v2240
        %v2242 = vperm.slane %v2238, %v2241
        %v2243 = vrot.slane %v1413, 4
        %v2244 = vsel %vm802, %v2243, %v1411
        %v2246 = vunpack.c.l.s4 1983009808
        %v2247 = vunpack.c.0.s8 %v2246
        %v2248 = vperm.slane %v2244, %v2247
        %v2249 = vsel %vm802, %v1416, %v1405
        %v2251 = vunpack.c.l.s4 1983009808
        %v2252 = vunpack.c.0.s8 %v2251
        %v2253 = vperm.slane %v2249, %v2252
        %v2254 = vrot.slane %v1417, 4
        %v2255 = vsel %vm802, %v2254, %v1415
        %v2257 = vunpack.c.l.s4 1983009808
        %v2258 = vunpack.c.0.s8 %v2257
        %v2259 = vperm.slane %v2255, %v2258
        %v2260 = vrot.slane %v2248, 4
        %v2261 = vsel %vm802, %v2260, %v2242
        %v2262 = vrot.slane %v2242, 4
        %v2263 = vsel %vm802, %v2248, %v2262
        %v2265 = vunpack.c.l.s4 1934713408
        %v2266 = vunpack.c.0.s8 %v2265
        %v2267 = vperm.slane %v2261, %v2266
        %v2269 = vunpack.c.l.s4 1934713408
        %v2270 = vunpack.c.0.s8 %v2269
        %v2271 = vperm.slane %v2263, %v2270
        %v2272 = vrot.slane %v2259, 4
        %v2273 = vsel %vm802, %v2272, %v2253
        %v2274 = vrot.slane %v2253, 4
        %v2275 = vsel %vm802, %v2259, %v2274
        %v2277 = vunpack.c.l.s4 1934713408
        %v2278 = vunpack.c.0.s8 %v2277
        %v2279 = vperm.slane %v2273, %v2278
        %v2281 = vunpack.c.l.s4 1934713408
        %v2282 = vunpack.c.0.s8 %v2281
        %v2283 = vperm.slane %v2275, %v2282
        %v2284 = vrot.slane %v2279, 4
        %v2285 = vsel %vm802, %v2284, %v2267
        %v2286 = vrot.slane %v2267, 4
        %v2287 = vsel %vm802, %v2279, %v2286
        %v2288 = vrot.slane %v2283, 4
        %v2289 = vsel %vm802, %v2288, %v2271
        %v2290 = vrot.slane %v2271, 4
        %v2291 = vsel %vm802, %v2283, %v2290
        %v2292 = vsel %vm802, %v1468, %v1449
        %v2294 = vunpack.c.l.s4 1983009808
        %v2295 = vunpack.c.0.s8 %v2294
        %v2296 = vperm.slane %v2292, %v2295
        %v2297 = vrot.slane %v1469, 4
        %v2298 = vsel %vm802, %v2297, %v1467
        %v2300 = vunpack.c.l.s4 1983009808
        %v2301 = vunpack.c.0.s8 %v2300
        %v2302 = vperm.slane %v2298, %v2301
        %v2303 = vsel %vm802, %v1472, %v1461
        %v2305 = vunpack.c.l.s4 1983009808
        %v2306 = vunpack.c.0.s8 %v2305
        %v2307 = vperm.slane %v2303, %v2306
        %v2308 = vrot.slane %v1473, 4
        %v2309 = vsel %vm802, %v2308, %v1471
        %v2311 = vunpack.c.l.s4 1983009808
        %v2312 = vunpack.c.0.s8 %v2311
        %v2313 = vperm.slane %v2309, %v2312
        %v2314 = vrot.slane %v2302, 4
        %v2315 = vsel %vm802, %v2314, %v2296
        %v2316 = vrot.slane %v2296, 4
        %v2317 = vsel %vm802, %v2302, %v2316
        %v2319 = vunpack.c.l.s4 1934713408
        %v2320 = vunpack.c.0.s8 %v2319
        %v2321 = vperm.slane %v2315, %v2320
        %v2323 = vunpack.c.l.s4 1934713408
        %v2324 = vunpack.c.0.s8 %v2323
        %v2325 = vperm.slane %v2317, %v2324
        %v2326 = vrot.slane %v2313, 4
        %v2327 = vsel %vm802, %v2326, %v2307
        %v2328 = vrot.slane %v2307, 4
        %v2329 = vsel %vm802, %v2313, %v2328
        %v2331 = vunpack.c.l.s4 1934713408
        %v2332 = vunpack.c.0.s8 %v2331
        %v2333 = vperm.slane %v2327, %v2332
        %v2335 = vunpack.c.l.s4 1934713408
        %v2336 = vunpack.c.0.s8 %v2335
        %v2337 = vperm.slane %v2329, %v2336
        %v2338 = vrot.slane %v2333, 4
        %v2339 = vsel %vm802, %v2338, %v2321
        %v2340 = vrot.slane %v2321, 4
        %v2341 = vsel %vm802, %v2333, %v2340
        %v2342 = vrot.slane %v2337, 4
        %v2343 = vsel %vm802, %v2342, %v2325
        %v2344 = vrot.slane %v2325, 4
        %v2345 = vsel %vm802, %v2337, %v2344
        %v2346 = vsel %vm802, %v1524, %v1505
        %v2348 = vunpack.c.l.s4 1983009808
        %v2349 = vunpack.c.0.s8 %v2348
        %v2350 = vperm.slane %v2346, %v2349
        %v2351 = vrot.slane %v1525, 4
        %v2352 = vsel %vm802, %v2351, %v1523
        %v2354 = vunpack.c.l.s4 1983009808
        %v2355 = vunpack.c.0.s8 %v2354
        %v2356 = vperm.slane %v2352, %v2355
        %v2357 = vsel %vm802, %v1528, %v1517
        %v2359 = vunpack.c.l.s4 1983009808
        %v2360 = vunpack.c.0.s8 %v2359
        %v2361 = vperm.slane %v2357, %v2360
        %v2362 = vrot.slane %v1529, 4
        %v2363 = vsel %vm802, %v2362, %v1527
        %v2365 = vunpack.c.l.s4 1983009808
        %v2366 = vunpack.c.0.s8 %v2365
        %v2367 = vperm.slane %v2363, %v2366
        %v2368 = vrot.slane %v2356, 4
        %v2369 = vsel %vm802, %v2368, %v2350
        %v2370 = vrot.slane %v2350, 4
        %v2371 = vsel %vm802, %v2356, %v2370
        %v2373 = vunpack.c.l.s4 1934713408
        %v2374 = vunpack.c.0.s8 %v2373
        %v2375 = vperm.slane %v2369, %v2374
        %v2377 = vunpack.c.l.s4 1934713408
        %v2378 = vunpack.c.0.s8 %v2377
        %v2379 = vperm.slane %v2371, %v2378
        %v2380 = vrot.slane %v2367, 4
        %v2381 = vsel %vm802, %v2380, %v2361
        %v2382 = vrot.slane %v2361, 4
        %v2383 = vsel %vm802, %v2367, %v2382
        %v2385 = vunpack.c.l.s4 1934713408
        %v2386 = vunpack.c.0.s8 %v2385
        %v2387 = vperm.slane %v2381, %v2386
        %v2389 = vunpack.c.l.s4 1934713408
        %v2390 = vunpack.c.0.s8 %v2389
        %v2391 = vperm.slane %v2383, %v2390
        %v2392 = vrot.slane %v2387, 4
        %v2393 = vsel %vm802, %v2392, %v2375
        %v2394 = vrot.slane %v2375, 4
        %v2395 = vsel %vm802, %v2387, %v2394
        %v2396 = vrot.slane %v2391, 4
        %v2397 = vsel %vm802, %v2396, %v2379
        %v2398 = vrot.slane %v2379, 4
        %v2399 = vsel %vm802, %v2391, %v2398
        %v2400 = vsel %vm802, %v1580, %v1561
        %v2402 = vunpack.c.l.s4 1983009808
        %v2403 = vunpack.c.0.s8 %v2402
        %v2404 = vperm.slane %v2400, %v2403
        %v2405 = vrot.slane %v1581, 4
        %v2406 = vsel %vm802, %v2405, %v1579
        %v2408 = vunpack.c.l.s4 1983009808
        %v2409 = vunpack.c.0.s8 %v2408
        %v2410 = vperm.slane %v2406, %v2409
        %v2411 = vsel %vm802, %v1584, %v1573
        %v2413 = vunpack.c.l.s4 1983009808
        %v2414 = vunpack.c.0.s8 %v2413
        %v2415 = vperm.slane %v2411, %v2414
        %v2416 = vrot.slane %v1585, 4
        %v2417 = vsel %vm802, %v2416, %v1583
        %v2419 = vunpack.c.l.s4 1983009808
        %v2420 = vunpack.c.0.s8 %v2419
        %v2421 = vperm.slane %v2417, %v2420
        %v2422 = vrot.slane %v2410, 4
        %v2423 = vsel %vm802, %v2422, %v2404
        %v2424 = vrot.slane %v2404, 4
        %v2425 = vsel %vm802, %v2410, %v2424
        %v2427 = vunpack.c.l.s4 1934713408
        %v2428 = vunpack.c.0.s8 %v2427
        %v2429 = vperm.slane %v2423, %v2428
        %v2431 = vunpack.c.l.s4 1934713408
        %v2432 = vunpack.c.0.s8 %v2431
        %v2433 = vperm.slane %v2425, %v2432
        %v2434 = vrot.slane %v2421, 4
        %v2435 = vsel %vm802, %v2434, %v2415
        %v2436 = vrot.slane %v2415, 4
        %v2437 = vsel %vm802, %v2421, %v2436
        %v2439 = vunpack.c.l.s4 1934713408
        %v2440 = vunpack.c.0.s8 %v2439
        %v2441 = vperm.slane %v2435, %v2440
        %v2443 = vunpack.c.l.s4 1934713408
        %v2444 = vunpack.c.0.s8 %v2443
        %v2445 = vperm.slane %v2437, %v2444
        %v2446 = vrot.slane %v2441, 4
        %v2447 = vsel %vm802, %v2446, %v2429
        %v2448 = vrot.slane %v2429, 4
        %v2449 = vsel %vm802, %v2441, %v2448
        %v2450 = vrot.slane %v2445, 4
        %v2451 = vsel %vm802, %v2450, %v2433
        %v2452 = vrot.slane %v2433, 4
        %v2453 = vsel %vm802, %v2445, %v2452
        %v2454 = vsel %vm802, %v1636, %v1617
        %v2456 = vunpack.c.l.s4 1983009808
        %v2457 = vunpack.c.0.s8 %v2456
        %v2458 = vperm.slane %v2454, %v2457
        %v2459 = vrot.slane %v1637, 4
        %v2460 = vsel %vm802, %v2459, %v1635
        %v2462 = vunpack.c.l.s4 1983009808
        %v2463 = vunpack.c.0.s8 %v2462
        %v2464 = vperm.slane %v2460, %v2463
        %v2465 = vsel %vm802, %v1640, %v1629
        %v2467 = vunpack.c.l.s4 1983009808
        %v2468 = vunpack.c.0.s8 %v2467
        %v2469 = vperm.slane %v2465, %v2468
        %v2470 = vrot.slane %v1641, 4
        %v2471 = vsel %vm802, %v2470, %v1639
        %v2473 = vunpack.c.l.s4 1983009808
        %v2474 = vunpack.c.0.s8 %v2473
        %v2475 = vperm.slane %v2471, %v2474
        %v2476 = vrot.slane %v2464, 4
        %v2477 = vsel %vm802, %v2476, %v2458
        %v2478 = vrot.slane %v2458, 4
        %v2479 = vsel %vm802, %v2464, %v2478
        %v2481 = vunpack.c.l.s4 1934713408
        %v2482 = vunpack.c.0.s8 %v2481
        %v2483 = vperm.slane %v2477, %v2482
        %v2485 = vunpack.c.l.s4 1934713408
        %v2486 = vunpack.c.0.s8 %v2485
        %v2487 = vperm.slane %v2479, %v2486
        %v2488 = vrot.slane %v2475, 4
        %v2489 = vsel %vm802, %v2488, %v2469
        %v2490 = vrot.slane %v2469, 4
        %v2491 = vsel %vm802, %v2475, %v2490
        %v2493 = vunpack.c.l.s4 1934713408
        %v2494 = vunpack.c.0.s8 %v2493
        %v2495 = vperm.slane %v2489, %v2494
        %v2497 = vunpack.c.l.s4 1934713408
        %v2498 = vunpack.c.0.s8 %v2497
        %v2499 = vperm.slane %v2491, %v2498
        %v2500 = vrot.slane %v2495, 4
        %v2501 = vsel %vm802, %v2500, %v2483
        %v2502 = vrot.slane %v2483, 4
        %v2503 = vsel %vm802, %v2495, %v2502
        %v2504 = vrot.slane %v2499, 4
        %v2505 = vsel %vm802, %v2504, %v2487
        %v2506 = vrot.slane %v2487, 4
        %v2507 = vsel %vm802, %v2499, %v2506
        %v2508 = vsel %vm802, %v1692, %v1673
        %v2510 = vunpack.c.l.s4 1983009808
        %v2511 = vunpack.c.0.s8 %v2510
        %v2512 = vperm.slane %v2508, %v2511
        %v2513 = vrot.slane %v1693, 4
        %v2514 = vsel %vm802, %v2513, %v1691
        %v2516 = vunpack.c.l.s4 1983009808
        %v2517 = vunpack.c.0.s8 %v2516
        %v2518 = vperm.slane %v2514, %v2517
        %v2519 = vsel %vm802, %v1696, %v1685
        %v2521 = vunpack.c.l.s4 1983009808
        %v2522 = vunpack.c.0.s8 %v2521
        %v2523 = vperm.slane %v2519, %v2522
        %v2524 = vrot.slane %v1697, 4
        %v2525 = vsel %vm802, %v2524, %v1695
        %v2527 = vunpack.c.l.s4 1983009808
        %v2528 = vunpack.c.0.s8 %v2527
        %v2529 = vperm.slane %v2525, %v2528
        %v2530 = vrot.slane %v2518, 4
        %v2531 = vsel %vm802, %v2530, %v2512
        %v2532 = vrot.slane %v2512, 4
        %v2533 = vsel %vm802, %v2518, %v2532
        %v2535 = vunpack.c.l.s4 1934713408
        %v2536 = vunpack.c.0.s8 %v2535
        %v2537 = vperm.slane %v2531, %v2536
        %v2539 = vunpack.c.l.s4 1934713408
        %v2540 = vunpack.c.0.s8 %v2539
        %v2541 = vperm.slane %v2533, %v2540
        %v2542 = vrot.slane %v2529, 4
        %v2543 = vsel %vm802, %v2542, %v2523
        %v2544 = vrot.slane %v2523, 4
        %v2545 = vsel %vm802, %v2529, %v2544
        %v2547 = vunpack.c.l.s4 1934713408
        %v2548 = vunpack.c.0.s8 %v2547
        %v2549 = vperm.slane %v2543, %v2548
        %v2551 = vunpack.c.l.s4 1934713408
        %v2552 = vunpack.c.0.s8 %v2551
        %v2553 = vperm.slane %v2545, %v2552
        %v2554 = vrot.slane %v2549, 4
        %v2555 = vsel %vm802, %v2554, %v2537
        %v2556 = vrot.slane %v2537, 4
        %v2557 = vsel %vm802, %v2549, %v2556
        %v2558 = vrot.slane %v2553, 4
        %v2559 = vsel %vm802, %v2558, %v2541
        %v2560 = vrot.slane %v2541, 4
        %v2561 = vsel %vm802, %v2553, %v2560
        %v2562 = vpack.c.bf16 %v1745, %v1745
        %v2563 = vpack.c.bf16 %v1799, %v1799
        %v2564 = vpack.c.bf16 %v1853, %v1853
        %v2565 = vpack.c.bf16 %v1907, %v1907
        %v2566 = vpack.c.bf16 %v1961, %v1961
        %v2567 = vpack.c.bf16 %v2015, %v2015
        %v2568 = vpack.c.bf16 %v2069, %v2069
        %v2569 = vpack.c.bf16 %v2123, %v2123
        %v2570 = vpack.c.bf16 %v2177, %v2177
        %v2571 = vpack.c.bf16 %v2231, %v2231
        %v2572 = vpack.c.bf16 %v2285, %v2285
        %v2573 = vpack.c.bf16 %v2339, %v2339
        %v2574 = vpack.c.bf16 %v2393, %v2393
        %v2575 = vpack.c.bf16 %v2447, %v2447
        %v2576 = vpack.c.bf16 %v2501, %v2501
        %v2577 = vpack.c.bf16 %v2555, %v2555
        %v2578 = vpack.c.bf16 %v1747, %v1747
        %v2579 = vpack.c.bf16 %v1801, %v1801
        %v2580 = vpack.c.bf16 %v1855, %v1855
        %v2581 = vpack.c.bf16 %v1909, %v1909
        %v2582 = vpack.c.bf16 %v1963, %v1963
        %v2583 = vpack.c.bf16 %v2017, %v2017
        %v2584 = vpack.c.bf16 %v2071, %v2071
        %v2585 = vpack.c.bf16 %v2125, %v2125
        %v2586 = vpack.c.bf16 %v2179, %v2179
        %v2587 = vpack.c.bf16 %v2233, %v2233
        %v2588 = vpack.c.bf16 %v2287, %v2287
        %v2589 = vpack.c.bf16 %v2341, %v2341
        %v2590 = vpack.c.bf16 %v2395, %v2395
        %v2591 = vpack.c.bf16 %v2449, %v2449
        %v2592 = vpack.c.bf16 %v2503, %v2503
        %v2593 = vpack.c.bf16 %v2557, %v2557
        %v2594 = vpack.c.bf16 %v1749, %v1749
        %v2595 = vpack.c.bf16 %v1803, %v1803
        %v2596 = vpack.c.bf16 %v1857, %v1857
        %v2597 = vpack.c.bf16 %v1911, %v1911
        %v2598 = vpack.c.bf16 %v1965, %v1965
        %v2599 = vpack.c.bf16 %v2019, %v2019
        %v2600 = vpack.c.bf16 %v2073, %v2073
        %v2601 = vpack.c.bf16 %v2127, %v2127
        %v2602 = vpack.c.bf16 %v2181, %v2181
        %v2603 = vpack.c.bf16 %v2235, %v2235
        %v2604 = vpack.c.bf16 %v2289, %v2289
        %v2605 = vpack.c.bf16 %v2343, %v2343
        %v2606 = vpack.c.bf16 %v2397, %v2397
        %v2607 = vpack.c.bf16 %v2451, %v2451
        %v2608 = vpack.c.bf16 %v2505, %v2505
        %v2609 = vpack.c.bf16 %v2559, %v2559
        %v2610 = vpack.c.bf16 %v1751, %v1751
        %v2611 = vpack.c.bf16 %v1805, %v1805
        %v2612 = vpack.c.bf16 %v1859, %v1859
        %v2613 = vpack.c.bf16 %v1913, %v1913
        %v2614 = vpack.c.bf16 %v1967, %v1967
        %v2615 = vpack.c.bf16 %v2021, %v2021
        %v2616 = vpack.c.bf16 %v2075, %v2075
        %v2617 = vpack.c.bf16 %v2129, %v2129
        %v2618 = vpack.c.bf16 %v2183, %v2183
        %v2619 = vpack.c.bf16 %v2237, %v2237
        %v2620 = vpack.c.bf16 %v2291, %v2291
        %v2621 = vpack.c.bf16 %v2345, %v2345
        %v2622 = vpack.c.bf16 %v2399, %v2399
        %v2623 = vpack.c.bf16 %v2453, %v2453
        %v2624 = vpack.c.bf16 %v2507, %v2507
        %v2625 = vpack.c.bf16 %v2561, %v2561
        %vm2626 = vcmask 257024
        %2627 = vst.msk [vmem:[%s253] sm:$0xf] %vm2626, %v2562
        %2628 = vst.msk [vmem:[%s253 + $0x4] sm:$0xf] %vm2626, %v2563
        %2629 = vst.msk [vmem:[%s253 + $0x8] sm:$0xf] %vm2626, %v2564
        %2630 = vst.msk [vmem:[%s253 + $0xc] sm:$0xf] %vm2626, %v2565
        %2631 = vst.msk [vmem:[%s253 + $0x10] sm:$0xf] %vm2626, %v2566
        %2632 = vst.msk [vmem:[%s253 + $0x14] sm:$0xf] %vm2626, %v2567
        %2633 = vst.msk [vmem:[%s253 + $0x18] sm:$0xf] %vm2626, %v2568
        %2634 = vst.msk [vmem:[%s253 + $0x1c] sm:$0xf] %vm2626, %v2569
        %2635 = vst.msk [vmem:[%s253 + $0x20] sm:$0xf] %vm2626, %v2570
        %2636 = vst.msk [vmem:[%s253 + $0x24] sm:$0xf] %vm2626, %v2571
        %2637 = vst.msk [vmem:[%s253 + $0x28] sm:$0xf] %vm2626, %v2572
        %2638 = vst.msk [vmem:[%s253 + $0x2c] sm:$0xf] %vm2626, %v2573
        %2639 = vst.msk [vmem:[%s253 + $0x30] sm:$0xf] %vm2626, %v2574
        %2640 = vst.msk [vmem:[%s253 + $0x34] sm:$0xf] %vm2626, %v2575
        %2641 = vst.msk [vmem:[%s253 + $0x38] sm:$0xf] %vm2626, %v2576
        %2642 = vst.msk [vmem:[%s253 + $0x3c] sm:$0xf] %vm2626, %v2577
        %2643 = vst.msk [vmem:[%s253 + $0x40] sm:$0xf] %vm2626, %v2578
        %2644 = vst.msk [vmem:[%s253 + $0x44] sm:$0xf] %vm2626, %v2579
        %2645 = vst.msk [vmem:[%s253 + $0x48] sm:$0xf] %vm2626, %v2580
        %2646 = vst.msk [vmem:[%s253 + $0x4c] sm:$0xf] %vm2626, %v2581
        %2647 = vst.msk [vmem:[%s253 + $0x50] sm:$0xf] %vm2626, %v2582
        %2648 = vst.msk [vmem:[%s253 + $0x54] sm:$0xf] %vm2626, %v2583
        %2649 = vst.msk [vmem:[%s253 + $0x58] sm:$0xf] %vm2626, %v2584
        %2650 = vst.msk [vmem:[%s253 + $0x5c] sm:$0xf] %vm2626, %v2585
        %2651 = vst.msk [vmem:[%s253 + $0x60] sm:$0xf] %vm2626, %v2586
        %2652 = vst.msk [vmem:[%s253 + $0x64] sm:$0xf] %vm2626, %v2587
        %2653 = vst.msk [vmem:[%s253 + $0x68] sm:$0xf] %vm2626, %v2588
        %2654 = vst.msk [vmem:[%s253 + $0x6c] sm:$0xf] %vm2626, %v2589
        %2655 = vst.msk [vmem:[%s253 + $0x70] sm:$0xf] %vm2626, %v2590
        %2656 = vst.msk [vmem:[%s253 + $0x74] sm:$0xf] %vm2626, %v2591
        %2657 = vst.msk [vmem:[%s253 + $0x78] sm:$0xf] %vm2626, %v2592
        %2658 = vst.msk [vmem:[%s253 + $0x7c] sm:$0xf] %vm2626, %v2593
        %2659 = vst.msk [vmem:[%s253 + $0x80] sm:$0xf] %vm2626, %v2594
        %2660 = vst.msk [vmem:[%s253 + $0x84] sm:$0xf] %vm2626, %v2595
        %2661 = vst.msk [vmem:[%s253 + $0x88] sm:$0xf] %vm2626, %v2596
        %2662 = vst.msk [vmem:[%s253 + $0x8c] sm:$0xf] %vm2626, %v2597
        %2663 = vst.msk [vmem:[%s253 + $0x90] sm:$0xf] %vm2626, %v2598
        %2664 = vst.msk [vmem:[%s253 + $0x94] sm:$0xf] %vm2626, %v2599
        %2665 = vst.msk [vmem:[%s253 + $0x98] sm:$0xf] %vm2626, %v2600
        %2666 = vst.msk [vmem:[%s253 + $0x9c] sm:$0xf] %vm2626, %v2601
        %2667 = vst.msk [vmem:[%s253 + $0xa0] sm:$0xf] %vm2626, %v2602
        %2668 = vst.msk [vmem:[%s253 + $0xa4] sm:$0xf] %vm2626, %v2603
        %2669 = vst.msk [vmem:[%s253 + $0xa8] sm:$0xf] %vm2626, %v2604
        %2670 = vst.msk [vmem:[%s253 + $0xac] sm:$0xf] %vm2626, %v2605
        %2671 = vst.msk [vmem:[%s253 + $0xb0] sm:$0xf] %vm2626, %v2606
        %2672 = vst.msk [vmem:[%s253 + $0xb4] sm:$0xf] %vm2626, %v2607
        %2673 = vst.msk [vmem:[%s253 + $0xb8] sm:$0xf] %vm2626, %v2608
        %2674 = vst.msk [vmem:[%s253 + $0xbc] sm:$0xf] %vm2626, %v2609
        %2675 = vst.msk [vmem:[%s253 + $0xc0] sm:$0xf] %vm2626, %v2610
        %2676 = vst.msk [vmem:[%s253 + $0xc4] sm:$0xf] %vm2626, %v2611
        %2677 = vst.msk [vmem:[%s253 + $0xc8] sm:$0xf] %vm2626, %v2612
        %2678 = vst.msk [vmem:[%s253 + $0xcc] sm:$0xf] %vm2626, %v2613
        %2679 = vst.msk [vmem:[%s253 + $0xd0] sm:$0xf] %vm2626, %v2614
        %2680 = vst.msk [vmem:[%s253 + $0xd4] sm:$0xf] %vm2626, %v2615
        %2681 = vst.msk [vmem:[%s253 + $0xd8] sm:$0xf] %vm2626, %v2616
        %2682 = vst.msk [vmem:[%s253 + $0xdc] sm:$0xf] %vm2626, %v2617
        %2683 = vst.msk [vmem:[%s253 + $0xe0] sm:$0xf] %vm2626, %v2618
        %2684 = vst.msk [vmem:[%s253 + $0xe4] sm:$0xf] %vm2626, %v2619
        %2685 = vst.msk [vmem:[%s253 + $0xe8] sm:$0xf] %vm2626, %v2620
        %2686 = vst.msk [vmem:[%s253 + $0xec] sm:$0xf] %vm2626, %v2621
        %2687 = vst.msk [vmem:[%s253 + $0xf0] sm:$0xf] %vm2626, %v2622
        %2688 = vst.msk [vmem:[%s253 + $0xf4] sm:$0xf] %vm2626, %v2623
        %2689 = vst.msk [vmem:[%s253 + $0xf8] sm:$0xf] %vm2626, %v2624
        %2690 = vst.msk [vmem:[%s253 + $0xfc] sm:$0xf] %vm2626, %v2625
        %2707 = vrot.lane.b32.xlu0 %v553, 96
        %v2708 = vpop.permute.xlu0 %2707
        %2709 = vrot.lane.b32.xlu0 %v555, 96
        %v2710 = vpop.permute.xlu0 %2709
        %2711 = vrot.lane.b32.xlu0 %v558, 96
        %v2712 = vpop.permute.xlu0 %2711
        %2713 = vrot.lane.b32.xlu0 %v560, 96
        %v2714 = vpop.permute.xlu0 %2713
        %2715 = vrot.lane.b32.xlu0 %v563, 96
        %v2716 = vpop.permute.xlu0 %2715
        %2717 = vrot.lane.b32.xlu0 %v565, 96
        %v2718 = vpop.permute.xlu0 %2717
        %2719 = vrot.lane.b32.xlu0 %v568, 96
        %v2720 = vpop.permute.xlu0 %2719
        %2721 = vrot.lane.b32.xlu0 %v570, 96
        %v2722 = vpop.permute.xlu0 %2721
        %2723 = vrot.lane.b32.xlu0 %v573, 96
        %v2724 = vpop.permute.xlu0 %2723
        %2725 = vrot.lane.b32.xlu0 %v575, 96
        %v2726 = vpop.permute.xlu0 %2725
        %2727 = vrot.lane.b32.xlu0 %v578, 96
        %v2728 = vpop.permute.xlu0 %2727
        %2729 = vrot.lane.b32.xlu0 %v580, 96
        %v2730 = vpop.permute.xlu0 %2729
        %2731 = vrot.lane.b32.xlu0 %v583, 96
        %v2732 = vpop.permute.xlu0 %2731
        %2733 = vrot.lane.b32.xlu0 %v585, 96
        %v2734 = vpop.permute.xlu0 %2733
        %2735 = vrot.lane.b32.xlu0 %v588, 96
        %v2736 = vpop.permute.xlu0 %2735
        %2737 = vrot.lane.b32.xlu0 %v590, 96
        %v2738 = vpop.permute.xlu0 %2737
        %2755 = vrot.lane.b32.xlu0 %v553, 64
        %v2756 = vpop.permute.xlu0 %2755
        %2757 = vrot.lane.b32.xlu0 %v555, 64
        %v2758 = vpop.permute.xlu0 %2757
        %2759 = vrot.lane.b32.xlu0 %v558, 64
        %v2760 = vpop.permute.xlu0 %2759
        %2761 = vrot.lane.b32.xlu0 %v560, 64
        %v2762 = vpop.permute.xlu0 %2761
        %2763 = vrot.lane.b32.xlu0 %v563, 64
        %v2764 = vpop.permute.xlu0 %2763
        %2765 = vrot.lane.b32.xlu0 %v565, 64
        %v2766 = vpop.permute.xlu0 %2765
        %2767 = vrot.lane.b32.xlu0 %v568, 64
        %v2768 = vpop.permute.xlu0 %2767
        %2769 = vrot.lane.b32.xlu0 %v570, 64
        %v2770 = vpop.permute.xlu0 %2769
        %2771 = vrot.lane.b32.xlu0 %v573, 64
        %v2772 = vpop.permute.xlu0 %2771
        %2773 = vrot.lane.b32.xlu0 %v575, 64
        %v2774 = vpop.permute.xlu0 %2773
        %2775 = vrot.lane.b32.xlu0 %v578, 64
        %v2776 = vpop.permute.xlu0 %2775
        %2777 = vrot.lane.b32.xlu0 %v580, 64
        %v2778 = vpop.permute.xlu0 %2777
        %2779 = vrot.lane.b32.xlu0 %v583, 64
        %v2780 = vpop.permute.xlu0 %2779
        %2781 = vrot.lane.b32.xlu0 %v585, 64
        %v2782 = vpop.permute.xlu0 %2781
        %2783 = vrot.lane.b32.xlu0 %v588, 64
        %v2784 = vpop.permute.xlu0 %2783
        %2785 = vrot.lane.b32.xlu0 %v590, 64
        %v2786 = vpop.permute.xlu0 %2785
        %2803 = vrot.lane.b32.xlu0 %v553, 32
        %v2804 = vpop.permute.xlu0 %2803
        %2805 = vrot.lane.b32.xlu0 %v555, 32
        %v2806 = vpop.permute.xlu0 %2805
        %2807 = vrot.lane.b32.xlu0 %v558, 32
        %v2808 = vpop.permute.xlu0 %2807
        %2809 = vrot.lane.b32.xlu0 %v560, 32
        %v2810 = vpop.permute.xlu0 %2809
        %2811 = vrot.lane.b32.xlu0 %v563, 32
        %v2812 = vpop.permute.xlu0 %2811
        %2813 = vrot.lane.b32.xlu0 %v565, 32
        %v2814 = vpop.permute.xlu0 %2813
        %2815 = vrot.lane.b32.xlu0 %v568, 32
        %v2816 = vpop.permute.xlu0 %2815
        %2817 = vrot.lane.b32.xlu0 %v570, 32
        %v2818 = vpop.permute.xlu0 %2817
        %2819 = vrot.lane.b32.xlu0 %v573, 32
        %v2820 = vpop.permute.xlu0 %2819
        %2821 = vrot.lane.b32.xlu0 %v575, 32
        %v2822 = vpop.permute.xlu0 %2821
        %2823 = vrot.lane.b32.xlu0 %v578, 32
        %v2824 = vpop.permute.xlu0 %2823
        %2825 = vrot.lane.b32.xlu0 %v580, 32
        %v2826 = vpop.permute.xlu0 %2825
        %2827 = vrot.lane.b32.xlu0 %v583, 32
        %v2828 = vpop.permute.xlu0 %2827
        %2829 = vrot.lane.b32.xlu0 %v585, 32
        %v2830 = vpop.permute.xlu0 %2829
        %2831 = vrot.lane.b32.xlu0 %v588, 32
        %v2832 = vpop.permute.xlu0 %2831
        %2833 = vrot.lane.b32.xlu0 %v590, 32
        %v2834 = vpop.permute.xlu0 %2833
        %v2851 = vrot.slane %v2756, 4
        %v2852 = vsel %vm802, %v2851, %v553
        %v2853 = vrot.slane %v553, 4
        %v2854 = vsel %vm802, %v2756, %v2853
        %v2856 = vunpack.c.l.s4 1983009808
        %v2857 = vunpack.c.0.s8 %v2856
        %v2858 = vperm.slane %v2852, %v2857
        %v2860 = vunpack.c.l.s4 1983009808
        %v2861 = vunpack.c.0.s8 %v2860
        %v2862 = vperm.slane %v2854, %v2861
        %v2863 = vrot.slane %v2804, 4
        %v2864 = vsel %vm802, %v2863, %v2708
        %v2865 = vrot.slane %v2708, 4
        %v2866 = vsel %vm802, %v2804, %v2865
        %v2868 = vunpack.c.l.s4 1983009808
        %v2869 = vunpack.c.0.s8 %v2868
        %v2870 = vperm.slane %v2864, %v2869
        %v2872 = vunpack.c.l.s4 1983009808
        %v2873 = vunpack.c.0.s8 %v2872
        %v2874 = vperm.slane %v2866, %v2873
        %v2875 = vrot.slane %v2870, 4
        %v2876 = vsel %vm802, %v2875, %v2858
        %v2877 = vrot.slane %v2858, 4
        %v2878 = vsel %vm802, %v2870, %v2877
        %v2880 = vunpack.c.l.s4 1934713408
        %v2881 = vunpack.c.0.s8 %v2880
        %v2882 = vperm.slane %v2876, %v2881
        %v2884 = vunpack.c.l.s4 1934713408
        %v2885 = vunpack.c.0.s8 %v2884
        %v2886 = vperm.slane %v2878, %v2885
        %v2887 = vrot.slane %v2874, 4
        %v2888 = vsel %vm802, %v2887, %v2862
        %v2889 = vrot.slane %v2862, 4
        %v2890 = vsel %vm802, %v2874, %v2889
        %v2892 = vunpack.c.l.s4 1934713408
        %v2893 = vunpack.c.0.s8 %v2892
        %v2894 = vperm.slane %v2888, %v2893
        %v2896 = vunpack.c.l.s4 1934713408
        %v2897 = vunpack.c.0.s8 %v2896
        %v2898 = vperm.slane %v2890, %v2897
        %v2899 = vrot.slane %v2882, 4
        %v2900 = vsel %vm802, 0.0, %v2899
        %v2901 = vrot.slane %v2886, 4
        %v2902 = vsel %vm802, 0.0, %v2901
        %v2903 = vrot.slane %v2894, 4
        %v2904 = vsel %vm802, 0.0, %v2903
        %v2905 = vrot.slane %v2898, 4
        %v2906 = vsel %vm802, 0.0, %v2905
        %v2907 = vrot.slane %v2758, 4
        %v2908 = vsel %vm802, %v2907, %v555
        %v2909 = vrot.slane %v555, 4
        %v2910 = vsel %vm802, %v2758, %v2909
        %v2912 = vunpack.c.l.s4 1983009808
        %v2913 = vunpack.c.0.s8 %v2912
        %v2914 = vperm.slane %v2908, %v2913
        %v2916 = vunpack.c.l.s4 1983009808
        %v2917 = vunpack.c.0.s8 %v2916
        %v2918 = vperm.slane %v2910, %v2917
        %v2919 = vrot.slane %v2806, 4
        %v2920 = vsel %vm802, %v2919, %v2710
        %v2921 = vrot.slane %v2710, 4
        %v2922 = vsel %vm802, %v2806, %v2921
        %v2924 = vunpack.c.l.s4 1983009808
        %v2925 = vunpack.c.0.s8 %v2924
        %v2926 = vperm.slane %v2920, %v2925
        %v2928 = vunpack.c.l.s4 1983009808
        %v2929 = vunpack.c.0.s8 %v2928
        %v2930 = vperm.slane %v2922, %v2929
        %v2931 = vrot.slane %v2926, 4
        %v2932 = vsel %vm802, %v2931, %v2914
        %v2933 = vrot.slane %v2914, 4
        %v2934 = vsel %vm802, %v2926, %v2933
        %v2936 = vunpack.c.l.s4 1934713408
        %v2937 = vunpack.c.0.s8 %v2936
        %v2938 = vperm.slane %v2932, %v2937
        %v2940 = vunpack.c.l.s4 1934713408
        %v2941 = vunpack.c.0.s8 %v2940
        %v2942 = vperm.slane %v2934, %v2941
        %v2943 = vrot.slane %v2930, 4
        %v2944 = vsel %vm802, %v2943, %v2918
        %v2945 = vrot.slane %v2918, 4
        %v2946 = vsel %vm802, %v2930, %v2945
        %v2948 = vunpack.c.l.s4 1934713408
        %v2949 = vunpack.c.0.s8 %v2948
        %v2950 = vperm.slane %v2944, %v2949
        %v2952 = vunpack.c.l.s4 1934713408
        %v2953 = vunpack.c.0.s8 %v2952
        %v2954 = vperm.slane %v2946, %v2953
        %v2955 = vrot.slane %v2938, 4
        %v2956 = vsel %vm802, 0.0, %v2955
        %v2957 = vrot.slane %v2942, 4
        %v2958 = vsel %vm802, 0.0, %v2957
        %v2959 = vrot.slane %v2950, 4
        %v2960 = vsel %vm802, 0.0, %v2959
        %v2961 = vrot.slane %v2954, 4
        %v2962 = vsel %vm802, 0.0, %v2961
        %v2963 = vrot.slane %v2760, 4
        %v2964 = vsel %vm802, %v2963, %v558
        %v2965 = vrot.slane %v558, 4
        %v2966 = vsel %vm802, %v2760, %v2965
        %v2968 = vunpack.c.l.s4 1983009808
        %v2969 = vunpack.c.0.s8 %v2968
        %v2970 = vperm.slane %v2964, %v2969
        %v2972 = vunpack.c.l.s4 1983009808
        %v2973 = vunpack.c.0.s8 %v2972
        %v2974 = vperm.slane %v2966, %v2973
        %v2975 = vrot.slane %v2808, 4
        %v2976 = vsel %vm802, %v2975, %v2712
        %v2977 = vrot.slane %v2712, 4
        %v2978 = vsel %vm802, %v2808, %v2977
        %v2980 = vunpack.c.l.s4 1983009808
        %v2981 = vunpack.c.0.s8 %v2980
        %v2982 = vperm.slane %v2976, %v2981
        %v2984 = vunpack.c.l.s4 1983009808
        %v2985 = vunpack.c.0.s8 %v2984
        %v2986 = vperm.slane %v2978, %v2985
        %v2987 = vrot.slane %v2982, 4
        %v2988 = vsel %vm802, %v2987, %v2970
        %v2989 = vrot.slane %v2970, 4
        %v2990 = vsel %vm802, %v2982, %v2989
        %v2992 = vunpack.c.l.s4 1934713408
        %v2993 = vunpack.c.0.s8 %v2992
        %v2994 = vperm.slane %v2988, %v2993
        %v2996 = vunpack.c.l.s4 1934713408
        %v2997 = vunpack.c.0.s8 %v2996
        %v2998 = vperm.slane %v2990, %v2997
        %v2999 = vrot.slane %v2986, 4
        %v3000 = vsel %vm802, %v2999, %v2974
        %v3001 = vrot.slane %v2974, 4
        %v3002 = vsel %vm802, %v2986, %v3001
        %v3004 = vunpack.c.l.s4 1934713408
        %v3005 = vunpack.c.0.s8 %v3004
        %v3006 = vperm.slane %v3000, %v3005
        %v3008 = vunpack.c.l.s4 1934713408
        %v3009 = vunpack.c.0.s8 %v3008
        %v3010 = vperm.slane %v3002, %v3009
        %v3011 = vrot.slane %v2994, 4
        %v3012 = vsel %vm802, 0.0, %v3011
        %v3013 = vrot.slane %v2998, 4
        %v3014 = vsel %vm802, 0.0, %v3013
        %v3015 = vrot.slane %v3006, 4
        %v3016 = vsel %vm802, 0.0, %v3015
        %v3017 = vrot.slane %v3010, 4
        %v3018 = vsel %vm802, 0.0, %v3017
        %v3019 = vrot.slane %v2762, 4
        %v3020 = vsel %vm802, %v3019, %v560
        %v3021 = vrot.slane %v560, 4
        %v3022 = vsel %vm802, %v2762, %v3021
        %v3024 = vunpack.c.l.s4 1983009808
        %v3025 = vunpack.c.0.s8 %v3024
        %v3026 = vperm.slane %v3020, %v3025
        %v3028 = vunpack.c.l.s4 1983009808
        %v3029 = vunpack.c.0.s8 %v3028
        %v3030 = vperm.slane %v3022, %v3029
        %v3031 = vrot.slane %v2810, 4
        %v3032 = vsel %vm802, %v3031, %v2714
        %v3033 = vrot.slane %v2714, 4
        %v3034 = vsel %vm802, %v2810, %v3033
        %v3036 = vunpack.c.l.s4 1983009808
        %v3037 = vunpack.c.0.s8 %v3036
        %v3038 = vperm.slane %v3032, %v3037
        %v3040 = vunpack.c.l.s4 1983009808
        %v3041 = vunpack.c.0.s8 %v3040
        %v3042 = vperm.slane %v3034, %v3041
        %v3043 = vrot.slane %v3038, 4
        %v3044 = vsel %vm802, %v3043, %v3026
        %v3045 = vrot.slane %v3026, 4
        %v3046 = vsel %vm802, %v3038, %v3045
        %v3048 = vunpack.c.l.s4 1934713408
        %v3049 = vunpack.c.0.s8 %v3048
        %v3050 = vperm.slane %v3044, %v3049
        %v3052 = vunpack.c.l.s4 1934713408
        %v3053 = vunpack.c.0.s8 %v3052
        %v3054 = vperm.slane %v3046, %v3053
        %v3055 = vrot.slane %v3042, 4
        %v3056 = vsel %vm802, %v3055, %v3030
        %v3057 = vrot.slane %v3030, 4
        %v3058 = vsel %vm802, %v3042, %v3057
        %v3060 = vunpack.c.l.s4 1934713408
        %v3061 = vunpack.c.0.s8 %v3060
        %v3062 = vperm.slane %v3056, %v3061
        %v3064 = vunpack.c.l.s4 1934713408
        %v3065 = vunpack.c.0.s8 %v3064
        %v3066 = vperm.slane %v3058, %v3065
        %v3067 = vrot.slane %v3050, 4
        %v3068 = vsel %vm802, 0.0, %v3067
        %v3069 = vrot.slane %v3054, 4
        %v3070 = vsel %vm802, 0.0, %v3069
        %v3071 = vrot.slane %v3062, 4
        %v3072 = vsel %vm802, 0.0, %v3071
        %v3073 = vrot.slane %v3066, 4
        %v3074 = vsel %vm802, 0.0, %v3073
        %v3075 = vrot.slane %v2764, 4
        %v3076 = vsel %vm802, %v3075, %v563
        %v3077 = vrot.slane %v563, 4
        %v3078 = vsel %vm802, %v2764, %v3077
        %v3080 = vunpack.c.l.s4 1983009808
        %v3081 = vunpack.c.0.s8 %v3080
        %v3082 = vperm.slane %v3076, %v3081
        %v3084 = vunpack.c.l.s4 1983009808
        %v3085 = vunpack.c.0.s8 %v3084
        %v3086 = vperm.slane %v3078, %v3085
        %v3087 = vrot.slane %v2812, 4
        %v3088 = vsel %vm802, %v3087, %v2716
        %v3089 = vrot.slane %v2716, 4
        %v3090 = vsel %vm802, %v2812, %v3089
        %v3092 = vunpack.c.l.s4 1983009808
        %v3093 = vunpack.c.0.s8 %v3092
        %v3094 = vperm.slane %v3088, %v3093
        %v3096 = vunpack.c.l.s4 1983009808
        %v3097 = vunpack.c.0.s8 %v3096
        %v3098 = vperm.slane %v3090, %v3097
        %v3099 = vrot.slane %v3094, 4
        %v3100 = vsel %vm802, %v3099, %v3082
        %v3101 = vrot.slane %v3082, 4
        %v3102 = vsel %vm802, %v3094, %v3101
        %v3104 = vunpack.c.l.s4 1934713408
        %v3105 = vunpack.c.0.s8 %v3104
        %v3106 = vperm.slane %v3100, %v3105
        %v3108 = vunpack.c.l.s4 1934713408
        %v3109 = vunpack.c.0.s8 %v3108
        %v3110 = vperm.slane %v3102, %v3109
        %v3111 = vrot.slane %v3098, 4
        %v3112 = vsel %vm802, %v3111, %v3086
        %v3113 = vrot.slane %v3086, 4
        %v3114 = vsel %vm802, %v3098, %v3113
        %v3116 = vunpack.c.l.s4 1934713408
        %v3117 = vunpack.c.0.s8 %v3116
        %v3118 = vperm.slane %v3112, %v3117
        %v3120 = vunpack.c.l.s4 1934713408
        %v3121 = vunpack.c.0.s8 %v3120
        %v3122 = vperm.slane %v3114, %v3121
        %v3123 = vrot.slane %v3106, 4
        %v3124 = vsel %vm802, 0.0, %v3123
        %v3125 = vrot.slane %v3110, 4
        %v3126 = vsel %vm802, 0.0, %v3125
        %v3127 = vrot.slane %v3118, 4
        %v3128 = vsel %vm802, 0.0, %v3127
        %v3129 = vrot.slane %v3122, 4
        %v3130 = vsel %vm802, 0.0, %v3129
        %v3131 = vrot.slane %v2766, 4
        %v3132 = vsel %vm802, %v3131, %v565
        %v3133 = vrot.slane %v565, 4
        %v3134 = vsel %vm802, %v2766, %v3133
        %v3136 = vunpack.c.l.s4 1983009808
        %v3137 = vunpack.c.0.s8 %v3136
        %v3138 = vperm.slane %v3132, %v3137
        %v3140 = vunpack.c.l.s4 1983009808
        %v3141 = vunpack.c.0.s8 %v3140
        %v3142 = vperm.slane %v3134, %v3141
        %v3143 = vrot.slane %v2814, 4
        %v3144 = vsel %vm802, %v3143, %v2718
        %v3145 = vrot.slane %v2718, 4
        %v3146 = vsel %vm802, %v2814, %v3145
        %v3148 = vunpack.c.l.s4 1983009808
        %v3149 = vunpack.c.0.s8 %v3148
        %v3150 = vperm.slane %v3144, %v3149
        %v3152 = vunpack.c.l.s4 1983009808
        %v3153 = vunpack.c.0.s8 %v3152
        %v3154 = vperm.slane %v3146, %v3153
        %v3155 = vrot.slane %v3150, 4
        %v3156 = vsel %vm802, %v3155, %v3138
        %v3157 = vrot.slane %v3138, 4
        %v3158 = vsel %vm802, %v3150, %v3157
        %v3160 = vunpack.c.l.s4 1934713408
        %v3161 = vunpack.c.0.s8 %v3160
        %v3162 = vperm.slane %v3156, %v3161
        %v3164 = vunpack.c.l.s4 1934713408
        %v3165 = vunpack.c.0.s8 %v3164
        %v3166 = vperm.slane %v3158, %v3165
        %v3167 = vrot.slane %v3154, 4
        %v3168 = vsel %vm802, %v3167, %v3142
        %v3169 = vrot.slane %v3142, 4
        %v3170 = vsel %vm802, %v3154, %v3169
        %v3172 = vunpack.c.l.s4 1934713408
        %v3173 = vunpack.c.0.s8 %v3172
        %v3174 = vperm.slane %v3168, %v3173
        %v3176 = vunpack.c.l.s4 1934713408
        %v3177 = vunpack.c.0.s8 %v3176
        %v3178 = vperm.slane %v3170, %v3177
        %v3179 = vrot.slane %v3162, 4
        %v3180 = vsel %vm802, 0.0, %v3179
        %v3181 = vrot.slane %v3166, 4
        %v3182 = vsel %vm802, 0.0, %v3181
        %v3183 = vrot.slane %v3174, 4
        %v3184 = vsel %vm802, 0.0, %v3183
        %v3185 = vrot.slane %v3178, 4
        %v3186 = vsel %vm802, 0.0, %v3185
        %v3187 = vrot.slane %v2768, 4
        %v3188 = vsel %vm802, %v3187, %v568
        %v3189 = vrot.slane %v568, 4
        %v3190 = vsel %vm802, %v2768, %v3189
        %v3192 = vunpack.c.l.s4 1983009808
        %v3193 = vunpack.c.0.s8 %v3192
        %v3194 = vperm.slane %v3188, %v3193
        %v3196 = vunpack.c.l.s4 1983009808
        %v3197 = vunpack.c.0.s8 %v3196
        %v3198 = vperm.slane %v3190, %v3197
        %v3199 = vrot.slane %v2816, 4
        %v3200 = vsel %vm802, %v3199, %v2720
        %v3201 = vrot.slane %v2720, 4
        %v3202 = vsel %vm802, %v2816, %v3201
        %v3204 = vunpack.c.l.s4 1983009808
        %v3205 = vunpack.c.0.s8 %v3204
        %v3206 = vperm.slane %v3200, %v3205
        %v3208 = vunpack.c.l.s4 1983009808
        %v3209 = vunpack.c.0.s8 %v3208
        %v3210 = vperm.slane %v3202, %v3209
        %v3211 = vrot.slane %v3206, 4
        %v3212 = vsel %vm802, %v3211, %v3194
        %v3213 = vrot.slane %v3194, 4
        %v3214 = vsel %vm802, %v3206, %v3213
        %v3216 = vunpack.c.l.s4 1934713408
        %v3217 = vunpack.c.0.s8 %v3216
        %v3218 = vperm.slane %v3212, %v3217
        %v3220 = vunpack.c.l.s4 1934713408
        %v3221 = vunpack.c.0.s8 %v3220
        %v3222 = vperm.slane %v3214, %v3221
        %v3223 = vrot.slane %v3210, 4
        %v3224 = vsel %vm802, %v3223, %v3198
        %v3225 = vrot.slane %v3198, 4
        %v3226 = vsel %vm802, %v3210, %v3225
        %v3228 = vunpack.c.l.s4 1934713408
        %v3229 = vunpack.c.0.s8 %v3228
        %v3230 = vperm.slane %v3224, %v3229
        %v3232 = vunpack.c.l.s4 1934713408
        %v3233 = vunpack.c.0.s8 %v3232
        %v3234 = vperm.slane %v3226, %v3233
        %v3235 = vrot.slane %v3218, 4
        %v3236 = vsel %vm802, 0.0, %v3235
        %v3237 = vrot.slane %v3222, 4
        %v3238 = vsel %vm802, 0.0, %v3237
        %v3239 = vrot.slane %v3230, 4
        %v3240 = vsel %vm802, 0.0, %v3239
        %v3241 = vrot.slane %v3234, 4
        %v3242 = vsel %vm802, 0.0, %v3241
        %v3243 = vrot.slane %v2770, 4
        %v3244 = vsel %vm802, %v3243, %v570
        %v3245 = vrot.slane %v570, 4
        %v3246 = vsel %vm802, %v2770, %v3245
        %v3248 = vunpack.c.l.s4 1983009808
        %v3249 = vunpack.c.0.s8 %v3248
        %v3250 = vperm.slane %v3244, %v3249
        %v3252 = vunpack.c.l.s4 1983009808
        %v3253 = vunpack.c.0.s8 %v3252
        %v3254 = vperm.slane %v3246, %v3253
        %v3255 = vrot.slane %v2818, 4
        %v3256 = vsel %vm802, %v3255, %v2722
        %v3257 = vrot.slane %v2722, 4
        %v3258 = vsel %vm802, %v2818, %v3257
        %v3260 = vunpack.c.l.s4 1983009808
        %v3261 = vunpack.c.0.s8 %v3260
        %v3262 = vperm.slane %v3256, %v3261
        %v3264 = vunpack.c.l.s4 1983009808
        %v3265 = vunpack.c.0.s8 %v3264
        %v3266 = vperm.slane %v3258, %v3265
        %v3267 = vrot.slane %v3262, 4
        %v3268 = vsel %vm802, %v3267, %v3250
        %v3269 = vrot.slane %v3250, 4
        %v3270 = vsel %vm802, %v3262, %v3269
        %v3272 = vunpack.c.l.s4 1934713408
        %v3273 = vunpack.c.0.s8 %v3272
        %v3274 = vperm.slane %v3268, %v3273
        %v3276 = vunpack.c.l.s4 1934713408
        %v3277 = vunpack.c.0.s8 %v3276
        %v3278 = vperm.slane %v3270, %v3277
        %v3279 = vrot.slane %v3266, 4
        %v3280 = vsel %vm802, %v3279, %v3254
        %v3281 = vrot.slane %v3254, 4
        %v3282 = vsel %vm802, %v3266, %v3281
        %v3284 = vunpack.c.l.s4 1934713408
        %v3285 = vunpack.c.0.s8 %v3284
        %v3286 = vperm.slane %v3280, %v3285
        %v3288 = vunpack.c.l.s4 1934713408
        %v3289 = vunpack.c.0.s8 %v3288
        %v3290 = vperm.slane %v3282, %v3289
        %v3291 = vrot.slane %v3274, 4
        %v3292 = vsel %vm802, 0.0, %v3291
        %v3293 = vrot.slane %v3278, 4
        %v3294 = vsel %vm802, 0.0, %v3293
        %v3295 = vrot.slane %v3286, 4
        %v3296 = vsel %vm802, 0.0, %v3295
        %v3297 = vrot.slane %v3290, 4
        %v3298 = vsel %vm802, 0.0, %v3297
        %v3299 = vrot.slane %v2772, 4
        %v3300 = vsel %vm802, %v3299, %v573
        %v3301 = vrot.slane %v573, 4
        %v3302 = vsel %vm802, %v2772, %v3301
        %v3304 = vunpack.c.l.s4 1983009808
        %v3305 = vunpack.c.0.s8 %v3304
        %v3306 = vperm.slane %v3300, %v3305
        %v3308 = vunpack.c.l.s4 1983009808
        %v3309 = vunpack.c.0.s8 %v3308
        %v3310 = vperm.slane %v3302, %v3309
        %v3311 = vrot.slane %v2820, 4
        %v3312 = vsel %vm802, %v3311, %v2724
        %v3313 = vrot.slane %v2724, 4
        %v3314 = vsel %vm802, %v2820, %v3313
        %v3316 = vunpack.c.l.s4 1983009808
        %v3317 = vunpack.c.0.s8 %v3316
        %v3318 = vperm.slane %v3312, %v3317
        %v3320 = vunpack.c.l.s4 1983009808
        %v3321 = vunpack.c.0.s8 %v3320
        %v3322 = vperm.slane %v3314, %v3321
        %v3323 = vrot.slane %v3318, 4
        %v3324 = vsel %vm802, %v3323, %v3306
        %v3325 = vrot.slane %v3306, 4
        %v3326 = vsel %vm802, %v3318, %v3325
        %v3328 = vunpack.c.l.s4 1934713408
        %v3329 = vunpack.c.0.s8 %v3328
        %v3330 = vperm.slane %v3324, %v3329
        %v3332 = vunpack.c.l.s4 1934713408
        %v3333 = vunpack.c.0.s8 %v3332
        %v3334 = vperm.slane %v3326, %v3333
        %v3335 = vrot.slane %v3322, 4
        %v3336 = vsel %vm802, %v3335, %v3310
        %v3337 = vrot.slane %v3310, 4
        %v3338 = vsel %vm802, %v3322, %v3337
        %v3340 = vunpack.c.l.s4 1934713408
        %v3341 = vunpack.c.0.s8 %v3340
        %v3342 = vperm.slane %v3336, %v3341
        %v3344 = vunpack.c.l.s4 1934713408
        %v3345 = vunpack.c.0.s8 %v3344
        %v3346 = vperm.slane %v3338, %v3345
        %v3347 = vrot.slane %v3330, 4
        %v3348 = vsel %vm802, 0.0, %v3347
        %v3349 = vrot.slane %v3334, 4
        %v3350 = vsel %vm802, 0.0, %v3349
        %v3351 = vrot.slane %v3342, 4
        %v3352 = vsel %vm802, 0.0, %v3351
        %v3353 = vrot.slane %v3346, 4
        %v3354 = vsel %vm802, 0.0, %v3353
        %v3355 = vrot.slane %v2774, 4
        %v3356 = vsel %vm802, %v3355, %v575
        %v3357 = vrot.slane %v575, 4
        %v3358 = vsel %vm802, %v2774, %v3357
        %v3360 = vunpack.c.l.s4 1983009808
        %v3361 = vunpack.c.0.s8 %v3360
        %v3362 = vperm.slane %v3356, %v3361
        %v3364 = vunpack.c.l.s4 1983009808
        %v3365 = vunpack.c.0.s8 %v3364
        %v3366 = vperm.slane %v3358, %v3365
        %v3367 = vrot.slane %v2822, 4
        %v3368 = vsel %vm802, %v3367, %v2726
        %v3369 = vrot.slane %v2726, 4
        %v3370 = vsel %vm802, %v2822, %v3369
        %v3372 = vunpack.c.l.s4 1983009808
        %v3373 = vunpack.c.0.s8 %v3372
        %v3374 = vperm.slane %v3368, %v3373
        %v3376 = vunpack.c.l.s4 1983009808
        %v3377 = vunpack.c.0.s8 %v3376
        %v3378 = vperm.slane %v3370, %v3377
        %v3379 = vrot.slane %v3374, 4
        %v3380 = vsel %vm802, %v3379, %v3362
        %v3381 = vrot.slane %v3362, 4
        %v3382 = vsel %vm802, %v3374, %v3381
        %v3384 = vunpack.c.l.s4 1934713408
        %v3385 = vunpack.c.0.s8 %v3384
        %v3386 = vperm.slane %v3380, %v3385
        %v3388 = vunpack.c.l.s4 1934713408
        %v3389 = vunpack.c.0.s8 %v3388
        %v3390 = vperm.slane %v3382, %v3389
        %v3391 = vrot.slane %v3378, 4
        %v3392 = vsel %vm802, %v3391, %v3366
        %v3393 = vrot.slane %v3366, 4
        %v3394 = vsel %vm802, %v3378, %v3393
        %v3396 = vunpack.c.l.s4 1934713408
        %v3397 = vunpack.c.0.s8 %v3396
        %v3398 = vperm.slane %v3392, %v3397
        %v3400 = vunpack.c.l.s4 1934713408
        %v3401 = vunpack.c.0.s8 %v3400
        %v3402 = vperm.slane %v3394, %v3401
        %v3403 = vrot.slane %v3386, 4
        %v3404 = vsel %vm802, 0.0, %v3403
        %v3405 = vrot.slane %v3390, 4
        %v3406 = vsel %vm802, 0.0, %v3405
        %v3407 = vrot.slane %v3398, 4
        %v3408 = vsel %vm802, 0.0, %v3407
        %v3409 = vrot.slane %v3402, 4
        %v3410 = vsel %vm802, 0.0, %v3409
        %v3411 = vrot.slane %v2776, 4
        %v3412 = vsel %vm802, %v3411, %v578
        %v3413 = vrot.slane %v578, 4
        %v3414 = vsel %vm802, %v2776, %v3413
        %v3416 = vunpack.c.l.s4 1983009808
        %v3417 = vunpack.c.0.s8 %v3416
        %v3418 = vperm.slane %v3412, %v3417
        %v3420 = vunpack.c.l.s4 1983009808
        %v3421 = vunpack.c.0.s8 %v3420
        %v3422 = vperm.slane %v3414, %v3421
        %v3423 = vrot.slane %v2824, 4
        %v3424 = vsel %vm802, %v3423, %v2728
        %v3425 = vrot.slane %v2728, 4
        %v3426 = vsel %vm802, %v2824, %v3425
        %v3428 = vunpack.c.l.s4 1983009808
        %v3429 = vunpack.c.0.s8 %v3428
        %v3430 = vperm.slane %v3424, %v3429
        %v3432 = vunpack.c.l.s4 1983009808
        %v3433 = vunpack.c.0.s8 %v3432
        %v3434 = vperm.slane %v3426, %v3433
        %v3435 = vrot.slane %v3430, 4
        %v3436 = vsel %vm802, %v3435, %v3418
        %v3437 = vrot.slane %v3418, 4
        %v3438 = vsel %vm802, %v3430, %v3437
        %v3440 = vunpack.c.l.s4 1934713408
        %v3441 = vunpack.c.0.s8 %v3440
        %v3442 = vperm.slane %v3436, %v3441
        %v3444 = vunpack.c.l.s4 1934713408
        %v3445 = vunpack.c.0.s8 %v3444
        %v3446 = vperm.slane %v3438, %v3445
        %v3447 = vrot.slane %v3434, 4
        %v3448 = vsel %vm802, %v3447, %v3422
        %v3449 = vrot.slane %v3422, 4
        %v3450 = vsel %vm802, %v3434, %v3449
        %v3452 = vunpack.c.l.s4 1934713408
        %v3453 = vunpack.c.0.s8 %v3452
        %v3454 = vperm.slane %v3448, %v3453
        %v3456 = vunpack.c.l.s4 1934713408
        %v3457 = vunpack.c.0.s8 %v3456
        %v3458 = vperm.slane %v3450, %v3457
        %v3459 = vrot.slane %v3442, 4
        %v3460 = vsel %vm802, 0.0, %v3459
        %v3461 = vrot.slane %v3446, 4
        %v3462 = vsel %vm802, 0.0, %v3461
        %v3463 = vrot.slane %v3454, 4
        %v3464 = vsel %vm802, 0.0, %v3463
        %v3465 = vrot.slane %v3458, 4
        %v3466 = vsel %vm802, 0.0, %v3465
        %v3467 = vrot.slane %v2778, 4
        %v3468 = vsel %vm802, %v3467, %v580
        %v3469 = vrot.slane %v580, 4
        %v3470 = vsel %vm802, %v2778, %v3469
        %v3472 = vunpack.c.l.s4 1983009808
        %v3473 = vunpack.c.0.s8 %v3472
        %v3474 = vperm.slane %v3468, %v3473
        %v3476 = vunpack.c.l.s4 1983009808
        %v3477 = vunpack.c.0.s8 %v3476
        %v3478 = vperm.slane %v3470, %v3477
        %v3479 = vrot.slane %v2826, 4
        %v3480 = vsel %vm802, %v3479, %v2730
        %v3481 = vrot.slane %v2730, 4
        %v3482 = vsel %vm802, %v2826, %v3481
        %v3484 = vunpack.c.l.s4 1983009808
        %v3485 = vunpack.c.0.s8 %v3484
        %v3486 = vperm.slane %v3480, %v3485
        %v3488 = vunpack.c.l.s4 1983009808
        %v3489 = vunpack.c.0.s8 %v3488
        %v3490 = vperm.slane %v3482, %v3489
        %v3491 = vrot.slane %v3486, 4
        %v3492 = vsel %vm802, %v3491, %v3474
        %v3493 = vrot.slane %v3474, 4
        %v3494 = vsel %vm802, %v3486, %v3493
        %v3496 = vunpack.c.l.s4 1934713408
        %v3497 = vunpack.c.0.s8 %v3496
        %v3498 = vperm.slane %v3492, %v3497
        %v3500 = vunpack.c.l.s4 1934713408
        %v3501 = vunpack.c.0.s8 %v3500
        %v3502 = vperm.slane %v3494, %v3501
        %v3503 = vrot.slane %v3490, 4
        %v3504 = vsel %vm802, %v3503, %v3478
        %v3505 = vrot.slane %v3478, 4
        %v3506 = vsel %vm802, %v3490, %v3505
        %v3508 = vunpack.c.l.s4 1934713408
        %v3509 = vunpack.c.0.s8 %v3508
        %v3510 = vperm.slane %v3504, %v3509
        %v3512 = vunpack.c.l.s4 1934713408
        %v3513 = vunpack.c.0.s8 %v3512
        %v3514 = vperm.slane %v3506, %v3513
        %v3515 = vrot.slane %v3498, 4
        %v3516 = vsel %vm802, 0.0, %v3515
        %v3517 = vrot.slane %v3502, 4
        %v3518 = vsel %vm802, 0.0, %v3517
        %v3519 = vrot.slane %v3510, 4
        %v3520 = vsel %vm802, 0.0, %v3519
        %v3521 = vrot.slane %v3514, 4
        %v3522 = vsel %vm802, 0.0, %v3521
        %v3523 = vrot.slane %v2780, 4
        %v3524 = vsel %vm802, %v3523, %v583
        %v3525 = vrot.slane %v583, 4
        %v3526 = vsel %vm802, %v2780, %v3525
        %v3528 = vunpack.c.l.s4 1983009808
        %v3529 = vunpack.c.0.s8 %v3528
        %v3530 = vperm.slane %v3524, %v3529
        %v3532 = vunpack.c.l.s4 1983009808
        %v3533 = vunpack.c.0.s8 %v3532
        %v3534 = vperm.slane %v3526, %v3533
        %v3535 = vrot.slane %v2828, 4
        %v3536 = vsel %vm802, %v3535, %v2732
        %v3537 = vrot.slane %v2732, 4
        %v3538 = vsel %vm802, %v2828, %v3537
        %v3540 = vunpack.c.l.s4 1983009808
        %v3541 = vunpack.c.0.s8 %v3540
        %v3542 = vperm.slane %v3536, %v3541
        %v3544 = vunpack.c.l.s4 1983009808
        %v3545 = vunpack.c.0.s8 %v3544
        %v3546 = vperm.slane %v3538, %v3545
        %v3547 = vrot.slane %v3542, 4
        %v3548 = vsel %vm802, %v3547, %v3530
        %v3549 = vrot.slane %v3530, 4
        %v3550 = vsel %vm802, %v3542, %v3549
        %v3552 = vunpack.c.l.s4 1934713408
        %v3553 = vunpack.c.0.s8 %v3552
        %v3554 = vperm.slane %v3548, %v3553
        %v3556 = vunpack.c.l.s4 1934713408
        %v3557 = vunpack.c.0.s8 %v3556
        %v3558 = vperm.slane %v3550, %v3557
        %v3559 = vrot.slane %v3546, 4
        %v3560 = vsel %vm802, %v3559, %v3534
        %v3561 = vrot.slane %v3534, 4
        %v3562 = vsel %vm802, %v3546, %v3561
        %v3564 = vunpack.c.l.s4 1934713408
        %v3565 = vunpack.c.0.s8 %v3564
        %v3566 = vperm.slane %v3560, %v3565
        %v3568 = vunpack.c.l.s4 1934713408
        %v3569 = vunpack.c.0.s8 %v3568
        %v3570 = vperm.slane %v3562, %v3569
        %v3571 = vrot.slane %v3554, 4
        %v3572 = vsel %vm802, 0.0, %v3571
        %v3573 = vrot.slane %v3558, 4
        %v3574 = vsel %vm802, 0.0, %v3573
        %v3575 = vrot.slane %v3566, 4
        %v3576 = vsel %vm802, 0.0, %v3575
        %v3577 = vrot.slane %v3570, 4
        %v3578 = vsel %vm802, 0.0, %v3577
        %v3579 = vrot.slane %v2782, 4
        %v3580 = vsel %vm802, %v3579, %v585
        %v3581 = vrot.slane %v585, 4
        %v3582 = vsel %vm802, %v2782, %v3581
        %v3584 = vunpack.c.l.s4 1983009808
        %v3585 = vunpack.c.0.s8 %v3584
        %v3586 = vperm.slane %v3580, %v3585
        %v3588 = vunpack.c.l.s4 1983009808
        %v3589 = vunpack.c.0.s8 %v3588
        %v3590 = vperm.slane %v3582, %v3589
        %v3591 = vrot.slane %v2830, 4
        %v3592 = vsel %vm802, %v3591, %v2734
        %v3593 = vrot.slane %v2734, 4
        %v3594 = vsel %vm802, %v2830, %v3593
        %v3596 = vunpack.c.l.s4 1983009808
        %v3597 = vunpack.c.0.s8 %v3596
        %v3598 = vperm.slane %v3592, %v3597
        %v3600 = vunpack.c.l.s4 1983009808
        %v3601 = vunpack.c.0.s8 %v3600
        %v3602 = vperm.slane %v3594, %v3601
        %v3603 = vrot.slane %v3598, 4
        %v3604 = vsel %vm802, %v3603, %v3586
        %v3605 = vrot.slane %v3586, 4
        %v3606 = vsel %vm802, %v3598, %v3605
        %v3608 = vunpack.c.l.s4 1934713408
        %v3609 = vunpack.c.0.s8 %v3608
        %v3610 = vperm.slane %v3604, %v3609
        %v3612 = vunpack.c.l.s4 1934713408
        %v3613 = vunpack.c.0.s8 %v3612
        %v3614 = vperm.slane %v3606, %v3613
        %v3615 = vrot.slane %v3602, 4
        %v3616 = vsel %vm802, %v3615, %v3590
        %v3617 = vrot.slane %v3590, 4
        %v3618 = vsel %vm802, %v3602, %v3617
        %v3620 = vunpack.c.l.s4 1934713408
        %v3621 = vunpack.c.0.s8 %v3620
        %v3622 = vperm.slane %v3616, %v3621
        %v3624 = vunpack.c.l.s4 1934713408
        %v3625 = vunpack.c.0.s8 %v3624
        %v3626 = vperm.slane %v3618, %v3625
        %v3627 = vrot.slane %v3610, 4
        %v3628 = vsel %vm802, 0.0, %v3627
        %v3629 = vrot.slane %v3614, 4
        %v3630 = vsel %vm802, 0.0, %v3629
        %v3631 = vrot.slane %v3622, 4
        %v3632 = vsel %vm802, 0.0, %v3631
        %v3633 = vrot.slane %v3626, 4
        %v3634 = vsel %vm802, 0.0, %v3633
        %v3635 = vrot.slane %v2784, 4
        %v3636 = vsel %vm802, %v3635, %v588
        %v3637 = vrot.slane %v588, 4
        %v3638 = vsel %vm802, %v2784, %v3637
        %v3640 = vunpack.c.l.s4 1983009808
        %v3641 = vunpack.c.0.s8 %v3640
        %v3642 = vperm.slane %v3636, %v3641
        %v3644 = vunpack.c.l.s4 1983009808
        %v3645 = vunpack.c.0.s8 %v3644
        %v3646 = vperm.slane %v3638, %v3645
        %v3647 = vrot.slane %v2832, 4
        %v3648 = vsel %vm802, %v3647, %v2736
        %v3649 = vrot.slane %v2736, 4
        %v3650 = vsel %vm802, %v2832, %v3649
        %v3652 = vunpack.c.l.s4 1983009808
        %v3653 = vunpack.c.0.s8 %v3652
        %v3654 = vperm.slane %v3648, %v3653
        %v3656 = vunpack.c.l.s4 1983009808
        %v3657 = vunpack.c.0.s8 %v3656
        %v3658 = vperm.slane %v3650, %v3657
        %v3659 = vrot.slane %v3654, 4
        %v3660 = vsel %vm802, %v3659, %v3642
        %v3661 = vrot.slane %v3642, 4
        %v3662 = vsel %vm802, %v3654, %v3661
        %v3664 = vunpack.c.l.s4 1934713408
        %v3665 = vunpack.c.0.s8 %v3664
        %v3666 = vperm.slane %v3660, %v3665
        %v3668 = vunpack.c.l.s4 1934713408
        %v3669 = vunpack.c.0.s8 %v3668
        %v3670 = vperm.slane %v3662, %v3669
        %v3671 = vrot.slane %v3658, 4
        %v3672 = vsel %vm802, %v3671, %v3646
        %v3673 = vrot.slane %v3646, 4
        %v3674 = vsel %vm802, %v3658, %v3673
        %v3676 = vunpack.c.l.s4 1934713408
        %v3677 = vunpack.c.0.s8 %v3676
        %v3678 = vperm.slane %v3672, %v3677
        %v3680 = vunpack.c.l.s4 1934713408
        %v3681 = vunpack.c.0.s8 %v3680
        %v3682 = vperm.slane %v3674, %v3681
        %v3683 = vrot.slane %v3666, 4
        %v3684 = vsel %vm802, 0.0, %v3683
        %v3685 = vrot.slane %v3670, 4
        %v3686 = vsel %vm802, 0.0, %v3685
        %v3687 = vrot.slane %v3678, 4
        %v3688 = vsel %vm802, 0.0, %v3687
        %v3689 = vrot.slane %v3682, 4
        %v3690 = vsel %vm802, 0.0, %v3689
        %v3691 = vrot.slane %v2786, 4
        %v3692 = vsel %vm802, %v3691, %v590
        %v3693 = vrot.slane %v590, 4
        %v3694 = vsel %vm802, %v2786, %v3693
        %v3696 = vunpack.c.l.s4 1983009808
        %v3697 = vunpack.c.0.s8 %v3696
        %v3698 = vperm.slane %v3692, %v3697
        %v3700 = vunpack.c.l.s4 1983009808
        %v3701 = vunpack.c.0.s8 %v3700
        %v3702 = vperm.slane %v3694, %v3701
        %v3703 = vrot.slane %v2834, 4
        %v3704 = vsel %vm802, %v3703, %v2738
        %v3705 = vrot.slane %v2738, 4
        %v3706 = vsel %vm802, %v2834, %v3705
        %v3708 = vunpack.c.l.s4 1983009808
        %v3709 = vunpack.c.0.s8 %v3708
        %v3710 = vperm.slane %v3704, %v3709
        %v3712 = vunpack.c.l.s4 1983009808
        %v3713 = vunpack.c.0.s8 %v3712
        %v3714 = vperm.slane %v3706, %v3713
        %v3715 = vrot.slane %v3710, 4
        %v3716 = vsel %vm802, %v3715, %v3698
        %v3717 = vrot.slane %v3698, 4
        %v3718 = vsel %vm802, %v3710, %v3717
        %v3720 = vunpack.c.l.s4 1934713408
        %v3721 = vunpack.c.0.s8 %v3720
        %v3722 = vperm.slane %v3716, %v3721
        %v3724 = vunpack.c.l.s4 1934713408
        %v3725 = vunpack.c.0.s8 %v3724
        %v3726 = vperm.slane %v3718, %v3725
        %v3727 = vrot.slane %v3714, 4
        %v3728 = vsel %vm802, %v3727, %v3702
        %v3729 = vrot.slane %v3702, 4
        %v3730 = vsel %vm802, %v3714, %v3729
        %v3732 = vunpack.c.l.s4 1934713408
        %v3733 = vunpack.c.0.s8 %v3732
        %v3734 = vperm.slane %v3728, %v3733
        %v3736 = vunpack.c.l.s4 1934713408
        %v3737 = vunpack.c.0.s8 %v3736
        %v3738 = vperm.slane %v3730, %v3737
        %v3739 = vrot.slane %v3722, 4
        %v3740 = vsel %vm802, 0.0, %v3739
        %v3741 = vrot.slane %v3726, 4
        %v3742 = vsel %vm802, 0.0, %v3741
        %v3743 = vrot.slane %v3734, 4
        %v3744 = vsel %vm802, 0.0, %v3743
        %v3745 = vrot.slane %v3738, 4
        %v3746 = vsel %vm802, 0.0, %v3745
        %v3747 = vsel %vm802, %v2901, %v2882
        %v3749 = vunpack.c.l.s4 1983009808
        %v3750 = vunpack.c.0.s8 %v3749
        %v3751 = vperm.slane %v3747, %v3750
        %v3752 = vrot.slane %v2902, 4
        %v3753 = vsel %vm802, %v3752, %v2900
        %v3755 = vunpack.c.l.s4 1983009808
        %v3756 = vunpack.c.0.s8 %v3755
        %v3757 = vperm.slane %v3753, %v3756
        %v3758 = vsel %vm802, %v2905, %v2894
        %v3760 = vunpack.c.l.s4 1983009808
        %v3761 = vunpack.c.0.s8 %v3760
        %v3762 = vperm.slane %v3758, %v3761
        %v3763 = vrot.slane %v2906, 4
        %v3764 = vsel %vm802, %v3763, %v2904
        %v3766 = vunpack.c.l.s4 1983009808
        %v3767 = vunpack.c.0.s8 %v3766
        %v3768 = vperm.slane %v3764, %v3767
        %v3769 = vrot.slane %v3757, 4
        %v3770 = vsel %vm802, %v3769, %v3751
        %v3771 = vrot.slane %v3751, 4
        %v3772 = vsel %vm802, %v3757, %v3771
        %v3774 = vunpack.c.l.s4 1934713408
        %v3775 = vunpack.c.0.s8 %v3774
        %v3776 = vperm.slane %v3770, %v3775
        %v3778 = vunpack.c.l.s4 1934713408
        %v3779 = vunpack.c.0.s8 %v3778
        %v3780 = vperm.slane %v3772, %v3779
        %v3781 = vrot.slane %v3768, 4
        %v3782 = vsel %vm802, %v3781, %v3762
        %v3783 = vrot.slane %v3762, 4
        %v3784 = vsel %vm802, %v3768, %v3783
        %v3786 = vunpack.c.l.s4 1934713408
        %v3787 = vunpack.c.0.s8 %v3786
        %v3788 = vperm.slane %v3782, %v3787
        %v3790 = vunpack.c.l.s4 1934713408
        %v3791 = vunpack.c.0.s8 %v3790
        %v3792 = vperm.slane %v3784, %v3791
        %v3793 = vrot.slane %v3788, 4
        %v3794 = vsel %vm802, %v3793, %v3776
        %v3795 = vrot.slane %v3776, 4
        %v3796 = vsel %vm802, %v3788, %v3795
        %v3797 = vrot.slane %v3792, 4
        %v3798 = vsel %vm802, %v3797, %v3780
        %v3799 = vrot.slane %v3780, 4
        %v3800 = vsel %vm802, %v3792, %v3799
        %v3801 = vsel %vm802, %v2957, %v2938
        %v3803 = vunpack.c.l.s4 1983009808
        %v3804 = vunpack.c.0.s8 %v3803
        %v3805 = vperm.slane %v3801, %v3804
        %v3806 = vrot.slane %v2958, 4
        %v3807 = vsel %vm802, %v3806, %v2956
        %v3809 = vunpack.c.l.s4 1983009808
        %v3810 = vunpack.c.0.s8 %v3809
        %v3811 = vperm.slane %v3807, %v3810
        %v3812 = vsel %vm802, %v2961, %v2950
        %v3814 = vunpack.c.l.s4 1983009808
        %v3815 = vunpack.c.0.s8 %v3814
        %v3816 = vperm.slane %v3812, %v3815
        %v3817 = vrot.slane %v2962, 4
        %v3818 = vsel %vm802, %v3817, %v2960
        %v3820 = vunpack.c.l.s4 1983009808
        %v3821 = vunpack.c.0.s8 %v3820
        %v3822 = vperm.slane %v3818, %v3821
        %v3823 = vrot.slane %v3811, 4
        %v3824 = vsel %vm802, %v3823, %v3805
        %v3825 = vrot.slane %v3805, 4
        %v3826 = vsel %vm802, %v3811, %v3825
        %v3828 = vunpack.c.l.s4 1934713408
        %v3829 = vunpack.c.0.s8 %v3828
        %v3830 = vperm.slane %v3824, %v3829
        %v3832 = vunpack.c.l.s4 1934713408
        %v3833 = vunpack.c.0.s8 %v3832
        %v3834 = vperm.slane %v3826, %v3833
        %v3835 = vrot.slane %v3822, 4
        %v3836 = vsel %vm802, %v3835, %v3816
        %v3837 = vrot.slane %v3816, 4
        %v3838 = vsel %vm802, %v3822, %v3837
        %v3840 = vunpack.c.l.s4 1934713408
        %v3841 = vunpack.c.0.s8 %v3840
        %v3842 = vperm.slane %v3836, %v3841
        %v3844 = vunpack.c.l.s4 1934713408
        %v3845 = vunpack.c.0.s8 %v3844
        %v3846 = vperm.slane %v3838, %v3845
        %v3847 = vrot.slane %v3842, 4
        %v3848 = vsel %vm802, %v3847, %v3830
        %v3849 = vrot.slane %v3830, 4
        %v3850 = vsel %vm802, %v3842, %v3849
        %v3851 = vrot.slane %v3846, 4
        %v3852 = vsel %vm802, %v3851, %v3834
        %v3853 = vrot.slane %v3834, 4
        %v3854 = vsel %vm802, %v3846, %v3853
        %v3855 = vsel %vm802, %v3013, %v2994
        %v3857 = vunpack.c.l.s4 1983009808
        %v3858 = vunpack.c.0.s8 %v3857
        %v3859 = vperm.slane %v3855, %v3858
        %v3860 = vrot.slane %v3014, 4
        %v3861 = vsel %vm802, %v3860, %v3012
        %v3863 = vunpack.c.l.s4 1983009808
        %v3864 = vunpack.c.0.s8 %v3863
        %v3865 = vperm.slane %v3861, %v3864
        %v3866 = vsel %vm802, %v3017, %v3006
        %v3868 = vunpack.c.l.s4 1983009808
        %v3869 = vunpack.c.0.s8 %v3868
        %v3870 = vperm.slane %v3866, %v3869
        %v3871 = vrot.slane %v3018, 4
        %v3872 = vsel %vm802, %v3871, %v3016
        %v3874 = vunpack.c.l.s4 1983009808
        %v3875 = vunpack.c.0.s8 %v3874
        %v3876 = vperm.slane %v3872, %v3875
        %v3877 = vrot.slane %v3865, 4
        %v3878 = vsel %vm802, %v3877, %v3859
        %v3879 = vrot.slane %v3859, 4
        %v3880 = vsel %vm802, %v3865, %v3879
        %v3882 = vunpack.c.l.s4 1934713408
        %v3883 = vunpack.c.0.s8 %v3882
        %v3884 = vperm.slane %v3878, %v3883
        %v3886 = vunpack.c.l.s4 1934713408
        %v3887 = vunpack.c.0.s8 %v3886
        %v3888 = vperm.slane %v3880, %v3887
        %v3889 = vrot.slane %v3876, 4
        %v3890 = vsel %vm802, %v3889, %v3870
        %v3891 = vrot.slane %v3870, 4
        %v3892 = vsel %vm802, %v3876, %v3891
        %v3894 = vunpack.c.l.s4 1934713408
        %v3895 = vunpack.c.0.s8 %v3894
        %v3896 = vperm.slane %v3890, %v3895
        %v3898 = vunpack.c.l.s4 1934713408
        %v3899 = vunpack.c.0.s8 %v3898
        %v3900 = vperm.slane %v3892, %v3899
        %v3901 = vrot.slane %v3896, 4
        %v3902 = vsel %vm802, %v3901, %v3884
        %v3903 = vrot.slane %v3884, 4
        %v3904 = vsel %vm802, %v3896, %v3903
        %v3905 = vrot.slane %v3900, 4
        %v3906 = vsel %vm802, %v3905, %v3888
        %v3907 = vrot.slane %v3888, 4
        %v3908 = vsel %vm802, %v3900, %v3907
        %v3909 = vsel %vm802, %v3069, %v3050
        %v3911 = vunpack.c.l.s4 1983009808
        %v3912 = vunpack.c.0.s8 %v3911
        %v3913 = vperm.slane %v3909, %v3912
        %v3914 = vrot.slane %v3070, 4
        %v3915 = vsel %vm802, %v3914, %v3068
        %v3917 = vunpack.c.l.s4 1983009808
        %v3918 = vunpack.c.0.s8 %v3917
        %v3919 = vperm.slane %v3915, %v3918
        %v3920 = vsel %vm802, %v3073, %v3062
        %v3922 = vunpack.c.l.s4 1983009808
        %v3923 = vunpack.c.0.s8 %v3922
        %v3924 = vperm.slane %v3920, %v3923
        %v3925 = vrot.slane %v3074, 4
        %v3926 = vsel %vm802, %v3925, %v3072
        %v3928 = vunpack.c.l.s4 1983009808
        %v3929 = vunpack.c.0.s8 %v3928
        %v3930 = vperm.slane %v3926, %v3929
        %v3931 = vrot.slane %v3919, 4
        %v3932 = vsel %vm802, %v3931, %v3913
        %v3933 = vrot.slane %v3913, 4
        %v3934 = vsel %vm802, %v3919, %v3933
        %v3936 = vunpack.c.l.s4 1934713408
        %v3937 = vunpack.c.0.s8 %v3936
        %v3938 = vperm.slane %v3932, %v3937
        %v3940 = vunpack.c.l.s4 1934713408
        %v3941 = vunpack.c.0.s8 %v3940
        %v3942 = vperm.slane %v3934, %v3941
        %v3943 = vrot.slane %v3930, 4
        %v3944 = vsel %vm802, %v3943, %v3924
        %v3945 = vrot.slane %v3924, 4
        %v3946 = vsel %vm802, %v3930, %v3945
        %v3948 = vunpack.c.l.s4 1934713408
        %v3949 = vunpack.c.0.s8 %v3948
        %v3950 = vperm.slane %v3944, %v3949
        %v3952 = vunpack.c.l.s4 1934713408
        %v3953 = vunpack.c.0.s8 %v3952
        %v3954 = vperm.slane %v3946, %v3953
        %v3955 = vrot.slane %v3950, 4
        %v3956 = vsel %vm802, %v3955, %v3938
        %v3957 = vrot.slane %v3938, 4
        %v3958 = vsel %vm802, %v3950, %v3957
        %v3959 = vrot.slane %v3954, 4
        %v3960 = vsel %vm802, %v3959, %v3942
        %v3961 = vrot.slane %v3942, 4
        %v3962 = vsel %vm802, %v3954, %v3961
        %v3963 = vsel %vm802, %v3125, %v3106
        %v3965 = vunpack.c.l.s4 1983009808
        %v3966 = vunpack.c.0.s8 %v3965
        %v3967 = vperm.slane %v3963, %v3966
        %v3968 = vrot.slane %v3126, 4
        %v3969 = vsel %vm802, %v3968, %v3124
        %v3971 = vunpack.c.l.s4 1983009808
        %v3972 = vunpack.c.0.s8 %v3971
        %v3973 = vperm.slane %v3969, %v3972
        %v3974 = vsel %vm802, %v3129, %v3118
        %v3976 = vunpack.c.l.s4 1983009808
        %v3977 = vunpack.c.0.s8 %v3976
        %v3978 = vperm.slane %v3974, %v3977
        %v3979 = vrot.slane %v3130, 4
        %v3980 = vsel %vm802, %v3979, %v3128
        %v3982 = vunpack.c.l.s4 1983009808
        %v3983 = vunpack.c.0.s8 %v3982
        %v3984 = vperm.slane %v3980, %v3983
        %v3985 = vrot.slane %v3973, 4
        %v3986 = vsel %vm802, %v3985, %v3967
        %v3987 = vrot.slane %v3967, 4
        %v3988 = vsel %vm802, %v3973, %v3987
        %v3990 = vunpack.c.l.s4 1934713408
        %v3991 = vunpack.c.0.s8 %v3990
        %v3992 = vperm.slane %v3986, %v3991
        %v3994 = vunpack.c.l.s4 1934713408
        %v3995 = vunpack.c.0.s8 %v3994
        %v3996 = vperm.slane %v3988, %v3995
        %v3997 = vrot.slane %v3984, 4
        %v3998 = vsel %vm802, %v3997, %v3978
        %v3999 = vrot.slane %v3978, 4
        %v4000 = vsel %vm802, %v3984, %v3999
        %v4002 = vunpack.c.l.s4 1934713408
        %v4003 = vunpack.c.0.s8 %v4002
        %v4004 = vperm.slane %v3998, %v4003
        %v4006 = vunpack.c.l.s4 1934713408
        %v4007 = vunpack.c.0.s8 %v4006
        %v4008 = vperm.slane %v4000, %v4007
        %v4009 = vrot.slane %v4004, 4
        %v4010 = vsel %vm802, %v4009, %v3992
        %v4011 = vrot.slane %v3992, 4
        %v4012 = vsel %vm802, %v4004, %v4011
        %v4013 = vrot.slane %v4008, 4
        %v4014 = vsel %vm802, %v4013, %v3996
        %v4015 = vrot.slane %v3996, 4
        %v4016 = vsel %vm802, %v4008, %v4015
        %v4017 = vsel %vm802, %v3181, %v3162
        %v4019 = vunpack.c.l.s4 1983009808
        %v4020 = vunpack.c.0.s8 %v4019
        %v4021 = vperm.slane %v4017, %v4020
        %v4022 = vrot.slane %v3182, 4
        %v4023 = vsel %vm802, %v4022, %v3180
        %v4025 = vunpack.c.l.s4 1983009808
        %v4026 = vunpack.c.0.s8 %v4025
        %v4027 = vperm.slane %v4023, %v4026
        %v4028 = vsel %vm802, %v3185, %v3174
        %v4030 = vunpack.c.l.s4 1983009808
        %v4031 = vunpack.c.0.s8 %v4030
        %v4032 = vperm.slane %v4028, %v4031
        %v4033 = vrot.slane %v3186, 4
        %v4034 = vsel %vm802, %v4033, %v3184
        %v4036 = vunpack.c.l.s4 1983009808
        %v4037 = vunpack.c.0.s8 %v4036
        %v4038 = vperm.slane %v4034, %v4037
        %v4039 = vrot.slane %v4027, 4
        %v4040 = vsel %vm802, %v4039, %v4021
        %v4041 = vrot.slane %v4021, 4
        %v4042 = vsel %vm802, %v4027, %v4041
        %v4044 = vunpack.c.l.s4 1934713408
        %v4045 = vunpack.c.0.s8 %v4044
        %v4046 = vperm.slane %v4040, %v4045
        %v4048 = vunpack.c.l.s4 1934713408
        %v4049 = vunpack.c.0.s8 %v4048
        %v4050 = vperm.slane %v4042, %v4049
        %v4051 = vrot.slane %v4038, 4
        %v4052 = vsel %vm802, %v4051, %v4032
        %v4053 = vrot.slane %v4032, 4
        %v4054 = vsel %vm802, %v4038, %v4053
        %v4056 = vunpack.c.l.s4 1934713408
        %v4057 = vunpack.c.0.s8 %v4056
        %v4058 = vperm.slane %v4052, %v4057
        %v4060 = vunpack.c.l.s4 1934713408
        %v4061 = vunpack.c.0.s8 %v4060
        %v4062 = vperm.slane %v4054, %v4061
        %v4063 = vrot.slane %v4058, 4
        %v4064 = vsel %vm802, %v4063, %v4046
        %v4065 = vrot.slane %v4046, 4
        %v4066 = vsel %vm802, %v4058, %v4065
        %v4067 = vrot.slane %v4062, 4
        %v4068 = vsel %vm802, %v4067, %v4050
        %v4069 = vrot.slane %v4050, 4
        %v4070 = vsel %vm802, %v4062, %v4069
        %v4071 = vsel %vm802, %v3237, %v3218
        %v4073 = vunpack.c.l.s4 1983009808
        %v4074 = vunpack.c.0.s8 %v4073
        %v4075 = vperm.slane %v4071, %v4074
        %v4076 = vrot.slane %v3238, 4
        %v4077 = vsel %vm802, %v4076, %v3236
        %v4079 = vunpack.c.l.s4 1983009808
        %v4080 = vunpack.c.0.s8 %v4079
        %v4081 = vperm.slane %v4077, %v4080
        %v4082 = vsel %vm802, %v3241, %v3230
        %v4084 = vunpack.c.l.s4 1983009808
        %v4085 = vunpack.c.0.s8 %v4084
        %v4086 = vperm.slane %v4082, %v4085
        %v4087 = vrot.slane %v3242, 4
        %v4088 = vsel %vm802, %v4087, %v3240
        %v4090 = vunpack.c.l.s4 1983009808
        %v4091 = vunpack.c.0.s8 %v4090
        %v4092 = vperm.slane %v4088, %v4091
        %v4093 = vrot.slane %v4081, 4
        %v4094 = vsel %vm802, %v4093, %v4075
        %v4095 = vrot.slane %v4075, 4
        %v4096 = vsel %vm802, %v4081, %v4095
        %v4098 = vunpack.c.l.s4 1934713408
        %v4099 = vunpack.c.0.s8 %v4098
        %v4100 = vperm.slane %v4094, %v4099
        %v4102 = vunpack.c.l.s4 1934713408
        %v4103 = vunpack.c.0.s8 %v4102
        %v4104 = vperm.slane %v4096, %v4103
        %v4105 = vrot.slane %v4092, 4
        %v4106 = vsel %vm802, %v4105, %v4086
        %v4107 = vrot.slane %v4086, 4
        %v4108 = vsel %vm802, %v4092, %v4107
        %v4110 = vunpack.c.l.s4 1934713408
        %v4111 = vunpack.c.0.s8 %v4110
        %v4112 = vperm.slane %v4106, %v4111
        %v4114 = vunpack.c.l.s4 1934713408
        %v4115 = vunpack.c.0.s8 %v4114
        %v4116 = vperm.slane %v4108, %v4115
        %v4117 = vrot.slane %v4112, 4
        %v4118 = vsel %vm802, %v4117, %v4100
        %v4119 = vrot.slane %v4100, 4
        %v4120 = vsel %vm802, %v4112, %v4119
        %v4121 = vrot.slane %v4116, 4
        %v4122 = vsel %vm802, %v4121, %v4104
        %v4123 = vrot.slane %v4104, 4
        %v4124 = vsel %vm802, %v4116, %v4123
        %v4125 = vsel %vm802, %v3293, %v3274
        %v4127 = vunpack.c.l.s4 1983009808
        %v4128 = vunpack.c.0.s8 %v4127
        %v4129 = vperm.slane %v4125, %v4128
        %v4130 = vrot.slane %v3294, 4
        %v4131 = vsel %vm802, %v4130, %v3292
        %v4133 = vunpack.c.l.s4 1983009808
        %v4134 = vunpack.c.0.s8 %v4133
        %v4135 = vperm.slane %v4131, %v4134
        %v4136 = vsel %vm802, %v3297, %v3286
        %v4138 = vunpack.c.l.s4 1983009808
        %v4139 = vunpack.c.0.s8 %v4138
        %v4140 = vperm.slane %v4136, %v4139
        %v4141 = vrot.slane %v3298, 4
        %v4142 = vsel %vm802, %v4141, %v3296
        %v4144 = vunpack.c.l.s4 1983009808
        %v4145 = vunpack.c.0.s8 %v4144
        %v4146 = vperm.slane %v4142, %v4145
        %v4147 = vrot.slane %v4135, 4
        %v4148 = vsel %vm802, %v4147, %v4129
        %v4149 = vrot.slane %v4129, 4
        %v4150 = vsel %vm802, %v4135, %v4149
        %v4152 = vunpack.c.l.s4 1934713408
        %v4153 = vunpack.c.0.s8 %v4152
        %v4154 = vperm.slane %v4148, %v4153
        %v4156 = vunpack.c.l.s4 1934713408
        %v4157 = vunpack.c.0.s8 %v4156
        %v4158 = vperm.slane %v4150, %v4157
        %v4159 = vrot.slane %v4146, 4
        %v4160 = vsel %vm802, %v4159, %v4140
        %v4161 = vrot.slane %v4140, 4
        %v4162 = vsel %vm802, %v4146, %v4161
        %v4164 = vunpack.c.l.s4 1934713408
        %v4165 = vunpack.c.0.s8 %v4164
        %v4166 = vperm.slane %v4160, %v4165
        %v4168 = vunpack.c.l.s4 1934713408
        %v4169 = vunpack.c.0.s8 %v4168
        %v4170 = vperm.slane %v4162, %v4169
        %v4171 = vrot.slane %v4166, 4
        %v4172 = vsel %vm802, %v4171, %v4154
        %v4173 = vrot.slane %v4154, 4
        %v4174 = vsel %vm802, %v4166, %v4173
        %v4175 = vrot.slane %v4170, 4
        %v4176 = vsel %vm802, %v4175, %v4158
        %v4177 = vrot.slane %v4158, 4
        %v4178 = vsel %vm802, %v4170, %v4177
        %v4179 = vsel %vm802, %v3349, %v3330
        %v4181 = vunpack.c.l.s4 1983009808
        %v4182 = vunpack.c.0.s8 %v4181
        %v4183 = vperm.slane %v4179, %v4182
        %v4184 = vrot.slane %v3350, 4
        %v4185 = vsel %vm802, %v4184, %v3348
        %v4187 = vunpack.c.l.s4 1983009808
        %v4188 = vunpack.c.0.s8 %v4187
        %v4189 = vperm.slane %v4185, %v4188
        %v4190 = vsel %vm802, %v3353, %v3342
        %v4192 = vunpack.c.l.s4 1983009808
        %v4193 = vunpack.c.0.s8 %v4192
        %v4194 = vperm.slane %v4190, %v4193
        %v4195 = vrot.slane %v3354, 4
        %v4196 = vsel %vm802, %v4195, %v3352
        %v4198 = vunpack.c.l.s4 1983009808
        %v4199 = vunpack.c.0.s8 %v4198
        %v4200 = vperm.slane %v4196, %v4199
        %v4201 = vrot.slane %v4189, 4
        %v4202 = vsel %vm802, %v4201, %v4183
        %v4203 = vrot.slane %v4183, 4
        %v4204 = vsel %vm802, %v4189, %v4203
        %v4206 = vunpack.c.l.s4 1934713408
        %v4207 = vunpack.c.0.s8 %v4206
        %v4208 = vperm.slane %v4202, %v4207
        %v4210 = vunpack.c.l.s4 1934713408
        %v4211 = vunpack.c.0.s8 %v4210
        %v4212 = vperm.slane %v4204, %v4211
        %v4213 = vrot.slane %v4200, 4
        %v4214 = vsel %vm802, %v4213, %v4194
        %v4215 = vrot.slane %v4194, 4
        %v4216 = vsel %vm802, %v4200, %v4215
        %v4218 = vunpack.c.l.s4 1934713408
        %v4219 = vunpack.c.0.s8 %v4218
        %v4220 = vperm.slane %v4214, %v4219
        %v4222 = vunpack.c.l.s4 1934713408
        %v4223 = vunpack.c.0.s8 %v4222
        %v4224 = vperm.slane %v4216, %v4223
        %v4225 = vrot.slane %v4220, 4
        %v4226 = vsel %vm802, %v4225, %v4208
        %v4227 = vrot.slane %v4208, 4
        %v4228 = vsel %vm802, %v4220, %v4227
        %v4229 = vrot.slane %v4224, 4
        %v4230 = vsel %vm802, %v4229, %v4212
        %v4231 = vrot.slane %v4212, 4
        %v4232 = vsel %vm802, %v4224, %v4231
        %v4233 = vsel %vm802, %v3405, %v3386
        %v4235 = vunpack.c.l.s4 1983009808
        %v4236 = vunpack.c.0.s8 %v4235
        %v4237 = vperm.slane %v4233, %v4236
        %v4238 = vrot.slane %v3406, 4
        %v4239 = vsel %vm802, %v4238, %v3404
        %v4241 = vunpack.c.l.s4 1983009808
        %v4242 = vunpack.c.0.s8 %v4241
        %v4243 = vperm.slane %v4239, %v4242
        %v4244 = vsel %vm802, %v3409, %v3398
        %v4246 = vunpack.c.l.s4 1983009808
        %v4247 = vunpack.c.0.s8 %v4246
        %v4248 = vperm.slane %v4244, %v4247
        %v4249 = vrot.slane %v3410, 4
        %v4250 = vsel %vm802, %v4249, %v3408
        %v4252 = vunpack.c.l.s4 1983009808
        %v4253 = vunpack.c.0.s8 %v4252
        %v4254 = vperm.slane %v4250, %v4253
        %v4255 = vrot.slane %v4243, 4
        %v4256 = vsel %vm802, %v4255, %v4237
        %v4257 = vrot.slane %v4237, 4
        %v4258 = vsel %vm802, %v4243, %v4257
        %v4260 = vunpack.c.l.s4 1934713408
        %v4261 = vunpack.c.0.s8 %v4260
        %v4262 = vperm.slane %v4256, %v4261
        %v4264 = vunpack.c.l.s4 1934713408
        %v4265 = vunpack.c.0.s8 %v4264
        %v4266 = vperm.slane %v4258, %v4265
        %v4267 = vrot.slane %v4254, 4
        %v4268 = vsel %vm802, %v4267, %v4248
        %v4269 = vrot.slane %v4248, 4
        %v4270 = vsel %vm802, %v4254, %v4269
        %v4272 = vunpack.c.l.s4 1934713408
        %v4273 = vunpack.c.0.s8 %v4272
        %v4274 = vperm.slane %v4268, %v4273
        %v4276 = vunpack.c.l.s4 1934713408
        %v4277 = vunpack.c.0.s8 %v4276
        %v4278 = vperm.slane %v4270, %v4277
        %v4279 = vrot.slane %v4274, 4
        %v4280 = vsel %vm802, %v4279, %v4262
        %v4281 = vrot.slane %v4262, 4
        %v4282 = vsel %vm802, %v4274, %v4281
        %v4283 = vrot.slane %v4278, 4
        %v4284 = vsel %vm802, %v4283, %v4266
        %v4285 = vrot.slane %v4266, 4
        %v4286 = vsel %vm802, %v4278, %v4285
        %v4287 = vsel %vm802, %v3461, %v3442
        %v4289 = vunpack.c.l.s4 1983009808
        %v4290 = vunpack.c.0.s8 %v4289
        %v4291 = vperm.slane %v4287, %v4290
        %v4292 = vrot.slane %v3462, 4
        %v4293 = vsel %vm802, %v4292, %v3460
        %v4295 = vunpack.c.l.s4 1983009808
        %v4296 = vunpack.c.0.s8 %v4295
        %v4297 = vperm.slane %v4293, %v4296
        %v4298 = vsel %vm802, %v3465, %v3454
        %v4300 = vunpack.c.l.s4 1983009808
        %v4301 = vunpack.c.0.s8 %v4300
        %v4302 = vperm.slane %v4298, %v4301
        %v4303 = vrot.slane %v3466, 4
        %v4304 = vsel %vm802, %v4303, %v3464
        %v4306 = vunpack.c.l.s4 1983009808
        %v4307 = vunpack.c.0.s8 %v4306
        %v4308 = vperm.slane %v4304, %v4307
        %v4309 = vrot.slane %v4297, 4
        %v4310 = vsel %vm802, %v4309, %v4291
        %v4311 = vrot.slane %v4291, 4
        %v4312 = vsel %vm802, %v4297, %v4311
        %v4314 = vunpack.c.l.s4 1934713408
        %v4315 = vunpack.c.0.s8 %v4314
        %v4316 = vperm.slane %v4310, %v4315
        %v4318 = vunpack.c.l.s4 1934713408
        %v4319 = vunpack.c.0.s8 %v4318
        %v4320 = vperm.slane %v4312, %v4319
        %v4321 = vrot.slane %v4308, 4
        %v4322 = vsel %vm802, %v4321, %v4302
        %v4323 = vrot.slane %v4302, 4
        %v4324 = vsel %vm802, %v4308, %v4323
        %v4326 = vunpack.c.l.s4 1934713408
        %v4327 = vunpack.c.0.s8 %v4326
        %v4328 = vperm.slane %v4322, %v4327
        %v4330 = vunpack.c.l.s4 1934713408
        %v4331 = vunpack.c.0.s8 %v4330
        %v4332 = vperm.slane %v4324, %v4331
        %v4333 = vrot.slane %v4328, 4
        %v4334 = vsel %vm802, %v4333, %v4316
        %v4335 = vrot.slane %v4316, 4
        %v4336 = vsel %vm802, %v4328, %v4335
        %v4337 = vrot.slane %v4332, 4
        %v4338 = vsel %vm802, %v4337, %v4320
        %v4339 = vrot.slane %v4320, 4
        %v4340 = vsel %vm802, %v4332, %v4339
        %v4341 = vsel %vm802, %v3517, %v3498
        %v4343 = vunpack.c.l.s4 1983009808
        %v4344 = vunpack.c.0.s8 %v4343
        %v4345 = vperm.slane %v4341, %v4344
        %v4346 = vrot.slane %v3518, 4
        %v4347 = vsel %vm802, %v4346, %v3516
        %v4349 = vunpack.c.l.s4 1983009808
        %v4350 = vunpack.c.0.s8 %v4349
        %v4351 = vperm.slane %v4347, %v4350
        %v4352 = vsel %vm802, %v3521, %v3510
        %v4354 = vunpack.c.l.s4 1983009808
        %v4355 = vunpack.c.0.s8 %v4354
        %v4356 = vperm.slane %v4352, %v4355
        %v4357 = vrot.slane %v3522, 4
        %v4358 = vsel %vm802, %v4357, %v3520
        %v4360 = vunpack.c.l.s4 1983009808
        %v4361 = vunpack.c.0.s8 %v4360
        %v4362 = vperm.slane %v4358, %v4361
        %v4363 = vrot.slane %v4351, 4
        %v4364 = vsel %vm802, %v4363, %v4345
        %v4365 = vrot.slane %v4345, 4
        %v4366 = vsel %vm802, %v4351, %v4365
        %v4368 = vunpack.c.l.s4 1934713408
        %v4369 = vunpack.c.0.s8 %v4368
        %v4370 = vperm.slane %v4364, %v4369
        %v4372 = vunpack.c.l.s4 1934713408
        %v4373 = vunpack.c.0.s8 %v4372
        %v4374 = vperm.slane %v4366, %v4373
        %v4375 = vrot.slane %v4362, 4
        %v4376 = vsel %vm802, %v4375, %v4356
        %v4377 = vrot.slane %v4356, 4
        %v4378 = vsel %vm802, %v4362, %v4377
        %v4380 = vunpack.c.l.s4 1934713408
        %v4381 = vunpack.c.0.s8 %v4380
        %v4382 = vperm.slane %v4376, %v4381
        %v4384 = vunpack.c.l.s4 1934713408
        %v4385 = vunpack.c.0.s8 %v4384
        %v4386 = vperm.slane %v4378, %v4385
        %v4387 = vrot.slane %v4382, 4
        %v4388 = vsel %vm802, %v4387, %v4370
        %v4389 = vrot.slane %v4370, 4
        %v4390 = vsel %vm802, %v4382, %v4389
        %v4391 = vrot.slane %v4386, 4
        %v4392 = vsel %vm802, %v4391, %v4374
        %v4393 = vrot.slane %v4374, 4
        %v4394 = vsel %vm802, %v4386, %v4393
        %v4395 = vsel %vm802, %v3573, %v3554
        %v4397 = vunpack.c.l.s4 1983009808
        %v4398 = vunpack.c.0.s8 %v4397
        %v4399 = vperm.slane %v4395, %v4398
        %v4400 = vrot.slane %v3574, 4
        %v4401 = vsel %vm802, %v4400, %v3572
        %v4403 = vunpack.c.l.s4 1983009808
        %v4404 = vunpack.c.0.s8 %v4403
        %v4405 = vperm.slane %v4401, %v4404
        %v4406 = vsel %vm802, %v3577, %v3566
        %v4408 = vunpack.c.l.s4 1983009808
        %v4409 = vunpack.c.0.s8 %v4408
        %v4410 = vperm.slane %v4406, %v4409
        %v4411 = vrot.slane %v3578, 4
        %v4412 = vsel %vm802, %v4411, %v3576
        %v4414 = vunpack.c.l.s4 1983009808
        %v4415 = vunpack.c.0.s8 %v4414
        %v4416 = vperm.slane %v4412, %v4415
        %v4417 = vrot.slane %v4405, 4
        %v4418 = vsel %vm802, %v4417, %v4399
        %v4419 = vrot.slane %v4399, 4
        %v4420 = vsel %vm802, %v4405, %v4419
        %v4422 = vunpack.c.l.s4 1934713408
        %v4423 = vunpack.c.0.s8 %v4422
        %v4424 = vperm.slane %v4418, %v4423
        %v4426 = vunpack.c.l.s4 1934713408
        %v4427 = vunpack.c.0.s8 %v4426
        %v4428 = vperm.slane %v4420, %v4427
        %v4429 = vrot.slane %v4416, 4
        %v4430 = vsel %vm802, %v4429, %v4410
        %v4431 = vrot.slane %v4410, 4
        %v4432 = vsel %vm802, %v4416, %v4431
        %v4434 = vunpack.c.l.s4 1934713408
        %v4435 = vunpack.c.0.s8 %v4434
        %v4436 = vperm.slane %v4430, %v4435
        %v4438 = vunpack.c.l.s4 1934713408
        %v4439 = vunpack.c.0.s8 %v4438
        %v4440 = vperm.slane %v4432, %v4439
        %v4441 = vrot.slane %v4436, 4
        %v4442 = vsel %vm802, %v4441, %v4424
        %v4443 = vrot.slane %v4424, 4
        %v4444 = vsel %vm802, %v4436, %v4443
        %v4445 = vrot.slane %v4440, 4
        %v4446 = vsel %vm802, %v4445, %v4428
        %v4447 = vrot.slane %v4428, 4
        %v4448 = vsel %vm802, %v4440, %v4447
        %v4449 = vsel %vm802, %v3629, %v3610
        %v4451 = vunpack.c.l.s4 1983009808
        %v4452 = vunpack.c.0.s8 %v4451
        %v4453 = vperm.slane %v4449, %v4452
        %v4454 = vrot.slane %v3630, 4
        %v4455 = vsel %vm802, %v4454, %v3628
        %v4457 = vunpack.c.l.s4 1983009808
        %v4458 = vunpack.c.0.s8 %v4457
        %v4459 = vperm.slane %v4455, %v4458
        %v4460 = vsel %vm802, %v3633, %v3622
        %v4462 = vunpack.c.l.s4 1983009808
        %v4463 = vunpack.c.0.s8 %v4462
        %v4464 = vperm.slane %v4460, %v4463
        %v4465 = vrot.slane %v3634, 4
        %v4466 = vsel %vm802, %v4465, %v3632
        %v4468 = vunpack.c.l.s4 1983009808
        %v4469 = vunpack.c.0.s8 %v4468
        %v4470 = vperm.slane %v4466, %v4469
        %v4471 = vrot.slane %v4459, 4
        %v4472 = vsel %vm802, %v4471, %v4453
        %v4473 = vrot.slane %v4453, 4
        %v4474 = vsel %vm802, %v4459, %v4473
        %v4476 = vunpack.c.l.s4 1934713408
        %v4477 = vunpack.c.0.s8 %v4476
        %v4478 = vperm.slane %v4472, %v4477
        %v4480 = vunpack.c.l.s4 1934713408
        %v4481 = vunpack.c.0.s8 %v4480
        %v4482 = vperm.slane %v4474, %v4481
        %v4483 = vrot.slane %v4470, 4
        %v4484 = vsel %vm802, %v4483, %v4464
        %v4485 = vrot.slane %v4464, 4
        %v4486 = vsel %vm802, %v4470, %v4485
        %v4488 = vunpack.c.l.s4 1934713408
        %v4489 = vunpack.c.0.s8 %v4488
        %v4490 = vperm.slane %v4484, %v4489
        %v4492 = vunpack.c.l.s4 1934713408
        %v4493 = vunpack.c.0.s8 %v4492
        %v4494 = vperm.slane %v4486, %v4493
        %v4495 = vrot.slane %v4490, 4
        %v4496 = vsel %vm802, %v4495, %v4478
        %v4497 = vrot.slane %v4478, 4
        %v4498 = vsel %vm802, %v4490, %v4497
        %v4499 = vrot.slane %v4494, 4
        %v4500 = vsel %vm802, %v4499, %v4482
        %v4501 = vrot.slane %v4482, 4
        %v4502 = vsel %vm802, %v4494, %v4501
        %v4503 = vsel %vm802, %v3685, %v3666
        %v4505 = vunpack.c.l.s4 1983009808
        %v4506 = vunpack.c.0.s8 %v4505
        %v4507 = vperm.slane %v4503, %v4506
        %v4508 = vrot.slane %v3686, 4
        %v4509 = vsel %vm802, %v4508, %v3684
        %v4511 = vunpack.c.l.s4 1983009808
        %v4512 = vunpack.c.0.s8 %v4511
        %v4513 = vperm.slane %v4509, %v4512
        %v4514 = vsel %vm802, %v3689, %v3678
        %v4516 = vunpack.c.l.s4 1983009808
        %v4517 = vunpack.c.0.s8 %v4516
        %v4518 = vperm.slane %v4514, %v4517
        %v4519 = vrot.slane %v3690, 4
        %v4520 = vsel %vm802, %v4519, %v3688
        %v4522 = vunpack.c.l.s4 1983009808
        %v4523 = vunpack.c.0.s8 %v4522
        %v4524 = vperm.slane %v4520, %v4523
        %v4525 = vrot.slane %v4513, 4
        %v4526 = vsel %vm802, %v4525, %v4507
        %v4527 = vrot.slane %v4507, 4
        %v4528 = vsel %vm802, %v4513, %v4527
        %v4530 = vunpack.c.l.s4 1934713408
        %v4531 = vunpack.c.0.s8 %v4530
        %v4532 = vperm.slane %v4526, %v4531
        %v4534 = vunpack.c.l.s4 1934713408
        %v4535 = vunpack.c.0.s8 %v4534
        %v4536 = vperm.slane %v4528, %v4535
        %v4537 = vrot.slane %v4524, 4
        %v4538 = vsel %vm802, %v4537, %v4518
        %v4539 = vrot.slane %v4518, 4
        %v4540 = vsel %vm802, %v4524, %v4539
        %v4542 = vunpack.c.l.s4 1934713408
        %v4543 = vunpack.c.0.s8 %v4542
        %v4544 = vperm.slane %v4538, %v4543
        %v4546 = vunpack.c.l.s4 1934713408
        %v4547 = vunpack.c.0.s8 %v4546
        %v4548 = vperm.slane %v4540, %v4547
        %v4549 = vrot.slane %v4544, 4
        %v4550 = vsel %vm802, %v4549, %v4532
        %v4551 = vrot.slane %v4532, 4
        %v4552 = vsel %vm802, %v4544, %v4551
        %v4553 = vrot.slane %v4548, 4
        %v4554 = vsel %vm802, %v4553, %v4536
        %v4555 = vrot.slane %v4536, 4
        %v4556 = vsel %vm802, %v4548, %v4555
        %v4557 = vsel %vm802, %v3741, %v3722
        %v4559 = vunpack.c.l.s4 1983009808
        %v4560 = vunpack.c.0.s8 %v4559
        %v4561 = vperm.slane %v4557, %v4560
        %v4562 = vrot.slane %v3742, 4
        %v4563 = vsel %vm802, %v4562, %v3740
        %v4565 = vunpack.c.l.s4 1983009808
        %v4566 = vunpack.c.0.s8 %v4565
        %v4567 = vperm.slane %v4563, %v4566
        %v4568 = vsel %vm802, %v3745, %v3734
        %v4570 = vunpack.c.l.s4 1983009808
        %v4571 = vunpack.c.0.s8 %v4570
        %v4572 = vperm.slane %v4568, %v4571
        %v4573 = vrot.slane %v3746, 4
        %v4574 = vsel %vm802, %v4573, %v3744
        %v4576 = vunpack.c.l.s4 1983009808
        %v4577 = vunpack.c.0.s8 %v4576
        %v4578 = vperm.slane %v4574, %v4577
        %v4579 = vrot.slane %v4567, 4
        %v4580 = vsel %vm802, %v4579, %v4561
        %v4581 = vrot.slane %v4561, 4
        %v4582 = vsel %vm802, %v4567, %v4581
        %v4584 = vunpack.c.l.s4 1934713408
        %v4585 = vunpack.c.0.s8 %v4584
        %v4586 = vperm.slane %v4580, %v4585
        %v4588 = vunpack.c.l.s4 1934713408
        %v4589 = vunpack.c.0.s8 %v4588
        %v4590 = vperm.slane %v4582, %v4589
        %v4591 = vrot.slane %v4578, 4
        %v4592 = vsel %vm802, %v4591, %v4572
        %v4593 = vrot.slane %v4572, 4
        %v4594 = vsel %vm802, %v4578, %v4593
        %v4596 = vunpack.c.l.s4 1934713408
        %v4597 = vunpack.c.0.s8 %v4596
        %v4598 = vperm.slane %v4592, %v4597
        %v4600 = vunpack.c.l.s4 1934713408
        %v4601 = vunpack.c.0.s8 %v4600
        %v4602 = vperm.slane %v4594, %v4601
        %v4603 = vrot.slane %v4598, 4
        %v4604 = vsel %vm802, %v4603, %v4586
        %v4605 = vrot.slane %v4586, 4
        %v4606 = vsel %vm802, %v4598, %v4605
        %v4607 = vrot.slane %v4602, 4
        %v4608 = vsel %vm802, %v4607, %v4590
        %v4609 = vrot.slane %v4590, 4
        %v4610 = vsel %vm802, %v4602, %v4609
        %v4611 = vpack.c.bf16 %v3794, %v3794
        %v4612 = vpack.c.bf16 %v3848, %v3848
        %v4613 = vpack.c.bf16 %v3902, %v3902
        %v4614 = vpack.c.bf16 %v3956, %v3956
        %v4615 = vpack.c.bf16 %v4010, %v4010
        %v4616 = vpack.c.bf16 %v4064, %v4064
        %v4617 = vpack.c.bf16 %v4118, %v4118
        %v4618 = vpack.c.bf16 %v4172, %v4172
        %v4619 = vpack.c.bf16 %v4226, %v4226
        %v4620 = vpack.c.bf16 %v4280, %v4280
        %v4621 = vpack.c.bf16 %v4334, %v4334
        %v4622 = vpack.c.bf16 %v4388, %v4388
        %v4623 = vpack.c.bf16 %v4442, %v4442
        %v4624 = vpack.c.bf16 %v4496, %v4496
        %v4625 = vpack.c.bf16 %v4550, %v4550
        %v4626 = vpack.c.bf16 %v4604, %v4604
        %v4627 = vpack.c.bf16 %v3796, %v3796
        %v4628 = vpack.c.bf16 %v3850, %v3850
        %v4629 = vpack.c.bf16 %v3904, %v3904
        %v4630 = vpack.c.bf16 %v3958, %v3958
        %v4631 = vpack.c.bf16 %v4012, %v4012
        %v4632 = vpack.c.bf16 %v4066, %v4066
        %v4633 = vpack.c.bf16 %v4120, %v4120
        %v4634 = vpack.c.bf16 %v4174, %v4174
        %v4635 = vpack.c.bf16 %v4228, %v4228
        %v4636 = vpack.c.bf16 %v4282, %v4282
        %v4637 = vpack.c.bf16 %v4336, %v4336
        %v4638 = vpack.c.bf16 %v4390, %v4390
        %v4639 = vpack.c.bf16 %v4444, %v4444
        %v4640 = vpack.c.bf16 %v4498, %v4498
        %v4641 = vpack.c.bf16 %v4552, %v4552
        %v4642 = vpack.c.bf16 %v4606, %v4606
        %v4643 = vpack.c.bf16 %v3798, %v3798
        %v4644 = vpack.c.bf16 %v3852, %v3852
        %v4645 = vpack.c.bf16 %v3906, %v3906
        %v4646 = vpack.c.bf16 %v3960, %v3960
        %v4647 = vpack.c.bf16 %v4014, %v4014
        %v4648 = vpack.c.bf16 %v4068, %v4068
        %v4649 = vpack.c.bf16 %v4122, %v4122
        %v4650 = vpack.c.bf16 %v4176, %v4176
        %v4651 = vpack.c.bf16 %v4230, %v4230
        %v4652 = vpack.c.bf16 %v4284, %v4284
        %v4653 = vpack.c.bf16 %v4338, %v4338
        %v4654 = vpack.c.bf16 %v4392, %v4392
        %v4655 = vpack.c.bf16 %v4446, %v4446
        %v4656 = vpack.c.bf16 %v4500, %v4500
        %v4657 = vpack.c.bf16 %v4554, %v4554
        %v4658 = vpack.c.bf16 %v4608, %v4608
        %v4659 = vpack.c.bf16 %v3800, %v3800
        %v4660 = vpack.c.bf16 %v3854, %v3854
        %v4661 = vpack.c.bf16 %v3908, %v3908
        %v4662 = vpack.c.bf16 %v3962, %v3962
        %v4663 = vpack.c.bf16 %v4016, %v4016
        %v4664 = vpack.c.bf16 %v4070, %v4070
        %v4665 = vpack.c.bf16 %v4124, %v4124
        %v4666 = vpack.c.bf16 %v4178, %v4178
        %v4667 = vpack.c.bf16 %v4232, %v4232
        %v4668 = vpack.c.bf16 %v4286, %v4286
        %v4669 = vpack.c.bf16 %v4340, %v4340
        %v4670 = vpack.c.bf16 %v4394, %v4394
        %v4671 = vpack.c.bf16 %v4448, %v4448
        %v4672 = vpack.c.bf16 %v4502, %v4502
        %v4673 = vpack.c.bf16 %v4556, %v4556
        %v4674 = vpack.c.bf16 %v4610, %v4610
        %4675 = vst.msk [vmem:[%s259] sm:$0xf] %vm2626, %v4611
        %4676 = vst.msk [vmem:[%s259 + $0x4] sm:$0xf] %vm2626, %v4612
        %4677 = vst.msk [vmem:[%s259 + $0x8] sm:$0xf] %vm2626, %v4613
        %4678 = vst.msk [vmem:[%s259 + $0xc] sm:$0xf] %vm2626, %v4614
        %4679 = vst.msk [vmem:[%s259 + $0x10] sm:$0xf] %vm2626, %v4615
        %4680 = vst.msk [vmem:[%s259 + $0x14] sm:$0xf] %vm2626, %v4616
        %4681 = vst.msk [vmem:[%s259 + $0x18] sm:$0xf] %vm2626, %v4617
        %4682 = vst.msk [vmem:[%s259 + $0x1c] sm:$0xf] %vm2626, %v4618
        %4683 = vst.msk [vmem:[%s259 + $0x20] sm:$0xf] %vm2626, %v4619
        %4684 = vst.msk [vmem:[%s259 + $0x24] sm:$0xf] %vm2626, %v4620
        %4685 = vst.msk [vmem:[%s259 + $0x28] sm:$0xf] %vm2626, %v4621
        %4686 = vst.msk [vmem:[%s259 + $0x2c] sm:$0xf] %vm2626, %v4622
        %4687 = vst.msk [vmem:[%s259 + $0x30] sm:$0xf] %vm2626, %v4623
        %4688 = vst.msk [vmem:[%s259 + $0x34] sm:$0xf] %vm2626, %v4624
        %4689 = vst.msk [vmem:[%s259 + $0x38] sm:$0xf] %vm2626, %v4625
        %4690 = vst.msk [vmem:[%s259 + $0x3c] sm:$0xf] %vm2626, %v4626
        %4691 = vst.msk [vmem:[%s259 + $0x40] sm:$0xf] %vm2626, %v4627
        %4692 = vst.msk [vmem:[%s259 + $0x44] sm:$0xf] %vm2626, %v4628
        %4693 = vst.msk [vmem:[%s259 + $0x48] sm:$0xf] %vm2626, %v4629
        %4694 = vst.msk [vmem:[%s259 + $0x4c] sm:$0xf] %vm2626, %v4630
        %4695 = vst.msk [vmem:[%s259 + $0x50] sm:$0xf] %vm2626, %v4631
        %4696 = vst.msk [vmem:[%s259 + $0x54] sm:$0xf] %vm2626, %v4632
        %4697 = vst.msk [vmem:[%s259 + $0x58] sm:$0xf] %vm2626, %v4633
        %4698 = vst.msk [vmem:[%s259 + $0x5c] sm:$0xf] %vm2626, %v4634
        %4699 = vst.msk [vmem:[%s259 + $0x60] sm:$0xf] %vm2626, %v4635
        %4700 = vst.msk [vmem:[%s259 + $0x64] sm:$0xf] %vm2626, %v4636
        %4701 = vst.msk [vmem:[%s259 + $0x68] sm:$0xf] %vm2626, %v4637
        %4702 = vst.msk [vmem:[%s259 + $0x6c] sm:$0xf] %vm2626, %v4638
        %4703 = vst.msk [vmem:[%s259 + $0x70] sm:$0xf] %vm2626, %v4639
        %4704 = vst.msk [vmem:[%s259 + $0x74] sm:$0xf] %vm2626, %v4640
        %4705 = vst.msk [vmem:[%s259 + $0x78] sm:$0xf] %vm2626, %v4641
        %4706 = vst.msk [vmem:[%s259 + $0x7c] sm:$0xf] %vm2626, %v4642
        %4707 = vst.msk [vmem:[%s259 + $0x80] sm:$0xf] %vm2626, %v4643
        %4708 = vst.msk [vmem:[%s259 + $0x84] sm:$0xf] %vm2626, %v4644
        %4709 = vst.msk [vmem:[%s259 + $0x88] sm:$0xf] %vm2626, %v4645
        %4710 = vst.msk [vmem:[%s259 + $0x8c] sm:$0xf] %vm2626, %v4646
        %4711 = vst.msk [vmem:[%s259 + $0x90] sm:$0xf] %vm2626, %v4647
        %4712 = vst.msk [vmem:[%s259 + $0x94] sm:$0xf] %vm2626, %v4648
        %4713 = vst.msk [vmem:[%s259 + $0x98] sm:$0xf] %vm2626, %v4649
        %4714 = vst.msk [vmem:[%s259 + $0x9c] sm:$0xf] %vm2626, %v4650
        %4715 = vst.msk [vmem:[%s259 + $0xa0] sm:$0xf] %vm2626, %v4651
        %4716 = vst.msk [vmem:[%s259 + $0xa4] sm:$0xf] %vm2626, %v4652
        %4717 = vst.msk [vmem:[%s259 + $0xa8] sm:$0xf] %vm2626, %v4653
        %4718 = vst.msk [vmem:[%s259 + $0xac] sm:$0xf] %vm2626, %v4654
        %4719 = vst.msk [vmem:[%s259 + $0xb0] sm:$0xf] %vm2626, %v4655
        %4720 = vst.msk [vmem:[%s259 + $0xb4] sm:$0xf] %vm2626, %v4656
        %4721 = vst.msk [vmem:[%s259 + $0xb8] sm:$0xf] %vm2626, %v4657
        %4722 = vst.msk [vmem:[%s259 + $0xbc] sm:$0xf] %vm2626, %v4658
        %4723 = vst.msk [vmem:[%s259 + $0xc0] sm:$0xf] %vm2626, %v4659
        %4724 = vst.msk [vmem:[%s259 + $0xc4] sm:$0xf] %vm2626, %v4660
        %4725 = vst.msk [vmem:[%s259 + $0xc8] sm:$0xf] %vm2626, %v4661
        %4726 = vst.msk [vmem:[%s259 + $0xcc] sm:$0xf] %vm2626, %v4662
        %4727 = vst.msk [vmem:[%s259 + $0xd0] sm:$0xf] %vm2626, %v4663
        %4728 = vst.msk [vmem:[%s259 + $0xd4] sm:$0xf] %vm2626, %v4664
        %4729 = vst.msk [vmem:[%s259 + $0xd8] sm:$0xf] %vm2626, %v4665
        %4730 = vst.msk [vmem:[%s259 + $0xdc] sm:$0xf] %vm2626, %v4666
        %4731 = vst.msk [vmem:[%s259 + $0xe0] sm:$0xf] %vm2626, %v4667
        %4732 = vst.msk [vmem:[%s259 + $0xe4] sm:$0xf] %vm2626, %v4668
        %4733 = vst.msk [vmem:[%s259 + $0xe8] sm:$0xf] %vm2626, %v4669
        %4734 = vst.msk [vmem:[%s259 + $0xec] sm:$0xf] %vm2626, %v4670
        %4735 = vst.msk [vmem:[%s259 + $0xf0] sm:$0xf] %vm2626, %v4671
        %4736 = vst.msk [vmem:[%s259 + $0xf4] sm:$0xf] %vm2626, %v4672
        %4737 = vst.msk [vmem:[%s259 + $0xf8] sm:$0xf] %vm2626, %v4673
        %4738 = vst.msk [vmem:[%s259 + $0xfc] sm:$0xf] %vm2626, %v4674
        %4755 = vrot.lane.b32.xlu0 %v602, 96
        %v4756 = vpop.permute.xlu0 %4755
        %4757 = vrot.lane.b32.xlu0 %v604, 96
        %v4758 = vpop.permute.xlu0 %4757
        %4759 = vrot.lane.b32.xlu0 %v607, 96
        %v4760 = vpop.permute.xlu0 %4759
        %4761 = vrot.lane.b32.xlu0 %v609, 96
        %v4762 = vpop.permute.xlu0 %4761
        %4763 = vrot.lane.b32.xlu0 %v612, 96
        %v4764 = vpop.permute.xlu0 %4763
        %4765 = vrot.lane.b32.xlu0 %v614, 96
        %v4766 = vpop.permute.xlu0 %4765
        %4767 = vrot.lane.b32.xlu0 %v617, 96
        %v4768 = vpop.permute.xlu0 %4767
        %4769 = vrot.lane.b32.xlu0 %v619, 96
        %v4770 = vpop.permute.xlu0 %4769
        %4771 = vrot.lane.b32.xlu0 %v622, 96
        %v4772 = vpop.permute.xlu0 %4771
        %4773 = vrot.lane.b32.xlu0 %v624, 96
        %v4774 = vpop.permute.xlu0 %4773
        %4775 = vrot.lane.b32.xlu0 %v627, 96
        %v4776 = vpop.permute.xlu0 %4775
        %4777 = vrot.lane.b32.xlu0 %v629, 96
        %v4778 = vpop.permute.xlu0 %4777
        %4779 = vrot.lane.b32.xlu0 %v632, 96
        %v4780 = vpop.permute.xlu0 %4779
        %4781 = vrot.lane.b32.xlu0 %v634, 96
        %v4782 = vpop.permute.xlu0 %4781
        %4783 = vrot.lane.b32.xlu0 %v637, 96
        %v4784 = vpop.permute.xlu0 %4783
        %4785 = vrot.lane.b32.xlu0 %v639, 96
        %v4786 = vpop.permute.xlu0 %4785
        %4803 = vrot.lane.b32.xlu0 %v602, 64
        %v4804 = vpop.permute.xlu0 %4803
        %4805 = vrot.lane.b32.xlu0 %v604, 64
        %v4806 = vpop.permute.xlu0 %4805
        %4807 = vrot.lane.b32.xlu0 %v607, 64
        %v4808 = vpop.permute.xlu0 %4807
        %4809 = vrot.lane.b32.xlu0 %v609, 64
        %v4810 = vpop.permute.xlu0 %4809
        %4811 = vrot.lane.b32.xlu0 %v612, 64
        %v4812 = vpop.permute.xlu0 %4811
        %4813 = vrot.lane.b32.xlu0 %v614, 64
        %v4814 = vpop.permute.xlu0 %4813
        %4815 = vrot.lane.b32.xlu0 %v617, 64
        %v4816 = vpop.permute.xlu0 %4815
        %4817 = vrot.lane.b32.xlu0 %v619, 64
        %v4818 = vpop.permute.xlu0 %4817
        %4819 = vrot.lane.b32.xlu0 %v622, 64
        %v4820 = vpop.permute.xlu0 %4819
        %4821 = vrot.lane.b32.xlu0 %v624, 64
        %v4822 = vpop.permute.xlu0 %4821
        %4823 = vrot.lane.b32.xlu0 %v627, 64
        %v4824 = vpop.permute.xlu0 %4823
        %4825 = vrot.lane.b32.xlu0 %v629, 64
        %v4826 = vpop.permute.xlu0 %4825
        %4827 = vrot.lane.b32.xlu0 %v632, 64
        %v4828 = vpop.permute.xlu0 %4827
        %4829 = vrot.lane.b32.xlu0 %v634, 64
        %v4830 = vpop.permute.xlu0 %4829
        %4831 = vrot.lane.b32.xlu0 %v637, 64
        %v4832 = vpop.permute.xlu0 %4831
        %4833 = vrot.lane.b32.xlu0 %v639, 64
        %v4834 = vpop.permute.xlu0 %4833
        %4851 = vrot.lane.b32.xlu0 %v602, 32
        %v4852 = vpop.permute.xlu0 %4851
        %4853 = vrot.lane.b32.xlu0 %v604, 32
        %v4854 = vpop.permute.xlu0 %4853
        %4855 = vrot.lane.b32.xlu0 %v607, 32
        %v4856 = vpop.permute.xlu0 %4855
        %4857 = vrot.lane.b32.xlu0 %v609, 32
        %v4858 = vpop.permute.xlu0 %4857
        %4859 = vrot.lane.b32.xlu0 %v612, 32
        %v4860 = vpop.permute.xlu0 %4859
        %4861 = vrot.lane.b32.xlu0 %v614, 32
        %v4862 = vpop.permute.xlu0 %4861
        %4863 = vrot.lane.b32.xlu0 %v617, 32
        %v4864 = vpop.permute.xlu0 %4863
        %4865 = vrot.lane.b32.xlu0 %v619, 32
        %v4866 = vpop.permute.xlu0 %4865
        %4867 = vrot.lane.b32.xlu0 %v622, 32
        %v4868 = vpop.permute.xlu0 %4867
        %4869 = vrot.lane.b32.xlu0 %v624, 32
        %v4870 = vpop.permute.xlu0 %4869
        %4871 = vrot.lane.b32.xlu0 %v627, 32
        %v4872 = vpop.permute.xlu0 %4871
        %4873 = vrot.lane.b32.xlu0 %v629, 32
        %v4874 = vpop.permute.xlu0 %4873
        %4875 = vrot.lane.b32.xlu0 %v632, 32
        %v4876 = vpop.permute.xlu0 %4875
        %4877 = vrot.lane.b32.xlu0 %v634, 32
        %v4878 = vpop.permute.xlu0 %4877
        %4879 = vrot.lane.b32.xlu0 %v637, 32
        %v4880 = vpop.permute.xlu0 %4879
        %4881 = vrot.lane.b32.xlu0 %v639, 32
        %v4882 = vpop.permute.xlu0 %4881
        %v4899 = vrot.slane %v4804, 4
        %v4900 = vsel %vm802, %v4899, %v602
        %v4901 = vrot.slane %v602, 4
        %v4902 = vsel %vm802, %v4804, %v4901
        %v4904 = vunpack.c.l.s4 1983009808
        %v4905 = vunpack.c.0.s8 %v4904
        %v4906 = vperm.slane %v4900, %v4905
        %v4908 = vunpack.c.l.s4 1983009808
        %v4909 = vunpack.c.0.s8 %v4908
        %v4910 = vperm.slane %v4902, %v4909
        %v4911 = vrot.slane %v4852, 4
        %v4912 = vsel %vm802, %v4911, %v4756
        %v4913 = vrot.slane %v4756, 4
        %v4914 = vsel %vm802, %v4852, %v4913
        %v4916 = vunpack.c.l.s4 1983009808
        %v4917 = vunpack.c.0.s8 %v4916
        %v4918 = vperm.slane %v4912, %v4917
        %v4920 = vunpack.c.l.s4 1983009808
        %v4921 = vunpack.c.0.s8 %v4920
        %v4922 = vperm.slane %v4914, %v4921
        %v4923 = vrot.slane %v4918, 4
        %v4924 = vsel %vm802, %v4923, %v4906
        %v4925 = vrot.slane %v4906, 4
        %v4926 = vsel %vm802, %v4918, %v4925
        %v4928 = vunpack.c.l.s4 1934713408
        %v4929 = vunpack.c.0.s8 %v4928
        %v4930 = vperm.slane %v4924, %v4929
        %v4932 = vunpack.c.l.s4 1934713408
        %v4933 = vunpack.c.0.s8 %v4932
        %v4934 = vperm.slane %v4926, %v4933
        %v4935 = vrot.slane %v4922, 4
        %v4936 = vsel %vm802, %v4935, %v4910
        %v4937 = vrot.slane %v4910, 4
        %v4938 = vsel %vm802, %v4922, %v4937
        %v4940 = vunpack.c.l.s4 1934713408
        %v4941 = vunpack.c.0.s8 %v4940
        %v4942 = vperm.slane %v4936, %v4941
        %v4944 = vunpack.c.l.s4 1934713408
        %v4945 = vunpack.c.0.s8 %v4944
        %v4946 = vperm.slane %v4938, %v4945
        %v4947 = vrot.slane %v4930, 4
        %v4948 = vsel %vm802, 0.0, %v4947
        %v4949 = vrot.slane %v4934, 4
        %v4950 = vsel %vm802, 0.0, %v4949
        %v4951 = vrot.slane %v4942, 4
        %v4952 = vsel %vm802, 0.0, %v4951
        %v4953 = vrot.slane %v4946, 4
        %v4954 = vsel %vm802, 0.0, %v4953
        %v4955 = vrot.slane %v4806, 4
        %v4956 = vsel %vm802, %v4955, %v604
        %v4957 = vrot.slane %v604, 4
        %v4958 = vsel %vm802, %v4806, %v4957
        %v4960 = vunpack.c.l.s4 1983009808
        %v4961 = vunpack.c.0.s8 %v4960
        %v4962 = vperm.slane %v4956, %v4961
        %v4964 = vunpack.c.l.s4 1983009808
        %v4965 = vunpack.c.0.s8 %v4964
        %v4966 = vperm.slane %v4958, %v4965
        %v4967 = vrot.slane %v4854, 4
        %v4968 = vsel %vm802, %v4967, %v4758
        %v4969 = vrot.slane %v4758, 4
        %v4970 = vsel %vm802, %v4854, %v4969
        %v4972 = vunpack.c.l.s4 1983009808
        %v4973 = vunpack.c.0.s8 %v4972
        %v4974 = vperm.slane %v4968, %v4973
        %v4976 = vunpack.c.l.s4 1983009808
        %v4977 = vunpack.c.0.s8 %v4976
        %v4978 = vperm.slane %v4970, %v4977
        %v4979 = vrot.slane %v4974, 4
        %v4980 = vsel %vm802, %v4979, %v4962
        %v4981 = vrot.slane %v4962, 4
        %v4982 = vsel %vm802, %v4974, %v4981
        %v4984 = vunpack.c.l.s4 1934713408
        %v4985 = vunpack.c.0.s8 %v4984
        %v4986 = vperm.slane %v4980, %v4985
        %v4988 = vunpack.c.l.s4 1934713408
        %v4989 = vunpack.c.0.s8 %v4988
        %v4990 = vperm.slane %v4982, %v4989
        %v4991 = vrot.slane %v4978, 4
        %v4992 = vsel %vm802, %v4991, %v4966
        %v4993 = vrot.slane %v4966, 4
        %v4994 = vsel %vm802, %v4978, %v4993
        %v4996 = vunpack.c.l.s4 1934713408
        %v4997 = vunpack.c.0.s8 %v4996
        %v4998 = vperm.slane %v4992, %v4997
        %v5000 = vunpack.c.l.s4 1934713408
        %v5001 = vunpack.c.0.s8 %v5000
        %v5002 = vperm.slane %v4994, %v5001
        %v5003 = vrot.slane %v4986, 4
        %v5004 = vsel %vm802, 0.0, %v5003
        %v5005 = vrot.slane %v4990, 4
        %v5006 = vsel %vm802, 0.0, %v5005
        %v5007 = vrot.slane %v4998, 4
        %v5008 = vsel %vm802, 0.0, %v5007
        %v5009 = vrot.slane %v5002, 4
        %v5010 = vsel %vm802, 0.0, %v5009
        %v5011 = vrot.slane %v4808, 4
        %v5012 = vsel %vm802, %v5011, %v607
        %v5013 = vrot.slane %v607, 4
        %v5014 = vsel %vm802, %v4808, %v5013
        %v5016 = vunpack.c.l.s4 1983009808
        %v5017 = vunpack.c.0.s8 %v5016
        %v5018 = vperm.slane %v5012, %v5017
        %v5020 = vunpack.c.l.s4 1983009808
        %v5021 = vunpack.c.0.s8 %v5020
        %v5022 = vperm.slane %v5014, %v5021
        %v5023 = vrot.slane %v4856, 4
        %v5024 = vsel %vm802, %v5023, %v4760
        %v5025 = vrot.slane %v4760, 4
        %v5026 = vsel %vm802, %v4856, %v5025
        %v5028 = vunpack.c.l.s4 1983009808
        %v5029 = vunpack.c.0.s8 %v5028
        %v5030 = vperm.slane %v5024, %v5029
        %v5032 = vunpack.c.l.s4 1983009808
        %v5033 = vunpack.c.0.s8 %v5032
        %v5034 = vperm.slane %v5026, %v5033
        %v5035 = vrot.slane %v5030, 4
        %v5036 = vsel %vm802, %v5035, %v5018
        %v5037 = vrot.slane %v5018, 4
        %v5038 = vsel %vm802, %v5030, %v5037
        %v5040 = vunpack.c.l.s4 1934713408
        %v5041 = vunpack.c.0.s8 %v5040
        %v5042 = vperm.slane %v5036, %v5041
        %v5044 = vunpack.c.l.s4 1934713408
        %v5045 = vunpack.c.0.s8 %v5044
        %v5046 = vperm.slane %v5038, %v5045
        %v5047 = vrot.slane %v5034, 4
        %v5048 = vsel %vm802, %v5047, %v5022
        %v5049 = vrot.slane %v5022, 4
        %v5050 = vsel %vm802, %v5034, %v5049
        %v5052 = vunpack.c.l.s4 1934713408
        %v5053 = vunpack.c.0.s8 %v5052
        %v5054 = vperm.slane %v5048, %v5053
        %v5056 = vunpack.c.l.s4 1934713408
        %v5057 = vunpack.c.0.s8 %v5056
        %v5058 = vperm.slane %v5050, %v5057
        %v5059 = vrot.slane %v5042, 4
        %v5060 = vsel %vm802, 0.0, %v5059
        %v5061 = vrot.slane %v5046, 4
        %v5062 = vsel %vm802, 0.0, %v5061
        %v5063 = vrot.slane %v5054, 4
        %v5064 = vsel %vm802, 0.0, %v5063
        %v5065 = vrot.slane %v5058, 4
        %v5066 = vsel %vm802, 0.0, %v5065
        %v5067 = vrot.slane %v4810, 4
        %v5068 = vsel %vm802, %v5067, %v609
        %v5069 = vrot.slane %v609, 4
        %v5070 = vsel %vm802, %v4810, %v5069
        %v5072 = vunpack.c.l.s4 1983009808
        %v5073 = vunpack.c.0.s8 %v5072
        %v5074 = vperm.slane %v5068, %v5073
        %v5076 = vunpack.c.l.s4 1983009808
        %v5077 = vunpack.c.0.s8 %v5076
        %v5078 = vperm.slane %v5070, %v5077
        %v5079 = vrot.slane %v4858, 4
        %v5080 = vsel %vm802, %v5079, %v4762
        %v5081 = vrot.slane %v4762, 4
        %v5082 = vsel %vm802, %v4858, %v5081
        %v5084 = vunpack.c.l.s4 1983009808
        %v5085 = vunpack.c.0.s8 %v5084
        %v5086 = vperm.slane %v5080, %v5085
        %v5088 = vunpack.c.l.s4 1983009808
        %v5089 = vunpack.c.0.s8 %v5088
        %v5090 = vperm.slane %v5082, %v5089
        %v5091 = vrot.slane %v5086, 4
        %v5092 = vsel %vm802, %v5091, %v5074
        %v5093 = vrot.slane %v5074, 4
        %v5094 = vsel %vm802, %v5086, %v5093
        %v5096 = vunpack.c.l.s4 1934713408
        %v5097 = vunpack.c.0.s8 %v5096
        %v5098 = vperm.slane %v5092, %v5097
        %v5100 = vunpack.c.l.s4 1934713408
        %v5101 = vunpack.c.0.s8 %v5100
        %v5102 = vperm.slane %v5094, %v5101
        %v5103 = vrot.slane %v5090, 4
        %v5104 = vsel %vm802, %v5103, %v5078
        %v5105 = vrot.slane %v5078, 4
        %v5106 = vsel %vm802, %v5090, %v5105
        %v5108 = vunpack.c.l.s4 1934713408
        %v5109 = vunpack.c.0.s8 %v5108
        %v5110 = vperm.slane %v5104, %v5109
        %v5112 = vunpack.c.l.s4 1934713408
        %v5113 = vunpack.c.0.s8 %v5112
        %v5114 = vperm.slane %v5106, %v5113
        %v5115 = vrot.slane %v5098, 4
        %v5116 = vsel %vm802, 0.0, %v5115
        %v5117 = vrot.slane %v5102, 4
        %v5118 = vsel %vm802, 0.0, %v5117
        %v5119 = vrot.slane %v5110, 4
        %v5120 = vsel %vm802, 0.0, %v5119
        %v5121 = vrot.slane %v5114, 4
        %v5122 = vsel %vm802, 0.0, %v5121
        %v5123 = vrot.slane %v4812, 4
        %v5124 = vsel %vm802, %v5123, %v612
        %v5125 = vrot.slane %v612, 4
        %v5126 = vsel %vm802, %v4812, %v5125
        %v5128 = vunpack.c.l.s4 1983009808
        %v5129 = vunpack.c.0.s8 %v5128
        %v5130 = vperm.slane %v5124, %v5129
        %v5132 = vunpack.c.l.s4 1983009808
        %v5133 = vunpack.c.0.s8 %v5132
        %v5134 = vperm.slane %v5126, %v5133
        %v5135 = vrot.slane %v4860, 4
        %v5136 = vsel %vm802, %v5135, %v4764
        %v5137 = vrot.slane %v4764, 4
        %v5138 = vsel %vm802, %v4860, %v5137
        %v5140 = vunpack.c.l.s4 1983009808
        %v5141 = vunpack.c.0.s8 %v5140
        %v5142 = vperm.slane %v5136, %v5141
        %v5144 = vunpack.c.l.s4 1983009808
        %v5145 = vunpack.c.0.s8 %v5144
        %v5146 = vperm.slane %v5138, %v5145
        %v5147 = vrot.slane %v5142, 4
        %v5148 = vsel %vm802, %v5147, %v5130
        %v5149 = vrot.slane %v5130, 4
        %v5150 = vsel %vm802, %v5142, %v5149
        %v5152 = vunpack.c.l.s4 1934713408
        %v5153 = vunpack.c.0.s8 %v5152
        %v5154 = vperm.slane %v5148, %v5153
        %v5156 = vunpack.c.l.s4 1934713408
        %v5157 = vunpack.c.0.s8 %v5156
        %v5158 = vperm.slane %v5150, %v5157
        %v5159 = vrot.slane %v5146, 4
        %v5160 = vsel %vm802, %v5159, %v5134
        %v5161 = vrot.slane %v5134, 4
        %v5162 = vsel %vm802, %v5146, %v5161
        %v5164 = vunpack.c.l.s4 1934713408
        %v5165 = vunpack.c.0.s8 %v5164
        %v5166 = vperm.slane %v5160, %v5165
        %v5168 = vunpack.c.l.s4 1934713408
        %v5169 = vunpack.c.0.s8 %v5168
        %v5170 = vperm.slane %v5162, %v5169
        %v5171 = vrot.slane %v5154, 4
        %v5172 = vsel %vm802, 0.0, %v5171
        %v5173 = vrot.slane %v5158, 4
        %v5174 = vsel %vm802, 0.0, %v5173
        %v5175 = vrot.slane %v5166, 4
        %v5176 = vsel %vm802, 0.0, %v5175
        %v5177 = vrot.slane %v5170, 4
        %v5178 = vsel %vm802, 0.0, %v5177
        %v5179 = vrot.slane %v4814, 4
        %v5180 = vsel %vm802, %v5179, %v614
        %v5181 = vrot.slane %v614, 4
        %v5182 = vsel %vm802, %v4814, %v5181
        %v5184 = vunpack.c.l.s4 1983009808
        %v5185 = vunpack.c.0.s8 %v5184
        %v5186 = vperm.slane %v5180, %v5185
        %v5188 = vunpack.c.l.s4 1983009808
        %v5189 = vunpack.c.0.s8 %v5188
        %v5190 = vperm.slane %v5182, %v5189
        %v5191 = vrot.slane %v4862, 4
        %v5192 = vsel %vm802, %v5191, %v4766
        %v5193 = vrot.slane %v4766, 4
        %v5194 = vsel %vm802, %v4862, %v5193
        %v5196 = vunpack.c.l.s4 1983009808
        %v5197 = vunpack.c.0.s8 %v5196
        %v5198 = vperm.slane %v5192, %v5197
        %v5200 = vunpack.c.l.s4 1983009808
        %v5201 = vunpack.c.0.s8 %v5200
        %v5202 = vperm.slane %v5194, %v5201
        %v5203 = vrot.slane %v5198, 4
        %v5204 = vsel %vm802, %v5203, %v5186
        %v5205 = vrot.slane %v5186, 4
        %v5206 = vsel %vm802, %v5198, %v5205
        %v5208 = vunpack.c.l.s4 1934713408
        %v5209 = vunpack.c.0.s8 %v5208
        %v5210 = vperm.slane %v5204, %v5209
        %v5212 = vunpack.c.l.s4 1934713408
        %v5213 = vunpack.c.0.s8 %v5212
        %v5214 = vperm.slane %v5206, %v5213
        %v5215 = vrot.slane %v5202, 4
        %v5216 = vsel %vm802, %v5215, %v5190
        %v5217 = vrot.slane %v5190, 4
        %v5218 = vsel %vm802, %v5202, %v5217
        %v5220 = vunpack.c.l.s4 1934713408
        %v5221 = vunpack.c.0.s8 %v5220
        %v5222 = vperm.slane %v5216, %v5221
        %v5224 = vunpack.c.l.s4 1934713408
        %v5225 = vunpack.c.0.s8 %v5224
        %v5226 = vperm.slane %v5218, %v5225
        %v5227 = vrot.slane %v5210, 4
        %v5228 = vsel %vm802, 0.0, %v5227
        %v5229 = vrot.slane %v5214, 4
        %v5230 = vsel %vm802, 0.0, %v5229
        %v5231 = vrot.slane %v5222, 4
        %v5232 = vsel %vm802, 0.0, %v5231
        %v5233 = vrot.slane %v5226, 4
        %v5234 = vsel %vm802, 0.0, %v5233
        %v5235 = vrot.slane %v4816, 4
        %v5236 = vsel %vm802, %v5235, %v617
        %v5237 = vrot.slane %v617, 4
        %v5238 = vsel %vm802, %v4816, %v5237
        %v5240 = vunpack.c.l.s4 1983009808
        %v5241 = vunpack.c.0.s8 %v5240
        %v5242 = vperm.slane %v5236, %v5241
        %v5244 = vunpack.c.l.s4 1983009808
        %v5245 = vunpack.c.0.s8 %v5244
        %v5246 = vperm.slane %v5238, %v5245
        %v5247 = vrot.slane %v4864, 4
        %v5248 = vsel %vm802, %v5247, %v4768
        %v5249 = vrot.slane %v4768, 4
        %v5250 = vsel %vm802, %v4864, %v5249
        %v5252 = vunpack.c.l.s4 1983009808
        %v5253 = vunpack.c.0.s8 %v5252
        %v5254 = vperm.slane %v5248, %v5253
        %v5256 = vunpack.c.l.s4 1983009808
        %v5257 = vunpack.c.0.s8 %v5256
        %v5258 = vperm.slane %v5250, %v5257
        %v5259 = vrot.slane %v5254, 4
        %v5260 = vsel %vm802, %v5259, %v5242
        %v5261 = vrot.slane %v5242, 4
        %v5262 = vsel %vm802, %v5254, %v5261
        %v5264 = vunpack.c.l.s4 1934713408
        %v5265 = vunpack.c.0.s8 %v5264
        %v5266 = vperm.slane %v5260, %v5265
        %v5268 = vunpack.c.l.s4 1934713408
        %v5269 = vunpack.c.0.s8 %v5268
        %v5270 = vperm.slane %v5262, %v5269
        %v5271 = vrot.slane %v5258, 4
        %v5272 = vsel %vm802, %v5271, %v5246
        %v5273 = vrot.slane %v5246, 4
        %v5274 = vsel %vm802, %v5258, %v5273
        %v5276 = vunpack.c.l.s4 1934713408
        %v5277 = vunpack.c.0.s8 %v5276
        %v5278 = vperm.slane %v5272, %v5277
        %v5280 = vunpack.c.l.s4 1934713408
        %v5281 = vunpack.c.0.s8 %v5280
        %v5282 = vperm.slane %v5274, %v5281
        %v5283 = vrot.slane %v5266, 4
        %v5284 = vsel %vm802, 0.0, %v5283
        %v5285 = vrot.slane %v5270, 4
        %v5286 = vsel %vm802, 0.0, %v5285
        %v5287 = vrot.slane %v5278, 4
        %v5288 = vsel %vm802, 0.0, %v5287
        %v5289 = vrot.slane %v5282, 4
        %v5290 = vsel %vm802, 0.0, %v5289
        %v5291 = vrot.slane %v4818, 4
        %v5292 = vsel %vm802, %v5291, %v619
        %v5293 = vrot.slane %v619, 4
        %v5294 = vsel %vm802, %v4818, %v5293
        %v5296 = vunpack.c.l.s4 1983009808
        %v5297 = vunpack.c.0.s8 %v5296
        %v5298 = vperm.slane %v5292, %v5297
        %v5300 = vunpack.c.l.s4 1983009808
        %v5301 = vunpack.c.0.s8 %v5300
        %v5302 = vperm.slane %v5294, %v5301
        %v5303 = vrot.slane %v4866, 4
        %v5304 = vsel %vm802, %v5303, %v4770
        %v5305 = vrot.slane %v4770, 4
        %v5306 = vsel %vm802, %v4866, %v5305
        %v5308 = vunpack.c.l.s4 1983009808
        %v5309 = vunpack.c.0.s8 %v5308
        %v5310 = vperm.slane %v5304, %v5309
        %v5312 = vunpack.c.l.s4 1983009808
        %v5313 = vunpack.c.0.s8 %v5312
        %v5314 = vperm.slane %v5306, %v5313
        %v5315 = vrot.slane %v5310, 4
        %v5316 = vsel %vm802, %v5315, %v5298
        %v5317 = vrot.slane %v5298, 4
        %v5318 = vsel %vm802, %v5310, %v5317
        %v5320 = vunpack.c.l.s4 1934713408
        %v5321 = vunpack.c.0.s8 %v5320
        %v5322 = vperm.slane %v5316, %v5321
        %v5324 = vunpack.c.l.s4 1934713408
        %v5325 = vunpack.c.0.s8 %v5324
        %v5326 = vperm.slane %v5318, %v5325
        %v5327 = vrot.slane %v5314, 4
        %v5328 = vsel %vm802, %v5327, %v5302
        %v5329 = vrot.slane %v5302, 4
        %v5330 = vsel %vm802, %v5314, %v5329
        %v5332 = vunpack.c.l.s4 1934713408
        %v5333 = vunpack.c.0.s8 %v5332
        %v5334 = vperm.slane %v5328, %v5333
        %v5336 = vunpack.c.l.s4 1934713408
        %v5337 = vunpack.c.0.s8 %v5336
        %v5338 = vperm.slane %v5330, %v5337
        %v5339 = vrot.slane %v5322, 4
        %v5340 = vsel %vm802, 0.0, %v5339
        %v5341 = vrot.slane %v5326, 4
        %v5342 = vsel %vm802, 0.0, %v5341
        %v5343 = vrot.slane %v5334, 4
        %v5344 = vsel %vm802, 0.0, %v5343
        %v5345 = vrot.slane %v5338, 4
        %v5346 = vsel %vm802, 0.0, %v5345
        %v5347 = vrot.slane %v4820, 4
        %v5348 = vsel %vm802, %v5347, %v622
        %v5349 = vrot.slane %v622, 4
        %v5350 = vsel %vm802, %v4820, %v5349
        %v5352 = vunpack.c.l.s4 1983009808
        %v5353 = vunpack.c.0.s8 %v5352
        %v5354 = vperm.slane %v5348, %v5353
        %v5356 = vunpack.c.l.s4 1983009808
        %v5357 = vunpack.c.0.s8 %v5356
        %v5358 = vperm.slane %v5350, %v5357
        %v5359 = vrot.slane %v4868, 4
        %v5360 = vsel %vm802, %v5359, %v4772
        %v5361 = vrot.slane %v4772, 4
        %v5362 = vsel %vm802, %v4868, %v5361
        %v5364 = vunpack.c.l.s4 1983009808
        %v5365 = vunpack.c.0.s8 %v5364
        %v5366 = vperm.slane %v5360, %v5365
        %v5368 = vunpack.c.l.s4 1983009808
        %v5369 = vunpack.c.0.s8 %v5368
        %v5370 = vperm.slane %v5362, %v5369
        %v5371 = vrot.slane %v5366, 4
        %v5372 = vsel %vm802, %v5371, %v5354
        %v5373 = vrot.slane %v5354, 4
        %v5374 = vsel %vm802, %v5366, %v5373
        %v5376 = vunpack.c.l.s4 1934713408
        %v5377 = vunpack.c.0.s8 %v5376
        %v5378 = vperm.slane %v5372, %v5377
        %v5380 = vunpack.c.l.s4 1934713408
        %v5381 = vunpack.c.0.s8 %v5380
        %v5382 = vperm.slane %v5374, %v5381
        %v5383 = vrot.slane %v5370, 4
        %v5384 = vsel %vm802, %v5383, %v5358
        %v5385 = vrot.slane %v5358, 4
        %v5386 = vsel %vm802, %v5370, %v5385
        %v5388 = vunpack.c.l.s4 1934713408
        %v5389 = vunpack.c.0.s8 %v5388
        %v5390 = vperm.slane %v5384, %v5389
        %v5392 = vunpack.c.l.s4 1934713408
        %v5393 = vunpack.c.0.s8 %v5392
        %v5394 = vperm.slane %v5386, %v5393
        %v5395 = vrot.slane %v5378, 4
        %v5396 = vsel %vm802, 0.0, %v5395
        %v5397 = vrot.slane %v5382, 4
        %v5398 = vsel %vm802, 0.0, %v5397
        %v5399 = vrot.slane %v5390, 4
        %v5400 = vsel %vm802, 0.0, %v5399
        %v5401 = vrot.slane %v5394, 4
        %v5402 = vsel %vm802, 0.0, %v5401
        %v5403 = vrot.slane %v4822, 4
        %v5404 = vsel %vm802, %v5403, %v624
        %v5405 = vrot.slane %v624, 4
        %v5406 = vsel %vm802, %v4822, %v5405
        %v5408 = vunpack.c.l.s4 1983009808
        %v5409 = vunpack.c.0.s8 %v5408
        %v5410 = vperm.slane %v5404, %v5409
        %v5412 = vunpack.c.l.s4 1983009808
        %v5413 = vunpack.c.0.s8 %v5412
        %v5414 = vperm.slane %v5406, %v5413
        %v5415 = vrot.slane %v4870, 4
        %v5416 = vsel %vm802, %v5415, %v4774
        %v5417 = vrot.slane %v4774, 4
        %v5418 = vsel %vm802, %v4870, %v5417
        %v5420 = vunpack.c.l.s4 1983009808
        %v5421 = vunpack.c.0.s8 %v5420
        %v5422 = vperm.slane %v5416, %v5421
        %v5424 = vunpack.c.l.s4 1983009808
        %v5425 = vunpack.c.0.s8 %v5424
        %v5426 = vperm.slane %v5418, %v5425
        %v5427 = vrot.slane %v5422, 4
        %v5428 = vsel %vm802, %v5427, %v5410
        %v5429 = vrot.slane %v5410, 4
        %v5430 = vsel %vm802, %v5422, %v5429
        %v5432 = vunpack.c.l.s4 1934713408
        %v5433 = vunpack.c.0.s8 %v5432
        %v5434 = vperm.slane %v5428, %v5433
        %v5436 = vunpack.c.l.s4 1934713408
        %v5437 = vunpack.c.0.s8 %v5436
        %v5438 = vperm.slane %v5430, %v5437
        %v5439 = vrot.slane %v5426, 4
        %v5440 = vsel %vm802, %v5439, %v5414
        %v5441 = vrot.slane %v5414, 4
        %v5442 = vsel %vm802, %v5426, %v5441
        %v5444 = vunpack.c.l.s4 1934713408
        %v5445 = vunpack.c.0.s8 %v5444
        %v5446 = vperm.slane %v5440, %v5445
        %v5448 = vunpack.c.l.s4 1934713408
        %v5449 = vunpack.c.0.s8 %v5448
        %v5450 = vperm.slane %v5442, %v5449
        %v5451 = vrot.slane %v5434, 4
        %v5452 = vsel %vm802, 0.0, %v5451
        %v5453 = vrot.slane %v5438, 4
        %v5454 = vsel %vm802, 0.0, %v5453
        %v5455 = vrot.slane %v5446, 4
        %v5456 = vsel %vm802, 0.0, %v5455
        %v5457 = vrot.slane %v5450, 4
        %v5458 = vsel %vm802, 0.0, %v5457
        %v5459 = vrot.slane %v4824, 4
        %v5460 = vsel %vm802, %v5459, %v627
        %v5461 = vrot.slane %v627, 4
        %v5462 = vsel %vm802, %v4824, %v5461
        %v5464 = vunpack.c.l.s4 1983009808
        %v5465 = vunpack.c.0.s8 %v5464
        %v5466 = vperm.slane %v5460, %v5465
        %v5468 = vunpack.c.l.s4 1983009808
        %v5469 = vunpack.c.0.s8 %v5468
        %v5470 = vperm.slane %v5462, %v5469
        %v5471 = vrot.slane %v4872, 4
        %v5472 = vsel %vm802, %v5471, %v4776
        %v5473 = vrot.slane %v4776, 4
        %v5474 = vsel %vm802, %v4872, %v5473
        %v5476 = vunpack.c.l.s4 1983009808
        %v5477 = vunpack.c.0.s8 %v5476
        %v5478 = vperm.slane %v5472, %v5477
        %v5480 = vunpack.c.l.s4 1983009808
        %v5481 = vunpack.c.0.s8 %v5480
        %v5482 = vperm.slane %v5474, %v5481
        %v5483 = vrot.slane %v5478, 4
        %v5484 = vsel %vm802, %v5483, %v5466
        %v5485 = vrot.slane %v5466, 4
        %v5486 = vsel %vm802, %v5478, %v5485
        %v5488 = vunpack.c.l.s4 1934713408
        %v5489 = vunpack.c.0.s8 %v5488
        %v5490 = vperm.slane %v5484, %v5489
        %v5492 = vunpack.c.l.s4 1934713408
        %v5493 = vunpack.c.0.s8 %v5492
        %v5494 = vperm.slane %v5486, %v5493
        %v5495 = vrot.slane %v5482, 4
        %v5496 = vsel %vm802, %v5495, %v5470
        %v5497 = vrot.slane %v5470, 4
        %v5498 = vsel %vm802, %v5482, %v5497
        %v5500 = vunpack.c.l.s4 1934713408
        %v5501 = vunpack.c.0.s8 %v5500
        %v5502 = vperm.slane %v5496, %v5501
        %v5504 = vunpack.c.l.s4 1934713408
        %v5505 = vunpack.c.0.s8 %v5504
        %v5506 = vperm.slane %v5498, %v5505
        %v5507 = vrot.slane %v5490, 4
        %v5508 = vsel %vm802, 0.0, %v5507
        %v5509 = vrot.slane %v5494, 4
        %v5510 = vsel %vm802, 0.0, %v5509
        %v5511 = vrot.slane %v5502, 4
        %v5512 = vsel %vm802, 0.0, %v5511
        %v5513 = vrot.slane %v5506, 4
        %v5514 = vsel %vm802, 0.0, %v5513
        %v5515 = vrot.slane %v4826, 4
        %v5516 = vsel %vm802, %v5515, %v629
        %v5517 = vrot.slane %v629, 4
        %v5518 = vsel %vm802, %v4826, %v5517
        %v5520 = vunpack.c.l.s4 1983009808
        %v5521 = vunpack.c.0.s8 %v5520
        %v5522 = vperm.slane %v5516, %v5521
        %v5524 = vunpack.c.l.s4 1983009808
        %v5525 = vunpack.c.0.s8 %v5524
        %v5526 = vperm.slane %v5518, %v5525
        %v5527 = vrot.slane %v4874, 4
        %v5528 = vsel %vm802, %v5527, %v4778
        %v5529 = vrot.slane %v4778, 4
        %v5530 = vsel %vm802, %v4874, %v5529
        %v5532 = vunpack.c.l.s4 1983009808
        %v5533 = vunpack.c.0.s8 %v5532
        %v5534 = vperm.slane %v5528, %v5533
        %v5536 = vunpack.c.l.s4 1983009808
        %v5537 = vunpack.c.0.s8 %v5536
        %v5538 = vperm.slane %v5530, %v5537
        %v5539 = vrot.slane %v5534, 4
        %v5540 = vsel %vm802, %v5539, %v5522
        %v5541 = vrot.slane %v5522, 4
        %v5542 = vsel %vm802, %v5534, %v5541
        %v5544 = vunpack.c.l.s4 1934713408
        %v5545 = vunpack.c.0.s8 %v5544
        %v5546 = vperm.slane %v5540, %v5545
        %v5548 = vunpack.c.l.s4 1934713408
        %v5549 = vunpack.c.0.s8 %v5548
        %v5550 = vperm.slane %v5542, %v5549
        %v5551 = vrot.slane %v5538, 4
        %v5552 = vsel %vm802, %v5551, %v5526
        %v5553 = vrot.slane %v5526, 4
        %v5554 = vsel %vm802, %v5538, %v5553
        %v5556 = vunpack.c.l.s4 1934713408
        %v5557 = vunpack.c.0.s8 %v5556
        %v5558 = vperm.slane %v5552, %v5557
        %v5560 = vunpack.c.l.s4 1934713408
        %v5561 = vunpack.c.0.s8 %v5560
        %v5562 = vperm.slane %v5554, %v5561
        %v5563 = vrot.slane %v5546, 4
        %v5564 = vsel %vm802, 0.0, %v5563
        %v5565 = vrot.slane %v5550, 4
        %v5566 = vsel %vm802, 0.0, %v5565
        %v5567 = vrot.slane %v5558, 4
        %v5568 = vsel %vm802, 0.0, %v5567
        %v5569 = vrot.slane %v5562, 4
        %v5570 = vsel %vm802, 0.0, %v5569
        %v5571 = vrot.slane %v4828, 4
        %v5572 = vsel %vm802, %v5571, %v632
        %v5573 = vrot.slane %v632, 4
        %v5574 = vsel %vm802, %v4828, %v5573
        %v5576 = vunpack.c.l.s4 1983009808
        %v5577 = vunpack.c.0.s8 %v5576
        %v5578 = vperm.slane %v5572, %v5577
        %v5580 = vunpack.c.l.s4 1983009808
        %v5581 = vunpack.c.0.s8 %v5580
        %v5582 = vperm.slane %v5574, %v5581
        %v5583 = vrot.slane %v4876, 4
        %v5584 = vsel %vm802, %v5583, %v4780
        %v5585 = vrot.slane %v4780, 4
        %v5586 = vsel %vm802, %v4876, %v5585
        %v5588 = vunpack.c.l.s4 1983009808
        %v5589 = vunpack.c.0.s8 %v5588
        %v5590 = vperm.slane %v5584, %v5589
        %v5592 = vunpack.c.l.s4 1983009808
        %v5593 = vunpack.c.0.s8 %v5592
        %v5594 = vperm.slane %v5586, %v5593
        %v5595 = vrot.slane %v5590, 4
        %v5596 = vsel %vm802, %v5595, %v5578
        %v5597 = vrot.slane %v5578, 4
        %v5598 = vsel %vm802, %v5590, %v5597
        %v5600 = vunpack.c.l.s4 1934713408
        %v5601 = vunpack.c.0.s8 %v5600
        %v5602 = vperm.slane %v5596, %v5601
        %v5604 = vunpack.c.l.s4 1934713408
        %v5605 = vunpack.c.0.s8 %v5604
        %v5606 = vperm.slane %v5598, %v5605
        %v5607 = vrot.slane %v5594, 4
        %v5608 = vsel %vm802, %v5607, %v5582
        %v5609 = vrot.slane %v5582, 4
        %v5610 = vsel %vm802, %v5594, %v5609
        %v5612 = vunpack.c.l.s4 1934713408
        %v5613 = vunpack.c.0.s8 %v5612
        %v5614 = vperm.slane %v5608, %v5613
        %v5616 = vunpack.c.l.s4 1934713408
        %v5617 = vunpack.c.0.s8 %v5616
        %v5618 = vperm.slane %v5610, %v5617
        %v5619 = vrot.slane %v5602, 4
        %v5620 = vsel %vm802, 0.0, %v5619
        %v5621 = vrot.slane %v5606, 4
        %v5622 = vsel %vm802, 0.0, %v5621
        %v5623 = vrot.slane %v5614, 4
        %v5624 = vsel %vm802, 0.0, %v5623
        %v5625 = vrot.slane %v5618, 4
        %v5626 = vsel %vm802, 0.0, %v5625
        %v5627 = vrot.slane %v4830, 4
        %v5628 = vsel %vm802, %v5627, %v634
        %v5629 = vrot.slane %v634, 4
        %v5630 = vsel %vm802, %v4830, %v5629
        %v5632 = vunpack.c.l.s4 1983009808
        %v5633 = vunpack.c.0.s8 %v5632
        %v5634 = vperm.slane %v5628, %v5633
        %v5636 = vunpack.c.l.s4 1983009808
        %v5637 = vunpack.c.0.s8 %v5636
        %v5638 = vperm.slane %v5630, %v5637
        %v5639 = vrot.slane %v4878, 4
        %v5640 = vsel %vm802, %v5639, %v4782
        %v5641 = vrot.slane %v4782, 4
        %v5642 = vsel %vm802, %v4878, %v5641
        %v5644 = vunpack.c.l.s4 1983009808
        %v5645 = vunpack.c.0.s8 %v5644
        %v5646 = vperm.slane %v5640, %v5645
        %v5648 = vunpack.c.l.s4 1983009808
        %v5649 = vunpack.c.0.s8 %v5648
        %v5650 = vperm.slane %v5642, %v5649
        %v5651 = vrot.slane %v5646, 4
        %v5652 = vsel %vm802, %v5651, %v5634
        %v5653 = vrot.slane %v5634, 4
        %v5654 = vsel %vm802, %v5646, %v5653
        %v5656 = vunpack.c.l.s4 1934713408
        %v5657 = vunpack.c.0.s8 %v5656
        %v5658 = vperm.slane %v5652, %v5657
        %v5660 = vunpack.c.l.s4 1934713408
        %v5661 = vunpack.c.0.s8 %v5660
        %v5662 = vperm.slane %v5654, %v5661
        %v5663 = vrot.slane %v5650, 4
        %v5664 = vsel %vm802, %v5663, %v5638
        %v5665 = vrot.slane %v5638, 4
        %v5666 = vsel %vm802, %v5650, %v5665
        %v5668 = vunpack.c.l.s4 1934713408
        %v5669 = vunpack.c.0.s8 %v5668
        %v5670 = vperm.slane %v5664, %v5669
        %v5672 = vunpack.c.l.s4 1934713408
        %v5673 = vunpack.c.0.s8 %v5672
        %v5674 = vperm.slane %v5666, %v5673
        %v5675 = vrot.slane %v5658, 4
        %v5676 = vsel %vm802, 0.0, %v5675
        %v5677 = vrot.slane %v5662, 4
        %v5678 = vsel %vm802, 0.0, %v5677
        %v5679 = vrot.slane %v5670, 4
        %v5680 = vsel %vm802, 0.0, %v5679
        %v5681 = vrot.slane %v5674, 4
        %v5682 = vsel %vm802, 0.0, %v5681
        %v5683 = vrot.slane %v4832, 4
        %v5684 = vsel %vm802, %v5683, %v637
        %v5685 = vrot.slane %v637, 4
        %v5686 = vsel %vm802, %v4832, %v5685
        %v5688 = vunpack.c.l.s4 1983009808
        %v5689 = vunpack.c.0.s8 %v5688
        %v5690 = vperm.slane %v5684, %v5689
        %v5692 = vunpack.c.l.s4 1983009808
        %v5693 = vunpack.c.0.s8 %v5692
        %v5694 = vperm.slane %v5686, %v5693
        %v5695 = vrot.slane %v4880, 4
        %v5696 = vsel %vm802, %v5695, %v4784
        %v5697 = vrot.slane %v4784, 4
        %v5698 = vsel %vm802, %v4880, %v5697
        %v5700 = vunpack.c.l.s4 1983009808
        %v5701 = vunpack.c.0.s8 %v5700
        %v5702 = vperm.slane %v5696, %v5701
        %v5704 = vunpack.c.l.s4 1983009808
        %v5705 = vunpack.c.0.s8 %v5704
        %v5706 = vperm.slane %v5698, %v5705
        %v5707 = vrot.slane %v5702, 4
        %v5708 = vsel %vm802, %v5707, %v5690
        %v5709 = vrot.slane %v5690, 4
        %v5710 = vsel %vm802, %v5702, %v5709
        %v5712 = vunpack.c.l.s4 1934713408
        %v5713 = vunpack.c.0.s8 %v5712
        %v5714 = vperm.slane %v5708, %v5713
        %v5716 = vunpack.c.l.s4 1934713408
        %v5717 = vunpack.c.0.s8 %v5716
        %v5718 = vperm.slane %v5710, %v5717
        %v5719 = vrot.slane %v5706, 4
        %v5720 = vsel %vm802, %v5719, %v5694
        %v5721 = vrot.slane %v5694, 4
        %v5722 = vsel %vm802, %v5706, %v5721
        %v5724 = vunpack.c.l.s4 1934713408
        %v5725 = vunpack.c.0.s8 %v5724
        %v5726 = vperm.slane %v5720, %v5725
        %v5728 = vunpack.c.l.s4 1934713408
        %v5729 = vunpack.c.0.s8 %v5728
        %v5730 = vperm.slane %v5722, %v5729
        %v5731 = vrot.slane %v5714, 4
        %v5732 = vsel %vm802, 0.0, %v5731
        %v5733 = vrot.slane %v5718, 4
        %v5734 = vsel %vm802, 0.0, %v5733
        %v5735 = vrot.slane %v5726, 4
        %v5736 = vsel %vm802, 0.0, %v5735
        %v5737 = vrot.slane %v5730, 4
        %v5738 = vsel %vm802, 0.0, %v5737
        %v5739 = vrot.slane %v4834, 4
        %v5740 = vsel %vm802, %v5739, %v639
        %v5741 = vrot.slane %v639, 4
        %v5742 = vsel %vm802, %v4834, %v5741
        %v5744 = vunpack.c.l.s4 1983009808
        %v5745 = vunpack.c.0.s8 %v5744
        %v5746 = vperm.slane %v5740, %v5745
        %v5748 = vunpack.c.l.s4 1983009808
        %v5749 = vunpack.c.0.s8 %v5748
        %v5750 = vperm.slane %v5742, %v5749
        %v5751 = vrot.slane %v4882, 4
        %v5752 = vsel %vm802, %v5751, %v4786
        %v5753 = vrot.slane %v4786, 4
        %v5754 = vsel %vm802, %v4882, %v5753
        %v5756 = vunpack.c.l.s4 1983009808
        %v5757 = vunpack.c.0.s8 %v5756
        %v5758 = vperm.slane %v5752, %v5757
        %v5760 = vunpack.c.l.s4 1983009808
        %v5761 = vunpack.c.0.s8 %v5760
        %v5762 = vperm.slane %v5754, %v5761
        %v5763 = vrot.slane %v5758, 4
        %v5764 = vsel %vm802, %v5763, %v5746
        %v5765 = vrot.slane %v5746, 4
        %v5766 = vsel %vm802, %v5758, %v5765
        %v5768 = vunpack.c.l.s4 1934713408
        %v5769 = vunpack.c.0.s8 %v5768
        %v5770 = vperm.slane %v5764, %v5769
        %v5772 = vunpack.c.l.s4 1934713408
        %v5773 = vunpack.c.0.s8 %v5772
        %v5774 = vperm.slane %v5766, %v5773
        %v5775 = vrot.slane %v5762, 4
        %v5776 = vsel %vm802, %v5775, %v5750
        %v5777 = vrot.slane %v5750, 4
        %v5778 = vsel %vm802, %v5762, %v5777
        %v5780 = vunpack.c.l.s4 1934713408
        %v5781 = vunpack.c.0.s8 %v5780
        %v5782 = vperm.slane %v5776, %v5781
        %v5784 = vunpack.c.l.s4 1934713408
        %v5785 = vunpack.c.0.s8 %v5784
        %v5786 = vperm.slane %v5778, %v5785
        %v5787 = vrot.slane %v5770, 4
        %v5788 = vsel %vm802, 0.0, %v5787
        %v5789 = vrot.slane %v5774, 4
        %v5790 = vsel %vm802, 0.0, %v5789
        %v5791 = vrot.slane %v5782, 4
        %v5792 = vsel %vm802, 0.0, %v5791
        %v5793 = vrot.slane %v5786, 4
        %v5794 = vsel %vm802, 0.0, %v5793
        %v5795 = vsel %vm802, %v4949, %v4930
        %v5797 = vunpack.c.l.s4 1983009808
        %v5798 = vunpack.c.0.s8 %v5797
        %v5799 = vperm.slane %v5795, %v5798
        %v5800 = vrot.slane %v4950, 4
        %v5801 = vsel %vm802, %v5800, %v4948
        %v5803 = vunpack.c.l.s4 1983009808
        %v5804 = vunpack.c.0.s8 %v5803
        %v5805 = vperm.slane %v5801, %v5804
        %v5806 = vsel %vm802, %v4953, %v4942
        %v5808 = vunpack.c.l.s4 1983009808
        %v5809 = vunpack.c.0.s8 %v5808
        %v5810 = vperm.slane %v5806, %v5809
        %v5811 = vrot.slane %v4954, 4
        %v5812 = vsel %vm802, %v5811, %v4952
        %v5814 = vunpack.c.l.s4 1983009808
        %v5815 = vunpack.c.0.s8 %v5814
        %v5816 = vperm.slane %v5812, %v5815
        %v5817 = vrot.slane %v5805, 4
        %v5818 = vsel %vm802, %v5817, %v5799
        %v5819 = vrot.slane %v5799, 4
        %v5820 = vsel %vm802, %v5805, %v5819
        %v5822 = vunpack.c.l.s4 1934713408
        %v5823 = vunpack.c.0.s8 %v5822
        %v5824 = vperm.slane %v5818, %v5823
        %v5826 = vunpack.c.l.s4 1934713408
        %v5827 = vunpack.c.0.s8 %v5826
        %v5828 = vperm.slane %v5820, %v5827
        %v5829 = vrot.slane %v5816, 4
        %v5830 = vsel %vm802, %v5829, %v5810
        %v5831 = vrot.slane %v5810, 4
        %v5832 = vsel %vm802, %v5816, %v5831
        %v5834 = vunpack.c.l.s4 1934713408
        %v5835 = vunpack.c.0.s8 %v5834
        %v5836 = vperm.slane %v5830, %v5835
        %v5838 = vunpack.c.l.s4 1934713408
        %v5839 = vunpack.c.0.s8 %v5838
        %v5840 = vperm.slane %v5832, %v5839
        %v5841 = vrot.slane %v5836, 4
        %v5842 = vsel %vm802, %v5841, %v5824
        %v5843 = vrot.slane %v5824, 4
        %v5844 = vsel %vm802, %v5836, %v5843
        %v5845 = vrot.slane %v5840, 4
        %v5846 = vsel %vm802, %v5845, %v5828
        %v5847 = vrot.slane %v5828, 4
        %v5848 = vsel %vm802, %v5840, %v5847
        %v5849 = vsel %vm802, %v5005, %v4986
        %v5851 = vunpack.c.l.s4 1983009808
        %v5852 = vunpack.c.0.s8 %v5851
        %v5853 = vperm.slane %v5849, %v5852
        %v5854 = vrot.slane %v5006, 4
        %v5855 = vsel %vm802, %v5854, %v5004
        %v5857 = vunpack.c.l.s4 1983009808
        %v5858 = vunpack.c.0.s8 %v5857
        %v5859 = vperm.slane %v5855, %v5858
        %v5860 = vsel %vm802, %v5009, %v4998
        %v5862 = vunpack.c.l.s4 1983009808
        %v5863 = vunpack.c.0.s8 %v5862
        %v5864 = vperm.slane %v5860, %v5863
        %v5865 = vrot.slane %v5010, 4
        %v5866 = vsel %vm802, %v5865, %v5008
        %v5868 = vunpack.c.l.s4 1983009808
        %v5869 = vunpack.c.0.s8 %v5868
        %v5870 = vperm.slane %v5866, %v5869
        %v5871 = vrot.slane %v5859, 4
        %v5872 = vsel %vm802, %v5871, %v5853
        %v5873 = vrot.slane %v5853, 4
        %v5874 = vsel %vm802, %v5859, %v5873
        %v5876 = vunpack.c.l.s4 1934713408
        %v5877 = vunpack.c.0.s8 %v5876
        %v5878 = vperm.slane %v5872, %v5877
        %v5880 = vunpack.c.l.s4 1934713408
        %v5881 = vunpack.c.0.s8 %v5880
        %v5882 = vperm.slane %v5874, %v5881
        %v5883 = vrot.slane %v5870, 4
        %v5884 = vsel %vm802, %v5883, %v5864
        %v5885 = vrot.slane %v5864, 4
        %v5886 = vsel %vm802, %v5870, %v5885
        %v5888 = vunpack.c.l.s4 1934713408
        %v5889 = vunpack.c.0.s8 %v5888
        %v5890 = vperm.slane %v5884, %v5889
        %v5892 = vunpack.c.l.s4 1934713408
        %v5893 = vunpack.c.0.s8 %v5892
        %v5894 = vperm.slane %v5886, %v5893
        %v5895 = vrot.slane %v5890, 4
        %v5896 = vsel %vm802, %v5895, %v5878
        %v5897 = vrot.slane %v5878, 4
        %v5898 = vsel %vm802, %v5890, %v5897
        %v5899 = vrot.slane %v5894, 4
        %v5900 = vsel %vm802, %v5899, %v5882
        %v5901 = vrot.slane %v5882, 4
        %v5902 = vsel %vm802, %v5894, %v5901
        %v5903 = vsel %vm802, %v5061, %v5042
        %v5905 = vunpack.c.l.s4 1983009808
        %v5906 = vunpack.c.0.s8 %v5905
        %v5907 = vperm.slane %v5903, %v5906
        %v5908 = vrot.slane %v5062, 4
        %v5909 = vsel %vm802, %v5908, %v5060
        %v5911 = vunpack.c.l.s4 1983009808
        %v5912 = vunpack.c.0.s8 %v5911
        %v5913 = vperm.slane %v5909, %v5912
        %v5914 = vsel %vm802, %v5065, %v5054
        %v5916 = vunpack.c.l.s4 1983009808
        %v5917 = vunpack.c.0.s8 %v5916
        %v5918 = vperm.slane %v5914, %v5917
        %v5919 = vrot.slane %v5066, 4
        %v5920 = vsel %vm802, %v5919, %v5064
        %v5922 = vunpack.c.l.s4 1983009808
        %v5923 = vunpack.c.0.s8 %v5922
        %v5924 = vperm.slane %v5920, %v5923
        %v5925 = vrot.slane %v5913, 4
        %v5926 = vsel %vm802, %v5925, %v5907
        %v5927 = vrot.slane %v5907, 4
        %v5928 = vsel %vm802, %v5913, %v5927
        %v5930 = vunpack.c.l.s4 1934713408
        %v5931 = vunpack.c.0.s8 %v5930
        %v5932 = vperm.slane %v5926, %v5931
        %v5934 = vunpack.c.l.s4 1934713408
        %v5935 = vunpack.c.0.s8 %v5934
        %v5936 = vperm.slane %v5928, %v5935
        %v5937 = vrot.slane %v5924, 4
        %v5938 = vsel %vm802, %v5937, %v5918
        %v5939 = vrot.slane %v5918, 4
        %v5940 = vsel %vm802, %v5924, %v5939
        %v5942 = vunpack.c.l.s4 1934713408
        %v5943 = vunpack.c.0.s8 %v5942
        %v5944 = vperm.slane %v5938, %v5943
        %v5946 = vunpack.c.l.s4 1934713408
        %v5947 = vunpack.c.0.s8 %v5946
        %v5948 = vperm.slane %v5940, %v5947
        %v5949 = vrot.slane %v5944, 4
        %v5950 = vsel %vm802, %v5949, %v5932
        %v5951 = vrot.slane %v5932, 4
        %v5952 = vsel %vm802, %v5944, %v5951
        %v5953 = vrot.slane %v5948, 4
        %v5954 = vsel %vm802, %v5953, %v5936
        %v5955 = vrot.slane %v5936, 4
        %v5956 = vsel %vm802, %v5948, %v5955
        %v5957 = vsel %vm802, %v5117, %v5098
        %v5959 = vunpack.c.l.s4 1983009808
        %v5960 = vunpack.c.0.s8 %v5959
        %v5961 = vperm.slane %v5957, %v5960
        %v5962 = vrot.slane %v5118, 4
        %v5963 = vsel %vm802, %v5962, %v5116
        %v5965 = vunpack.c.l.s4 1983009808
        %v5966 = vunpack.c.0.s8 %v5965
        %v5967 = vperm.slane %v5963, %v5966
        %v5968 = vsel %vm802, %v5121, %v5110
        %v5970 = vunpack.c.l.s4 1983009808
        %v5971 = vunpack.c.0.s8 %v5970
        %v5972 = vperm.slane %v5968, %v5971
        %v5973 = vrot.slane %v5122, 4
        %v5974 = vsel %vm802, %v5973, %v5120
        %v5976 = vunpack.c.l.s4 1983009808
        %v5977 = vunpack.c.0.s8 %v5976
        %v5978 = vperm.slane %v5974, %v5977
        %v5979 = vrot.slane %v5967, 4
        %v5980 = vsel %vm802, %v5979, %v5961
        %v5981 = vrot.slane %v5961, 4
        %v5982 = vsel %vm802, %v5967, %v5981
        %v5984 = vunpack.c.l.s4 1934713408
        %v5985 = vunpack.c.0.s8 %v5984
        %v5986 = vperm.slane %v5980, %v5985
        %v5988 = vunpack.c.l.s4 1934713408
        %v5989 = vunpack.c.0.s8 %v5988
        %v5990 = vperm.slane %v5982, %v5989
        %v5991 = vrot.slane %v5978, 4
        %v5992 = vsel %vm802, %v5991, %v5972
        %v5993 = vrot.slane %v5972, 4
        %v5994 = vsel %vm802, %v5978, %v5993
        %v5996 = vunpack.c.l.s4 1934713408
        %v5997 = vunpack.c.0.s8 %v5996
        %v5998 = vperm.slane %v5992, %v5997
        %v6000 = vunpack.c.l.s4 1934713408
        %v6001 = vunpack.c.0.s8 %v6000
        %v6002 = vperm.slane %v5994, %v6001
        %v6003 = vrot.slane %v5998, 4
        %v6004 = vsel %vm802, %v6003, %v5986
        %v6005 = vrot.slane %v5986, 4
        %v6006 = vsel %vm802, %v5998, %v6005
        %v6007 = vrot.slane %v6002, 4
        %v6008 = vsel %vm802, %v6007, %v5990
        %v6009 = vrot.slane %v5990, 4
        %v6010 = vsel %vm802, %v6002, %v6009
        %v6011 = vsel %vm802, %v5173, %v5154
        %v6013 = vunpack.c.l.s4 1983009808
        %v6014 = vunpack.c.0.s8 %v6013
        %v6015 = vperm.slane %v6011, %v6014
        %v6016 = vrot.slane %v5174, 4
        %v6017 = vsel %vm802, %v6016, %v5172
        %v6019 = vunpack.c.l.s4 1983009808
        %v6020 = vunpack.c.0.s8 %v6019
        %v6021 = vperm.slane %v6017, %v6020
        %v6022 = vsel %vm802, %v5177, %v5166
        %v6024 = vunpack.c.l.s4 1983009808
        %v6025 = vunpack.c.0.s8 %v6024
        %v6026 = vperm.slane %v6022, %v6025
        %v6027 = vrot.slane %v5178, 4
        %v6028 = vsel %vm802, %v6027, %v5176
        %v6030 = vunpack.c.l.s4 1983009808
        %v6031 = vunpack.c.0.s8 %v6030
        %v6032 = vperm.slane %v6028, %v6031
        %v6033 = vrot.slane %v6021, 4
        %v6034 = vsel %vm802, %v6033, %v6015
        %v6035 = vrot.slane %v6015, 4
        %v6036 = vsel %vm802, %v6021, %v6035
        %v6038 = vunpack.c.l.s4 1934713408
        %v6039 = vunpack.c.0.s8 %v6038
        %v6040 = vperm.slane %v6034, %v6039
        %v6042 = vunpack.c.l.s4 1934713408
        %v6043 = vunpack.c.0.s8 %v6042
        %v6044 = vperm.slane %v6036, %v6043
        %v6045 = vrot.slane %v6032, 4
        %v6046 = vsel %vm802, %v6045, %v6026
        %v6047 = vrot.slane %v6026, 4
        %v6048 = vsel %vm802, %v6032, %v6047
        %v6050 = vunpack.c.l.s4 1934713408
        %v6051 = vunpack.c.0.s8 %v6050
        %v6052 = vperm.slane %v6046, %v6051
        %v6054 = vunpack.c.l.s4 1934713408
        %v6055 = vunpack.c.0.s8 %v6054
        %v6056 = vperm.slane %v6048, %v6055
        %v6057 = vrot.slane %v6052, 4
        %v6058 = vsel %vm802, %v6057, %v6040
        %v6059 = vrot.slane %v6040, 4
        %v6060 = vsel %vm802, %v6052, %v6059
        %v6061 = vrot.slane %v6056, 4
        %v6062 = vsel %vm802, %v6061, %v6044
        %v6063 = vrot.slane %v6044, 4
        %v6064 = vsel %vm802, %v6056, %v6063
        %v6065 = vsel %vm802, %v5229, %v5210
        %v6067 = vunpack.c.l.s4 1983009808
        %v6068 = vunpack.c.0.s8 %v6067
        %v6069 = vperm.slane %v6065, %v6068
        %v6070 = vrot.slane %v5230, 4
        %v6071 = vsel %vm802, %v6070, %v5228
        %v6073 = vunpack.c.l.s4 1983009808
        %v6074 = vunpack.c.0.s8 %v6073
        %v6075 = vperm.slane %v6071, %v6074
        %v6076 = vsel %vm802, %v5233, %v5222
        %v6078 = vunpack.c.l.s4 1983009808
        %v6079 = vunpack.c.0.s8 %v6078
        %v6080 = vperm.slane %v6076, %v6079
        %v6081 = vrot.slane %v5234, 4
        %v6082 = vsel %vm802, %v6081, %v5232
        %v6084 = vunpack.c.l.s4 1983009808
        %v6085 = vunpack.c.0.s8 %v6084
        %v6086 = vperm.slane %v6082, %v6085
        %v6087 = vrot.slane %v6075, 4
        %v6088 = vsel %vm802, %v6087, %v6069
        %v6089 = vrot.slane %v6069, 4
        %v6090 = vsel %vm802, %v6075, %v6089
        %v6092 = vunpack.c.l.s4 1934713408
        %v6093 = vunpack.c.0.s8 %v6092
        %v6094 = vperm.slane %v6088, %v6093
        %v6096 = vunpack.c.l.s4 1934713408
        %v6097 = vunpack.c.0.s8 %v6096
        %v6098 = vperm.slane %v6090, %v6097
        %v6099 = vrot.slane %v6086, 4
        %v6100 = vsel %vm802, %v6099, %v6080
        %v6101 = vrot.slane %v6080, 4
        %v6102 = vsel %vm802, %v6086, %v6101
        %v6104 = vunpack.c.l.s4 1934713408
        %v6105 = vunpack.c.0.s8 %v6104
        %v6106 = vperm.slane %v6100, %v6105
        %v6108 = vunpack.c.l.s4 1934713408
        %v6109 = vunpack.c.0.s8 %v6108
        %v6110 = vperm.slane %v6102, %v6109
        %v6111 = vrot.slane %v6106, 4
        %v6112 = vsel %vm802, %v6111, %v6094
        %v6113 = vrot.slane %v6094, 4
        %v6114 = vsel %vm802, %v6106, %v6113
        %v6115 = vrot.slane %v6110, 4
        %v6116 = vsel %vm802, %v6115, %v6098
        %v6117 = vrot.slane %v6098, 4
        %v6118 = vsel %vm802, %v6110, %v6117
        %v6119 = vsel %vm802, %v5285, %v5266
        %v6121 = vunpack.c.l.s4 1983009808
        %v6122 = vunpack.c.0.s8 %v6121
        %v6123 = vperm.slane %v6119, %v6122
        %v6124 = vrot.slane %v5286, 4
        %v6125 = vsel %vm802, %v6124, %v5284
        %v6127 = vunpack.c.l.s4 1983009808
        %v6128 = vunpack.c.0.s8 %v6127
        %v6129 = vperm.slane %v6125, %v6128
        %v6130 = vsel %vm802, %v5289, %v5278
        %v6132 = vunpack.c.l.s4 1983009808
        %v6133 = vunpack.c.0.s8 %v6132
        %v6134 = vperm.slane %v6130, %v6133
        %v6135 = vrot.slane %v5290, 4
        %v6136 = vsel %vm802, %v6135, %v5288
        %v6138 = vunpack.c.l.s4 1983009808
        %v6139 = vunpack.c.0.s8 %v6138
        %v6140 = vperm.slane %v6136, %v6139
        %v6141 = vrot.slane %v6129, 4
        %v6142 = vsel %vm802, %v6141, %v6123
        %v6143 = vrot.slane %v6123, 4
        %v6144 = vsel %vm802, %v6129, %v6143
        %v6146 = vunpack.c.l.s4 1934713408
        %v6147 = vunpack.c.0.s8 %v6146
        %v6148 = vperm.slane %v6142, %v6147
        %v6150 = vunpack.c.l.s4 1934713408
        %v6151 = vunpack.c.0.s8 %v6150
        %v6152 = vperm.slane %v6144, %v6151
        %v6153 = vrot.slane %v6140, 4
        %v6154 = vsel %vm802, %v6153, %v6134
        %v6155 = vrot.slane %v6134, 4
        %v6156 = vsel %vm802, %v6140, %v6155
        %v6158 = vunpack.c.l.s4 1934713408
        %v6159 = vunpack.c.0.s8 %v6158
        %v6160 = vperm.slane %v6154, %v6159
        %v6162 = vunpack.c.l.s4 1934713408
        %v6163 = vunpack.c.0.s8 %v6162
        %v6164 = vperm.slane %v6156, %v6163
        %v6165 = vrot.slane %v6160, 4
        %v6166 = vsel %vm802, %v6165, %v6148
        %v6167 = vrot.slane %v6148, 4
        %v6168 = vsel %vm802, %v6160, %v6167
        %v6169 = vrot.slane %v6164, 4
        %v6170 = vsel %vm802, %v6169, %v6152
        %v6171 = vrot.slane %v6152, 4
        %v6172 = vsel %vm802, %v6164, %v6171
        %v6173 = vsel %vm802, %v5341, %v5322
        %v6175 = vunpack.c.l.s4 1983009808
        %v6176 = vunpack.c.0.s8 %v6175
        %v6177 = vperm.slane %v6173, %v6176
        %v6178 = vrot.slane %v5342, 4
        %v6179 = vsel %vm802, %v6178, %v5340
        %v6181 = vunpack.c.l.s4 1983009808
        %v6182 = vunpack.c.0.s8 %v6181
        %v6183 = vperm.slane %v6179, %v6182
        %v6184 = vsel %vm802, %v5345, %v5334
        %v6186 = vunpack.c.l.s4 1983009808
        %v6187 = vunpack.c.0.s8 %v6186
        %v6188 = vperm.slane %v6184, %v6187
        %v6189 = vrot.slane %v5346, 4
        %v6190 = vsel %vm802, %v6189, %v5344
        %v6192 = vunpack.c.l.s4 1983009808
        %v6193 = vunpack.c.0.s8 %v6192
        %v6194 = vperm.slane %v6190, %v6193
        %v6195 = vrot.slane %v6183, 4
        %v6196 = vsel %vm802, %v6195, %v6177
        %v6197 = vrot.slane %v6177, 4
        %v6198 = vsel %vm802, %v6183, %v6197
        %v6200 = vunpack.c.l.s4 1934713408
        %v6201 = vunpack.c.0.s8 %v6200
        %v6202 = vperm.slane %v6196, %v6201
        %v6204 = vunpack.c.l.s4 1934713408
        %v6205 = vunpack.c.0.s8 %v6204
        %v6206 = vperm.slane %v6198, %v6205
        %v6207 = vrot.slane %v6194, 4
        %v6208 = vsel %vm802, %v6207, %v6188
        %v6209 = vrot.slane %v6188, 4
        %v6210 = vsel %vm802, %v6194, %v6209
        %v6212 = vunpack.c.l.s4 1934713408
        %v6213 = vunpack.c.0.s8 %v6212
        %v6214 = vperm.slane %v6208, %v6213
        %v6216 = vunpack.c.l.s4 1934713408
        %v6217 = vunpack.c.0.s8 %v6216
        %v6218 = vperm.slane %v6210, %v6217
        %v6219 = vrot.slane %v6214, 4
        %v6220 = vsel %vm802, %v6219, %v6202
        %v6221 = vrot.slane %v6202, 4
        %v6222 = vsel %vm802, %v6214, %v6221
        %v6223 = vrot.slane %v6218, 4
        %v6224 = vsel %vm802, %v6223, %v6206
        %v6225 = vrot.slane %v6206, 4
        %v6226 = vsel %vm802, %v6218, %v6225
        %v6227 = vsel %vm802, %v5397, %v5378
        %v6229 = vunpack.c.l.s4 1983009808
        %v6230 = vunpack.c.0.s8 %v6229
        %v6231 = vperm.slane %v6227, %v6230
        %v6232 = vrot.slane %v5398, 4
        %v6233 = vsel %vm802, %v6232, %v5396
        %v6235 = vunpack.c.l.s4 1983009808
        %v6236 = vunpack.c.0.s8 %v6235
        %v6237 = vperm.slane %v6233, %v6236
        %v6238 = vsel %vm802, %v5401, %v5390
        %v6240 = vunpack.c.l.s4 1983009808
        %v6241 = vunpack.c.0.s8 %v6240
        %v6242 = vperm.slane %v6238, %v6241
        %v6243 = vrot.slane %v5402, 4
        %v6244 = vsel %vm802, %v6243, %v5400
        %v6246 = vunpack.c.l.s4 1983009808
        %v6247 = vunpack.c.0.s8 %v6246
        %v6248 = vperm.slane %v6244, %v6247
        %v6249 = vrot.slane %v6237, 4
        %v6250 = vsel %vm802, %v6249, %v6231
        %v6251 = vrot.slane %v6231, 4
        %v6252 = vsel %vm802, %v6237, %v6251
        %v6254 = vunpack.c.l.s4 1934713408
        %v6255 = vunpack.c.0.s8 %v6254
        %v6256 = vperm.slane %v6250, %v6255
        %v6258 = vunpack.c.l.s4 1934713408
        %v6259 = vunpack.c.0.s8 %v6258
        %v6260 = vperm.slane %v6252, %v6259
        %v6261 = vrot.slane %v6248, 4
        %v6262 = vsel %vm802, %v6261, %v6242
        %v6263 = vrot.slane %v6242, 4
        %v6264 = vsel %vm802, %v6248, %v6263
        %v6266 = vunpack.c.l.s4 1934713408
        %v6267 = vunpack.c.0.s8 %v6266
        %v6268 = vperm.slane %v6262, %v6267
        %v6270 = vunpack.c.l.s4 1934713408
        %v6271 = vunpack.c.0.s8 %v6270
        %v6272 = vperm.slane %v6264, %v6271
        %v6273 = vrot.slane %v6268, 4
        %v6274 = vsel %vm802, %v6273, %v6256
        %v6275 = vrot.slane %v6256, 4
        %v6276 = vsel %vm802, %v6268, %v6275
        %v6277 = vrot.slane %v6272, 4
        %v6278 = vsel %vm802, %v6277, %v6260
        %v6279 = vrot.slane %v6260, 4
        %v6280 = vsel %vm802, %v6272, %v6279
        %v6281 = vsel %vm802, %v5453, %v5434
        %v6283 = vunpack.c.l.s4 1983009808
        %v6284 = vunpack.c.0.s8 %v6283
        %v6285 = vperm.slane %v6281, %v6284
        %v6286 = vrot.slane %v5454, 4
        %v6287 = vsel %vm802, %v6286, %v5452
        %v6289 = vunpack.c.l.s4 1983009808
        %v6290 = vunpack.c.0.s8 %v6289
        %v6291 = vperm.slane %v6287, %v6290
        %v6292 = vsel %vm802, %v5457, %v5446
        %v6294 = vunpack.c.l.s4 1983009808
        %v6295 = vunpack.c.0.s8 %v6294
        %v6296 = vperm.slane %v6292, %v6295
        %v6297 = vrot.slane %v5458, 4
        %v6298 = vsel %vm802, %v6297, %v5456
        %v6300 = vunpack.c.l.s4 1983009808
        %v6301 = vunpack.c.0.s8 %v6300
        %v6302 = vperm.slane %v6298, %v6301
        %v6303 = vrot.slane %v6291, 4
        %v6304 = vsel %vm802, %v6303, %v6285
        %v6305 = vrot.slane %v6285, 4
        %v6306 = vsel %vm802, %v6291, %v6305
        %v6308 = vunpack.c.l.s4 1934713408
        %v6309 = vunpack.c.0.s8 %v6308
        %v6310 = vperm.slane %v6304, %v6309
        %v6312 = vunpack.c.l.s4 1934713408
        %v6313 = vunpack.c.0.s8 %v6312
        %v6314 = vperm.slane %v6306, %v6313
        %v6315 = vrot.slane %v6302, 4
        %v6316 = vsel %vm802, %v6315, %v6296
        %v6317 = vrot.slane %v6296, 4
        %v6318 = vsel %vm802, %v6302, %v6317
        %v6320 = vunpack.c.l.s4 1934713408
        %v6321 = vunpack.c.0.s8 %v6320
        %v6322 = vperm.slane %v6316, %v6321
        %v6324 = vunpack.c.l.s4 1934713408
        %v6325 = vunpack.c.0.s8 %v6324
        %v6326 = vperm.slane %v6318, %v6325
        %v6327 = vrot.slane %v6322, 4
        %v6328 = vsel %vm802, %v6327, %v6310
        %v6329 = vrot.slane %v6310, 4
        %v6330 = vsel %vm802, %v6322, %v6329
        %v6331 = vrot.slane %v6326, 4
        %v6332 = vsel %vm802, %v6331, %v6314
        %v6333 = vrot.slane %v6314, 4
        %v6334 = vsel %vm802, %v6326, %v6333
        %v6335 = vsel %vm802, %v5509, %v5490
        %v6337 = vunpack.c.l.s4 1983009808
        %v6338 = vunpack.c.0.s8 %v6337
        %v6339 = vperm.slane %v6335, %v6338
        %v6340 = vrot.slane %v5510, 4
        %v6341 = vsel %vm802, %v6340, %v5508
        %v6343 = vunpack.c.l.s4 1983009808
        %v6344 = vunpack.c.0.s8 %v6343
        %v6345 = vperm.slane %v6341, %v6344
        %v6346 = vsel %vm802, %v5513, %v5502
        %v6348 = vunpack.c.l.s4 1983009808
        %v6349 = vunpack.c.0.s8 %v6348
        %v6350 = vperm.slane %v6346, %v6349
        %v6351 = vrot.slane %v5514, 4
        %v6352 = vsel %vm802, %v6351, %v5512
        %v6354 = vunpack.c.l.s4 1983009808
        %v6355 = vunpack.c.0.s8 %v6354
        %v6356 = vperm.slane %v6352, %v6355
        %v6357 = vrot.slane %v6345, 4
        %v6358 = vsel %vm802, %v6357, %v6339
        %v6359 = vrot.slane %v6339, 4
        %v6360 = vsel %vm802, %v6345, %v6359
        %v6362 = vunpack.c.l.s4 1934713408
        %v6363 = vunpack.c.0.s8 %v6362
        %v6364 = vperm.slane %v6358, %v6363
        %v6366 = vunpack.c.l.s4 1934713408
        %v6367 = vunpack.c.0.s8 %v6366
        %v6368 = vperm.slane %v6360, %v6367
        %v6369 = vrot.slane %v6356, 4
        %v6370 = vsel %vm802, %v6369, %v6350
        %v6371 = vrot.slane %v6350, 4
        %v6372 = vsel %vm802, %v6356, %v6371
        %v6374 = vunpack.c.l.s4 1934713408
        %v6375 = vunpack.c.0.s8 %v6374
        %v6376 = vperm.slane %v6370, %v6375
        %v6378 = vunpack.c.l.s4 1934713408
        %v6379 = vunpack.c.0.s8 %v6378
        %v6380 = vperm.slane %v6372, %v6379
        %v6381 = vrot.slane %v6376, 4
        %v6382 = vsel %vm802, %v6381, %v6364
        %v6383 = vrot.slane %v6364, 4
        %v6384 = vsel %vm802, %v6376, %v6383
        %v6385 = vrot.slane %v6380, 4
        %v6386 = vsel %vm802, %v6385, %v6368
        %v6387 = vrot.slane %v6368, 4
        %v6388 = vsel %vm802, %v6380, %v6387
        %v6389 = vsel %vm802, %v5565, %v5546
        %v6391 = vunpack.c.l.s4 1983009808
        %v6392 = vunpack.c.0.s8 %v6391
        %v6393 = vperm.slane %v6389, %v6392
        %v6394 = vrot.slane %v5566, 4
        %v6395 = vsel %vm802, %v6394, %v5564
        %v6397 = vunpack.c.l.s4 1983009808
        %v6398 = vunpack.c.0.s8 %v6397
        %v6399 = vperm.slane %v6395, %v6398
        %v6400 = vsel %vm802, %v5569, %v5558
        %v6402 = vunpack.c.l.s4 1983009808
        %v6403 = vunpack.c.0.s8 %v6402
        %v6404 = vperm.slane %v6400, %v6403
        %v6405 = vrot.slane %v5570, 4
        %v6406 = vsel %vm802, %v6405, %v5568
        %v6408 = vunpack.c.l.s4 1983009808
        %v6409 = vunpack.c.0.s8 %v6408
        %v6410 = vperm.slane %v6406, %v6409
        %v6411 = vrot.slane %v6399, 4
        %v6412 = vsel %vm802, %v6411, %v6393
        %v6413 = vrot.slane %v6393, 4
        %v6414 = vsel %vm802, %v6399, %v6413
        %v6416 = vunpack.c.l.s4 1934713408
        %v6417 = vunpack.c.0.s8 %v6416
        %v6418 = vperm.slane %v6412, %v6417
        %v6420 = vunpack.c.l.s4 1934713408
        %v6421 = vunpack.c.0.s8 %v6420
        %v6422 = vperm.slane %v6414, %v6421
        %v6423 = vrot.slane %v6410, 4
        %v6424 = vsel %vm802, %v6423, %v6404
        %v6425 = vrot.slane %v6404, 4
        %v6426 = vsel %vm802, %v6410, %v6425
        %v6428 = vunpack.c.l.s4 1934713408
        %v6429 = vunpack.c.0.s8 %v6428
        %v6430 = vperm.slane %v6424, %v6429
        %v6432 = vunpack.c.l.s4 1934713408
        %v6433 = vunpack.c.0.s8 %v6432
        %v6434 = vperm.slane %v6426, %v6433
        %v6435 = vrot.slane %v6430, 4
        %v6436 = vsel %vm802, %v6435, %v6418
        %v6437 = vrot.slane %v6418, 4
        %v6438 = vsel %vm802, %v6430, %v6437
        %v6439 = vrot.slane %v6434, 4
        %v6440 = vsel %vm802, %v6439, %v6422
        %v6441 = vrot.slane %v6422, 4
        %v6442 = vsel %vm802, %v6434, %v6441
        %v6443 = vsel %vm802, %v5621, %v5602
        %v6445 = vunpack.c.l.s4 1983009808
        %v6446 = vunpack.c.0.s8 %v6445
        %v6447 = vperm.slane %v6443, %v6446
        %v6448 = vrot.slane %v5622, 4
        %v6449 = vsel %vm802, %v6448, %v5620
        %v6451 = vunpack.c.l.s4 1983009808
        %v6452 = vunpack.c.0.s8 %v6451
        %v6453 = vperm.slane %v6449, %v6452
        %v6454 = vsel %vm802, %v5625, %v5614
        %v6456 = vunpack.c.l.s4 1983009808
        %v6457 = vunpack.c.0.s8 %v6456
        %v6458 = vperm.slane %v6454, %v6457
        %v6459 = vrot.slane %v5626, 4
        %v6460 = vsel %vm802, %v6459, %v5624
        %v6462 = vunpack.c.l.s4 1983009808
        %v6463 = vunpack.c.0.s8 %v6462
        %v6464 = vperm.slane %v6460, %v6463
        %v6465 = vrot.slane %v6453, 4
        %v6466 = vsel %vm802, %v6465, %v6447
        %v6467 = vrot.slane %v6447, 4
        %v6468 = vsel %vm802, %v6453, %v6467
        %v6470 = vunpack.c.l.s4 1934713408
        %v6471 = vunpack.c.0.s8 %v6470
        %v6472 = vperm.slane %v6466, %v6471
        %v6474 = vunpack.c.l.s4 1934713408
        %v6475 = vunpack.c.0.s8 %v6474
        %v6476 = vperm.slane %v6468, %v6475
        %v6477 = vrot.slane %v6464, 4
        %v6478 = vsel %vm802, %v6477, %v6458
        %v6479 = vrot.slane %v6458, 4
        %v6480 = vsel %vm802, %v6464, %v6479
        %v6482 = vunpack.c.l.s4 1934713408
        %v6483 = vunpack.c.0.s8 %v6482
        %v6484 = vperm.slane %v6478, %v6483
        %v6486 = vunpack.c.l.s4 1934713408
        %v6487 = vunpack.c.0.s8 %v6486
        %v6488 = vperm.slane %v6480, %v6487
        %v6489 = vrot.slane %v6484, 4
        %v6490 = vsel %vm802, %v6489, %v6472
        %v6491 = vrot.slane %v6472, 4
        %v6492 = vsel %vm802, %v6484, %v6491
        %v6493 = vrot.slane %v6488, 4
        %v6494 = vsel %vm802, %v6493, %v6476
        %v6495 = vrot.slane %v6476, 4
        %v6496 = vsel %vm802, %v6488, %v6495
        %v6497 = vsel %vm802, %v5677, %v5658
        %v6499 = vunpack.c.l.s4 1983009808
        %v6500 = vunpack.c.0.s8 %v6499
        %v6501 = vperm.slane %v6497, %v6500
        %v6502 = vrot.slane %v5678, 4
        %v6503 = vsel %vm802, %v6502, %v5676
        %v6505 = vunpack.c.l.s4 1983009808
        %v6506 = vunpack.c.0.s8 %v6505
        %v6507 = vperm.slane %v6503, %v6506
        %v6508 = vsel %vm802, %v5681, %v5670
        %v6510 = vunpack.c.l.s4 1983009808
        %v6511 = vunpack.c.0.s8 %v6510
        %v6512 = vperm.slane %v6508, %v6511
        %v6513 = vrot.slane %v5682, 4
        %v6514 = vsel %vm802, %v6513, %v5680
        %v6516 = vunpack.c.l.s4 1983009808
        %v6517 = vunpack.c.0.s8 %v6516
        %v6518 = vperm.slane %v6514, %v6517
        %v6519 = vrot.slane %v6507, 4
        %v6520 = vsel %vm802, %v6519, %v6501
        %v6521 = vrot.slane %v6501, 4
        %v6522 = vsel %vm802, %v6507, %v6521
        %v6524 = vunpack.c.l.s4 1934713408
        %v6525 = vunpack.c.0.s8 %v6524
        %v6526 = vperm.slane %v6520, %v6525
        %v6528 = vunpack.c.l.s4 1934713408
        %v6529 = vunpack.c.0.s8 %v6528
        %v6530 = vperm.slane %v6522, %v6529
        %v6531 = vrot.slane %v6518, 4
        %v6532 = vsel %vm802, %v6531, %v6512
        %v6533 = vrot.slane %v6512, 4
        %v6534 = vsel %vm802, %v6518, %v6533
        %v6536 = vunpack.c.l.s4 1934713408
        %v6537 = vunpack.c.0.s8 %v6536
        %v6538 = vperm.slane %v6532, %v6537
        %v6540 = vunpack.c.l.s4 1934713408
        %v6541 = vunpack.c.0.s8 %v6540
        %v6542 = vperm.slane %v6534, %v6541
        %v6543 = vrot.slane %v6538, 4
        %v6544 = vsel %vm802, %v6543, %v6526
        %v6545 = vrot.slane %v6526, 4
        %v6546 = vsel %vm802, %v6538, %v6545
        %v6547 = vrot.slane %v6542, 4
        %v6548 = vsel %vm802, %v6547, %v6530
        %v6549 = vrot.slane %v6530, 4
        %v6550 = vsel %vm802, %v6542, %v6549
        %v6551 = vsel %vm802, %v5733, %v5714
        %v6553 = vunpack.c.l.s4 1983009808
        %v6554 = vunpack.c.0.s8 %v6553
        %v6555 = vperm.slane %v6551, %v6554
        %v6556 = vrot.slane %v5734, 4
        %v6557 = vsel %vm802, %v6556, %v5732
        %v6559 = vunpack.c.l.s4 1983009808
        %v6560 = vunpack.c.0.s8 %v6559
        %v6561 = vperm.slane %v6557, %v6560
        %v6562 = vsel %vm802, %v5737, %v5726
        %v6564 = vunpack.c.l.s4 1983009808
        %v6565 = vunpack.c.0.s8 %v6564
        %v6566 = vperm.slane %v6562, %v6565
        %v6567 = vrot.slane %v5738, 4
        %v6568 = vsel %vm802, %v6567, %v5736
        %v6570 = vunpack.c.l.s4 1983009808
        %v6571 = vunpack.c.0.s8 %v6570
        %v6572 = vperm.slane %v6568, %v6571
        %v6573 = vrot.slane %v6561, 4
        %v6574 = vsel %vm802, %v6573, %v6555
        %v6575 = vrot.slane %v6555, 4
        %v6576 = vsel %vm802, %v6561, %v6575
        %v6578 = vunpack.c.l.s4 1934713408
        %v6579 = vunpack.c.0.s8 %v6578
        %v6580 = vperm.slane %v6574, %v6579
        %v6582 = vunpack.c.l.s4 1934713408
        %v6583 = vunpack.c.0.s8 %v6582
        %v6584 = vperm.slane %v6576, %v6583
        %v6585 = vrot.slane %v6572, 4
        %v6586 = vsel %vm802, %v6585, %v6566
        %v6587 = vrot.slane %v6566, 4
        %v6588 = vsel %vm802, %v6572, %v6587
        %v6590 = vunpack.c.l.s4 1934713408
        %v6591 = vunpack.c.0.s8 %v6590
        %v6592 = vperm.slane %v6586, %v6591
        %v6594 = vunpack.c.l.s4 1934713408
        %v6595 = vunpack.c.0.s8 %v6594
        %v6596 = vperm.slane %v6588, %v6595
        %v6597 = vrot.slane %v6592, 4
        %v6598 = vsel %vm802, %v6597, %v6580
        %v6599 = vrot.slane %v6580, 4
        %v6600 = vsel %vm802, %v6592, %v6599
        %v6601 = vrot.slane %v6596, 4
        %v6602 = vsel %vm802, %v6601, %v6584
        %v6603 = vrot.slane %v6584, 4
        %v6604 = vsel %vm802, %v6596, %v6603
        %v6605 = vsel %vm802, %v5789, %v5770
        %v6607 = vunpack.c.l.s4 1983009808
        %v6608 = vunpack.c.0.s8 %v6607
        %v6609 = vperm.slane %v6605, %v6608
        %v6610 = vrot.slane %v5790, 4
        %v6611 = vsel %vm802, %v6610, %v5788
        %v6613 = vunpack.c.l.s4 1983009808
        %v6614 = vunpack.c.0.s8 %v6613
        %v6615 = vperm.slane %v6611, %v6614
        %v6616 = vsel %vm802, %v5793, %v5782
        %v6618 = vunpack.c.l.s4 1983009808
        %v6619 = vunpack.c.0.s8 %v6618
        %v6620 = vperm.slane %v6616, %v6619
        %v6621 = vrot.slane %v5794, 4
        %v6622 = vsel %vm802, %v6621, %v5792
        %v6624 = vunpack.c.l.s4 1983009808
        %v6625 = vunpack.c.0.s8 %v6624
        %v6626 = vperm.slane %v6622, %v6625
        %v6627 = vrot.slane %v6615, 4
        %v6628 = vsel %vm802, %v6627, %v6609
        %v6629 = vrot.slane %v6609, 4
        %v6630 = vsel %vm802, %v6615, %v6629
        %v6632 = vunpack.c.l.s4 1934713408
        %v6633 = vunpack.c.0.s8 %v6632
        %v6634 = vperm.slane %v6628, %v6633
        %v6636 = vunpack.c.l.s4 1934713408
        %v6637 = vunpack.c.0.s8 %v6636
        %v6638 = vperm.slane %v6630, %v6637
        %v6639 = vrot.slane %v6626, 4
        %v6640 = vsel %vm802, %v6639, %v6620
        %v6641 = vrot.slane %v6620, 4
        %v6642 = vsel %vm802, %v6626, %v6641
        %v6644 = vunpack.c.l.s4 1934713408
        %v6645 = vunpack.c.0.s8 %v6644
        %v6646 = vperm.slane %v6640, %v6645
        %v6648 = vunpack.c.l.s4 1934713408
        %v6649 = vunpack.c.0.s8 %v6648
        %v6650 = vperm.slane %v6642, %v6649
        %v6651 = vrot.slane %v6646, 4
        %v6652 = vsel %vm802, %v6651, %v6634
        %v6653 = vrot.slane %v6634, 4
        %v6654 = vsel %vm802, %v6646, %v6653
        %v6655 = vrot.slane %v6650, 4
        %v6656 = vsel %vm802, %v6655, %v6638
        %v6657 = vrot.slane %v6638, 4
        %v6658 = vsel %vm802, %v6650, %v6657
        %v6659 = vpack.c.bf16 %v5842, %v5842
        %v6660 = vpack.c.bf16 %v5896, %v5896
        %v6661 = vpack.c.bf16 %v5950, %v5950
        %v6662 = vpack.c.bf16 %v6004, %v6004
        %v6663 = vpack.c.bf16 %v6058, %v6058
        %v6664 = vpack.c.bf16 %v6112, %v6112
        %v6665 = vpack.c.bf16 %v6166, %v6166
        %v6666 = vpack.c.bf16 %v6220, %v6220
        %v6667 = vpack.c.bf16 %v6274, %v6274
        %v6668 = vpack.c.bf16 %v6328, %v6328
        %v6669 = vpack.c.bf16 %v6382, %v6382
        %v6670 = vpack.c.bf16 %v6436, %v6436
        %v6671 = vpack.c.bf16 %v6490, %v6490
        %v6672 = vpack.c.bf16 %v6544, %v6544
        %v6673 = vpack.c.bf16 %v6598, %v6598
        %v6674 = vpack.c.bf16 %v6652, %v6652
        %v6675 = vpack.c.bf16 %v5844, %v5844
        %v6676 = vpack.c.bf16 %v5898, %v5898
        %v6677 = vpack.c.bf16 %v5952, %v5952
        %v6678 = vpack.c.bf16 %v6006, %v6006
        %v6679 = vpack.c.bf16 %v6060, %v6060
        %v6680 = vpack.c.bf16 %v6114, %v6114
        %v6681 = vpack.c.bf16 %v6168, %v6168
        %v6682 = vpack.c.bf16 %v6222, %v6222
        %v6683 = vpack.c.bf16 %v6276, %v6276
        %v6684 = vpack.c.bf16 %v6330, %v6330
        %v6685 = vpack.c.bf16 %v6384, %v6384
        %v6686 = vpack.c.bf16 %v6438, %v6438
        %v6687 = vpack.c.bf16 %v6492, %v6492
        %v6688 = vpack.c.bf16 %v6546, %v6546
        %v6689 = vpack.c.bf16 %v6600, %v6600
        %v6690 = vpack.c.bf16 %v6654, %v6654
        %v6691 = vpack.c.bf16 %v5846, %v5846
        %v6692 = vpack.c.bf16 %v5900, %v5900
        %v6693 = vpack.c.bf16 %v5954, %v5954
        %v6694 = vpack.c.bf16 %v6008, %v6008
        %v6695 = vpack.c.bf16 %v6062, %v6062
        %v6696 = vpack.c.bf16 %v6116, %v6116
        %v6697 = vpack.c.bf16 %v6170, %v6170
        %v6698 = vpack.c.bf16 %v6224, %v6224
        %v6699 = vpack.c.bf16 %v6278, %v6278
        %v6700 = vpack.c.bf16 %v6332, %v6332
        %v6701 = vpack.c.bf16 %v6386, %v6386
        %v6702 = vpack.c.bf16 %v6440, %v6440
        %v6703 = vpack.c.bf16 %v6494, %v6494
        %v6704 = vpack.c.bf16 %v6548, %v6548
        %v6705 = vpack.c.bf16 %v6602, %v6602
        %v6706 = vpack.c.bf16 %v6656, %v6656
        %v6707 = vpack.c.bf16 %v5848, %v5848
        %v6708 = vpack.c.bf16 %v5902, %v5902
        %v6709 = vpack.c.bf16 %v5956, %v5956
        %v6710 = vpack.c.bf16 %v6010, %v6010
        %v6711 = vpack.c.bf16 %v6064, %v6064
        %v6712 = vpack.c.bf16 %v6118, %v6118
        %v6713 = vpack.c.bf16 %v6172, %v6172
        %v6714 = vpack.c.bf16 %v6226, %v6226
        %v6715 = vpack.c.bf16 %v6280, %v6280
        %v6716 = vpack.c.bf16 %v6334, %v6334
        %v6717 = vpack.c.bf16 %v6388, %v6388
        %v6718 = vpack.c.bf16 %v6442, %v6442
        %v6719 = vpack.c.bf16 %v6496, %v6496
        %v6720 = vpack.c.bf16 %v6550, %v6550
        %v6721 = vpack.c.bf16 %v6604, %v6604
        %v6722 = vpack.c.bf16 %v6658, %v6658
        %6723 = vst.msk [vmem:[%s265] sm:$0xf] %vm2626, %v6659
        %6724 = vst.msk [vmem:[%s265 + $0x4] sm:$0xf] %vm2626, %v6660
        %6725 = vst.msk [vmem:[%s265 + $0x8] sm:$0xf] %vm2626, %v6661
        %6726 = vst.msk [vmem:[%s265 + $0xc] sm:$0xf] %vm2626, %v6662
        %6727 = vst.msk [vmem:[%s265 + $0x10] sm:$0xf] %vm2626, %v6663
        %6728 = vst.msk [vmem:[%s265 + $0x14] sm:$0xf] %vm2626, %v6664
        %6729 = vst.msk [vmem:[%s265 + $0x18] sm:$0xf] %vm2626, %v6665
        %6730 = vst.msk [vmem:[%s265 + $0x1c] sm:$0xf] %vm2626, %v6666
        %6731 = vst.msk [vmem:[%s265 + $0x20] sm:$0xf] %vm2626, %v6667
        %6732 = vst.msk [vmem:[%s265 + $0x24] sm:$0xf] %vm2626, %v6668
        %6733 = vst.msk [vmem:[%s265 + $0x28] sm:$0xf] %vm2626, %v6669
        %6734 = vst.msk [vmem:[%s265 + $0x2c] sm:$0xf] %vm2626, %v6670
        %6735 = vst.msk [vmem:[%s265 + $0x30] sm:$0xf] %vm2626, %v6671
        %6736 = vst.msk [vmem:[%s265 + $0x34] sm:$0xf] %vm2626, %v6672
        %6737 = vst.msk [vmem:[%s265 + $0x38] sm:$0xf] %vm2626, %v6673
        %6738 = vst.msk [vmem:[%s265 + $0x3c] sm:$0xf] %vm2626, %v6674
        %6739 = vst.msk [vmem:[%s265 + $0x40] sm:$0xf] %vm2626, %v6675
        %6740 = vst.msk [vmem:[%s265 + $0x44] sm:$0xf] %vm2626, %v6676
        %6741 = vst.msk [vmem:[%s265 + $0x48] sm:$0xf] %vm2626, %v6677
        %6742 = vst.msk [vmem:[%s265 + $0x4c] sm:$0xf] %vm2626, %v6678
        %6743 = vst.msk [vmem:[%s265 + $0x50] sm:$0xf] %vm2626, %v6679
        %6744 = vst.msk [vmem:[%s265 + $0x54] sm:$0xf] %vm2626, %v6680
        %6745 = vst.msk [vmem:[%s265 + $0x58] sm:$0xf] %vm2626, %v6681
        %6746 = vst.msk [vmem:[%s265 + $0x5c] sm:$0xf] %vm2626, %v6682
        %6747 = vst.msk [vmem:[%s265 + $0x60] sm:$0xf] %vm2626, %v6683
        %6748 = vst.msk [vmem:[%s265 + $0x64] sm:$0xf] %vm2626, %v6684
        %6749 = vst.msk [vmem:[%s265 + $0x68] sm:$0xf] %vm2626, %v6685
        %6750 = vst.msk [vmem:[%s265 + $0x6c] sm:$0xf] %vm2626, %v6686
        %6751 = vst.msk [vmem:[%s265 + $0x70] sm:$0xf] %vm2626, %v6687
        %6752 = vst.msk [vmem:[%s265 + $0x74] sm:$0xf] %vm2626, %v6688
        %6753 = vst.msk [vmem:[%s265 + $0x78] sm:$0xf] %vm2626, %v6689
        %6754 = vst.msk [vmem:[%s265 + $0x7c] sm:$0xf] %vm2626, %v6690
        %6755 = vst.msk [vmem:[%s265 + $0x80] sm:$0xf] %vm2626, %v6691
        %6756 = vst.msk [vmem:[%s265 + $0x84] sm:$0xf] %vm2626, %v6692
        %6757 = vst.msk [vmem:[%s265 + $0x88] sm:$0xf] %vm2626, %v6693
        %6758 = vst.msk [vmem:[%s265 + $0x8c] sm:$0xf] %vm2626, %v6694
        %6759 = vst.msk [vmem:[%s265 + $0x90] sm:$0xf] %vm2626, %v6695
        %6760 = vst.msk [vmem:[%s265 + $0x94] sm:$0xf] %vm2626, %v6696
        %6761 = vst.msk [vmem:[%s265 + $0x98] sm:$0xf] %vm2626, %v6697
        %6762 = vst.msk [vmem:[%s265 + $0x9c] sm:$0xf] %vm2626, %v6698
        %6763 = vst.msk [vmem:[%s265 + $0xa0] sm:$0xf] %vm2626, %v6699
        %6764 = vst.msk [vmem:[%s265 + $0xa4] sm:$0xf] %vm2626, %v6700
        %6765 = vst.msk [vmem:[%s265 + $0xa8] sm:$0xf] %vm2626, %v6701
        %6766 = vst.msk [vmem:[%s265 + $0xac] sm:$0xf] %vm2626, %v6702
        %6767 = vst.msk [vmem:[%s265 + $0xb0] sm:$0xf] %vm2626, %v6703
        %6768 = vst.msk [vmem:[%s265 + $0xb4] sm:$0xf] %vm2626, %v6704
        %6769 = vst.msk [vmem:[%s265 + $0xb8] sm:$0xf] %vm2626, %v6705
        %6770 = vst.msk [vmem:[%s265 + $0xbc] sm:$0xf] %vm2626, %v6706
        %6771 = vst.msk [vmem:[%s265 + $0xc0] sm:$0xf] %vm2626, %v6707
        %6772 = vst.msk [vmem:[%s265 + $0xc4] sm:$0xf] %vm2626, %v6708
        %6773 = vst.msk [vmem:[%s265 + $0xc8] sm:$0xf] %vm2626, %v6709
        %6774 = vst.msk [vmem:[%s265 + $0xcc] sm:$0xf] %vm2626, %v6710
        %6775 = vst.msk [vmem:[%s265 + $0xd0] sm:$0xf] %vm2626, %v6711
        %6776 = vst.msk [vmem:[%s265 + $0xd4] sm:$0xf] %vm2626, %v6712
        %6777 = vst.msk [vmem:[%s265 + $0xd8] sm:$0xf] %vm2626, %v6713
        %6778 = vst.msk [vmem:[%s265 + $0xdc] sm:$0xf] %vm2626, %v6714
        %6779 = vst.msk [vmem:[%s265 + $0xe0] sm:$0xf] %vm2626, %v6715
        %6780 = vst.msk [vmem:[%s265 + $0xe4] sm:$0xf] %vm2626, %v6716
        %6781 = vst.msk [vmem:[%s265 + $0xe8] sm:$0xf] %vm2626, %v6717
        %6782 = vst.msk [vmem:[%s265 + $0xec] sm:$0xf] %vm2626, %v6718
        %6783 = vst.msk [vmem:[%s265 + $0xf0] sm:$0xf] %vm2626, %v6719
        %6784 = vst.msk [vmem:[%s265 + $0xf4] sm:$0xf] %vm2626, %v6720
        %6785 = vst.msk [vmem:[%s265 + $0xf8] sm:$0xf] %vm2626, %v6721
        %6786 = vst.msk [vmem:[%s265 + $0xfc] sm:$0xf] %vm2626, %v6722
        %s6787 = sand.u32 %s91, 1
        %s6788 = sand.u32 %s91, 1
        %s6789 = smul.addr %s6788, 256
        %s6790 = scalar_lea.vmem [#allocation6], %s6789
        %s6791 = sand.u32 %s119, 1
        %s6792 = sand.u32 %s119, 1
        %s6793 = smul.addr %s6792, 256
        %s6794 = scalar_lea.vmem [#allocation7], %s6793
        %s6795 = sand.u32 %s147, 1
        %s6796 = sand.u32 %s147, 1
        %s6797 = smul.addr %s6796, 256
        %s6798 = scalar_lea.vmem [#allocation8], %s6797
        // Predicated region
        $region37: #{tpu_custom_call.1} parent=27 // pred_check
          %p6799 = pneg %p101
        $region38: #{tpu_custom_call.1} parent=27 // pred_check_branch
          %6801 = sbr.rel (%p6799) target = $region40
        $region39: #{tpu_custom_call.1} parent=27 // pred_region
          %s6802 = smul.u32 16, %s25
          %s6803 = smul.addr %s24, 128
          %s6804 = sadd.s32 %s6802, %s6803
          %s6805 = smul.addr %s6804, 4
          %s6806 = scalar_lea.vmem %s2, %s6805
          // Predicated region
          $region41: #{tpu_custom_call.1} parent=39 // pred_check
            _
          $region42: #{tpu_custom_call.1} parent=39 // pred_check_branch
            %6808 = sbr.rel (0) target = $region44
          $region43: #{tpu_custom_call.1} parent=39 // pred_region
            // Predicated region
            $region45: #{tpu_custom_call.1} parent=43 // pred_check
              _
            $region46: #{tpu_custom_call.1} parent=43 // pred_check_branch
              %6810 = sbr.rel target = $region48
            $region47: #{tpu_custom_call.1} parent=43 // pred_region
              // Predicated region
              $region60: #{tpu_custom_call.1} parent=47 // pred_check
                _
              $region61: #{tpu_custom_call.1} parent=47 // pred_check_branch
                %6952 = sbr.rel (0) target = $region63
              $region62: #{tpu_custom_call.1} parent=47 // pred_region
                loop: start=0, step=1, limit=1
                $region64: #{tpu_custom_call.1} parent=62 // loop_pre_header
                  _
                $region65: #{tpu_custom_call.1} parent=62 // loop_header
                  %s6954 = sphi 0, %s6958
                  %p6955 = scmp.ge.s32.totalorder %s6954, 1
                  %s6959 = sphi %s6790, %s6790
                  %s6960 = sphi %s6806, %s6806
                $region66: #{tpu_custom_call.1} parent=62 // loop_header_branch
                  %6957 = sbr.rel (%p6955) target = $region70
                $region67: #{tpu_custom_call.1} parent=62 // loop_body
                  _
                $region68: #{tpu_custom_call.1} parent=62 // loop_footer
                  %s6958 = sadd.s32 1, %s6954
                $region69: #{tpu_custom_call.1} parent=62 // loop_footer_branch
                  %6953 = sbr.rel target = $region65
                $region70: #{tpu_custom_call.1} parent=62 // loop_exit
                  _
                %s6962 = ssub.s32 16, 1
                loop: start=0, step=1, limit=1
                $region71: #{tpu_custom_call.1} parent=62 // loop_pre_header
                  _
                $region72: #{tpu_custom_call.1} parent=62 // loop_header
                  %s6964 = sphi 0, %s6968
                  %p6965 = scmp.ge.s32.totalorder %s6964, 1
                  %s6969 = sphi %s6790, %s6790
                  %s6970 = sphi %s6806, %s6806
                $region73: #{tpu_custom_call.1} parent=62 // loop_header_branch
                  %6967 = sbr.rel (%p6965) target = $region77
                $region74: #{tpu_custom_call.1} parent=62 // loop_body
                  %v6971 = vld [vmem:[%s6969] sm:%s6962]
                  %6972 = vst [vmem:[%s6970] sm:%s6962] %v6971
                  %v6973 = vld [vmem:[%s6969 + $0x4] sm:%s6962]
                  %6974 = vst [vmem:[%s6970 + $0x4] sm:%s6962] %v6973
                  %v6975 = vld [vmem:[%s6969 + $0x8] sm:%s6962]
                  %6976 = vst [vmem:[%s6970 + $0x8] sm:%s6962] %v6975
                  %v6977 = vld [vmem:[%s6969 + $0xc] sm:%s6962]
                  %6978 = vst [vmem:[%s6970 + $0xc] sm:%s6962] %v6977
                  %v6979 = vld [vmem:[%s6969 + $0x10] sm:%s6962]
                  %6980 = vst [vmem:[%s6970 + $0x10] sm:%s6962] %v6979
                  %v6981 = vld [vmem:[%s6969 + $0x14] sm:%s6962]
                  %6982 = vst [vmem:[%s6970 + $0x14] sm:%s6962] %v6981
                  %v6983 = vld [vmem:[%s6969 + $0x18] sm:%s6962]
                  %6984 = vst [vmem:[%s6970 + $0x18] sm:%s6962] %v6983
                  %v6985 = vld [vmem:[%s6969 + $0x1c] sm:%s6962]
                  %6986 = vst [vmem:[%s6970 + $0x1c] sm:%s6962] %v6985
                  %v6987 = vld [vmem:[%s6969 + $0x20] sm:%s6962]
                  %6988 = vst [vmem:[%s6970 + $0x20] sm:%s6962] %v6987
                  %v6989 = vld [vmem:[%s6969 + $0x24] sm:%s6962]
                  %6990 = vst [vmem:[%s6970 + $0x24] sm:%s6962] %v6989
                  %v6991 = vld [vmem:[%s6969 + $0x28] sm:%s6962]
                  %6992 = vst [vmem:[%s6970 + $0x28] sm:%s6962] %v6991
                  %v6993 = vld [vmem:[%s6969 + $0x2c] sm:%s6962]
                  %6994 = vst [vmem:[%s6970 + $0x2c] sm:%s6962] %v6993
                  %v6995 = vld [vmem:[%s6969 + $0x30] sm:%s6962]
                  %6996 = vst [vmem:[%s6970 + $0x30] sm:%s6962] %v6995
                  %v6997 = vld [vmem:[%s6969 + $0x34] sm:%s6962]
                  %6998 = vst [vmem:[%s6970 + $0x34] sm:%s6962] %v6997
                  %v6999 = vld [vmem:[%s6969 + $0x38] sm:%s6962]
                  %7000 = vst [vmem:[%s6970 + $0x38] sm:%s6962] %v6999
                  %v7001 = vld [vmem:[%s6969 + $0x3c] sm:%s6962]
                  %7002 = vst [vmem:[%s6970 + $0x3c] sm:%s6962] %v7001
                  %v7003 = vld [vmem:[%s6969 + $0x40] sm:%s6962]
                  %7004 = vst [vmem:[%s6970 + $0x80] sm:%s6962] %v7003
                  %v7005 = vld [vmem:[%s6969 + $0x44] sm:%s6962]
                  %7006 = vst [vmem:[%s6970 + $0x84] sm:%s6962] %v7005
                  %v7007 = vld [vmem:[%s6969 + $0x48] sm:%s6962]
                  %7008 = vst [vmem:[%s6970 + $0x88] sm:%s6962] %v7007
                  %v7009 = vld [vmem:[%s6969 + $0x4c] sm:%s6962]
                  %7010 = vst [vmem:[%s6970 + $0x8c] sm:%s6962] %v7009
                  %v7011 = vld [vmem:[%s6969 + $0x50] sm:%s6962]
                  %7012 = vst [vmem:[%s6970 + $0x90] sm:%s6962] %v7011
                  %v7013 = vld [vmem:[%s6969 + $0x54] sm:%s6962]
                  %7014 = vst [vmem:[%s6970 + $0x94] sm:%s6962] %v7013
                  %v7015 = vld [vmem:[%s6969 + $0x58] sm:%s6962]
                  %7016 = vst [vmem:[%s6970 + $0x98] sm:%s6962] %v7015
                  %v7017 = vld [vmem:[%s6969 + $0x5c] sm:%s6962]
                  %7018 = vst [vmem:[%s6970 + $0x9c] sm:%s6962] %v7017
                  %v7019 = vld [vmem:[%s6969 + $0x60] sm:%s6962]
                  %7020 = vst [vmem:[%s6970 + $0xa0] sm:%s6962] %v7019
                  %v7021 = vld [vmem:[%s6969 + $0x64] sm:%s6962]
                  %7022 = vst [vmem:[%s6970 + $0xa4] sm:%s6962] %v7021
                  %v7023 = vld [vmem:[%s6969 + $0x68] sm:%s6962]
                  %7024 = vst [vmem:[%s6970 + $0xa8] sm:%s6962] %v7023
                  %v7025 = vld [vmem:[%s6969 + $0x6c] sm:%s6962]
                  %7026 = vst [vmem:[%s6970 + $0xac] sm:%s6962] %v7025
                  %v7027 = vld [vmem:[%s6969 + $0x70] sm:%s6962]
                  %7028 = vst [vmem:[%s6970 + $0xb0] sm:%s6962] %v7027
                  %v7029 = vld [vmem:[%s6969 + $0x74] sm:%s6962]
                  %7030 = vst [vmem:[%s6970 + $0xb4] sm:%s6962] %v7029
                  %v7031 = vld [vmem:[%s6969 + $0x78] sm:%s6962]
                  %7032 = vst [vmem:[%s6970 + $0xb8] sm:%s6962] %v7031
                  %v7033 = vld [vmem:[%s6969 + $0x7c] sm:%s6962]
                  %7034 = vst [vmem:[%s6970 + $0xbc] sm:%s6962] %v7033
                  %v7035 = vld [vmem:[%s6969 + $0x80] sm:%s6962]
                  %7036 = vst [vmem:[%s6970 + $0x100] sm:%s6962] %v7035
                  %v7037 = vld [vmem:[%s6969 + $0x84] sm:%s6962]
                  %7038 = vst [vmem:[%s6970 + $0x104] sm:%s6962] %v7037
                  %v7039 = vld [vmem:[%s6969 + $0x88] sm:%s6962]
                  %7040 = vst [vmem:[%s6970 + $0x108] sm:%s6962] %v7039
                  %v7041 = vld [vmem:[%s6969 + $0x8c] sm:%s6962]
                  %7042 = vst [vmem:[%s6970 + $0x10c] sm:%s6962] %v7041
                  %v7043 = vld [vmem:[%s6969 + $0x90] sm:%s6962]
                  %7044 = vst [vmem:[%s6970 + $0x110] sm:%s6962] %v7043
                  %v7045 = vld [vmem:[%s6969 + $0x94] sm:%s6962]
                  %7046 = vst [vmem:[%s6970 + $0x114] sm:%s6962] %v7045
                  %v7047 = vld [vmem:[%s6969 + $0x98] sm:%s6962]
                  %7048 = vst [vmem:[%s6970 + $0x118] sm:%s6962] %v7047
                  %v7049 = vld [vmem:[%s6969 + $0x9c] sm:%s6962]
                  %7050 = vst [vmem:[%s6970 + $0x11c] sm:%s6962] %v7049
                  %v7051 = vld [vmem:[%s6969 + $0xa0] sm:%s6962]
                  %7052 = vst [vmem:[%s6970 + $0x120] sm:%s6962] %v7051
                  %v7053 = vld [vmem:[%s6969 + $0xa4] sm:%s6962]
                  %7054 = vst [vmem:[%s6970 + $0x124] sm:%s6962] %v7053
                  %v7055 = vld [vmem:[%s6969 + $0xa8] sm:%s6962]
                  %7056 = vst [vmem:[%s6970 + $0x128] sm:%s6962] %v7055
                  %v7057 = vld [vmem:[%s6969 + $0xac] sm:%s6962]
                  %7058 = vst [vmem:[%s6970 + $0x12c] sm:%s6962] %v7057
                  %v7059 = vld [vmem:[%s6969 + $0xb0] sm:%s6962]
                  %7060 = vst [vmem:[%s6970 + $0x130] sm:%s6962] %v7059
                  %v7061 = vld [vmem:[%s6969 + $0xb4] sm:%s6962]
                  %7062 = vst [vmem:[%s6970 + $0x134] sm:%s6962] %v7061
                  %v7063 = vld [vmem:[%s6969 + $0xb8] sm:%s6962]
                  %7064 = vst [vmem:[%s6970 + $0x138] sm:%s6962] %v7063
                  %v7065 = vld [vmem:[%s6969 + $0xbc] sm:%s6962]
                  %7066 = vst [vmem:[%s6970 + $0x13c] sm:%s6962] %v7065
                  %v7067 = vld [vmem:[%s6969 + $0xc0] sm:%s6962]
                  %7068 = vst [vmem:[%s6970 + $0x180] sm:%s6962] %v7067
                  %v7069 = vld [vmem:[%s6969 + $0xc4] sm:%s6962]
                  %7070 = vst [vmem:[%s6970 + $0x184] sm:%s6962] %v7069
                  %v7071 = vld [vmem:[%s6969 + $0xc8] sm:%s6962]
                  %7072 = vst [vmem:[%s6970 + $0x188] sm:%s6962] %v7071
                  %v7073 = vld [vmem:[%s6969 + $0xcc] sm:%s6962]
                  %7074 = vst [vmem:[%s6970 + $0x18c] sm:%s6962] %v7073
                  %v7075 = vld [vmem:[%s6969 + $0xd0] sm:%s6962]
                  %7076 = vst [vmem:[%s6970 + $0x190] sm:%s6962] %v7075
                  %v7077 = vld [vmem:[%s6969 + $0xd4] sm:%s6962]
                  %7078 = vst [vmem:[%s6970 + $0x194] sm:%s6962] %v7077
                  %v7079 = vld [vmem:[%s6969 + $0xd8] sm:%s6962]
                  %7080 = vst [vmem:[%s6970 + $0x198] sm:%s6962] %v7079
                  %v7081 = vld [vmem:[%s6969 + $0xdc] sm:%s6962]
                  %7082 = vst [vmem:[%s6970 + $0x19c] sm:%s6962] %v7081
                  %v7083 = vld [vmem:[%s6969 + $0xe0] sm:%s6962]
                  %7084 = vst [vmem:[%s6970 + $0x1a0] sm:%s6962] %v7083
                  %v7085 = vld [vmem:[%s6969 + $0xe4] sm:%s6962]
                  %7086 = vst [vmem:[%s6970 + $0x1a4] sm:%s6962] %v7085
                  %v7087 = vld [vmem:[%s6969 + $0xe8] sm:%s6962]
                  %7088 = vst [vmem:[%s6970 + $0x1a8] sm:%s6962] %v7087
                  %v7089 = vld [vmem:[%s6969 + $0xec] sm:%s6962]
                  %7090 = vst [vmem:[%s6970 + $0x1ac] sm:%s6962] %v7089
                  %v7091 = vld [vmem:[%s6969 + $0xf0] sm:%s6962]
                  %7092 = vst [vmem:[%s6970 + $0x1b0] sm:%s6962] %v7091
                  %v7093 = vld [vmem:[%s6969 + $0xf4] sm:%s6962]
                  %7094 = vst [vmem:[%s6970 + $0x1b4] sm:%s6962] %v7093
                  %v7095 = vld [vmem:[%s6969 + $0xf8] sm:%s6962]
                  %7096 = vst [vmem:[%s6970 + $0x1b8] sm:%s6962] %v7095
                  %v7097 = vld [vmem:[%s6969 + $0xfc] sm:%s6962]
                  %7098 = vst [vmem:[%s6970 + $0x1bc] sm:%s6962] %v7097
                $region75: #{tpu_custom_call.1} parent=62 // loop_footer
                  %s6968 = sadd.s32 1, %s6964
                $region76: #{tpu_custom_call.1} parent=62 // loop_footer_branch
                  %6963 = sbr.rel target = $region72
                $region77: #{tpu_custom_call.1} parent=62 // loop_exit
                  _
              $region63: #{tpu_custom_call.1} parent=47 // pred_fallthru
                _
            $region48: #{tpu_custom_call.1} parent=43 // pred_fallthru
              _
            // Predicated region
            $region49: #{tpu_custom_call.1} parent=43 // pred_check
              _
            $region50: #{tpu_custom_call.1} parent=43 // pred_check_branch
              %6812 = sbr.rel (0) target = $region52
            $region51: #{tpu_custom_call.1} parent=43 // pred_region
              %s6814 = ssub.s32 16, 1
              loop: start=0, step=1, limit=1
              $region53: #{tpu_custom_call.1} parent=51 // loop_pre_header
                _
              $region54: #{tpu_custom_call.1} parent=51 // loop_header
                %s6816 = sphi 0, %s6820
                %p6817 = scmp.ge.s32.totalorder %s6816, 1
                %s6821 = sphi %s6790, %s6790
                %s6822 = sphi %s6806, %s6806
              $region55: #{tpu_custom_call.1} parent=51 // loop_header_branch
                %6819 = sbr.rel (%p6817) target = $region59
              $region56: #{tpu_custom_call.1} parent=51 // loop_body
                %v6823 = vld [vmem:[%s6821] sm:%s6814]
                %6824 = vst [vmem:[%s6822] sm:%s6814] %v6823
                %v6825 = vld [vmem:[%s6821 + $0x4] sm:%s6814]
                %6826 = vst [vmem:[%s6822 + $0x4] sm:%s6814] %v6825
                %v6827 = vld [vmem:[%s6821 + $0x8] sm:%s6814]
                %6828 = vst [vmem:[%s6822 + $0x8] sm:%s6814] %v6827
                %v6829 = vld [vmem:[%s6821 + $0xc] sm:%s6814]
                %6830 = vst [vmem:[%s6822 + $0xc] sm:%s6814] %v6829
                %v6831 = vld [vmem:[%s6821 + $0x10] sm:%s6814]
                %6832 = vst [vmem:[%s6822 + $0x10] sm:%s6814] %v6831
                %v6833 = vld [vmem:[%s6821 + $0x14] sm:%s6814]
                %6834 = vst [vmem:[%s6822 + $0x14] sm:%s6814] %v6833
                %v6835 = vld [vmem:[%s6821 + $0x18] sm:%s6814]
                %6836 = vst [vmem:[%s6822 + $0x18] sm:%s6814] %v6835
                %v6837 = vld [vmem:[%s6821 + $0x1c] sm:%s6814]
                %6838 = vst [vmem:[%s6822 + $0x1c] sm:%s6814] %v6837
                %v6839 = vld [vmem:[%s6821 + $0x20] sm:%s6814]
                %6840 = vst [vmem:[%s6822 + $0x20] sm:%s6814] %v6839
                %v6841 = vld [vmem:[%s6821 + $0x24] sm:%s6814]
                %6842 = vst [vmem:[%s6822 + $0x24] sm:%s6814] %v6841
                %v6843 = vld [vmem:[%s6821 + $0x28] sm:%s6814]
                %6844 = vst [vmem:[%s6822 + $0x28] sm:%s6814] %v6843
                %v6845 = vld [vmem:[%s6821 + $0x2c] sm:%s6814]
                %6846 = vst [vmem:[%s6822 + $0x2c] sm:%s6814] %v6845
                %v6847 = vld [vmem:[%s6821 + $0x30] sm:%s6814]
                %6848 = vst [vmem:[%s6822 + $0x30] sm:%s6814] %v6847
                %v6849 = vld [vmem:[%s6821 + $0x34] sm:%s6814]
                %6850 = vst [vmem:[%s6822 + $0x34] sm:%s6814] %v6849
                %v6851 = vld [vmem:[%s6821 + $0x38] sm:%s6814]
                %6852 = vst [vmem:[%s6822 + $0x38] sm:%s6814] %v6851
                %v6853 = vld [vmem:[%s6821 + $0x3c] sm:%s6814]
                %6854 = vst [vmem:[%s6822 + $0x3c] sm:%s6814] %v6853
                %v6855 = vld [vmem:[%s6821 + $0x40] sm:%s6814]
                %6856 = vst [vmem:[%s6822 + $0x80] sm:%s6814] %v6855
                %v6857 = vld [vmem:[%s6821 + $0x44] sm:%s6814]
                %6858 = vst [vmem:[%s6822 + $0x84] sm:%s6814] %v6857
                %v6859 = vld [vmem:[%s6821 + $0x48] sm:%s6814]
                %6860 = vst [vmem:[%s6822 + $0x88] sm:%s6814] %v6859
                %v6861 = vld [vmem:[%s6821 + $0x4c] sm:%s6814]
                %6862 = vst [vmem:[%s6822 + $0x8c] sm:%s6814] %v6861
                %v6863 = vld [vmem:[%s6821 + $0x50] sm:%s6814]
                %6864 = vst [vmem:[%s6822 + $0x90] sm:%s6814] %v6863
                %v6865 = vld [vmem:[%s6821 + $0x54] sm:%s6814]
                %6866 = vst [vmem:[%s6822 + $0x94] sm:%s6814] %v6865
                %v6867 = vld [vmem:[%s6821 + $0x58] sm:%s6814]
                %6868 = vst [vmem:[%s6822 + $0x98] sm:%s6814] %v6867
                %v6869 = vld [vmem:[%s6821 + $0x5c] sm:%s6814]
                %6870 = vst [vmem:[%s6822 + $0x9c] sm:%s6814] %v6869
                %v6871 = vld [vmem:[%s6821 + $0x60] sm:%s6814]
                %6872 = vst [vmem:[%s6822 + $0xa0] sm:%s6814] %v6871
                %v6873 = vld [vmem:[%s6821 + $0x64] sm:%s6814]
                %6874 = vst [vmem:[%s6822 + $0xa4] sm:%s6814] %v6873
                %v6875 = vld [vmem:[%s6821 + $0x68] sm:%s6814]
                %6876 = vst [vmem:[%s6822 + $0xa8] sm:%s6814] %v6875
                %v6877 = vld [vmem:[%s6821 + $0x6c] sm:%s6814]
                %6878 = vst [vmem:[%s6822 + $0xac] sm:%s6814] %v6877
                %v6879 = vld [vmem:[%s6821 + $0x70] sm:%s6814]
                %6880 = vst [vmem:[%s6822 + $0xb0] sm:%s6814] %v6879
                %v6881 = vld [vmem:[%s6821 + $0x74] sm:%s6814]
                %6882 = vst [vmem:[%s6822 + $0xb4] sm:%s6814] %v6881
                %v6883 = vld [vmem:[%s6821 + $0x78] sm:%s6814]
                %6884 = vst [vmem:[%s6822 + $0xb8] sm:%s6814] %v6883
                %v6885 = vld [vmem:[%s6821 + $0x7c] sm:%s6814]
                %6886 = vst [vmem:[%s6822 + $0xbc] sm:%s6814] %v6885
                %v6887 = vld [vmem:[%s6821 + $0x80] sm:%s6814]
                %6888 = vst [vmem:[%s6822 + $0x100] sm:%s6814] %v6887
                %v6889 = vld [vmem:[%s6821 + $0x84] sm:%s6814]
                %6890 = vst [vmem:[%s6822 + $0x104] sm:%s6814] %v6889
                %v6891 = vld [vmem:[%s6821 + $0x88] sm:%s6814]
                %6892 = vst [vmem:[%s6822 + $0x108] sm:%s6814] %v6891
                %v6893 = vld [vmem:[%s6821 + $0x8c] sm:%s6814]
                %6894 = vst [vmem:[%s6822 + $0x10c] sm:%s6814] %v6893
                %v6895 = vld [vmem:[%s6821 + $0x90] sm:%s6814]
                %6896 = vst [vmem:[%s6822 + $0x110] sm:%s6814] %v6895
                %v6897 = vld [vmem:[%s6821 + $0x94] sm:%s6814]
                %6898 = vst [vmem:[%s6822 + $0x114] sm:%s6814] %v6897
                %v6899 = vld [vmem:[%s6821 + $0x98] sm:%s6814]
                %6900 = vst [vmem:[%s6822 + $0x118] sm:%s6814] %v6899
                %v6901 = vld [vmem:[%s6821 + $0x9c] sm:%s6814]
                %6902 = vst [vmem:[%s6822 + $0x11c] sm:%s6814] %v6901
                %v6903 = vld [vmem:[%s6821 + $0xa0] sm:%s6814]
                %6904 = vst [vmem:[%s6822 + $0x120] sm:%s6814] %v6903
                %v6905 = vld [vmem:[%s6821 + $0xa4] sm:%s6814]
                %6906 = vst [vmem:[%s6822 + $0x124] sm:%s6814] %v6905
                %v6907 = vld [vmem:[%s6821 + $0xa8] sm:%s6814]
                %6908 = vst [vmem:[%s6822 + $0x128] sm:%s6814] %v6907
                %v6909 = vld [vmem:[%s6821 + $0xac] sm:%s6814]
                %6910 = vst [vmem:[%s6822 + $0x12c] sm:%s6814] %v6909
                %v6911 = vld [vmem:[%s6821 + $0xb0] sm:%s6814]
                %6912 = vst [vmem:[%s6822 + $0x130] sm:%s6814] %v6911
                %v6913 = vld [vmem:[%s6821 + $0xb4] sm:%s6814]
                %6914 = vst [vmem:[%s6822 + $0x134] sm:%s6814] %v6913
                %v6915 = vld [vmem:[%s6821 + $0xb8] sm:%s6814]
                %6916 = vst [vmem:[%s6822 + $0x138] sm:%s6814] %v6915
                %v6917 = vld [vmem:[%s6821 + $0xbc] sm:%s6814]
                %6918 = vst [vmem:[%s6822 + $0x13c] sm:%s6814] %v6917
                %v6919 = vld [vmem:[%s6821 + $0xc0] sm:%s6814]
                %6920 = vst [vmem:[%s6822 + $0x180] sm:%s6814] %v6919
                %v6921 = vld [vmem:[%s6821 + $0xc4] sm:%s6814]
                %6922 = vst [vmem:[%s6822 + $0x184] sm:%s6814] %v6921
                %v6923 = vld [vmem:[%s6821 + $0xc8] sm:%s6814]
                %6924 = vst [vmem:[%s6822 + $0x188] sm:%s6814] %v6923
                %v6925 = vld [vmem:[%s6821 + $0xcc] sm:%s6814]
                %6926 = vst [vmem:[%s6822 + $0x18c] sm:%s6814] %v6925
                %v6927 = vld [vmem:[%s6821 + $0xd0] sm:%s6814]
                %6928 = vst [vmem:[%s6822 + $0x190] sm:%s6814] %v6927
                %v6929 = vld [vmem:[%s6821 + $0xd4] sm:%s6814]
                %6930 = vst [vmem:[%s6822 + $0x194] sm:%s6814] %v6929
                %v6931 = vld [vmem:[%s6821 + $0xd8] sm:%s6814]
                %6932 = vst [vmem:[%s6822 + $0x198] sm:%s6814] %v6931
                %v6933 = vld [vmem:[%s6821 + $0xdc] sm:%s6814]
                %6934 = vst [vmem:[%s6822 + $0x19c] sm:%s6814] %v6933
                %v6935 = vld [vmem:[%s6821 + $0xe0] sm:%s6814]
                %6936 = vst [vmem:[%s6822 + $0x1a0] sm:%s6814] %v6935
                %v6937 = vld [vmem:[%s6821 + $0xe4] sm:%s6814]
                %6938 = vst [vmem:[%s6822 + $0x1a4] sm:%s6814] %v6937
                %v6939 = vld [vmem:[%s6821 + $0xe8] sm:%s6814]
                %6940 = vst [vmem:[%s6822 + $0x1a8] sm:%s6814] %v6939
                %v6941 = vld [vmem:[%s6821 + $0xec] sm:%s6814]
                %6942 = vst [vmem:[%s6822 + $0x1ac] sm:%s6814] %v6941
                %v6943 = vld [vmem:[%s6821 + $0xf0] sm:%s6814]
                %6944 = vst [vmem:[%s6822 + $0x1b0] sm:%s6814] %v6943
                %v6945 = vld [vmem:[%s6821 + $0xf4] sm:%s6814]
                %6946 = vst [vmem:[%s6822 + $0x1b4] sm:%s6814] %v6945
                %v6947 = vld [vmem:[%s6821 + $0xf8] sm:%s6814]
                %6948 = vst [vmem:[%s6822 + $0x1b8] sm:%s6814] %v6947
                %v6949 = vld [vmem:[%s6821 + $0xfc] sm:%s6814]
                %6950 = vst [vmem:[%s6822 + $0x1bc] sm:%s6814] %v6949
              $region57: #{tpu_custom_call.1} parent=51 // loop_footer
                %s6820 = sadd.s32 1, %s6816
              $region58: #{tpu_custom_call.1} parent=51 // loop_footer_branch
                %6815 = sbr.rel target = $region54
              $region59: #{tpu_custom_call.1} parent=51 // loop_exit
                _
            $region52: #{tpu_custom_call.1} parent=43 // pred_fallthru
              _
          $region44: #{tpu_custom_call.1} parent=39 // pred_fallthru
            _
          %7099 = vnop
        $region40: #{tpu_custom_call.1} parent=27 // pred_fallthru
          _
        // Predicated region
        $region78: #{tpu_custom_call.1} parent=27 // pred_check
          %p7100 = pneg %p129
        $region79: #{tpu_custom_call.1} parent=27 // pred_check_branch
          %7102 = sbr.rel (%p7100) target = $region81
        $region80: #{tpu_custom_call.1} parent=27 // pred_region
          %s7103 = smul.u32 16, %s25
          %s7104 = smul.addr %s24, 128
          %s7105 = sadd.s32 %s7103, %s7104
          %s7106 = smul.addr %s7105, 4
          %s7107 = scalar_lea.vmem %s3, %s7106
          // Predicated region
          $region82: #{tpu_custom_call.1} parent=80 // pred_check
            _
          $region83: #{tpu_custom_call.1} parent=80 // pred_check_branch
            %7109 = sbr.rel (0) target = $region85
          $region84: #{tpu_custom_call.1} parent=80 // pred_region
            // Predicated region
            $region86: #{tpu_custom_call.1} parent=84 // pred_check
              _
            $region87: #{tpu_custom_call.1} parent=84 // pred_check_branch
              %7111 = sbr.rel target = $region89
            $region88: #{tpu_custom_call.1} parent=84 // pred_region
              // Predicated region
              $region101: #{tpu_custom_call.1} parent=88 // pred_check
                _
              $region102: #{tpu_custom_call.1} parent=88 // pred_check_branch
                %7253 = sbr.rel (0) target = $region104
              $region103: #{tpu_custom_call.1} parent=88 // pred_region
                loop: start=0, step=1, limit=1
                $region105: #{tpu_custom_call.1} parent=103 // loop_pre_header
                  _
                $region106: #{tpu_custom_call.1} parent=103 // loop_header
                  %s7255 = sphi 0, %s7259
                  %p7256 = scmp.ge.s32.totalorder %s7255, 1
                  %s7260 = sphi %s6794, %s6794
                  %s7261 = sphi %s7107, %s7107
                $region107: #{tpu_custom_call.1} parent=103 // loop_header_branch
                  %7258 = sbr.rel (%p7256) target = $region111
                $region108: #{tpu_custom_call.1} parent=103 // loop_body
                  _
                $region109: #{tpu_custom_call.1} parent=103 // loop_footer
                  %s7259 = sadd.s32 1, %s7255
                $region110: #{tpu_custom_call.1} parent=103 // loop_footer_branch
                  %7254 = sbr.rel target = $region106
                $region111: #{tpu_custom_call.1} parent=103 // loop_exit
                  _
                %s7263 = ssub.s32 16, 1
                loop: start=0, step=1, limit=1
                $region112: #{tpu_custom_call.1} parent=103 // loop_pre_header
                  _
                $region113: #{tpu_custom_call.1} parent=103 // loop_header
                  %s7265 = sphi 0, %s7269
                  %p7266 = scmp.ge.s32.totalorder %s7265, 1
                  %s7270 = sphi %s6794, %s6794
                  %s7271 = sphi %s7107, %s7107
                $region114: #{tpu_custom_call.1} parent=103 // loop_header_branch
                  %7268 = sbr.rel (%p7266) target = $region118
                $region115: #{tpu_custom_call.1} parent=103 // loop_body
                  %v7272 = vld [vmem:[%s7270] sm:%s7263]
                  %7273 = vst [vmem:[%s7271] sm:%s7263] %v7272
                  %v7274 = vld [vmem:[%s7270 + $0x4] sm:%s7263]
                  %7275 = vst [vmem:[%s7271 + $0x4] sm:%s7263] %v7274
                  %v7276 = vld [vmem:[%s7270 + $0x8] sm:%s7263]
                  %7277 = vst [vmem:[%s7271 + $0x8] sm:%s7263] %v7276
                  %v7278 = vld [vmem:[%s7270 + $0xc] sm:%s7263]
                  %7279 = vst [vmem:[%s7271 + $0xc] sm:%s7263] %v7278
                  %v7280 = vld [vmem:[%s7270 + $0x10] sm:%s7263]
                  %7281 = vst [vmem:[%s7271 + $0x10] sm:%s7263] %v7280
                  %v7282 = vld [vmem:[%s7270 + $0x14] sm:%s7263]
                  %7283 = vst [vmem:[%s7271 + $0x14] sm:%s7263] %v7282
                  %v7284 = vld [vmem:[%s7270 + $0x18] sm:%s7263]
                  %7285 = vst [vmem:[%s7271 + $0x18] sm:%s7263] %v7284
                  %v7286 = vld [vmem:[%s7270 + $0x1c] sm:%s7263]
                  %7287 = vst [vmem:[%s7271 + $0x1c] sm:%s7263] %v7286
                  %v7288 = vld [vmem:[%s7270 + $0x20] sm:%s7263]
                  %7289 = vst [vmem:[%s7271 + $0x20] sm:%s7263] %v7288
                  %v7290 = vld [vmem:[%s7270 + $0x24] sm:%s7263]
                  %7291 = vst [vmem:[%s7271 + $0x24] sm:%s7263] %v7290
                  %v7292 = vld [vmem:[%s7270 + $0x28] sm:%s7263]
                  %7293 = vst [vmem:[%s7271 + $0x28] sm:%s7263] %v7292
                  %v7294 = vld [vmem:[%s7270 + $0x2c] sm:%s7263]
                  %7295 = vst [vmem:[%s7271 + $0x2c] sm:%s7263] %v7294
                  %v7296 = vld [vmem:[%s7270 + $0x30] sm:%s7263]
                  %7297 = vst [vmem:[%s7271 + $0x30] sm:%s7263] %v7296
                  %v7298 = vld [vmem:[%s7270 + $0x34] sm:%s7263]
                  %7299 = vst [vmem:[%s7271 + $0x34] sm:%s7263] %v7298
                  %v7300 = vld [vmem:[%s7270 + $0x38] sm:%s7263]
                  %7301 = vst [vmem:[%s7271 + $0x38] sm:%s7263] %v7300
                  %v7302 = vld [vmem:[%s7270 + $0x3c] sm:%s7263]
                  %7303 = vst [vmem:[%s7271 + $0x3c] sm:%s7263] %v7302
                  %v7304 = vld [vmem:[%s7270 + $0x40] sm:%s7263]
                  %7305 = vst [vmem:[%s7271 + $0x80] sm:%s7263] %v7304
                  %v7306 = vld [vmem:[%s7270 + $0x44] sm:%s7263]
                  %7307 = vst [vmem:[%s7271 + $0x84] sm:%s7263] %v7306
                  %v7308 = vld [vmem:[%s7270 + $0x48] sm:%s7263]
                  %7309 = vst [vmem:[%s7271 + $0x88] sm:%s7263] %v7308
                  %v7310 = vld [vmem:[%s7270 + $0x4c] sm:%s7263]
                  %7311 = vst [vmem:[%s7271 + $0x8c] sm:%s7263] %v7310
                  %v7312 = vld [vmem:[%s7270 + $0x50] sm:%s7263]
                  %7313 = vst [vmem:[%s7271 + $0x90] sm:%s7263] %v7312
                  %v7314 = vld [vmem:[%s7270 + $0x54] sm:%s7263]
                  %7315 = vst [vmem:[%s7271 + $0x94] sm:%s7263] %v7314
                  %v7316 = vld [vmem:[%s7270 + $0x58] sm:%s7263]
                  %7317 = vst [vmem:[%s7271 + $0x98] sm:%s7263] %v7316
                  %v7318 = vld [vmem:[%s7270 + $0x5c] sm:%s7263]
                  %7319 = vst [vmem:[%s7271 + $0x9c] sm:%s7263] %v7318
                  %v7320 = vld [vmem:[%s7270 + $0x60] sm:%s7263]
                  %7321 = vst [vmem:[%s7271 + $0xa0] sm:%s7263] %v7320
                  %v7322 = vld [vmem:[%s7270 + $0x64] sm:%s7263]
                  %7323 = vst [vmem:[%s7271 + $0xa4] sm:%s7263] %v7322
                  %v7324 = vld [vmem:[%s7270 + $0x68] sm:%s7263]
                  %7325 = vst [vmem:[%s7271 + $0xa8] sm:%s7263] %v7324
                  %v7326 = vld [vmem:[%s7270 + $0x6c] sm:%s7263]
                  %7327 = vst [vmem:[%s7271 + $0xac] sm:%s7263] %v7326
                  %v7328 = vld [vmem:[%s7270 + $0x70] sm:%s7263]
                  %7329 = vst [vmem:[%s7271 + $0xb0] sm:%s7263] %v7328
                  %v7330 = vld [vmem:[%s7270 + $0x74] sm:%s7263]
                  %7331 = vst [vmem:[%s7271 + $0xb4] sm:%s7263] %v7330
                  %v7332 = vld [vmem:[%s7270 + $0x78] sm:%s7263]
                  %7333 = vst [vmem:[%s7271 + $0xb8] sm:%s7263] %v7332
                  %v7334 = vld [vmem:[%s7270 + $0x7c] sm:%s7263]
                  %7335 = vst [vmem:[%s7271 + $0xbc] sm:%s7263] %v7334
                  %v7336 = vld [vmem:[%s7270 + $0x80] sm:%s7263]
                  %7337 = vst [vmem:[%s7271 + $0x100] sm:%s7263] %v7336
                  %v7338 = vld [vmem:[%s7270 + $0x84] sm:%s7263]
                  %7339 = vst [vmem:[%s7271 + $0x104] sm:%s7263] %v7338
                  %v7340 = vld [vmem:[%s7270 + $0x88] sm:%s7263]
                  %7341 = vst [vmem:[%s7271 + $0x108] sm:%s7263] %v7340
                  %v7342 = vld [vmem:[%s7270 + $0x8c] sm:%s7263]
                  %7343 = vst [vmem:[%s7271 + $0x10c] sm:%s7263] %v7342
                  %v7344 = vld [vmem:[%s7270 + $0x90] sm:%s7263]
                  %7345 = vst [vmem:[%s7271 + $0x110] sm:%s7263] %v7344
                  %v7346 = vld [vmem:[%s7270 + $0x94] sm:%s7263]
                  %7347 = vst [vmem:[%s7271 + $0x114] sm:%s7263] %v7346
                  %v7348 = vld [vmem:[%s7270 + $0x98] sm:%s7263]
                  %7349 = vst [vmem:[%s7271 + $0x118] sm:%s7263] %v7348
                  %v7350 = vld [vmem:[%s7270 + $0x9c] sm:%s7263]
                  %7351 = vst [vmem:[%s7271 + $0x11c] sm:%s7263] %v7350
                  %v7352 = vld [vmem:[%s7270 + $0xa0] sm:%s7263]
                  %7353 = vst [vmem:[%s7271 + $0x120] sm:%s7263] %v7352
                  %v7354 = vld [vmem:[%s7270 + $0xa4] sm:%s7263]
                  %7355 = vst [vmem:[%s7271 + $0x124] sm:%s7263] %v7354
                  %v7356 = vld [vmem:[%s7270 + $0xa8] sm:%s7263]
                  %7357 = vst [vmem:[%s7271 + $0x128] sm:%s7263] %v7356
                  %v7358 = vld [vmem:[%s7270 + $0xac] sm:%s7263]
                  %7359 = vst [vmem:[%s7271 + $0x12c] sm:%s7263] %v7358
                  %v7360 = vld [vmem:[%s7270 + $0xb0] sm:%s7263]
                  %7361 = vst [vmem:[%s7271 + $0x130] sm:%s7263] %v7360
                  %v7362 = vld [vmem:[%s7270 + $0xb4] sm:%s7263]
                  %7363 = vst [vmem:[%s7271 + $0x134] sm:%s7263] %v7362
                  %v7364 = vld [vmem:[%s7270 + $0xb8] sm:%s7263]
                  %7365 = vst [vmem:[%s7271 + $0x138] sm:%s7263] %v7364
                  %v7366 = vld [vmem:[%s7270 + $0xbc] sm:%s7263]
                  %7367 = vst [vmem:[%s7271 + $0x13c] sm:%s7263] %v7366
                  %v7368 = vld [vmem:[%s7270 + $0xc0] sm:%s7263]
                  %7369 = vst [vmem:[%s7271 + $0x180] sm:%s7263] %v7368
                  %v7370 = vld [vmem:[%s7270 + $0xc4] sm:%s7263]
                  %7371 = vst [vmem:[%s7271 + $0x184] sm:%s7263] %v7370
                  %v7372 = vld [vmem:[%s7270 + $0xc8] sm:%s7263]
                  %7373 = vst [vmem:[%s7271 + $0x188] sm:%s7263] %v7372
                  %v7374 = vld [vmem:[%s7270 + $0xcc] sm:%s7263]
                  %7375 = vst [vmem:[%s7271 + $0x18c] sm:%s7263] %v7374
                  %v7376 = vld [vmem:[%s7270 + $0xd0] sm:%s7263]
                  %7377 = vst [vmem:[%s7271 + $0x190] sm:%s7263] %v7376
                  %v7378 = vld [vmem:[%s7270 + $0xd4] sm:%s7263]
                  %7379 = vst [vmem:[%s7271 + $0x194] sm:%s7263] %v7378
                  %v7380 = vld [vmem:[%s7270 + $0xd8] sm:%s7263]
                  %7381 = vst [vmem:[%s7271 + $0x198] sm:%s7263] %v7380
                  %v7382 = vld [vmem:[%s7270 + $0xdc] sm:%s7263]
                  %7383 = vst [vmem:[%s7271 + $0x19c] sm:%s7263] %v7382
                  %v7384 = vld [vmem:[%s7270 + $0xe0] sm:%s7263]
                  %7385 = vst [vmem:[%s7271 + $0x1a0] sm:%s7263] %v7384
                  %v7386 = vld [vmem:[%s7270 + $0xe4] sm:%s7263]
                  %7387 = vst [vmem:[%s7271 + $0x1a4] sm:%s7263] %v7386
                  %v7388 = vld [vmem:[%s7270 + $0xe8] sm:%s7263]
                  %7389 = vst [vmem:[%s7271 + $0x1a8] sm:%s7263] %v7388
                  %v7390 = vld [vmem:[%s7270 + $0xec] sm:%s7263]
                  %7391 = vst [vmem:[%s7271 + $0x1ac] sm:%s7263] %v7390
                  %v7392 = vld [vmem:[%s7270 + $0xf0] sm:%s7263]
                  %7393 = vst [vmem:[%s7271 + $0x1b0] sm:%s7263] %v7392
                  %v7394 = vld [vmem:[%s7270 + $0xf4] sm:%s7263]
                  %7395 = vst [vmem:[%s7271 + $0x1b4] sm:%s7263] %v7394
                  %v7396 = vld [vmem:[%s7270 + $0xf8] sm:%s7263]
                  %7397 = vst [vmem:[%s7271 + $0x1b8] sm:%s7263] %v7396
                  %v7398 = vld [vmem:[%s7270 + $0xfc] sm:%s7263]
                  %7399 = vst [vmem:[%s7271 + $0x1bc] sm:%s7263] %v7398
                $region116: #{tpu_custom_call.1} parent=103 // loop_footer
                  %s7269 = sadd.s32 1, %s7265
                $region117: #{tpu_custom_call.1} parent=103 // loop_footer_branch
                  %7264 = sbr.rel target = $region113
                $region118: #{tpu_custom_call.1} parent=103 // loop_exit
                  _
              $region104: #{tpu_custom_call.1} parent=88 // pred_fallthru
                _
            $region89: #{tpu_custom_call.1} parent=84 // pred_fallthru
              _
            // Predicated region
            $region90: #{tpu_custom_call.1} parent=84 // pred_check
              _
            $region91: #{tpu_custom_call.1} parent=84 // pred_check_branch
              %7113 = sbr.rel (0) target = $region93
            $region92: #{tpu_custom_call.1} parent=84 // pred_region
              %s7115 = ssub.s32 16, 1
              loop: start=0, step=1, limit=1
              $region94: #{tpu_custom_call.1} parent=92 // loop_pre_header
                _
              $region95: #{tpu_custom_call.1} parent=92 // loop_header
                %s7117 = sphi 0, %s7121
                %p7118 = scmp.ge.s32.totalorder %s7117, 1
                %s7122 = sphi %s6794, %s6794
                %s7123 = sphi %s7107, %s7107
              $region96: #{tpu_custom_call.1} parent=92 // loop_header_branch
                %7120 = sbr.rel (%p7118) target = $region100
              $region97: #{tpu_custom_call.1} parent=92 // loop_body
                %v7124 = vld [vmem:[%s7122] sm:%s7115]
                %7125 = vst [vmem:[%s7123] sm:%s7115] %v7124
                %v7126 = vld [vmem:[%s7122 + $0x4] sm:%s7115]
                %7127 = vst [vmem:[%s7123 + $0x4] sm:%s7115] %v7126
                %v7128 = vld [vmem:[%s7122 + $0x8] sm:%s7115]
                %7129 = vst [vmem:[%s7123 + $0x8] sm:%s7115] %v7128
                %v7130 = vld [vmem:[%s7122 + $0xc] sm:%s7115]
                %7131 = vst [vmem:[%s7123 + $0xc] sm:%s7115] %v7130
                %v7132 = vld [vmem:[%s7122 + $0x10] sm:%s7115]
                %7133 = vst [vmem:[%s7123 + $0x10] sm:%s7115] %v7132
                %v7134 = vld [vmem:[%s7122 + $0x14] sm:%s7115]
                %7135 = vst [vmem:[%s7123 + $0x14] sm:%s7115] %v7134
                %v7136 = vld [vmem:[%s7122 + $0x18] sm:%s7115]
                %7137 = vst [vmem:[%s7123 + $0x18] sm:%s7115] %v7136
                %v7138 = vld [vmem:[%s7122 + $0x1c] sm:%s7115]
                %7139 = vst [vmem:[%s7123 + $0x1c] sm:%s7115] %v7138
                %v7140 = vld [vmem:[%s7122 + $0x20] sm:%s7115]
                %7141 = vst [vmem:[%s7123 + $0x20] sm:%s7115] %v7140
                %v7142 = vld [vmem:[%s7122 + $0x24] sm:%s7115]
                %7143 = vst [vmem:[%s7123 + $0x24] sm:%s7115] %v7142
                %v7144 = vld [vmem:[%s7122 + $0x28] sm:%s7115]
                %7145 = vst [vmem:[%s7123 + $0x28] sm:%s7115] %v7144
                %v7146 = vld [vmem:[%s7122 + $0x2c] sm:%s7115]
                %7147 = vst [vmem:[%s7123 + $0x2c] sm:%s7115] %v7146
                %v7148 = vld [vmem:[%s7122 + $0x30] sm:%s7115]
                %7149 = vst [vmem:[%s7123 + $0x30] sm:%s7115] %v7148
                %v7150 = vld [vmem:[%s7122 + $0x34] sm:%s7115]
                %7151 = vst [vmem:[%s7123 + $0x34] sm:%s7115] %v7150
                %v7152 = vld [vmem:[%s7122 + $0x38] sm:%s7115]
                %7153 = vst [vmem:[%s7123 + $0x38] sm:%s7115] %v7152
                %v7154 = vld [vmem:[%s7122 + $0x3c] sm:%s7115]
                %7155 = vst [vmem:[%s7123 + $0x3c] sm:%s7115] %v7154
                %v7156 = vld [vmem:[%s7122 + $0x40] sm:%s7115]
                %7157 = vst [vmem:[%s7123 + $0x80] sm:%s7115] %v7156
                %v7158 = vld [vmem:[%s7122 + $0x44] sm:%s7115]
                %7159 = vst [vmem:[%s7123 + $0x84] sm:%s7115] %v7158
                %v7160 = vld [vmem:[%s7122 + $0x48] sm:%s7115]
                %7161 = vst [vmem:[%s7123 + $0x88] sm:%s7115] %v7160
                %v7162 = vld [vmem:[%s7122 + $0x4c] sm:%s7115]
                %7163 = vst [vmem:[%s7123 + $0x8c] sm:%s7115] %v7162
                %v7164 = vld [vmem:[%s7122 + $0x50] sm:%s7115]
                %7165 = vst [vmem:[%s7123 + $0x90] sm:%s7115] %v7164
                %v7166 = vld [vmem:[%s7122 + $0x54] sm:%s7115]
                %7167 = vst [vmem:[%s7123 + $0x94] sm:%s7115] %v7166
                %v7168 = vld [vmem:[%s7122 + $0x58] sm:%s7115]
                %7169 = vst [vmem:[%s7123 + $0x98] sm:%s7115] %v7168
                %v7170 = vld [vmem:[%s7122 + $0x5c] sm:%s7115]
                %7171 = vst [vmem:[%s7123 + $0x9c] sm:%s7115] %v7170
                %v7172 = vld [vmem:[%s7122 + $0x60] sm:%s7115]
                %7173 = vst [vmem:[%s7123 + $0xa0] sm:%s7115] %v7172
                %v7174 = vld [vmem:[%s7122 + $0x64] sm:%s7115]
                %7175 = vst [vmem:[%s7123 + $0xa4] sm:%s7115] %v7174
                %v7176 = vld [vmem:[%s7122 + $0x68] sm:%s7115]
                %7177 = vst [vmem:[%s7123 + $0xa8] sm:%s7115] %v7176
                %v7178 = vld [vmem:[%s7122 + $0x6c] sm:%s7115]
                %7179 = vst [vmem:[%s7123 + $0xac] sm:%s7115] %v7178
                %v7180 = vld [vmem:[%s7122 + $0x70] sm:%s7115]
                %7181 = vst [vmem:[%s7123 + $0xb0] sm:%s7115] %v7180
                %v7182 = vld [vmem:[%s7122 + $0x74] sm:%s7115]
                %7183 = vst [vmem:[%s7123 + $0xb4] sm:%s7115] %v7182
                %v7184 = vld [vmem:[%s7122 + $0x78] sm:%s7115]
                %7185 = vst [vmem:[%s7123 + $0xb8] sm:%s7115] %v7184
                %v7186 = vld [vmem:[%s7122 + $0x7c] sm:%s7115]
                %7187 = vst [vmem:[%s7123 + $0xbc] sm:%s7115] %v7186
                %v7188 = vld [vmem:[%s7122 + $0x80] sm:%s7115]
                %7189 = vst [vmem:[%s7123 + $0x100] sm:%s7115] %v7188
                %v7190 = vld [vmem:[%s7122 + $0x84] sm:%s7115]
                %7191 = vst [vmem:[%s7123 + $0x104] sm:%s7115] %v7190
                %v7192 = vld [vmem:[%s7122 + $0x88] sm:%s7115]
                %7193 = vst [vmem:[%s7123 + $0x108] sm:%s7115] %v7192
                %v7194 = vld [vmem:[%s7122 + $0x8c] sm:%s7115]
                %7195 = vst [vmem:[%s7123 + $0x10c] sm:%s7115] %v7194
                %v7196 = vld [vmem:[%s7122 + $0x90] sm:%s7115]
                %7197 = vst [vmem:[%s7123 + $0x110] sm:%s7115] %v7196
                %v7198 = vld [vmem:[%s7122 + $0x94] sm:%s7115]
                %7199 = vst [vmem:[%s7123 + $0x114] sm:%s7115] %v7198
                %v7200 = vld [vmem:[%s7122 + $0x98] sm:%s7115]
                %7201 = vst [vmem:[%s7123 + $0x118] sm:%s7115] %v7200
                %v7202 = vld [vmem:[%s7122 + $0x9c] sm:%s7115]
                %7203 = vst [vmem:[%s7123 + $0x11c] sm:%s7115] %v7202
                %v7204 = vld [vmem:[%s7122 + $0xa0] sm:%s7115]
                %7205 = vst [vmem:[%s7123 + $0x120] sm:%s7115] %v7204
                %v7206 = vld [vmem:[%s7122 + $0xa4] sm:%s7115]
                %7207 = vst [vmem:[%s7123 + $0x124] sm:%s7115] %v7206
                %v7208 = vld [vmem:[%s7122 + $0xa8] sm:%s7115]
                %7209 = vst [vmem:[%s7123 + $0x128] sm:%s7115] %v7208
                %v7210 = vld [vmem:[%s7122 + $0xac] sm:%s7115]
                %7211 = vst [vmem:[%s7123 + $0x12c] sm:%s7115] %v7210
                %v7212 = vld [vmem:[%s7122 + $0xb0] sm:%s7115]
                %7213 = vst [vmem:[%s7123 + $0x130] sm:%s7115] %v7212
                %v7214 = vld [vmem:[%s7122 + $0xb4] sm:%s7115]
                %7215 = vst [vmem:[%s7123 + $0x134] sm:%s7115] %v7214
                %v7216 = vld [vmem:[%s7122 + $0xb8] sm:%s7115]
                %7217 = vst [vmem:[%s7123 + $0x138] sm:%s7115] %v7216
                %v7218 = vld [vmem:[%s7122 + $0xbc] sm:%s7115]
                %7219 = vst [vmem:[%s7123 + $0x13c] sm:%s7115] %v7218
                %v7220 = vld [vmem:[%s7122 + $0xc0] sm:%s7115]
                %7221 = vst [vmem:[%s7123 + $0x180] sm:%s7115] %v7220
                %v7222 = vld [vmem:[%s7122 + $0xc4] sm:%s7115]
                %7223 = vst [vmem:[%s7123 + $0x184] sm:%s7115] %v7222
                %v7224 = vld [vmem:[%s7122 + $0xc8] sm:%s7115]
                %7225 = vst [vmem:[%s7123 + $0x188] sm:%s7115] %v7224
                %v7226 = vld [vmem:[%s7122 + $0xcc] sm:%s7115]
                %7227 = vst [vmem:[%s7123 + $0x18c] sm:%s7115] %v7226
                %v7228 = vld [vmem:[%s7122 + $0xd0] sm:%s7115]
                %7229 = vst [vmem:[%s7123 + $0x190] sm:%s7115] %v7228
                %v7230 = vld [vmem:[%s7122 + $0xd4] sm:%s7115]
                %7231 = vst [vmem:[%s7123 + $0x194] sm:%s7115] %v7230
                %v7232 = vld [vmem:[%s7122 + $0xd8] sm:%s7115]
                %7233 = vst [vmem:[%s7123 + $0x198] sm:%s7115] %v7232
                %v7234 = vld [vmem:[%s7122 + $0xdc] sm:%s7115]
                %7235 = vst [vmem:[%s7123 + $0x19c] sm:%s7115] %v7234
                %v7236 = vld [vmem:[%s7122 + $0xe0] sm:%s7115]
                %7237 = vst [vmem:[%s7123 + $0x1a0] sm:%s7115] %v7236
                %v7238 = vld [vmem:[%s7122 + $0xe4] sm:%s7115]
                %7239 = vst [vmem:[%s7123 + $0x1a4] sm:%s7115] %v7238
                %v7240 = vld [vmem:[%s7122 + $0xe8] sm:%s7115]
                %7241 = vst [vmem:[%s7123 + $0x1a8] sm:%s7115] %v7240
                %v7242 = vld [vmem:[%s7122 + $0xec] sm:%s7115]
                %7243 = vst [vmem:[%s7123 + $0x1ac] sm:%s7115] %v7242
                %v7244 = vld [vmem:[%s7122 + $0xf0] sm:%s7115]
                %7245 = vst [vmem:[%s7123 + $0x1b0] sm:%s7115] %v7244
                %v7246 = vld [vmem:[%s7122 + $0xf4] sm:%s7115]
                %7247 = vst [vmem:[%s7123 + $0x1b4] sm:%s7115] %v7246
                %v7248 = vld [vmem:[%s7122 + $0xf8] sm:%s7115]
                %7249 = vst [vmem:[%s7123 + $0x1b8] sm:%s7115] %v7248
                %v7250 = vld [vmem:[%s7122 + $0xfc] sm:%s7115]
                %7251 = vst [vmem:[%s7123 + $0x1bc] sm:%s7115] %v7250
              $region98: #{tpu_custom_call.1} parent=92 // loop_footer
                %s7121 = sadd.s32 1, %s7117
              $region99: #{tpu_custom_call.1} parent=92 // loop_footer_branch
                %7116 = sbr.rel target = $region95
              $region100: #{tpu_custom_call.1} parent=92 // loop_exit
                _
            $region93: #{tpu_custom_call.1} parent=84 // pred_fallthru
              _
          $region85: #{tpu_custom_call.1} parent=80 // pred_fallthru
            _
          %7400 = vnop
        $region81: #{tpu_custom_call.1} parent=27 // pred_fallthru
          _
        // Predicated region
        $region119: #{tpu_custom_call.1} parent=27 // pred_check
          %p7401 = pneg %p157
        $region120: #{tpu_custom_call.1} parent=27 // pred_check_branch
          %7403 = sbr.rel (%p7401) target = $region122
        $region121: #{tpu_custom_call.1} parent=27 // pred_region
          %s7404 = smul.u32 16, %s25
          %s7405 = smul.addr %s24, 128
          %s7406 = sadd.s32 %s7404, %s7405
          %s7407 = smul.addr %s7406, 4
          %s7408 = scalar_lea.vmem %s4, %s7407
          // Predicated region
          $region123: #{tpu_custom_call.1} parent=121 // pred_check
            _
          $region124: #{tpu_custom_call.1} parent=121 // pred_check_branch
            %7410 = sbr.rel (0) target = $region126
          $region125: #{tpu_custom_call.1} parent=121 // pred_region
            // Predicated region
            $region127: #{tpu_custom_call.1} parent=125 // pred_check
              _
            $region128: #{tpu_custom_call.1} parent=125 // pred_check_branch
              %7412 = sbr.rel target = $region130
            $region129: #{tpu_custom_call.1} parent=125 // pred_region
              // Predicated region
              $region142: #{tpu_custom_call.1} parent=129 // pred_check
                _
              $region143: #{tpu_custom_call.1} parent=129 // pred_check_branch
                %7554 = sbr.rel (0) target = $region145
              $region144: #{tpu_custom_call.1} parent=129 // pred_region
                loop: start=0, step=1, limit=1
                $region146: #{tpu_custom_call.1} parent=144 // loop_pre_header
                  _
                $region147: #{tpu_custom_call.1} parent=144 // loop_header
                  %s7556 = sphi 0, %s7560
                  %p7557 = scmp.ge.s32.totalorder %s7556, 1
                  %s7561 = sphi %s6798, %s6798
                  %s7562 = sphi %s7408, %s7408
                $region148: #{tpu_custom_call.1} parent=144 // loop_header_branch
                  %7559 = sbr.rel (%p7557) target = $region152
                $region149: #{tpu_custom_call.1} parent=144 // loop_body
                  _
                $region150: #{tpu_custom_call.1} parent=144 // loop_footer
                  %s7560 = sadd.s32 1, %s7556
                $region151: #{tpu_custom_call.1} parent=144 // loop_footer_branch
                  %7555 = sbr.rel target = $region147
                $region152: #{tpu_custom_call.1} parent=144 // loop_exit
                  _
                %s7564 = ssub.s32 16, 1
                loop: start=0, step=1, limit=1
                $region153: #{tpu_custom_call.1} parent=144 // loop_pre_header
                  _
                $region154: #{tpu_custom_call.1} parent=144 // loop_header
                  %s7566 = sphi 0, %s7570
                  %p7567 = scmp.ge.s32.totalorder %s7566, 1
                  %s7571 = sphi %s6798, %s6798
                  %s7572 = sphi %s7408, %s7408
                $region155: #{tpu_custom_call.1} parent=144 // loop_header_branch
                  %7569 = sbr.rel (%p7567) target = $region159
                $region156: #{tpu_custom_call.1} parent=144 // loop_body
                  %v7573 = vld [vmem:[%s7571] sm:%s7564]
                  %7574 = vst [vmem:[%s7572] sm:%s7564] %v7573
                  %v7575 = vld [vmem:[%s7571 + $0x4] sm:%s7564]
                  %7576 = vst [vmem:[%s7572 + $0x4] sm:%s7564] %v7575
                  %v7577 = vld [vmem:[%s7571 + $0x8] sm:%s7564]
                  %7578 = vst [vmem:[%s7572 + $0x8] sm:%s7564] %v7577
                  %v7579 = vld [vmem:[%s7571 + $0xc] sm:%s7564]
                  %7580 = vst [vmem:[%s7572 + $0xc] sm:%s7564] %v7579
                  %v7581 = vld [vmem:[%s7571 + $0x10] sm:%s7564]
                  %7582 = vst [vmem:[%s7572 + $0x10] sm:%s7564] %v7581
                  %v7583 = vld [vmem:[%s7571 + $0x14] sm:%s7564]
                  %7584 = vst [vmem:[%s7572 + $0x14] sm:%s7564] %v7583
                  %v7585 = vld [vmem:[%s7571 + $0x18] sm:%s7564]
                  %7586 = vst [vmem:[%s7572 + $0x18] sm:%s7564] %v7585
                  %v7587 = vld [vmem:[%s7571 + $0x1c] sm:%s7564]
                  %7588 = vst [vmem:[%s7572 + $0x1c] sm:%s7564] %v7587
                  %v7589 = vld [vmem:[%s7571 + $0x20] sm:%s7564]
                  %7590 = vst [vmem:[%s7572 + $0x20] sm:%s7564] %v7589
                  %v7591 = vld [vmem:[%s7571 + $0x24] sm:%s7564]
                  %7592 = vst [vmem:[%s7572 + $0x24] sm:%s7564] %v7591
                  %v7593 = vld [vmem:[%s7571 + $0x28] sm:%s7564]
                  %7594 = vst [vmem:[%s7572 + $0x28] sm:%s7564] %v7593
                  %v7595 = vld [vmem:[%s7571 + $0x2c] sm:%s7564]
                  %7596 = vst [vmem:[%s7572 + $0x2c] sm:%s7564] %v7595
                  %v7597 = vld [vmem:[%s7571 + $0x30] sm:%s7564]
                  %7598 = vst [vmem:[%s7572 + $0x30] sm:%s7564] %v7597
                  %v7599 = vld [vmem:[%s7571 + $0x34] sm:%s7564]
                  %7600 = vst [vmem:[%s7572 + $0x34] sm:%s7564] %v7599
                  %v7601 = vld [vmem:[%s7571 + $0x38] sm:%s7564]
                  %7602 = vst [vmem:[%s7572 + $0x38] sm:%s7564] %v7601
                  %v7603 = vld [vmem:[%s7571 + $0x3c] sm:%s7564]
                  %7604 = vst [vmem:[%s7572 + $0x3c] sm:%s7564] %v7603
                  %v7605 = vld [vmem:[%s7571 + $0x40] sm:%s7564]
                  %7606 = vst [vmem:[%s7572 + $0x80] sm:%s7564] %v7605
                  %v7607 = vld [vmem:[%s7571 + $0x44] sm:%s7564]
                  %7608 = vst [vmem:[%s7572 + $0x84] sm:%s7564] %v7607
                  %v7609 = vld [vmem:[%s7571 + $0x48] sm:%s7564]
                  %7610 = vst [vmem:[%s7572 + $0x88] sm:%s7564] %v7609
                  %v7611 = vld [vmem:[%s7571 + $0x4c] sm:%s7564]
                  %7612 = vst [vmem:[%s7572 + $0x8c] sm:%s7564] %v7611
                  %v7613 = vld [vmem:[%s7571 + $0x50] sm:%s7564]
                  %7614 = vst [vmem:[%s7572 + $0x90] sm:%s7564] %v7613
                  %v7615 = vld [vmem:[%s7571 + $0x54] sm:%s7564]
                  %7616 = vst [vmem:[%s7572 + $0x94] sm:%s7564] %v7615
                  %v7617 = vld [vmem:[%s7571 + $0x58] sm:%s7564]
                  %7618 = vst [vmem:[%s7572 + $0x98] sm:%s7564] %v7617
                  %v7619 = vld [vmem:[%s7571 + $0x5c] sm:%s7564]
                  %7620 = vst [vmem:[%s7572 + $0x9c] sm:%s7564] %v7619
                  %v7621 = vld [vmem:[%s7571 + $0x60] sm:%s7564]
                  %7622 = vst [vmem:[%s7572 + $0xa0] sm:%s7564] %v7621
                  %v7623 = vld [vmem:[%s7571 + $0x64] sm:%s7564]
                  %7624 = vst [vmem:[%s7572 + $0xa4] sm:%s7564] %v7623
                  %v7625 = vld [vmem:[%s7571 + $0x68] sm:%s7564]
                  %7626 = vst [vmem:[%s7572 + $0xa8] sm:%s7564] %v7625
                  %v7627 = vld [vmem:[%s7571 + $0x6c] sm:%s7564]
                  %7628 = vst [vmem:[%s7572 + $0xac] sm:%s7564] %v7627
                  %v7629 = vld [vmem:[%s7571 + $0x70] sm:%s7564]
                  %7630 = vst [vmem:[%s7572 + $0xb0] sm:%s7564] %v7629
                  %v7631 = vld [vmem:[%s7571 + $0x74] sm:%s7564]
                  %7632 = vst [vmem:[%s7572 + $0xb4] sm:%s7564] %v7631
                  %v7633 = vld [vmem:[%s7571 + $0x78] sm:%s7564]
                  %7634 = vst [vmem:[%s7572 + $0xb8] sm:%s7564] %v7633
                  %v7635 = vld [vmem:[%s7571 + $0x7c] sm:%s7564]
                  %7636 = vst [vmem:[%s7572 + $0xbc] sm:%s7564] %v7635
                  %v7637 = vld [vmem:[%s7571 + $0x80] sm:%s7564]
                  %7638 = vst [vmem:[%s7572 + $0x100] sm:%s7564] %v7637
                  %v7639 = vld [vmem:[%s7571 + $0x84] sm:%s7564]
                  %7640 = vst [vmem:[%s7572 + $0x104] sm:%s7564] %v7639
                  %v7641 = vld [vmem:[%s7571 + $0x88] sm:%s7564]
                  %7642 = vst [vmem:[%s7572 + $0x108] sm:%s7564] %v7641
                  %v7643 = vld [vmem:[%s7571 + $0x8c] sm:%s7564]
                  %7644 = vst [vmem:[%s7572 + $0x10c] sm:%s7564] %v7643
                  %v7645 = vld [vmem:[%s7571 + $0x90] sm:%s7564]
                  %7646 = vst [vmem:[%s7572 + $0x110] sm:%s7564] %v7645
                  %v7647 = vld [vmem:[%s7571 + $0x94] sm:%s7564]
                  %7648 = vst [vmem:[%s7572 + $0x114] sm:%s7564] %v7647
                  %v7649 = vld [vmem:[%s7571 + $0x98] sm:%s7564]
                  %7650 = vst [vmem:[%s7572 + $0x118] sm:%s7564] %v7649
                  %v7651 = vld [vmem:[%s7571 + $0x9c] sm:%s7564]
                  %7652 = vst [vmem:[%s7572 + $0x11c] sm:%s7564] %v7651
                  %v7653 = vld [vmem:[%s7571 + $0xa0] sm:%s7564]
                  %7654 = vst [vmem:[%s7572 + $0x120] sm:%s7564] %v7653
                  %v7655 = vld [vmem:[%s7571 + $0xa4] sm:%s7564]
                  %7656 = vst [vmem:[%s7572 + $0x124] sm:%s7564] %v7655
                  %v7657 = vld [vmem:[%s7571 + $0xa8] sm:%s7564]
                  %7658 = vst [vmem:[%s7572 + $0x128] sm:%s7564] %v7657
                  %v7659 = vld [vmem:[%s7571 + $0xac] sm:%s7564]
                  %7660 = vst [vmem:[%s7572 + $0x12c] sm:%s7564] %v7659
                  %v7661 = vld [vmem:[%s7571 + $0xb0] sm:%s7564]
                  %7662 = vst [vmem:[%s7572 + $0x130] sm:%s7564] %v7661
                  %v7663 = vld [vmem:[%s7571 + $0xb4] sm:%s7564]
                  %7664 = vst [vmem:[%s7572 + $0x134] sm:%s7564] %v7663
                  %v7665 = vld [vmem:[%s7571 + $0xb8] sm:%s7564]
                  %7666 = vst [vmem:[%s7572 + $0x138] sm:%s7564] %v7665
                  %v7667 = vld [vmem:[%s7571 + $0xbc] sm:%s7564]
                  %7668 = vst [vmem:[%s7572 + $0x13c] sm:%s7564] %v7667
                  %v7669 = vld [vmem:[%s7571 + $0xc0] sm:%s7564]
                  %7670 = vst [vmem:[%s7572 + $0x180] sm:%s7564] %v7669
                  %v7671 = vld [vmem:[%s7571 + $0xc4] sm:%s7564]
                  %7672 = vst [vmem:[%s7572 + $0x184] sm:%s7564] %v7671
                  %v7673 = vld [vmem:[%s7571 + $0xc8] sm:%s7564]
                  %7674 = vst [vmem:[%s7572 + $0x188] sm:%s7564] %v7673
                  %v7675 = vld [vmem:[%s7571 + $0xcc] sm:%s7564]
                  %7676 = vst [vmem:[%s7572 + $0x18c] sm:%s7564] %v7675
                  %v7677 = vld [vmem:[%s7571 + $0xd0] sm:%s7564]
                  %7678 = vst [vmem:[%s7572 + $0x190] sm:%s7564] %v7677
                  %v7679 = vld [vmem:[%s7571 + $0xd4] sm:%s7564]
                  %7680 = vst [vmem:[%s7572 + $0x194] sm:%s7564] %v7679
                  %v7681 = vld [vmem:[%s7571 + $0xd8] sm:%s7564]
                  %7682 = vst [vmem:[%s7572 + $0x198] sm:%s7564] %v7681
                  %v7683 = vld [vmem:[%s7571 + $0xdc] sm:%s7564]
                  %7684 = vst [vmem:[%s7572 + $0x19c] sm:%s7564] %v7683
                  %v7685 = vld [vmem:[%s7571 + $0xe0] sm:%s7564]
                  %7686 = vst [vmem:[%s7572 + $0x1a0] sm:%s7564] %v7685
                  %v7687 = vld [vmem:[%s7571 + $0xe4] sm:%s7564]
                  %7688 = vst [vmem:[%s7572 + $0x1a4] sm:%s7564] %v7687
                  %v7689 = vld [vmem:[%s7571 + $0xe8] sm:%s7564]
                  %7690 = vst [vmem:[%s7572 + $0x1a8] sm:%s7564] %v7689
                  %v7691 = vld [vmem:[%s7571 + $0xec] sm:%s7564]
                  %7692 = vst [vmem:[%s7572 + $0x1ac] sm:%s7564] %v7691
                  %v7693 = vld [vmem:[%s7571 + $0xf0] sm:%s7564]
                  %7694 = vst [vmem:[%s7572 + $0x1b0] sm:%s7564] %v7693
                  %v7695 = vld [vmem:[%s7571 + $0xf4] sm:%s7564]
                  %7696 = vst [vmem:[%s7572 + $0x1b4] sm:%s7564] %v7695
                  %v7697 = vld [vmem:[%s7571 + $0xf8] sm:%s7564]
                  %7698 = vst [vmem:[%s7572 + $0x1b8] sm:%s7564] %v7697
                  %v7699 = vld [vmem:[%s7571 + $0xfc] sm:%s7564]
                  %7700 = vst [vmem:[%s7572 + $0x1bc] sm:%s7564] %v7699
                $region157: #{tpu_custom_call.1} parent=144 // loop_footer
                  %s7570 = sadd.s32 1, %s7566
                $region158: #{tpu_custom_call.1} parent=144 // loop_footer_branch
                  %7565 = sbr.rel target = $region154
                $region159: #{tpu_custom_call.1} parent=144 // loop_exit
                  _
              $region145: #{tpu_custom_call.1} parent=129 // pred_fallthru
                _
            $region130: #{tpu_custom_call.1} parent=125 // pred_fallthru
              _
            // Predicated region
            $region131: #{tpu_custom_call.1} parent=125 // pred_check
              _
            $region132: #{tpu_custom_call.1} parent=125 // pred_check_branch
              %7414 = sbr.rel (0) target = $region134
            $region133: #{tpu_custom_call.1} parent=125 // pred_region
              %s7416 = ssub.s32 16, 1
              loop: start=0, step=1, limit=1
              $region135: #{tpu_custom_call.1} parent=133 // loop_pre_header
                _
              $region136: #{tpu_custom_call.1} parent=133 // loop_header
                %s7418 = sphi 0, %s7422
                %p7419 = scmp.ge.s32.totalorder %s7418, 1
                %s7423 = sphi %s6798, %s6798
                %s7424 = sphi %s7408, %s7408
              $region137: #{tpu_custom_call.1} parent=133 // loop_header_branch
                %7421 = sbr.rel (%p7419) target = $region141
              $region138: #{tpu_custom_call.1} parent=133 // loop_body
                %v7425 = vld [vmem:[%s7423] sm:%s7416]
                %7426 = vst [vmem:[%s7424] sm:%s7416] %v7425
                %v7427 = vld [vmem:[%s7423 + $0x4] sm:%s7416]
                %7428 = vst [vmem:[%s7424 + $0x4] sm:%s7416] %v7427
                %v7429 = vld [vmem:[%s7423 + $0x8] sm:%s7416]
                %7430 = vst [vmem:[%s7424 + $0x8] sm:%s7416] %v7429
                %v7431 = vld [vmem:[%s7423 + $0xc] sm:%s7416]
                %7432 = vst [vmem:[%s7424 + $0xc] sm:%s7416] %v7431
                %v7433 = vld [vmem:[%s7423 + $0x10] sm:%s7416]
                %7434 = vst [vmem:[%s7424 + $0x10] sm:%s7416] %v7433
                %v7435 = vld [vmem:[%s7423 + $0x14] sm:%s7416]
                %7436 = vst [vmem:[%s7424 + $0x14] sm:%s7416] %v7435
                %v7437 = vld [vmem:[%s7423 + $0x18] sm:%s7416]
                %7438 = vst [vmem:[%s7424 + $0x18] sm:%s7416] %v7437
                %v7439 = vld [vmem:[%s7423 + $0x1c] sm:%s7416]
                %7440 = vst [vmem:[%s7424 + $0x1c] sm:%s7416] %v7439
                %v7441 = vld [vmem:[%s7423 + $0x20] sm:%s7416]
                %7442 = vst [vmem:[%s7424 + $0x20] sm:%s7416] %v7441
                %v7443 = vld [vmem:[%s7423 + $0x24] sm:%s7416]
                %7444 = vst [vmem:[%s7424 + $0x24] sm:%s7416] %v7443
                %v7445 = vld [vmem:[%s7423 + $0x28] sm:%s7416]
                %7446 = vst [vmem:[%s7424 + $0x28] sm:%s7416] %v7445
                %v7447 = vld [vmem:[%s7423 + $0x2c] sm:%s7416]
                %7448 = vst [vmem:[%s7424 + $0x2c] sm:%s7416] %v7447
                %v7449 = vld [vmem:[%s7423 + $0x30] sm:%s7416]
                %7450 = vst [vmem:[%s7424 + $0x30] sm:%s7416] %v7449
                %v7451 = vld [vmem:[%s7423 + $0x34] sm:%s7416]
                %7452 = vst [vmem:[%s7424 + $0x34] sm:%s7416] %v7451
                %v7453 = vld [vmem:[%s7423 + $0x38] sm:%s7416]
                %7454 = vst [vmem:[%s7424 + $0x38] sm:%s7416] %v7453
                %v7455 = vld [vmem:[%s7423 + $0x3c] sm:%s7416]
                %7456 = vst [vmem:[%s7424 + $0x3c] sm:%s7416] %v7455
                %v7457 = vld [vmem:[%s7423 + $0x40] sm:%s7416]
                %7458 = vst [vmem:[%s7424 + $0x80] sm:%s7416] %v7457
                %v7459 = vld [vmem:[%s7423 + $0x44] sm:%s7416]
                %7460 = vst [vmem:[%s7424 + $0x84] sm:%s7416] %v7459
                %v7461 = vld [vmem:[%s7423 + $0x48] sm:%s7416]
                %7462 = vst [vmem:[%s7424 + $0x88] sm:%s7416] %v7461
                %v7463 = vld [vmem:[%s7423 + $0x4c] sm:%s7416]
                %7464 = vst [vmem:[%s7424 + $0x8c] sm:%s7416] %v7463
                %v7465 = vld [vmem:[%s7423 + $0x50] sm:%s7416]
                %7466 = vst [vmem:[%s7424 + $0x90] sm:%s7416] %v7465
                %v7467 = vld [vmem:[%s7423 + $0x54] sm:%s7416]
                %7468 = vst [vmem:[%s7424 + $0x94] sm:%s7416] %v7467
                %v7469 = vld [vmem:[%s7423 + $0x58] sm:%s7416]
                %7470 = vst [vmem:[%s7424 + $0x98] sm:%s7416] %v7469
                %v7471 = vld [vmem:[%s7423 + $0x5c] sm:%s7416]
                %7472 = vst [vmem:[%s7424 + $0x9c] sm:%s7416] %v7471
                %v7473 = vld [vmem:[%s7423 + $0x60] sm:%s7416]
                %7474 = vst [vmem:[%s7424 + $0xa0] sm:%s7416] %v7473
                %v7475 = vld [vmem:[%s7423 + $0x64] sm:%s7416]
                %7476 = vst [vmem:[%s7424 + $0xa4] sm:%s7416] %v7475
                %v7477 = vld [vmem:[%s7423 + $0x68] sm:%s7416]
                %7478 = vst [vmem:[%s7424 + $0xa8] sm:%s7416] %v7477
                %v7479 = vld [vmem:[%s7423 + $0x6c] sm:%s7416]
                %7480 = vst [vmem:[%s7424 + $0xac] sm:%s7416] %v7479
                %v7481 = vld [vmem:[%s7423 + $0x70] sm:%s7416]
                %7482 = vst [vmem:[%s7424 + $0xb0] sm:%s7416] %v7481
                %v7483 = vld [vmem:[%s7423 + $0x74] sm:%s7416]
                %7484 = vst [vmem:[%s7424 + $0xb4] sm:%s7416] %v7483
                %v7485 = vld [vmem:[%s7423 + $0x78] sm:%s7416]
                %7486 = vst [vmem:[%s7424 + $0xb8] sm:%s7416] %v7485
                %v7487 = vld [vmem:[%s7423 + $0x7c] sm:%s7416]
                %7488 = vst [vmem:[%s7424 + $0xbc] sm:%s7416] %v7487
                %v7489 = vld [vmem:[%s7423 + $0x80] sm:%s7416]
                %7490 = vst [vmem:[%s7424 + $0x100] sm:%s7416] %v7489
                %v7491 = vld [vmem:[%s7423 + $0x84] sm:%s7416]
                %7492 = vst [vmem:[%s7424 + $0x104] sm:%s7416] %v7491
                %v7493 = vld [vmem:[%s7423 + $0x88] sm:%s7416]
                %7494 = vst [vmem:[%s7424 + $0x108] sm:%s7416] %v7493
                %v7495 = vld [vmem:[%s7423 + $0x8c] sm:%s7416]
                %7496 = vst [vmem:[%s7424 + $0x10c] sm:%s7416] %v7495
                %v7497 = vld [vmem:[%s7423 + $0x90] sm:%s7416]
                %7498 = vst [vmem:[%s7424 + $0x110] sm:%s7416] %v7497
                %v7499 = vld [vmem:[%s7423 + $0x94] sm:%s7416]
                %7500 = vst [vmem:[%s7424 + $0x114] sm:%s7416] %v7499
                %v7501 = vld [vmem:[%s7423 + $0x98] sm:%s7416]
                %7502 = vst [vmem:[%s7424 + $0x118] sm:%s7416] %v7501
                %v7503 = vld [vmem:[%s7423 + $0x9c] sm:%s7416]
                %7504 = vst [vmem:[%s7424 + $0x11c] sm:%s7416] %v7503
                %v7505 = vld [vmem:[%s7423 + $0xa0] sm:%s7416]
                %7506 = vst [vmem:[%s7424 + $0x120] sm:%s7416] %v7505
                %v7507 = vld [vmem:[%s7423 + $0xa4] sm:%s7416]
                %7508 = vst [vmem:[%s7424 + $0x124] sm:%s7416] %v7507
                %v7509 = vld [vmem:[%s7423 + $0xa8] sm:%s7416]
                %7510 = vst [vmem:[%s7424 + $0x128] sm:%s7416] %v7509
                %v7511 = vld [vmem:[%s7423 + $0xac] sm:%s7416]
                %7512 = vst [vmem:[%s7424 + $0x12c] sm:%s7416] %v7511
                %v7513 = vld [vmem:[%s7423 + $0xb0] sm:%s7416]
                %7514 = vst [vmem:[%s7424 + $0x130] sm:%s7416] %v7513
                %v7515 = vld [vmem:[%s7423 + $0xb4] sm:%s7416]
                %7516 = vst [vmem:[%s7424 + $0x134] sm:%s7416] %v7515
                %v7517 = vld [vmem:[%s7423 + $0xb8] sm:%s7416]
                %7518 = vst [vmem:[%s7424 + $0x138] sm:%s7416] %v7517
                %v7519 = vld [vmem:[%s7423 + $0xbc] sm:%s7416]
                %7520 = vst [vmem:[%s7424 + $0x13c] sm:%s7416] %v7519
                %v7521 = vld [vmem:[%s7423 + $0xc0] sm:%s7416]
                %7522 = vst [vmem:[%s7424 + $0x180] sm:%s7416] %v7521
                %v7523 = vld [vmem:[%s7423 + $0xc4] sm:%s7416]
                %7524 = vst [vmem:[%s7424 + $0x184] sm:%s7416] %v7523
                %v7525 = vld [vmem:[%s7423 + $0xc8] sm:%s7416]
                %7526 = vst [vmem:[%s7424 + $0x188] sm:%s7416] %v7525
                %v7527 = vld [vmem:[%s7423 + $0xcc] sm:%s7416]
                %7528 = vst [vmem:[%s7424 + $0x18c] sm:%s7416] %v7527
                %v7529 = vld [vmem:[%s7423 + $0xd0] sm:%s7416]
                %7530 = vst [vmem:[%s7424 + $0x190] sm:%s7416] %v7529
                %v7531 = vld [vmem:[%s7423 + $0xd4] sm:%s7416]
                %7532 = vst [vmem:[%s7424 + $0x194] sm:%s7416] %v7531
                %v7533 = vld [vmem:[%s7423 + $0xd8] sm:%s7416]
                %7534 = vst [vmem:[%s7424 + $0x198] sm:%s7416] %v7533
                %v7535 = vld [vmem:[%s7423 + $0xdc] sm:%s7416]
                %7536 = vst [vmem:[%s7424 + $0x19c] sm:%s7416] %v7535
                %v7537 = vld [vmem:[%s7423 + $0xe0] sm:%s7416]
                %7538 = vst [vmem:[%s7424 + $0x1a0] sm:%s7416] %v7537
                %v7539 = vld [vmem:[%s7423 + $0xe4] sm:%s7416]
                %7540 = vst [vmem:[%s7424 + $0x1a4] sm:%s7416] %v7539
                %v7541 = vld [vmem:[%s7423 + $0xe8] sm:%s7416]
                %7542 = vst [vmem:[%s7424 + $0x1a8] sm:%s7416] %v7541
                %v7543 = vld [vmem:[%s7423 + $0xec] sm:%s7416]
                %7544 = vst [vmem:[%s7424 + $0x1ac] sm:%s7416] %v7543
                %v7545 = vld [vmem:[%s7423 + $0xf0] sm:%s7416]
                %7546 = vst [vmem:[%s7424 + $0x1b0] sm:%s7416] %v7545
                %v7547 = vld [vmem:[%s7423 + $0xf4] sm:%s7416]
                %7548 = vst [vmem:[%s7424 + $0x1b4] sm:%s7416] %v7547
                %v7549 = vld [vmem:[%s7423 + $0xf8] sm:%s7416]
                %7550 = vst [vmem:[%s7424 + $0x1b8] sm:%s7416] %v7549
                %v7551 = vld [vmem:[%s7423 + $0xfc] sm:%s7416]
                %7552 = vst [vmem:[%s7424 + $0x1bc] sm:%s7416] %v7551
              $region139: #{tpu_custom_call.1} parent=133 // loop_footer
                %s7422 = sadd.s32 1, %s7418
              $region140: #{tpu_custom_call.1} parent=133 // loop_footer_branch
                %7417 = sbr.rel target = $region136
              $region141: #{tpu_custom_call.1} parent=133 // loop_exit
                _
            $region134: #{tpu_custom_call.1} parent=125 // pred_fallthru
              _
          $region126: #{tpu_custom_call.1} parent=121 // pred_fallthru
            _
          %7701 = vnop
        $region122: #{tpu_custom_call.1} parent=27 // pred_fallthru
          _
      $region28: #{tpu_custom_call.1} parent=5 // pred_fallthru
        _
      %p7702 = scmp.le.s32.totalorder 2, %s15
      // Predicated region
      $region160: #{tpu_custom_call.1} parent=5 // pred_check
        %p7703 = pneg %p7702
      $region161: #{tpu_custom_call.1} parent=5 // pred_check_branch
        %7705 = sbr.rel (%p7703) target = $region163
      $region162: #{tpu_custom_call.1} parent=5 // pred_region
        %s7706 = ssub.s32 %s15, 2
        // Predicated region
        $region164: #{tpu_custom_call.1} parent=162 // pred_check
          %p7707 = pneg %p107
        $region165: #{tpu_custom_call.1} parent=162 // pred_check_branch
          %7709 = sbr.rel (%p7707) target = $region167
        $region166: #{tpu_custom_call.1} parent=162 // pred_region
          %s7710 = sand.u32 %s92, 1
          %s7711 = sand.u32 %s92, 1
          %s7712 = smul.addr %s7711, 256
          %s7713 = scalar_lea.vmem [#allocation6], %s7712
        $region167: #{tpu_custom_call.1} parent=162 // pred_fallthru
          _
        // Predicated region
        $region168: #{tpu_custom_call.1} parent=162 // pred_check
          %p7714 = pneg %p135
        $region169: #{tpu_custom_call.1} parent=162 // pred_check_branch
          %7716 = sbr.rel (%p7714) target = $region171
        $region170: #{tpu_custom_call.1} parent=162 // pred_region
          %s7717 = sand.u32 %s120, 1
          %s7718 = sand.u32 %s120, 1
          %s7719 = smul.addr %s7718, 256
          %s7720 = scalar_lea.vmem [#allocation7], %s7719
        $region171: #{tpu_custom_call.1} parent=162 // pred_fallthru
          _
        // Predicated region
        $region172: #{tpu_custom_call.1} parent=162 // pred_check
          %p7721 = pneg %p163
        $region173: #{tpu_custom_call.1} parent=162 // pred_check_branch
          %7723 = sbr.rel (%p7721) target = $region175
        $region174: #{tpu_custom_call.1} parent=162 // pred_region
          %s7724 = sand.u32 %s148, 1
          %s7725 = sand.u32 %s148, 1
          %s7726 = smul.addr %s7725, 256
          %s7727 = scalar_lea.vmem [#allocation8], %s7726
        $region175: #{tpu_custom_call.1} parent=162 // pred_fallthru
          _
      $region163: #{tpu_custom_call.1} parent=5 // pred_fallthru
        _
    $region6: #{tpu_custom_call.1} parent=1 // loop_footer
      %s19 = sadd.s32 1, %s15
    $region7: #{tpu_custom_call.1} parent=1 // loop_footer_branch
      %14 = sbr.rel target = $region3
    $region8: #{tpu_custom_call.1} parent=1 // loop_exit
      _
    %7728 = vsyncpa [#allocation3], 1
    %s7729 = scalar_lea.sflag [#allocation3], 1
    %7730 = vsyncpa %s7729, 1
    %7731 = vsyncpa [#allocation5], 1

</llo_original>
